<compile_context>
chip_gen: v7x
topology: tpu7x:2x2x1
jax: 0.10.0
libtpu: 0.0.40
codegen_flags: <defaults>
</compile_context>

<pallas_src>
import functools

import numpy as np
import jax
import jax.numpy as jnp
from jax import lax
from jax.experimental import pallas as pl
from jax.experimental.pallas import tpu as pltpu

_VMEM_LIMIT = 48 * 1024 * 1024          # headroom on v7x (64 MiB physical VMEM)
_BN_EPS = 1e-5
_BN_SCALE = 1.0 / (1.0 + _BN_EPS) ** 0.5  # eval-mode BN w/ default running stats


def _round_up(x, m):
    return (x + m - 1) // m * m


def _pick_tm(m, cap):
    """Pick a row tile <= cap.  Prefer one that divides M so the (often tens of
    MB) patches array is never padded/copied; fall back to a small pad."""
    cap = min(cap, _round_up(m, 8))
    cap = max(8, cap - cap % 8)
    tmin = min(cap, 64)
    for t in range(cap, tmin - 1, -8):
        if m % t == 0:
            return t, m
    return cap, _round_up(m, cap)


# ----------------------------------------------------------------------------
# Matmul kernel: C = A @ B (+ bias) (+ residual) (+ ReLU)   -- bf16 in, f32 acc
# ----------------------------------------------------------------------------
def _matmul_kernel(*refs, has_bias, has_res, act):
    a_ref, b_ref, o_ref = refs[0], refs[1], refs[-1]
    acc = jnp.dot(a_ref[...], b_ref[...], preferred_element_type=jnp.float32)
    k = 2
    if has_bias:
        acc = acc + refs[k][...]
        k += 1
    if has_res:
        acc = acc + refs[k][...].astype(jnp.float32)
        k += 1
    if act == "relu":
        acc = jnp.maximum(acc, 0.0)
    o_ref[...] = acc.astype(o_ref.dtype)


def pallas_matmul(a, b, bias=None, residual=None, act=None, out_dtype=None,
                  tm_cap=512):
    """(M,K) @ (K,N) with optional bias / fused residual-add / ReLU epilogue."""
    M, K = a.shape
    K2, N = b.shape
    assert K == K2
    out_dtype = out_dtype or a.dtype
    # VMEM-aware cap: keep the A tile around ~2 MB (bf16) so tiles + the
    # resident weight block stay far under the 48 MiB budget even for layer4.
    cap = max(8, min(tm_cap, (2 * 1024 * 1024) // max(1, K * a.dtype.itemsize)))
    tm, m_pad = _pick_tm(M, cap)
    if m_pad != M:                       # only tiny tensors ever hit this path
        a = jnp.pad(a, ((0, m_pad - M), (0, 0)))
        if residual is not None:
            residual = jnp.pad(residual, ((0, m_pad - M), (0, 0)))

    inputs = [a, b]
    in_specs = [pl.BlockSpec((tm, K), lambda i: (i, 0)),
                pl.BlockSpec((K, N), lambda i: (0, 0))]     # weight resident
    if bias is not None:
        inputs.append(bias.reshape(1, N).astype(jnp.float32))
        in_specs.append(pl.BlockSpec((1, N), lambda i: (0, 0)))
    if residual is not None:
        inputs.append(residual)
        in_specs.append(pl.BlockSpec((tm, N), lambda i: (i, 0)))

    out = pl.pallas_call(
        functools.partial(_matmul_kernel, has_bias=bias is not None,
                          has_res=residual is not None, act=act),
        out_shape=jax.ShapeDtypeStruct((m_pad, N), out_dtype),
        grid=(m_pad // tm,),
        in_specs=in_specs,
        out_specs=pl.BlockSpec((tm, N), lambda i: (i, 0)),
        compiler_params=pltpu.CompilerParams(
            dimension_semantics=("parallel",), vmem_limit_bytes=_VMEM_LIMIT),
    )(*inputs)
    return out[:M] if m_pad != M else out


# ----------------------------------------------------------------------------
# ValueLayer kernel: values = t * MLP(t - bin/(C-1)) for every bin, lane-dense
# ----------------------------------------------------------------------------
def _value_mlp_kernel(t_ref, o_ref, *, layers, slope, inv_c1, tr):
    shift = pl.program_id(1).astype(jnp.float32) * inv_c1

    def strip(s, carry):
        r0 = pl.multiple_of(s * 8, 8)
        t = t_ref[pl.ds(r0, 8), :]                      # (8,128) f32, lane-dense
        h = [t - shift]                                 # input layer, width 1
        for li, (w, bvec) in enumerate(layers):
            n_in, n_out = len(w), len(w[0])
            nh = []
            for k in range(n_out):
                acc = jnp.full_like(t, bvec[k])
                for j in range(n_in):
                    acc = acc + h[j] * w[j][k]          # VPU FMA (no K=1 MXU dot)
                if li < len(layers) - 1:
                    acc = jnp.where(acc > 0, acc, slope * acc)   # LeakyReLU(0.1)
                nh.append(acc)
            h = nh
        o_ref[pl.ds(r0, 8), :] = h[0] * t               # fused `values = t * mlp`
        return carry

    lax.fori_loop(0, tr // 8, strip, 0)


def pallas_value_mlp(t, layer_scalars, num_bins, slope=0.1, tr=256):
    """Returns (num_bins, N): per-bin values t * mlp(t - bin/(C-1))."""
    n = t.shape[0]
    block = tr * 128
    n_pad = _round_up(max(n, 1), block)
    rows = n_pad // 128
    nrb = rows // tr
    t2 = jnp.pad(t.astype(jnp.float32), (0, n_pad - n)).reshape(rows, 128)
    inv_c1 = 1.0 / max(num_bins - 1, 1)
    out = pl.pallas_call(
        functools.partial(_value_mlp_kernel, layers=layer_scalars, slope=slope,
                          inv_c1=inv_c1, tr=tr),
        out_shape=jax.ShapeDtypeStruct((num_bins * rows, 128), jnp.float32),
        grid=(nrb, num_bins),
        in_specs=[pl.BlockSpec((tr, 128), lambda r, c: (r, 0))],
        out_specs=pl.BlockSpec((tr, 128), lambda r, c, _n=nrb: (c * _n + r, 0)),
        compiler_params=pltpu.CompilerParams(
            dimension_semantics=("parallel", "parallel"),
            vmem_limit_bytes=_VMEM_LIMIT),
    )(t2)
    return out.reshape(num_bins, n_pad)[:, :n]


# ----------------------------------------------------------------------------
# Scatter-add: vox[idx] += val  (event-chunked, resident voxel-tile accumulator)
# ----------------------------------------------------------------------------
def _scatter_add_kernel(idx_ref, val_ref, o_ref, *, tv):
    @pl.when(pl.program_id(1) == 0)
    def _():
        o_ref[...] = jnp.zeros_like(o_ref)
    cols = pl.program_id(0) * tv + lax.broadcasted_iota(jnp.int32, (1, tv), 1)
    onehot = (idx_ref[...] == cols).astype(jnp.float32)      # (te, tv)
    o_ref[...] += jnp.dot(val_ref[...], onehot, preferred_element_type=jnp.float32)


def pallas_scatter_add(idx, values, size, tv=512, te=256):
    n = idx.shape[0]
    n_pad = _round_up(max(n, te), te)
    # padded events: idx 0 / value 0 -> harmless +0 into voxel 0
    idx_p = jnp.pad(idx.astype(jnp.int32), (0, n_pad - n)).reshape(n_pad, 1)
    val_p = jnp.pad(values.astype(jnp.float32), (0, n_pad - n)).reshape(1, n_pad)
    v_pad = _round_up(max(size, tv), tv)
    out = pl.pallas_call(
        functools.partial(_scatter_add_kernel, tv=tv),
        out_shape=jax.ShapeDtypeStruct((1, v_pad), jnp.float32),
        grid=(v_pad // tv, n_pad // te),
        in_specs=[
            pl.BlockSpec((te, 1), lambda j, e: (e, 0)),   # events on sublanes (for one-hot)
            pl.BlockSpec((1, te), lambda j, e: (0, e)),   # values lane-dense
        ],
        out_specs=pl.BlockSpec((1, tv), lambda j, e: (0, j)),
        compiler_params=pltpu.CompilerParams(
            dimension_semantics=("parallel", "arbitrary"),
            vmem_limit_bytes=_VMEM_LIMIT),
    )(idx_p, val_p)
    return out[0, :size]


# ----------------------------------------------------------------------------
# Conv (NHWC, bf16) via im2col + Pallas matmul with fused epilogues
# ----------------------------------------------------------------------------
def conv2d_pallas(x, conv, stride=1, padding=0, act=None, residual=None,
                  out_dtype=jnp.bfloat16):
    """x: (B,H,W,Cin) bf16; conv['w']: (kh*kw*Cin, Cout) bf16 (BN prefolded)."""
    B, H, W, Cin = x.shape
    kh, kw = conv["kh"], conv["kw"]
    wm = conv["w"]
    Cout = wm.shape[1]
    Ho = (H + 2 * padding - kh) // stride + 1
    Wo = (W + 2 * padding - kw) // stride + 1
    if padding:
        x = jnp.pad(x, ((0, 0), (padding, padding), (padding, padding), (0, 0)))
    if kh == 1 and kw == 1 and stride == 1:
        patches = x.reshape(B * Ho * Wo, Cin)
    else:
        # TODO(synk): patches still materialized in HBM (bf16, NHWC, no
        # transposes); in-kernel shifted-window reduction left as follow-up.
        cols = []
        for i in range(kh):
            for j in range(kw):
                cols.append(x[:, i:i + (Ho - 1) * stride + 1:stride,
                                 j:j + (Wo - 1) * stride + 1:stride, :])
        patches = jnp.concatenate(cols, axis=-1).reshape(B * Ho * Wo, kh * kw * Cin)
    res2 = residual.reshape(B * Ho * Wo, Cout) if residual is not None else None
    out = pallas_matmul(patches, wm, bias=None, residual=res2, act=act,
                        out_dtype=out_dtype)
    return out.reshape(B, Ho, Wo, Cout)


def maxpool2d_nhwc(x, k=3, s=2, p=1):
    # TODO(synk): 3x3/stride-2 max-pool kept as lax.reduce_window glue
    # (tiny vs the conv matmuls, no clean Pallas win).
    init = jnp.array(-jnp.inf, dtype=x.dtype)
    return lax.reduce_window(x, init, lax.max,
                             (1, k, k, 1), (1, s, s, 1),
                             [(0, 0), (p, p), (p, p), (0, 0)])


# ----------------------------------------------------------------------------
# QuantizationLayer
# ----------------------------------------------------------------------------
def quantization_forward(events, dim, value_scalars, num_batches):
    """events: (N, 5) float32 columns (x, y, t, p, b); p in {-1,+1}, b in [0,B)."""
    C, H, W = dim
    x, y, t, p, b = (events[:, i] for i in range(5))
    b_int = b.astype(jnp.int32)
    t_norm = t
    for bi in range(num_batches):                            # per-batch t /= t.max()
        mask = b_int == bi
        t_max = jnp.max(jnp.where(mask, t, -jnp.inf))
        t_norm = jnp.where(mask, t / t_max, t_norm)
    # Voxel index computed in int32 (exact; float32 rounds past 2^24 voxels).
    xi = x.astype(jnp.int32)
    yi = y.astype(jnp.int32)
    pi = (p > 0).astype(jnp.int32)                           # (p+1)/2 for p in {-1,+1}
    idx_before = xi + W * yi + (W * H * C) * pi + (W * H * C * 2) * b_int
    n = t_norm.shape[0]

    # All C temporal bins in one lane-dense Pallas value-MLP call (t* fused in).
    vals = pallas_value_mlp(t_norm, value_scalars, C, slope=0.1)     # (C, n)
    bins = (W * H) * jnp.arange(C, dtype=jnp.int32)
    idx_all = (idx_before[None, :] + bins[:, None]).reshape(-1)
    values_all = vals.reshape(-1)

    num_voxels = int(2 * C * H * W * num_batches)
    vox = pallas_scatter_add(idx_all, values_all, num_voxels)
    vox = vox.reshape(num_batches, 2, C, H, W)
    vox = jnp.concatenate([vox[:, 0], vox[:, 1]], axis=1)    # (B, 2C, H, W)
    return vox


def crop_and_resize_to_resolution(x, output_resolution):
    B, C, H, W = x.shape
    if H > W:
        h = H // 2
        x = x[:, :, h - W // 2:h + W // 2, :]
    else:
        h = W // 2
        x = x[:, :, :, h - H // 2:h + H // 2]
    _, _, Hc, Wc = x.shape
    oh, ow = output_resolution
    ih = (jnp.arange(oh) * Hc) // oh                          # PyTorch 'nearest'
    iw = (jnp.arange(ow) * Wc) // ow
    # TODO(synk): F.interpolate(mode='nearest') done as plain-JAX gather.
    return x[:, :, ih[:, None], iw[None, :]]


# ----------------------------------------------------------------------------
# ResNet-34 (conv1: in=2C, fc: num_classes), NHWC / bf16, BN folded at init
# ----------------------------------------------------------------------------
_RESNET34_CFG = [(64, 3, 1), (128, 4, 2), (256, 6, 2), (512, 3, 2)]


def _prep_conv(w4d):
    # TODO(synk): BN applied in eval mode with default running stats
    # (mean=0, var=1, gamma=1, beta=0), folded into the weights once here.
    cout, cin, kh, kw = w4d.shape
    wm = (w4d * _BN_SCALE).transpose(2, 3, 1, 0).reshape(kh * kw * cin, cout)
    return {"w": wm.astype(jnp.bfloat16), "kh": kh, "kw": kw}


def init_resnet34_params(key, in_channels, num_classes):
    keys = iter(jax.random.split(key, 64))

    def conv_w(cout, cin, ksz):
        fan_in = cin * ksz * ksz
        w = jax.random.normal(next(keys), (cout, cin, ksz, ksz), jnp.float32)
        return _prep_conv(w * (2.0 / fan_in) ** 0.5)

    params = {"conv1": conv_w(64, in_channels, 7)}
    layers = []
    in_ch = 64
    for out_ch, n_blocks, stride in _RESNET34_CFG:
        blocks = []
        for bi in range(n_blocks):
            s = stride if bi == 0 else 1
            cin = in_ch if bi == 0 else out_ch
            blk = {"conv1": conv_w(out_ch, cin, 3),
                   "conv2": conv_w(out_ch, out_ch, 3)}
            if s != 1 or cin != out_ch:
                blk["down"] = conv_w(out_ch, cin, 1)
            blocks.append(blk)
        layers.append((blocks, stride))
        in_ch = out_ch
    params["layers"] = layers
    fc_w = jax.random.normal(next(keys), (512, num_classes), jnp.float32) * 0.02
    params["fc_w"] = fc_w.astype(jnp.bfloat16)
    params["fc_b"] = jnp.zeros((num_classes,), jnp.float32)
    return params


def resnet34_forward(x, params):
    """x: (B, H, W, 2C) bf16 NHWC."""
    x = conv2d_pallas(x, params["conv1"], stride=2, padding=3, act="relu")
    x = maxpool2d_nhwc(x)
    for blocks, stride in params["layers"]:
        for bi, blk in enumerate(blocks):
            s = stride if bi == 0 else 1
            if "down" in blk:
                identity = conv2d_pallas(x, blk["down"], stride=s, padding=0, act=None)
            else:
                identity = x
            h = conv2d_pallas(x, blk["conv1"], stride=s, padding=1, act="relu")
            # residual add + ReLU fused into conv2's matmul epilogue
            x = conv2d_pallas(h, blk["conv2"], stride=1, padding=1,
                              act="relu", residual=identity)
    feat = jnp.mean(x.astype(jnp.float32), axis=(1, 2))       # adaptive avg pool
    return pallas_matmul(feat.astype(jnp.bfloat16), params["fc_w"],
                         bias=params["fc_b"], act=None, out_dtype=jnp.float32)


# ----------------------------------------------------------------------------
# Classifier
# ----------------------------------------------------------------------------
def init_value_layer_scalars(key, mlp_layers=(1, 30, 30, 1)):
    assert mlp_layers[0] == 1 and mlp_layers[-1] == 1
    keys = iter(jax.random.split(key, 2 * len(mlp_layers)))
    layers = []
    in_c = mlp_layers[0]
    for out_c in mlp_layers[1:]:
        bound = 1.0 / (in_c ** 0.5)
        w = jax.random.uniform(next(keys), (in_c, out_c), jnp.float32, -bound, bound)
        b = jax.random.uniform(next(keys), (out_c,), jnp.float32, -bound, bound)
        # baked as compile-time scalars inside the value-MLP kernel
        w_t = tuple(tuple(float(v) for v in row) for row in np.asarray(w))
        b_t = tuple(float(v) for v in np.asarray(b))
        layers.append((w_t, b_t))
        in_c = out_c
    return tuple(layers)


class PallasClassifier:
    def __init__(self, voxel_dimension=(4, 16, 12), crop_dimension=(32, 32),
                 num_classes=10, mlp_layers=(1, 30, 30, 1), seed=42):
        self.voxel_dimension = voxel_dimension
        self.crop_dimension = crop_dimension
        key = jax.random.PRNGKey(seed)
        k_val, k_res = jax.random.split(key)
        # TODO(synk): weights initialised deterministically in-script
        # (no .pth / pretrained load).
        self.value_scalars = init_value_layer_scalars(k_val, mlp_layers)
        self.resnet_params = init_resnet34_params(
            k_res, 2 * voxel_dimension[0], num_classes)

    def forward(self, events):
        num_batches = int(events[-1, -1]) + 1                 # B = 1 + events[-1, -1]
        vox = quantization_forward(events, self.voxel_dimension,
                                   self.value_scalars, num_batches)
        vox_cropped = crop_and_resize_to_resolution(vox, self.crop_dimension)
        x_nhwc = vox_cropped.transpose(0, 2, 3, 1).astype(jnp.bfloat16)
        pred = resnet34_forward(x_nhwc, self.resnet_params)
        return pred, vox


# ----------------------------------------------------------------------------
# Example inputs / smoke test
# ----------------------------------------------------------------------------
def make_events(key, n_events, dim, num_batches):
    C, H, W = dim
    kx, ky, kt, kp, kb = jax.random.split(key, 5)
    xs = jax.random.randint(kx, (n_events,), 0, W).astype(jnp.float32)
    ys = jax.random.randint(ky, (n_events,), 0, H).astype(jnp.float32)
    ts = jax.random.uniform(kt, (n_events,), jnp.float32, 1e-3, 1.0)
    ps = jax.random.randint(kp, (n_events,), 0, 2).astype(jnp.float32) * 2.0 - 1.0
    bs = jnp.sort(jax.random.randint(kb, (n_events,), 0, num_batches)).astype(jnp.float32)
    bs = bs.at[0].set(0.0).at[-1].set(float(num_batches - 1))
    return jnp.stack([xs, ys, ts, ps, bs], axis=1)            # (N, 5): x, y, t, p, b


if __name__ == "__main__":
    voxel_dim = (4, 16, 12)     # (C, H, W) — small stand-in for (9, 240, 320)
    crop_dim = (32, 32)         # small stand-in for (224, 224)
    num_classes = 10
    n_events = 500
    num_batches = 2

    model = PallasClassifier(voxel_dim, crop_dim, num_classes, seed=42)
    events = make_events(jax.random.PRNGKey(0), n_events, voxel_dim, num_batches)

    pred, vox = model.forward(events)
    jax.block_until_ready((pred, vox))

    assert pred.shape == (num_batches, num_classes)
    assert vox.shape == (num_batches, 2 * voxel_dim[0], voxel_dim[1], voxel_dim[2])
    assert bool(jnp.all(jnp.isfinite(pred))) and bool(jnp.all(jnp.isfinite(vox)))
    print("KERNEL_OK")
</pallas_src>

<mosaic_0001>
module attributes {stable_mosaic.version = 11 : i64} {
  func.func @_value_mlp_kernel(%arg0: i32, %arg1: i32, %arg2: memref<256x128xf32, #tpu.memory_space<vmem>>, %arg3: memref<256x128xf32, #tpu.memory_space<vmem>>) attributes {dimension_semantics = [#tpu.dimension_semantics<parallel>, #tpu.dimension_semantics<parallel>], iteration_bounds = array<i64: 1, 4>, scalar_prefetch = 0 : i64, scratch_operands = 0 : i64, tpu.core_type = #tpu.core_type<tc>, window_params = [{transform_indices = @transform_0, window_bounds = array<i64: 256, 128>}, {transform_indices = @transform_1, window_bounds = array<i64: 256, 128>}]} {
    %0 = arith.sitofp %arg1 : i32 to f32
    %cst = arith.constant 0.333333343 : f32
    %1 = arith.mulf %0, %cst : f32
    %c0_i32 = arith.constant 0 : i32
    %c32_i32 = arith.constant 32 : i32
    %2 = arith.addi %c0_i32, %c32_i32 : i32
    %c1_i32 = arith.constant 1 : i32
    scf.for %arg4 = %c0_i32 to %2 step %c1_i32  : i32 {
      %c8_i32 = arith.constant 8 : i32
      %3 = arith.muli %arg4, %c8_i32 : i32
      %4 = tpu.assume_multiple %3, 8 : i32
      %5 = arith.index_cast %4 : i32 to index
      %c0 = arith.constant 0 : index
      %6 = vector.load %arg2[%5, %c0] : memref<256x128xf32, #tpu.memory_space<vmem>>, vector<8x128xf32>
      %7 = vector.broadcast %1 : f32 to vector<8x128xf32>
      %8 = arith.subf %6, %7 : vector<8x128xf32>
      %cst_1 = arith.constant -0.167027235 : f32
      %9 = vector.broadcast %cst_1 : f32 to vector<8x128xf32>
      %cst_2 = arith.constant -0.528350115 : f32
      %10 = vector.broadcast %cst_2 : f32 to vector<8x128xf32>
      %11 = arith.mulf %8, %10 : vector<8x128xf32>
      %12 = arith.addf %9, %11 : vector<8x128xf32>
      %cst_3 = arith.constant 0.000000e+00 : f32
      %13 = vector.broadcast %cst_3 : f32 to vector<8x128xf32>
      %14 = arith.cmpf ogt, %12, %13 : vector<8x128xf32>
      %cst_4 = arith.constant 1.000000e-01 : f32
      %15 = vector.broadcast %cst_4 : f32 to vector<8x128xf32>
      %16 = arith.mulf %15, %12 : vector<8x128xf32>
      %17 = arith.select %14, %12, %16 : vector<8x128xi1>, vector<8x128xf32>
      %cst_5 = arith.constant -0.827052832 : f32
      %18 = vector.broadcast %cst_5 : f32 to vector<8x128xf32>
      %cst_6 = arith.constant 0.879380941 : f32
      %19 = vector.broadcast %cst_6 : f32 to vector<8x128xf32>
      %20 = arith.mulf %8, %19 : vector<8x128xf32>
      %21 = arith.addf %18, %20 : vector<8x128xf32>
      %cst_7 = arith.constant 0.000000e+00 : f32
      %22 = vector.broadcast %cst_7 : f32 to vector<8x128xf32>
      %23 = arith.cmpf ogt, %21, %22 : vector<8x128xf32>
      %cst_8 = arith.constant 1.000000e-01 : f32
      %24 = vector.broadcast %cst_8 : f32 to vector<8x128xf32>
      %25 = arith.mulf %24, %21 : vector<8x128xf32>
      %26 = arith.select %23, %21, %25 : vector<8x128xi1>, vector<8x128xf32>
      %cst_9 = arith.constant -0.0358958244 : f32
      %27 = vector.broadcast %cst_9 : f32 to vector<8x128xf32>
      %cst_10 = arith.constant -0.607856035 : f32
      %28 = vector.broadcast %cst_10 : f32 to vector<8x128xf32>
      %29 = arith.mulf %8, %28 : vector<8x128xf32>
      %30 = arith.addf %27, %29 : vector<8x128xf32>
      %cst_11 = arith.constant 0.000000e+00 : f32
      %31 = vector.broadcast %cst_11 : f32 to vector<8x128xf32>
      %32 = arith.cmpf ogt, %30, %31 : vector<8x128xf32>
      %cst_12 = arith.constant 1.000000e-01 : f32
      %33 = vector.broadcast %cst_12 : f32 to vector<8x128xf32>
      %34 = arith.mulf %33, %30 : vector<8x128xf32>
      %35 = arith.select %32, %30, %34 : vector<8x128xi1>, vector<8x128xf32>
      %cst_13 = arith.constant -0.751352072 : f32
      %36 = vector.broadcast %cst_13 : f32 to vector<8x128xf32>
      %cst_14 = arith.constant 2.133820e-01 : f32
      %37 = vector.broadcast %cst_14 : f32 to vector<8x128xf32>
      %38 = arith.mulf %8, %37 : vector<8x128xf32>
      %39 = arith.addf %36, %38 : vector<8x128xf32>
      %cst_15 = arith.constant 0.000000e+00 : f32
      %40 = vector.broadcast %cst_15 : f32 to vector<8x128xf32>
      %41 = arith.cmpf ogt, %39, %40 : vector<8x128xf32>
      %cst_16 = arith.constant 1.000000e-01 : f32
      %42 = vector.broadcast %cst_16 : f32 to vector<8x128xf32>
      %43 = arith.mulf %42, %39 : vector<8x128xf32>
      %44 = arith.select %41, %39, %43 : vector<8x128xi1>, vector<8x128xf32>
      %cst_17 = arith.constant 0.94439435 : f32
      %45 = vector.broadcast %cst_17 : f32 to vector<8x128xf32>
      %cst_18 = arith.constant 0.146562815 : f32
      %46 = vector.broadcast %cst_18 : f32 to vector<8x128xf32>
      %47 = arith.mulf %8, %46 : vector<8x128xf32>
      %48 = arith.addf %45, %47 : vector<8x128xf32>
      %cst_19 = arith.constant 0.000000e+00 : f32
      %49 = vector.broadcast %cst_19 : f32 to vector<8x128xf32>
      %50 = arith.cmpf ogt, %48, %49 : vector<8x128xf32>
      %cst_20 = arith.constant 1.000000e-01 : f32
      %51 = vector.broadcast %cst_20 : f32 to vector<8x128xf32>
      %52 = arith.mulf %51, %48 : vector<8x128xf32>
      %53 = arith.select %50, %48, %52 : vector<8x128xi1>, vector<8x128xf32>
      %cst_21 = arith.constant -0.366647243 : f32
      %54 = vector.broadcast %cst_21 : f32 to vector<8x128xf32>
      %cst_22 = arith.constant 0.670289278 : f32
      %55 = vector.broadcast %cst_22 : f32 to vector<8x128xf32>
      %56 = arith.mulf %8, %55 : vector<8x128xf32>
      %57 = arith.addf %54, %56 : vector<8x128xf32>
      %cst_23 = arith.constant 0.000000e+00 : f32
      %58 = vector.broadcast %cst_23 : f32 to vector<8x128xf32>
      %59 = arith.cmpf ogt, %57, %58 : vector<8x128xf32>
      %cst_24 = arith.constant 1.000000e-01 : f32
      %60 = vector.broadcast %cst_24 : f32 to vector<8x128xf32>
      %61 = arith.mulf %60, %57 : vector<8x128xf32>
      %62 = arith.select %59, %57, %61 : vector<8x128xi1>, vector<8x128xf32>
      %cst_25 = arith.constant 0.48293519 : f32
      %63 = vector.broadcast %cst_25 : f32 to vector<8x128xf32>
      %cst_26 = arith.constant -0.267630339 : f32
      %64 = vector.broadcast %cst_26 : f32 to vector<8x128xf32>
      %65 = arith.mulf %8, %64 : vector<8x128xf32>
      %66 = arith.addf %63, %65 : vector<8x128xf32>
      %cst_27 = arith.constant 0.000000e+00 : f32
      %67 = vector.broadcast %cst_27 : f32 to vector<8x128xf32>
      %68 = arith.cmpf ogt, %66, %67 : vector<8x128xf32>
      %cst_28 = arith.constant 1.000000e-01 : f32
      %69 = vector.broadcast %cst_28 : f32 to vector<8x128xf32>
      %70 = arith.mulf %69, %66 : vector<8x128xf32>
      %71 = arith.select %68, %66, %70 : vector<8x128xi1>, vector<8x128xf32>
      %cst_29 = arith.constant 5.001590e-01 : f32
      %72 = vector.broadcast %cst_29 : f32 to vector<8x128xf32>
      %cst_30 = arith.constant -0.793206691 : f32
      %73 = vector.broadcast %cst_30 : f32 to vector<8x128xf32>
      %74 = arith.mulf %8, %73 : vector<8x128xf32>
      %75 = arith.addf %72, %74 : vector<8x128xf32>
      %cst_31 = arith.constant 0.000000e+00 : f32
      %76 = vector.broadcast %cst_31 : f32 to vector<8x128xf32>
      %77 = arith.cmpf ogt, %75, %76 : vector<8x128xf32>
      %cst_32 = arith.constant 1.000000e-01 : f32
      %78 = vector.broadcast %cst_32 : f32 to vector<8x128xf32>
      %79 = arith.mulf %78, %75 : vector<8x128xf32>
      %80 = arith.select %77, %75, %79 : vector<8x128xi1>, vector<8x128xf32>
      %cst_33 = arith.constant 0.996831178 : f32
      %81 = vector.broadcast %cst_33 : f32 to vector<8x128xf32>
      %cst_34 = arith.constant -0.177238464 : f32
      %82 = vector.broadcast %cst_34 : f32 to vector<8x128xf32>
      %83 = arith.mulf %8, %82 : vector<8x128xf32>
      %84 = arith.addf %81, %83 : vector<8x128xf32>
      %cst_35 = arith.constant 0.000000e+00 : f32
      %85 = vector.broadcast %cst_35 : f32 to vector<8x128xf32>
      %86 = arith.cmpf ogt, %84, %85 : vector<8x128xf32>
      %cst_36 = arith.constant 1.000000e-01 : f32
      %87 = vector.broadcast %cst_36 : f32 to vector<8x128xf32>
      %88 = arith.mulf %87, %84 : vector<8x128xf32>
      %89 = arith.select %86, %84, %88 : vector<8x128xi1>, vector<8x128xf32>
      %cst_37 = arith.constant -0.618142843 : f32
      %90 = vector.broadcast %cst_37 : f32 to vector<8x128xf32>
      %cst_38 = arith.constant -0.205730438 : f32
      %91 = vector.broadcast %cst_38 : f32 to vector<8x128xf32>
      %92 = arith.mulf %8, %91 : vector<8x128xf32>
      %93 = arith.addf %90, %92 : vector<8x128xf32>
      %cst_39 = arith.constant 0.000000e+00 : f32
      %94 = vector.broadcast %cst_39 : f32 to vector<8x128xf32>
      %95 = arith.cmpf ogt, %93, %94 : vector<8x128xf32>
      %cst_40 = arith.constant 1.000000e-01 : f32
      %96 = vector.broadcast %cst_40 : f32 to vector<8x128xf32>
      %97 = arith.mulf %96, %93 : vector<8x128xf32>
      %98 = arith.select %95, %93, %97 : vector<8x128xi1>, vector<8x128xf32>
      %cst_41 = arith.constant 0.807991743 : f32
      %99 = vector.broadcast %cst_41 : f32 to vector<8x128xf32>
      %cst_42 = arith.constant -0.291486025 : f32
      %100 = vector.broadcast %cst_42 : f32 to vector<8x128xf32>
      %101 = arith.mulf %8, %100 : vector<8x128xf32>
      %102 = arith.addf %99, %101 : vector<8x128xf32>
      %cst_43 = arith.constant 0.000000e+00 : f32
      %103 = vector.broadcast %cst_43 : f32 to vector<8x128xf32>
      %104 = arith.cmpf ogt, %102, %103 : vector<8x128xf32>
      %cst_44 = arith.constant 1.000000e-01 : f32
      %105 = vector.broadcast %cst_44 : f32 to vector<8x128xf32>
      %106 = arith.mulf %105, %102 : vector<8x128xf32>
      %107 = arith.select %104, %102, %106 : vector<8x128xi1>, vector<8x128xf32>
      %cst_45 = arith.constant -0.400957584 : f32
      %108 = vector.broadcast %cst_45 : f32 to vector<8x128xf32>
      %cst_46 = arith.constant 0.085948944 : f32
      %109 = vector.broadcast %cst_46 : f32 to vector<8x128xf32>
      %110 = arith.mulf %8, %109 : vector<8x128xf32>
      %111 = arith.addf %108, %110 : vector<8x128xf32>
      %cst_47 = arith.constant 0.000000e+00 : f32
      %112 = vector.broadcast %cst_47 : f32 to vector<8x128xf32>
      %113 = arith.cmpf ogt, %111, %112 : vector<8x128xf32>
      %cst_48 = arith.constant 1.000000e-01 : f32
      %114 = vector.broadcast %cst_48 : f32 to vector<8x128xf32>
      %115 = arith.mulf %114, %111 : vector<8x128xf32>
      %116 = arith.select %113, %111, %115 : vector<8x128xi1>, vector<8x128xf32>
      %cst_49 = arith.constant 0.385724545 : f32
      %117 = vector.broadcast %cst_49 : f32 to vector<8x128xf32>
      %cst_50 = arith.constant 0.295261145 : f32
      %118 = vector.broadcast %cst_50 : f32 to vector<8x128xf32>
      %119 = arith.mulf %8, %118 : vector<8x128xf32>
      %120 = arith.addf %117, %119 : vector<8x128xf32>
      %cst_51 = arith.constant 0.000000e+00 : f32
      %121 = vector.broadcast %cst_51 : f32 to vector<8x128xf32>
      %122 = arith.cmpf ogt, %120, %121 : vector<8x128xf32>
      %cst_52 = arith.constant 1.000000e-01 : f32
      %123 = vector.broadcast %cst_52 : f32 to vector<8x128xf32>
      %124 = arith.mulf %123, %120 : vector<8x128xf32>
      %125 = arith.select %122, %120, %124 : vector<8x128xi1>, vector<8x128xf32>
      %cst_53 = arith.constant 0.701403379 : f32
      %126 = vector.broadcast %cst_53 : f32 to vector<8x128xf32>
      %cst_54 = arith.constant -8.090780e-01 : f32
      %127 = vector.broadcast %cst_54 : f32 to vector<8x128xf32>
      %128 = arith.mulf %8, %127 : vector<8x128xf32>
      %129 = arith.addf %126, %128 : vector<8x128xf32>
      %cst_55 = arith.constant 0.000000e+00 : f32
      %130 = vector.broadcast %cst_55 : f32 to vector<8x128xf32>
      %131 = arith.cmpf ogt, %129, %130 : vector<8x128xf32>
      %cst_56 = arith.constant 1.000000e-01 : f32
      %132 = vector.broadcast %cst_56 : f32 to vector<8x128xf32>
      %133 = arith.mulf %132, %129 : vector<8x128xf32>
      %134 = arith.select %131, %129, %133 : vector<8x128xi1>, vector<8x128xf32>
      %cst_57 = arith.constant -0.131606102 : f32
      %135 = vector.broadcast %cst_57 : f32 to vector<8x128xf32>
      %cst_58 = arith.constant -2.982850e-01 : f32
      %136 = vector.broadcast %cst_58 : f32 to vector<8x128xf32>
      %137 = arith.mulf %8, %136 : vector<8x128xf32>
      %138 = arith.addf %135, %137 : vector<8x128xf32>
      %cst_59 = arith.constant 0.000000e+00 : f32
      %139 = vector.broadcast %cst_59 : f32 to vector<8x128xf32>
      %140 = arith.cmpf ogt, %138, %139 : vector<8x128xf32>
      %cst_60 = arith.constant 1.000000e-01 : f32
      %141 = vector.broadcast %cst_60 : f32 to vector<8x128xf32>
      %142 = arith.mulf %141, %138 : vector<8x128xf32>
      %143 = arith.select %140, %138, %142 : vector<8x128xi1>, vector<8x128xf32>
      %cst_61 = arith.constant -0.356880426 : f32
      %144 = vector.broadcast %cst_61 : f32 to vector<8x128xf32>
      %cst_62 = arith.constant 0.621672869 : f32
      %145 = vector.broadcast %cst_62 : f32 to vector<8x128xf32>
      %146 = arith.mulf %8, %145 : vector<8x128xf32>
      %147 = arith.addf %144, %146 : vector<8x128xf32>
      %cst_63 = arith.constant 0.000000e+00 : f32
      %148 = vector.broadcast %cst_63 : f32 to vector<8x128xf32>
      %149 = arith.cmpf ogt, %147, %148 : vector<8x128xf32>
      %cst_64 = arith.constant 1.000000e-01 : f32
      %150 = vector.broadcast %cst_64 : f32 to vector<8x128xf32>
      %151 = arith.mulf %150, %147 : vector<8x128xf32>
      %152 = arith.select %149, %147, %151 : vector<8x128xi1>, vector<8x128xf32>
      %cst_65 = arith.constant 0.423279047 : f32
      %153 = vector.broadcast %cst_65 : f32 to vector<8x128xf32>
      %cst_66 = arith.constant -0.599423409 : f32
      %154 = vector.broadcast %cst_66 : f32 to vector<8x128xf32>
      %155 = arith.mulf %8, %154 : vector<8x128xf32>
      %156 = arith.addf %153, %155 : vector<8x128xf32>
      %cst_67 = arith.constant 0.000000e+00 : f32
      %157 = vector.broadcast %cst_67 : f32 to vector<8x128xf32>
      %158 = arith.cmpf ogt, %156, %157 : vector<8x128xf32>
      %cst_68 = arith.constant 1.000000e-01 : f32
      %159 = vector.broadcast %cst_68 : f32 to vector<8x128xf32>
      %160 = arith.mulf %159, %156 : vector<8x128xf32>
      %161 = arith.select %158, %156, %160 : vector<8x128xi1>, vector<8x128xf32>
      %cst_69 = arith.constant -0.944524049 : f32
      %162 = vector.broadcast %cst_69 : f32 to vector<8x128xf32>
      %cst_70 = arith.constant 0.182540417 : f32
      %163 = vector.broadcast %cst_70 : f32 to vector<8x128xf32>
      %164 = arith.mulf %8, %163 : vector<8x128xf32>
      %165 = arith.addf %162, %164 : vector<8x128xf32>
      %cst_71 = arith.constant 0.000000e+00 : f32
      %166 = vector.broadcast %cst_71 : f32 to vector<8x128xf32>
      %167 = arith.cmpf ogt, %165, %166 : vector<8x128xf32>
      %cst_72 = arith.constant 1.000000e-01 : f32
      %168 = vector.broadcast %cst_72 : f32 to vector<8x128xf32>
      %169 = arith.mulf %168, %165 : vector<8x128xf32>
      %170 = arith.select %167, %165, %169 : vector<8x128xi1>, vector<8x128xf32>
      %cst_73 = arith.constant 0.305197716 : f32
      %171 = vector.broadcast %cst_73 : f32 to vector<8x128xf32>
      %cst_74 = arith.constant 0.345807314 : f32
      %172 = vector.broadcast %cst_74 : f32 to vector<8x128xf32>
      %173 = arith.mulf %8, %172 : vector<8x128xf32>
      %174 = arith.addf %171, %173 : vector<8x128xf32>
      %cst_75 = arith.constant 0.000000e+00 : f32
      %175 = vector.broadcast %cst_75 : f32 to vector<8x128xf32>
      %176 = arith.cmpf ogt, %174, %175 : vector<8x128xf32>
      %cst_76 = arith.constant 1.000000e-01 : f32
      %177 = vector.broadcast %cst_76 : f32 to vector<8x128xf32>
      %178 = arith.mulf %177, %174 : vector<8x128xf32>
      %179 = arith.select %176, %174, %178 : vector<8x128xi1>, vector<8x128xf32>
      %cst_77 = arith.constant -0.637255191 : f32
      %180 = vector.broadcast %cst_77 : f32 to vector<8x128xf32>
      %cst_78 = arith.constant -0.676247597 : f32
      %181 = vector.broadcast %cst_78 : f32 to vector<8x128xf32>
      %182 = arith.mulf %8, %181 : vector<8x128xf32>
      %183 = arith.addf %180, %182 : vector<8x128xf32>
      %cst_79 = arith.constant 0.000000e+00 : f32
      %184 = vector.broadcast %cst_79 : f32 to vector<8x128xf32>
      %185 = arith.cmpf ogt, %183, %184 : vector<8x128xf32>
      %cst_80 = arith.constant 1.000000e-01 : f32
      %186 = vector.broadcast %cst_80 : f32 to vector<8x128xf32>
      %187 = arith.mulf %186, %183 : vector<8x128xf32>
      %188 = arith.select %185, %183, %187 : vector<8x128xi1>, vector<8x128xf32>
      %cst_81 = arith.constant -0.221901655 : f32
      %189 = vector.broadcast %cst_81 : f32 to vector<8x128xf32>
      %cst_82 = arith.constant -0.694189548 : f32
      %190 = vector.broadcast %cst_82 : f32 to vector<8x128xf32>
      %191 = arith.mulf %8, %190 : vector<8x128xf32>
      %192 = arith.addf %189, %191 : vector<8x128xf32>
      %cst_83 = arith.constant 0.000000e+00 : f32
      %193 = vector.broadcast %cst_83 : f32 to vector<8x128xf32>
      %194 = arith.cmpf ogt, %192, %193 : vector<8x128xf32>
      %cst_84 = arith.constant 1.000000e-01 : f32
      %195 = vector.broadcast %cst_84 : f32 to vector<8x128xf32>
      %196 = arith.mulf %195, %192 : vector<8x128xf32>
      %197 = arith.select %194, %192, %196 : vector<8x128xi1>, vector<8x128xf32>
      %cst_85 = arith.constant 0.17201829 : f32
      %198 = vector.broadcast %cst_85 : f32 to vector<8x128xf32>
      %cst_86 = arith.constant -0.640036345 : f32
      %199 = vector.broadcast %cst_86 : f32 to vector<8x128xf32>
      %200 = arith.mulf %8, %199 : vector<8x128xf32>
      %201 = arith.addf %198, %200 : vector<8x128xf32>
      %cst_87 = arith.constant 0.000000e+00 : f32
      %202 = vector.broadcast %cst_87 : f32 to vector<8x128xf32>
      %203 = arith.cmpf ogt, %201, %202 : vector<8x128xf32>
      %cst_88 = arith.constant 1.000000e-01 : f32
      %204 = vector.broadcast %cst_88 : f32 to vector<8x128xf32>
      %205 = arith.mulf %204, %201 : vector<8x128xf32>
      %206 = arith.select %203, %201, %205 : vector<8x128xi1>, vector<8x128xf32>
      %cst_89 = arith.constant 0.281182528 : f32
      %207 = vector.broadcast %cst_89 : f32 to vector<8x128xf32>
      %cst_90 = arith.constant 0.443615437 : f32
      %208 = vector.broadcast %cst_90 : f32 to vector<8x128xf32>
      %209 = arith.mulf %8, %208 : vector<8x128xf32>
      %210 = arith.addf %207, %209 : vector<8x128xf32>
      %cst_91 = arith.constant 0.000000e+00 : f32
      %211 = vector.broadcast %cst_91 : f32 to vector<8x128xf32>
      %212 = arith.cmpf ogt, %210, %211 : vector<8x128xf32>
      %cst_92 = arith.constant 1.000000e-01 : f32
      %213 = vector.broadcast %cst_92 : f32 to vector<8x128xf32>
      %214 = arith.mulf %213, %210 : vector<8x128xf32>
      %215 = arith.select %212, %210, %214 : vector<8x128xi1>, vector<8x128xf32>
      %cst_93 = arith.constant 0.993811368 : f32
      %216 = vector.broadcast %cst_93 : f32 to vector<8x128xf32>
      %cst_94 = arith.constant -0.757230759 : f32
      %217 = vector.broadcast %cst_94 : f32 to vector<8x128xf32>
      %218 = arith.mulf %8, %217 : vector<8x128xf32>
      %219 = arith.addf %216, %218 : vector<8x128xf32>
      %cst_95 = arith.constant 0.000000e+00 : f32
      %220 = vector.broadcast %cst_95 : f32 to vector<8x128xf32>
      %221 = arith.cmpf ogt, %219, %220 : vector<8x128xf32>
      %cst_96 = arith.constant 1.000000e-01 : f32
      %222 = vector.broadcast %cst_96 : f32 to vector<8x128xf32>
      %223 = arith.mulf %222, %219 : vector<8x128xf32>
      %224 = arith.select %221, %219, %223 : vector<8x128xi1>, vector<8x128xf32>
      %cst_97 = arith.constant 0.325173378 : f32
      %225 = vector.broadcast %cst_97 : f32 to vector<8x128xf32>
      %cst_98 = arith.constant -5.323560e-01 : f32
      %226 = vector.broadcast %cst_98 : f32 to vector<8x128xf32>
      %227 = arith.mulf %8, %226 : vector<8x128xf32>
      %228 = arith.addf %225, %227 : vector<8x128xf32>
      %cst_99 = arith.constant 0.000000e+00 : f32
      %229 = vector.broadcast %cst_99 : f32 to vector<8x128xf32>
      %230 = arith.cmpf ogt, %228, %229 : vector<8x128xf32>
      %cst_100 = arith.constant 1.000000e-01 : f32
      %231 = vector.broadcast %cst_100 : f32 to vector<8x128xf32>
      %232 = arith.mulf %231, %228 : vector<8x128xf32>
      %233 = arith.select %230, %228, %232 : vector<8x128xi1>, vector<8x128xf32>
      %cst_101 = arith.constant 9.119580e-01 : f32
      %234 = vector.broadcast %cst_101 : f32 to vector<8x128xf32>
      %cst_102 = arith.constant -0.268965244 : f32
      %235 = vector.broadcast %cst_102 : f32 to vector<8x128xf32>
      %236 = arith.mulf %8, %235 : vector<8x128xf32>
      %237 = arith.addf %234, %236 : vector<8x128xf32>
      %cst_103 = arith.constant 0.000000e+00 : f32
      %238 = vector.broadcast %cst_103 : f32 to vector<8x128xf32>
      %239 = arith.cmpf ogt, %237, %238 : vector<8x128xf32>
      %cst_104 = arith.constant 1.000000e-01 : f32
      %240 = vector.broadcast %cst_104 : f32 to vector<8x128xf32>
      %241 = arith.mulf %240, %237 : vector<8x128xf32>
      %242 = arith.select %239, %237, %241 : vector<8x128xi1>, vector<8x128xf32>
      %cst_105 = arith.constant 3.346250e-01 : f32
      %243 = vector.broadcast %cst_105 : f32 to vector<8x128xf32>
      %cst_106 = arith.constant 0.35996747 : f32
      %244 = vector.broadcast %cst_106 : f32 to vector<8x128xf32>
      %245 = arith.mulf %8, %244 : vector<8x128xf32>
      %246 = arith.addf %243, %245 : vector<8x128xf32>
      %cst_107 = arith.constant 0.000000e+00 : f32
      %247 = vector.broadcast %cst_107 : f32 to vector<8x128xf32>
      %248 = arith.cmpf ogt, %246, %247 : vector<8x128xf32>
      %cst_108 = arith.constant 1.000000e-01 : f32
      %249 = vector.broadcast %cst_108 : f32 to vector<8x128xf32>
      %250 = arith.mulf %249, %246 : vector<8x128xf32>
      %251 = arith.select %248, %246, %250 : vector<8x128xi1>, vector<8x128xf32>
      %cst_109 = arith.constant -0.942471504 : f32
      %252 = vector.broadcast %cst_109 : f32 to vector<8x128xf32>
      %cst_110 = arith.constant 0.0689382553 : f32
      %253 = vector.broadcast %cst_110 : f32 to vector<8x128xf32>
      %254 = arith.mulf %8, %253 : vector<8x128xf32>
      %255 = arith.addf %252, %254 : vector<8x128xf32>
      %cst_111 = arith.constant 0.000000e+00 : f32
      %256 = vector.broadcast %cst_111 : f32 to vector<8x128xf32>
      %257 = arith.cmpf ogt, %255, %256 : vector<8x128xf32>
      %cst_112 = arith.constant 1.000000e-01 : f32
      %258 = vector.broadcast %cst_112 : f32 to vector<8x128xf32>
      %259 = arith.mulf %258, %255 : vector<8x128xf32>
      %260 = arith.select %257, %255, %259 : vector<8x128xi1>, vector<8x128xf32>
      %cst_113 = arith.constant -0.678701401 : f32
      %261 = vector.broadcast %cst_113 : f32 to vector<8x128xf32>
      %cst_114 = arith.constant 0.0924632549 : f32
      %262 = vector.broadcast %cst_114 : f32 to vector<8x128xf32>
      %263 = arith.mulf %8, %262 : vector<8x128xf32>
      %264 = arith.addf %261, %263 : vector<8x128xf32>
      %cst_115 = arith.constant 0.000000e+00 : f32
      %265 = vector.broadcast %cst_115 : f32 to vector<8x128xf32>
      %266 = arith.cmpf ogt, %264, %265 : vector<8x128xf32>
      %cst_116 = arith.constant 1.000000e-01 : f32
      %267 = vector.broadcast %cst_116 : f32 to vector<8x128xf32>
      %268 = arith.mulf %267, %264 : vector<8x128xf32>
      %269 = arith.select %266, %264, %268 : vector<8x128xi1>, vector<8x128xf32>
      %cst_117 = arith.constant 0.87033081 : f32
      %270 = vector.broadcast %cst_117 : f32 to vector<8x128xf32>
      %cst_118 = arith.constant -0.151065588 : f32
      %271 = vector.broadcast %cst_118 : f32 to vector<8x128xf32>
      %272 = arith.mulf %8, %271 : vector<8x128xf32>
      %273 = arith.addf %270, %272 : vector<8x128xf32>
      %cst_119 = arith.constant 0.000000e+00 : f32
      %274 = vector.broadcast %cst_119 : f32 to vector<8x128xf32>
      %275 = arith.cmpf ogt, %273, %274 : vector<8x128xf32>
      %cst_120 = arith.constant 1.000000e-01 : f32
      %276 = vector.broadcast %cst_120 : f32 to vector<8x128xf32>
      %277 = arith.mulf %276, %273 : vector<8x128xf32>
      %278 = arith.select %275, %273, %277 : vector<8x128xi1>, vector<8x128xf32>
      %cst_121 = arith.constant -0.127220348 : f32
      %279 = vector.broadcast %cst_121 : f32 to vector<8x128xf32>
      %cst_122 = arith.constant -0.17018567 : f32
      %280 = vector.broadcast %cst_122 : f32 to vector<8x128xf32>
      %281 = arith.mulf %17, %280 : vector<8x128xf32>
      %282 = arith.addf %279, %281 : vector<8x128xf32>
      %cst_123 = arith.constant -0.00429370813 : f32
      %283 = vector.broadcast %cst_123 : f32 to vector<8x128xf32>
      %284 = arith.mulf %26, %283 : vector<8x128xf32>
      %285 = arith.addf %282, %284 : vector<8x128xf32>
      %cst_124 = arith.constant -0.106553786 : f32
      %286 = vector.broadcast %cst_124 : f32 to vector<8x128xf32>
      %287 = arith.mulf %35, %286 : vector<8x128xf32>
      %288 = arith.addf %285, %287 : vector<8x128xf32>
      %cst_125 = arith.constant 0.120884687 : f32
      %289 = vector.broadcast %cst_125 : f32 to vector<8x128xf32>
      %290 = arith.mulf %44, %289 : vector<8x128xf32>
      %291 = arith.addf %288, %290 : vector<8x128xf32>
      %cst_126 = arith.constant 0.108000517 : f32
      %292 = vector.broadcast %cst_126 : f32 to vector<8x128xf32>
      %293 = arith.mulf %53, %292 : vector<8x128xf32>
      %294 = arith.addf %291, %293 : vector<8x128xf32>
      %cst_127 = arith.constant -0.0411552191 : f32
      %295 = vector.broadcast %cst_127 : f32 to vector<8x128xf32>
      %296 = arith.mulf %62, %295 : vector<8x128xf32>
      %297 = arith.addf %294, %296 : vector<8x128xf32>
      %cst_128 = arith.constant 0.0529675744 : f32
      %298 = vector.broadcast %cst_128 : f32 to vector<8x128xf32>
      %299 = arith.mulf %71, %298 : vector<8x128xf32>
      %300 = arith.addf %297, %299 : vector<8x128xf32>
      %cst_129 = arith.constant 0.0225010514 : f32
      %301 = vector.broadcast %cst_129 : f32 to vector<8x128xf32>
      %302 = arith.mulf %80, %301 : vector<8x128xf32>
      %303 = arith.addf %300, %302 : vector<8x128xf32>
      %cst_130 = arith.constant -0.061107032 : f32
      %304 = vector.broadcast %cst_130 : f32 to vector<8x128xf32>
      %305 = arith.mulf %89, %304 : vector<8x128xf32>
      %306 = arith.addf %303, %305 : vector<8x128xf32>
      %cst_131 = arith.constant -0.064413324 : f32
      %307 = vector.broadcast %cst_131 : f32 to vector<8x128xf32>
      %308 = arith.mulf %98, %307 : vector<8x128xf32>
      %309 = arith.addf %306, %308 : vector<8x128xf32>
      %cst_132 = arith.constant 0.0991488769 : f32
      %310 = vector.broadcast %cst_132 : f32 to vector<8x128xf32>
      %311 = arith.mulf %107, %310 : vector<8x128xf32>
      %312 = arith.addf %309, %311 : vector<8x128xf32>
      %cst_133 = arith.constant -0.0261443481 : f32
      %313 = vector.broadcast %cst_133 : f32 to vector<8x128xf32>
      %314 = arith.mulf %116, %313 : vector<8x128xf32>
      %315 = arith.addf %312, %314 : vector<8x128xf32>
      %cst_134 = arith.constant -0.0491281785 : f32
      %316 = vector.broadcast %cst_134 : f32 to vector<8x128xf32>
      %317 = arith.mulf %125, %316 : vector<8x128xf32>
      %318 = arith.addf %315, %317 : vector<8x128xf32>
      %cst_135 = arith.constant 0.0261016451 : f32
      %319 = vector.broadcast %cst_135 : f32 to vector<8x128xf32>
      %320 = arith.mulf %134, %319 : vector<8x128xf32>
      %321 = arith.addf %318, %320 : vector<8x128xf32>
      %cst_136 = arith.constant 0.0453955159 : f32
      %322 = vector.broadcast %cst_136 : f32 to vector<8x128xf32>
      %323 = arith.mulf %143, %322 : vector<8x128xf32>
      %324 = arith.addf %321, %323 : vector<8x128xf32>
      %cst_137 = arith.constant 0.166021734 : f32
      %325 = vector.broadcast %cst_137 : f32 to vector<8x128xf32>
      %326 = arith.mulf %152, %325 : vector<8x128xf32>
      %327 = arith.addf %324, %326 : vector<8x128xf32>
      %cst_138 = arith.constant 0.180702865 : f32
      %328 = vector.broadcast %cst_138 : f32 to vector<8x128xf32>
      %329 = arith.mulf %161, %328 : vector<8x128xf32>
      %330 = arith.addf %327, %329 : vector<8x128xf32>
      %cst_139 = arith.constant -0.0297634415 : f32
      %331 = vector.broadcast %cst_139 : f32 to vector<8x128xf32>
      %332 = arith.mulf %170, %331 : vector<8x128xf32>
      %333 = arith.addf %330, %332 : vector<8x128xf32>
      %cst_140 = arith.constant -0.0375773907 : f32
      %334 = vector.broadcast %cst_140 : f32 to vector<8x128xf32>
      %335 = arith.mulf %179, %334 : vector<8x128xf32>
      %336 = arith.addf %333, %335 : vector<8x128xf32>
      %cst_141 = arith.constant 0.126387104 : f32
      %337 = vector.broadcast %cst_141 : f32 to vector<8x128xf32>
      %338 = arith.mulf %188, %337 : vector<8x128xf32>
      %339 = arith.addf %336, %338 : vector<8x128xf32>
      %cst_142 = arith.constant 0.126136258 : f32
      %340 = vector.broadcast %cst_142 : f32 to vector<8x128xf32>
      %341 = arith.mulf %197, %340 : vector<8x128xf32>
      %342 = arith.addf %339, %341 : vector<8x128xf32>
      %cst_143 = arith.constant -0.117235124 : f32
      %343 = vector.broadcast %cst_143 : f32 to vector<8x128xf32>
      %344 = arith.mulf %206, %343 : vector<8x128xf32>
      %345 = arith.addf %342, %344 : vector<8x128xf32>
      %cst_144 = arith.constant 0.0159551911 : f32
      %346 = vector.broadcast %cst_144 : f32 to vector<8x128xf32>
      %347 = arith.mulf %215, %346 : vector<8x128xf32>
      %348 = arith.addf %345, %347 : vector<8x128xf32>
      %cst_145 = arith.constant -0.0776106491 : f32
      %349 = vector.broadcast %cst_145 : f32 to vector<8x128xf32>
      %350 = arith.mulf %224, %349 : vector<8x128xf32>
      %351 = arith.addf %348, %350 : vector<8x128xf32>
      %cst_146 = arith.constant 0.020364644 : f32
      %352 = vector.broadcast %cst_146 : f32 to vector<8x128xf32>
      %353 = arith.mulf %233, %352 : vector<8x128xf32>
      %354 = arith.addf %351, %353 : vector<8x128xf32>
      %cst_147 = arith.constant -0.0200161505 : f32
      %355 = vector.broadcast %cst_147 : f32 to vector<8x128xf32>
      %356 = arith.mulf %242, %355 : vector<8x128xf32>
      %357 = arith.addf %354, %356 : vector<8x128xf32>
      %cst_148 = arith.constant 0.107302614 : f32
      %358 = vector.broadcast %cst_148 : f32 to vector<8x128xf32>
      %359 = arith.mulf %251, %358 : vector<8x128xf32>
      %360 = arith.addf %357, %359 : vector<8x128xf32>
      %cst_149 = arith.constant -0.12644735 : f32
      %361 = vector.broadcast %cst_149 : f32 to vector<8x128xf32>
      %362 = arith.mulf %260, %361 : vector<8x128xf32>
      %363 = arith.addf %360, %362 : vector<8x128xf32>
      %cst_150 = arith.constant -0.00340362568 : f32
      %364 = vector.broadcast %cst_150 : f32 to vector<8x128xf32>
      %365 = arith.mulf %269, %364 : vector<8x128xf32>
      %366 = arith.addf %363, %365 : vector<8x128xf32>
      %cst_151 = arith.constant 0.159409493 : f32
      %367 = vector.broadcast %cst_151 : f32 to vector<8x128xf32>
      %368 = arith.mulf %278, %367 : vector<8x128xf32>
      %369 = arith.addf %366, %368 : vector<8x128xf32>
      %cst_152 = arith.constant 0.000000e+00 : f32
      %370 = vector.broadcast %cst_152 : f32 to vector<8x128xf32>
      %371 = arith.cmpf ogt, %369, %370 : vector<8x128xf32>
      %cst_153 = arith.constant 1.000000e-01 : f32
      %372 = vector.broadcast %cst_153 : f32 to vector<8x128xf32>
      %373 = arith.mulf %372, %369 : vector<8x128xf32>
      %374 = arith.select %371, %369, %373 : vector<8x128xi1>, vector<8x128xf32>
      %cst_154 = arith.constant 0.053577546 : f32
      %375 = vector.broadcast %cst_154 : f32 to vector<8x128xf32>
      %cst_155 = arith.constant -0.0576959625 : f32
      %376 = vector.broadcast %cst_155 : f32 to vector<8x128xf32>
      %377 = arith.mulf %17, %376 : vector<8x128xf32>
      %378 = arith.addf %375, %377 : vector<8x128xf32>
      %cst_156 = arith.constant -0.0165597238 : f32
      %379 = vector.broadcast %cst_156 : f32 to vector<8x128xf32>
      %380 = arith.mulf %26, %379 : vector<8x128xf32>
      %381 = arith.addf %378, %380 : vector<8x128xf32>
      %cst_157 = arith.constant -0.137156814 : f32
      %382 = vector.broadcast %cst_157 : f32 to vector<8x128xf32>
      %383 = arith.mulf %35, %382 : vector<8x128xf32>
      %384 = arith.addf %381, %383 : vector<8x128xf32>
      %cst_158 = arith.constant -4.187310e-02 : f32
      %385 = vector.broadcast %cst_158 : f32 to vector<8x128xf32>
      %386 = arith.mulf %44, %385 : vector<8x128xf32>
      %387 = arith.addf %384, %386 : vector<8x128xf32>
      %cst_159 = arith.constant 0.142068416 : f32
      %388 = vector.broadcast %cst_159 : f32 to vector<8x128xf32>
      %389 = arith.mulf %53, %388 : vector<8x128xf32>
      %390 = arith.addf %387, %389 : vector<8x128xf32>
      %cst_160 = arith.constant 0.178826287 : f32
      %391 = vector.broadcast %cst_160 : f32 to vector<8x128xf32>
      %392 = arith.mulf %62, %391 : vector<8x128xf32>
      %393 = arith.addf %390, %392 : vector<8x128xf32>
      %cst_161 = arith.constant -0.0987268164 : f32
      %394 = vector.broadcast %cst_161 : f32 to vector<8x128xf32>
      %395 = arith.mulf %71, %394 : vector<8x128xf32>
      %396 = arith.addf %393, %395 : vector<8x128xf32>
      %cst_162 = arith.constant 0.143728614 : f32
      %397 = vector.broadcast %cst_162 : f32 to vector<8x128xf32>
      %398 = arith.mulf %80, %397 : vector<8x128xf32>
      %399 = arith.addf %396, %398 : vector<8x128xf32>
      %cst_163 = arith.constant 0.0176951792 : f32
      %400 = vector.broadcast %cst_163 : f32 to vector<8x128xf32>
      %401 = arith.mulf %89, %400 : vector<8x128xf32>
      %402 = arith.addf %399, %401 : vector<8x128xf32>
      %cst_164 = arith.constant 0.087322548 : f32
      %403 = vector.broadcast %cst_164 : f32 to vector<8x128xf32>
      %404 = arith.mulf %98, %403 : vector<8x128xf32>
      %405 = arith.addf %402, %404 : vector<8x128xf32>
      %cst_165 = arith.constant -0.0323347487 : f32
      %406 = vector.broadcast %cst_165 : f32 to vector<8x128xf32>
      %407 = arith.mulf %107, %406 : vector<8x128xf32>
      %408 = arith.addf %405, %407 : vector<8x128xf32>
      %cst_166 = arith.constant 0.152180612 : f32
      %409 = vector.broadcast %cst_166 : f32 to vector<8x128xf32>
      %410 = arith.mulf %116, %409 : vector<8x128xf32>
      %411 = arith.addf %408, %410 : vector<8x128xf32>
      %cst_167 = arith.constant -0.145360872 : f32
      %412 = vector.broadcast %cst_167 : f32 to vector<8x128xf32>
      %413 = arith.mulf %125, %412 : vector<8x128xf32>
      %414 = arith.addf %411, %413 : vector<8x128xf32>
      %cst_168 = arith.constant -0.0548368879 : f32
      %415 = vector.broadcast %cst_168 : f32 to vector<8x128xf32>
      %416 = arith.mulf %134, %415 : vector<8x128xf32>
      %417 = arith.addf %414, %416 : vector<8x128xf32>
      %cst_169 = arith.constant -0.107132763 : f32
      %418 = vector.broadcast %cst_169 : f32 to vector<8x128xf32>
      %419 = arith.mulf %143, %418 : vector<8x128xf32>
      %420 = arith.addf %417, %419 : vector<8x128xf32>
      %cst_170 = arith.constant -0.0615472421 : f32
      %421 = vector.broadcast %cst_170 : f32 to vector<8x128xf32>
      %422 = arith.mulf %152, %421 : vector<8x128xf32>
      %423 = arith.addf %420, %422 : vector<8x128xf32>
      %cst_171 = arith.constant -0.059294872 : f32
      %424 = vector.broadcast %cst_171 : f32 to vector<8x128xf32>
      %425 = arith.mulf %161, %424 : vector<8x128xf32>
      %426 = arith.addf %423, %425 : vector<8x128xf32>
      %cst_172 = arith.constant 0.0904499813 : f32
      %427 = vector.broadcast %cst_172 : f32 to vector<8x128xf32>
      %428 = arith.mulf %170, %427 : vector<8x128xf32>
      %429 = arith.addf %426, %428 : vector<8x128xf32>
      %cst_173 = arith.constant -0.0272472426 : f32
      %430 = vector.broadcast %cst_173 : f32 to vector<8x128xf32>
      %431 = arith.mulf %179, %430 : vector<8x128xf32>
      %432 = arith.addf %429, %431 : vector<8x128xf32>
      %cst_174 = arith.constant 0.147481948 : f32
      %433 = vector.broadcast %cst_174 : f32 to vector<8x128xf32>
      %434 = arith.mulf %188, %433 : vector<8x128xf32>
      %435 = arith.addf %432, %434 : vector<8x128xf32>
      %cst_175 = arith.constant 0.0687240586 : f32
      %436 = vector.broadcast %cst_175 : f32 to vector<8x128xf32>
      %437 = arith.mulf %197, %436 : vector<8x128xf32>
      %438 = arith.addf %435, %437 : vector<8x128xf32>
      %cst_176 = arith.constant -0.0575286373 : f32
      %439 = vector.broadcast %cst_176 : f32 to vector<8x128xf32>
      %440 = arith.mulf %206, %439 : vector<8x128xf32>
      %441 = arith.addf %438, %440 : vector<8x128xf32>
      %cst_177 = arith.constant -0.0431775376 : f32
      %442 = vector.broadcast %cst_177 : f32 to vector<8x128xf32>
      %443 = arith.mulf %215, %442 : vector<8x128xf32>
      %444 = arith.addf %441, %443 : vector<8x128xf32>
      %cst_178 = arith.constant 0.0320155062 : f32
      %445 = vector.broadcast %cst_178 : f32 to vector<8x128xf32>
      %446 = arith.mulf %224, %445 : vector<8x128xf32>
      %447 = arith.addf %444, %446 : vector<8x128xf32>
      %cst_179 = arith.constant -0.110977598 : f32
      %448 = vector.broadcast %cst_179 : f32 to vector<8x128xf32>
      %449 = arith.mulf %233, %448 : vector<8x128xf32>
      %450 = arith.addf %447, %449 : vector<8x128xf32>
      %cst_180 = arith.constant 0.00976148247 : f32
      %451 = vector.broadcast %cst_180 : f32 to vector<8x128xf32>
      %452 = arith.mulf %242, %451 : vector<8x128xf32>
      %453 = arith.addf %450, %452 : vector<8x128xf32>
      %cst_181 = arith.constant -0.172394216 : f32
      %454 = vector.broadcast %cst_181 : f32 to vector<8x128xf32>
      %455 = arith.mulf %251, %454 : vector<8x128xf32>
      %456 = arith.addf %453, %455 : vector<8x128xf32>
      %cst_182 = arith.constant -0.0274716802 : f32
      %457 = vector.broadcast %cst_182 : f32 to vector<8x128xf32>
      %458 = arith.mulf %260, %457 : vector<8x128xf32>
      %459 = arith.addf %456, %458 : vector<8x128xf32>
      %cst_183 = arith.constant 0.0564519912 : f32
      %460 = vector.broadcast %cst_183 : f32 to vector<8x128xf32>
      %461 = arith.mulf %269, %460 : vector<8x128xf32>
      %462 = arith.addf %459, %461 : vector<8x128xf32>
      %cst_184 = arith.constant -0.0839685947 : f32
      %463 = vector.broadcast %cst_184 : f32 to vector<8x128xf32>
      %464 = arith.mulf %278, %463 : vector<8x128xf32>
      %465 = arith.addf %462, %464 : vector<8x128xf32>
      %cst_185 = arith.constant 0.000000e+00 : f32
      %466 = vector.broadcast %cst_185 : f32 to vector<8x128xf32>
      %467 = arith.cmpf ogt, %465, %466 : vector<8x128xf32>
      %cst_186 = arith.constant 1.000000e-01 : f32
      %468 = vector.broadcast %cst_186 : f32 to vector<8x128xf32>
      %469 = arith.mulf %468, %465 : vector<8x128xf32>
      %470 = arith.select %467, %465, %469 : vector<8x128xi1>, vector<8x128xf32>
      %cst_187 = arith.constant -0.00944559183 : f32
      %471 = vector.broadcast %cst_187 : f32 to vector<8x128xf32>
      %cst_188 = arith.constant 0.0767365396 : f32
      %472 = vector.broadcast %cst_188 : f32 to vector<8x128xf32>
      %473 = arith.mulf %17, %472 : vector<8x128xf32>
      %474 = arith.addf %471, %473 : vector<8x128xf32>
      %cst_189 = arith.constant -0.160807252 : f32
      %475 = vector.broadcast %cst_189 : f32 to vector<8x128xf32>
      %476 = arith.mulf %26, %475 : vector<8x128xf32>
      %477 = arith.addf %474, %476 : vector<8x128xf32>
      %cst_190 = arith.constant -0.0844503715 : f32
      %478 = vector.broadcast %cst_190 : f32 to vector<8x128xf32>
      %479 = arith.mulf %35, %478 : vector<8x128xf32>
      %480 = arith.addf %477, %479 : vector<8x128xf32>
      %cst_191 = arith.constant 0.177959397 : f32
      %481 = vector.broadcast %cst_191 : f32 to vector<8x128xf32>
      %482 = arith.mulf %44, %481 : vector<8x128xf32>
      %483 = arith.addf %480, %482 : vector<8x128xf32>
      %cst_192 = arith.constant 0.0213737339 : f32
      %484 = vector.broadcast %cst_192 : f32 to vector<8x128xf32>
      %485 = arith.mulf %53, %484 : vector<8x128xf32>
      %486 = arith.addf %483, %485 : vector<8x128xf32>
      %cst_193 = arith.constant 0.0475879908 : f32
      %487 = vector.broadcast %cst_193 : f32 to vector<8x128xf32>
      %488 = arith.mulf %62, %487 : vector<8x128xf32>
      %489 = arith.addf %486, %488 : vector<8x128xf32>
      %cst_194 = arith.constant -0.115004256 : f32
      %490 = vector.broadcast %cst_194 : f32 to vector<8x128xf32>
      %491 = arith.mulf %71, %490 : vector<8x128xf32>
      %492 = arith.addf %489, %491 : vector<8x128xf32>
      %cst_195 = arith.constant 0.0595184378 : f32
      %493 = vector.broadcast %cst_195 : f32 to vector<8x128xf32>
      %494 = arith.mulf %80, %493 : vector<8x128xf32>
      %495 = arith.addf %492, %494 : vector<8x128xf32>
      %cst_196 = arith.constant 7.11221597E-4 : f32
      %496 = vector.broadcast %cst_196 : f32 to vector<8x128xf32>
      %497 = arith.mulf %89, %496 : vector<8x128xf32>
      %498 = arith.addf %495, %497 : vector<8x128xf32>
      %cst_197 = arith.constant 0.0324225463 : f32
      %499 = vector.broadcast %cst_197 : f32 to vector<8x128xf32>
      %500 = arith.mulf %98, %499 : vector<8x128xf32>
      %501 = arith.addf %498, %500 : vector<8x128xf32>
      %cst_198 = arith.constant -0.112012066 : f32
      %502 = vector.broadcast %cst_198 : f32 to vector<8x128xf32>
      %503 = arith.mulf %107, %502 : vector<8x128xf32>
      %504 = arith.addf %501, %503 : vector<8x128xf32>
      %cst_199 = arith.constant -0.0311375242 : f32
      %505 = vector.broadcast %cst_199 : f32 to vector<8x128xf32>
      %506 = arith.mulf %116, %505 : vector<8x128xf32>
      %507 = arith.addf %504, %506 : vector<8x128xf32>
      %cst_200 = arith.constant 0.0181651618 : f32
      %508 = vector.broadcast %cst_200 : f32 to vector<8x128xf32>
      %509 = arith.mulf %125, %508 : vector<8x128xf32>
      %510 = arith.addf %507, %509 : vector<8x128xf32>
      %cst_201 = arith.constant -0.105791718 : f32
      %511 = vector.broadcast %cst_201 : f32 to vector<8x128xf32>
      %512 = arith.mulf %134, %511 : vector<8x128xf32>
      %513 = arith.addf %510, %512 : vector<8x128xf32>
      %cst_202 = arith.constant 0.0148675302 : f32
      %514 = vector.broadcast %cst_202 : f32 to vector<8x128xf32>
      %515 = arith.mulf %143, %514 : vector<8x128xf32>
      %516 = arith.addf %513, %515 : vector<8x128xf32>
      %cst_203 = arith.constant -0.127629176 : f32
      %517 = vector.broadcast %cst_203 : f32 to vector<8x128xf32>
      %518 = arith.mulf %152, %517 : vector<8x128xf32>
      %519 = arith.addf %516, %518 : vector<8x128xf32>
      %cst_204 = arith.constant 0.0230812058 : f32
      %520 = vector.broadcast %cst_204 : f32 to vector<8x128xf32>
      %521 = arith.mulf %161, %520 : vector<8x128xf32>
      %522 = arith.addf %519, %521 : vector<8x128xf32>
      %cst_205 = arith.constant -0.041297473 : f32
      %523 = vector.broadcast %cst_205 : f32 to vector<8x128xf32>
      %524 = arith.mulf %170, %523 : vector<8x128xf32>
      %525 = arith.addf %522, %524 : vector<8x128xf32>
      %cst_206 = arith.constant 0.106380798 : f32
      %526 = vector.broadcast %cst_206 : f32 to vector<8x128xf32>
      %527 = arith.mulf %179, %526 : vector<8x128xf32>
      %528 = arith.addf %525, %527 : vector<8x128xf32>
      %cst_207 = arith.constant 0.141988367 : f32
      %529 = vector.broadcast %cst_207 : f32 to vector<8x128xf32>
      %530 = arith.mulf %188, %529 : vector<8x128xf32>
      %531 = arith.addf %528, %530 : vector<8x128xf32>
      %cst_208 = arith.constant 0.144333974 : f32
      %532 = vector.broadcast %cst_208 : f32 to vector<8x128xf32>
      %533 = arith.mulf %197, %532 : vector<8x128xf32>
      %534 = arith.addf %531, %533 : vector<8x128xf32>
      %cst_209 = arith.constant 0.0589013696 : f32
      %535 = vector.broadcast %cst_209 : f32 to vector<8x128xf32>
      %536 = arith.mulf %206, %535 : vector<8x128xf32>
      %537 = arith.addf %534, %536 : vector<8x128xf32>
      %cst_210 = arith.constant 0.0286518391 : f32
      %538 = vector.broadcast %cst_210 : f32 to vector<8x128xf32>
      %539 = arith.mulf %215, %538 : vector<8x128xf32>
      %540 = arith.addf %537, %539 : vector<8x128xf32>
      %cst_211 = arith.constant 0.0291948654 : f32
      %541 = vector.broadcast %cst_211 : f32 to vector<8x128xf32>
      %542 = arith.mulf %224, %541 : vector<8x128xf32>
      %543 = arith.addf %540, %542 : vector<8x128xf32>
      %cst_212 = arith.constant -0.02674013 : f32
      %544 = vector.broadcast %cst_212 : f32 to vector<8x128xf32>
      %545 = arith.mulf %233, %544 : vector<8x128xf32>
      %546 = arith.addf %543, %545 : vector<8x128xf32>
      %cst_213 = arith.constant -0.174726233 : f32
      %547 = vector.broadcast %cst_213 : f32 to vector<8x128xf32>
      %548 = arith.mulf %242, %547 : vector<8x128xf32>
      %549 = arith.addf %546, %548 : vector<8x128xf32>
      %cst_214 = arith.constant 0.136985868 : f32
      %550 = vector.broadcast %cst_214 : f32 to vector<8x128xf32>
      %551 = arith.mulf %251, %550 : vector<8x128xf32>
      %552 = arith.addf %549, %551 : vector<8x128xf32>
      %cst_215 = arith.constant 0.0228467584 : f32
      %553 = vector.broadcast %cst_215 : f32 to vector<8x128xf32>
      %554 = arith.mulf %260, %553 : vector<8x128xf32>
      %555 = arith.addf %552, %554 : vector<8x128xf32>
      %cst_216 = arith.constant -0.129908442 : f32
      %556 = vector.broadcast %cst_216 : f32 to vector<8x128xf32>
      %557 = arith.mulf %269, %556 : vector<8x128xf32>
      %558 = arith.addf %555, %557 : vector<8x128xf32>
      %cst_217 = arith.constant -0.172242984 : f32
      %559 = vector.broadcast %cst_217 : f32 to vector<8x128xf32>
      %560 = arith.mulf %278, %559 : vector<8x128xf32>
      %561 = arith.addf %558, %560 : vector<8x128xf32>
      %cst_218 = arith.constant 0.000000e+00 : f32
      %562 = vector.broadcast %cst_218 : f32 to vector<8x128xf32>
      %563 = arith.cmpf ogt, %561, %562 : vector<8x128xf32>
      %cst_219 = arith.constant 1.000000e-01 : f32
      %564 = vector.broadcast %cst_219 : f32 to vector<8x128xf32>
      %565 = arith.mulf %564, %561 : vector<8x128xf32>
      %566 = arith.select %563, %561, %565 : vector<8x128xi1>, vector<8x128xf32>
      %cst_220 = arith.constant -0.153172821 : f32
      %567 = vector.broadcast %cst_220 : f32 to vector<8x128xf32>
      %cst_221 = arith.constant 0.178677246 : f32
      %568 = vector.broadcast %cst_221 : f32 to vector<8x128xf32>
      %569 = arith.mulf %17, %568 : vector<8x128xf32>
      %570 = arith.addf %567, %569 : vector<8x128xf32>
      %cst_222 = arith.constant 0.0619668625 : f32
      %571 = vector.broadcast %cst_222 : f32 to vector<8x128xf32>
      %572 = arith.mulf %26, %571 : vector<8x128xf32>
      %573 = arith.addf %570, %572 : vector<8x128xf32>
      %cst_223 = arith.constant -0.156389043 : f32
      %574 = vector.broadcast %cst_223 : f32 to vector<8x128xf32>
      %575 = arith.mulf %35, %574 : vector<8x128xf32>
      %576 = arith.addf %573, %575 : vector<8x128xf32>
      %cst_224 = arith.constant -0.0509718955 : f32
      %577 = vector.broadcast %cst_224 : f32 to vector<8x128xf32>
      %578 = arith.mulf %44, %577 : vector<8x128xf32>
      %579 = arith.addf %576, %578 : vector<8x128xf32>
      %cst_225 = arith.constant 0.128686279 : f32
      %580 = vector.broadcast %cst_225 : f32 to vector<8x128xf32>
      %581 = arith.mulf %53, %580 : vector<8x128xf32>
      %582 = arith.addf %579, %581 : vector<8x128xf32>
      %cst_226 = arith.constant -0.156520903 : f32
      %583 = vector.broadcast %cst_226 : f32 to vector<8x128xf32>
      %584 = arith.mulf %62, %583 : vector<8x128xf32>
      %585 = arith.addf %582, %584 : vector<8x128xf32>
      %cst_227 = arith.constant 0.125420332 : f32
      %586 = vector.broadcast %cst_227 : f32 to vector<8x128xf32>
      %587 = arith.mulf %71, %586 : vector<8x128xf32>
      %588 = arith.addf %585, %587 : vector<8x128xf32>
      %cst_228 = arith.constant 0.0012327435 : f32
      %589 = vector.broadcast %cst_228 : f32 to vector<8x128xf32>
      %590 = arith.mulf %80, %589 : vector<8x128xf32>
      %591 = arith.addf %588, %590 : vector<8x128xf32>
      %cst_229 = arith.constant -6.86758256E-4 : f32
      %592 = vector.broadcast %cst_229 : f32 to vector<8x128xf32>
      %593 = arith.mulf %89, %592 : vector<8x128xf32>
      %594 = arith.addf %591, %593 : vector<8x128xf32>
      %cst_230 = arith.constant 0.0874853059 : f32
      %595 = vector.broadcast %cst_230 : f32 to vector<8x128xf32>
      %596 = arith.mulf %98, %595 : vector<8x128xf32>
      %597 = arith.addf %594, %596 : vector<8x128xf32>
      %cst_231 = arith.constant -0.0110087208 : f32
      %598 = vector.broadcast %cst_231 : f32 to vector<8x128xf32>
      %599 = arith.mulf %107, %598 : vector<8x128xf32>
      %600 = arith.addf %597, %599 : vector<8x128xf32>
      %cst_232 = arith.constant 0.125125036 : f32
      %601 = vector.broadcast %cst_232 : f32 to vector<8x128xf32>
      %602 = arith.mulf %116, %601 : vector<8x128xf32>
      %603 = arith.addf %600, %602 : vector<8x128xf32>
      %cst_233 = arith.constant 0.00861823466 : f32
      %604 = vector.broadcast %cst_233 : f32 to vector<8x128xf32>
      %605 = arith.mulf %125, %604 : vector<8x128xf32>
      %606 = arith.addf %603, %605 : vector<8x128xf32>
      %cst_234 = arith.constant -0.0720120221 : f32
      %607 = vector.broadcast %cst_234 : f32 to vector<8x128xf32>
      %608 = arith.mulf %134, %607 : vector<8x128xf32>
      %609 = arith.addf %606, %608 : vector<8x128xf32>
      %cst_235 = arith.constant 0.0429769121 : f32
      %610 = vector.broadcast %cst_235 : f32 to vector<8x128xf32>
      %611 = arith.mulf %143, %610 : vector<8x128xf32>
      %612 = arith.addf %609, %611 : vector<8x128xf32>
      %cst_236 = arith.constant 0.124216966 : f32
      %613 = vector.broadcast %cst_236 : f32 to vector<8x128xf32>
      %614 = arith.mulf %152, %613 : vector<8x128xf32>
      %615 = arith.addf %612, %614 : vector<8x128xf32>
      %cst_237 = arith.constant 0.0345447622 : f32
      %616 = vector.broadcast %cst_237 : f32 to vector<8x128xf32>
      %617 = arith.mulf %161, %616 : vector<8x128xf32>
      %618 = arith.addf %615, %617 : vector<8x128xf32>
      %cst_238 = arith.constant -0.0506583564 : f32
      %619 = vector.broadcast %cst_238 : f32 to vector<8x128xf32>
      %620 = arith.mulf %170, %619 : vector<8x128xf32>
      %621 = arith.addf %618, %620 : vector<8x128xf32>
      %cst_239 = arith.constant 0.11915236 : f32
      %622 = vector.broadcast %cst_239 : f32 to vector<8x128xf32>
      %623 = arith.mulf %179, %622 : vector<8x128xf32>
      %624 = arith.addf %621, %623 : vector<8x128xf32>
      %cst_240 = arith.constant -0.0118504427 : f32
      %625 = vector.broadcast %cst_240 : f32 to vector<8x128xf32>
      %626 = arith.mulf %188, %625 : vector<8x128xf32>
      %627 = arith.addf %624, %626 : vector<8x128xf32>
      %cst_241 = arith.constant 0.0575996339 : f32
      %628 = vector.broadcast %cst_241 : f32 to vector<8x128xf32>
      %629 = arith.mulf %197, %628 : vector<8x128xf32>
      %630 = arith.addf %627, %629 : vector<8x128xf32>
      %cst_242 = arith.constant -0.176763177 : f32
      %631 = vector.broadcast %cst_242 : f32 to vector<8x128xf32>
      %632 = arith.mulf %206, %631 : vector<8x128xf32>
      %633 = arith.addf %630, %632 : vector<8x128xf32>
      %cst_243 = arith.constant 0.115552291 : f32
      %634 = vector.broadcast %cst_243 : f32 to vector<8x128xf32>
      %635 = arith.mulf %215, %634 : vector<8x128xf32>
      %636 = arith.addf %633, %635 : vector<8x128xf32>
      %cst_244 = arith.constant 0.0376741104 : f32
      %637 = vector.broadcast %cst_244 : f32 to vector<8x128xf32>
      %638 = arith.mulf %224, %637 : vector<8x128xf32>
      %639 = arith.addf %636, %638 : vector<8x128xf32>
      %cst_245 = arith.constant 0.0121103553 : f32
      %640 = vector.broadcast %cst_245 : f32 to vector<8x128xf32>
      %641 = arith.mulf %233, %640 : vector<8x128xf32>
      %642 = arith.addf %639, %641 : vector<8x128xf32>
      %cst_246 = arith.constant 0.148079783 : f32
      %643 = vector.broadcast %cst_246 : f32 to vector<8x128xf32>
      %644 = arith.mulf %242, %643 : vector<8x128xf32>
      %645 = arith.addf %642, %644 : vector<8x128xf32>
      %cst_247 = arith.constant -0.0336840637 : f32
      %646 = vector.broadcast %cst_247 : f32 to vector<8x128xf32>
      %647 = arith.mulf %251, %646 : vector<8x128xf32>
      %648 = arith.addf %645, %647 : vector<8x128xf32>
      %cst_248 = arith.constant -0.00800752174 : f32
      %649 = vector.broadcast %cst_248 : f32 to vector<8x128xf32>
      %650 = arith.mulf %260, %649 : vector<8x128xf32>
      %651 = arith.addf %648, %650 : vector<8x128xf32>
      %cst_249 = arith.constant 0.00735005876 : f32
      %652 = vector.broadcast %cst_249 : f32 to vector<8x128xf32>
      %653 = arith.mulf %269, %652 : vector<8x128xf32>
      %654 = arith.addf %651, %653 : vector<8x128xf32>
      %cst_250 = arith.constant -0.016243441 : f32
      %655 = vector.broadcast %cst_250 : f32 to vector<8x128xf32>
      %656 = arith.mulf %278, %655 : vector<8x128xf32>
      %657 = arith.addf %654, %656 : vector<8x128xf32>
      %cst_251 = arith.constant 0.000000e+00 : f32
      %658 = vector.broadcast %cst_251 : f32 to vector<8x128xf32>
      %659 = arith.cmpf ogt, %657, %658 : vector<8x128xf32>
      %cst_252 = arith.constant 1.000000e-01 : f32
      %660 = vector.broadcast %cst_252 : f32 to vector<8x128xf32>
      %661 = arith.mulf %660, %657 : vector<8x128xf32>
      %662 = arith.select %659, %657, %661 : vector<8x128xi1>, vector<8x128xf32>
      %cst_253 = arith.constant -0.00180963438 : f32
      %663 = vector.broadcast %cst_253 : f32 to vector<8x128xf32>
      %cst_254 = arith.constant 0.140313536 : f32
      %664 = vector.broadcast %cst_254 : f32 to vector<8x128xf32>
      %665 = arith.mulf %17, %664 : vector<8x128xf32>
      %666 = arith.addf %663, %665 : vector<8x128xf32>
      %cst_255 = arith.constant 0.160331041 : f32
      %667 = vector.broadcast %cst_255 : f32 to vector<8x128xf32>
      %668 = arith.mulf %26, %667 : vector<8x128xf32>
      %669 = arith.addf %666, %668 : vector<8x128xf32>
      %cst_256 = arith.constant -0.0424420685 : f32
      %670 = vector.broadcast %cst_256 : f32 to vector<8x128xf32>
      %671 = arith.mulf %35, %670 : vector<8x128xf32>
      %672 = arith.addf %669, %671 : vector<8x128xf32>
      %cst_257 = arith.constant 0.151017249 : f32
      %673 = vector.broadcast %cst_257 : f32 to vector<8x128xf32>
      %674 = arith.mulf %44, %673 : vector<8x128xf32>
      %675 = arith.addf %672, %674 : vector<8x128xf32>
      %cst_258 = arith.constant -0.13640973 : f32
      %676 = vector.broadcast %cst_258 : f32 to vector<8x128xf32>
      %677 = arith.mulf %53, %676 : vector<8x128xf32>
      %678 = arith.addf %675, %677 : vector<8x128xf32>
      %cst_259 = arith.constant 0.17753917 : f32
      %679 = vector.broadcast %cst_259 : f32 to vector<8x128xf32>
      %680 = arith.mulf %62, %679 : vector<8x128xf32>
      %681 = arith.addf %678, %680 : vector<8x128xf32>
      %cst_260 = arith.constant -0.122008391 : f32
      %682 = vector.broadcast %cst_260 : f32 to vector<8x128xf32>
      %683 = arith.mulf %71, %682 : vector<8x128xf32>
      %684 = arith.addf %681, %683 : vector<8x128xf32>
      %cst_261 = arith.constant -0.145450622 : f32
      %685 = vector.broadcast %cst_261 : f32 to vector<8x128xf32>
      %686 = arith.mulf %80, %685 : vector<8x128xf32>
      %687 = arith.addf %684, %686 : vector<8x128xf32>
      %cst_262 = arith.constant 0.0208716262 : f32
      %688 = vector.broadcast %cst_262 : f32 to vector<8x128xf32>
      %689 = arith.mulf %89, %688 : vector<8x128xf32>
      %690 = arith.addf %687, %689 : vector<8x128xf32>
      %cst_263 = arith.constant -0.0856990441 : f32
      %691 = vector.broadcast %cst_263 : f32 to vector<8x128xf32>
      %692 = arith.mulf %98, %691 : vector<8x128xf32>
      %693 = arith.addf %690, %692 : vector<8x128xf32>
      %cst_264 = arith.constant 0.0255312398 : f32
      %694 = vector.broadcast %cst_264 : f32 to vector<8x128xf32>
      %695 = arith.mulf %107, %694 : vector<8x128xf32>
      %696 = arith.addf %693, %695 : vector<8x128xf32>
      %cst_265 = arith.constant 0.143643036 : f32
      %697 = vector.broadcast %cst_265 : f32 to vector<8x128xf32>
      %698 = arith.mulf %116, %697 : vector<8x128xf32>
      %699 = arith.addf %696, %698 : vector<8x128xf32>
      %cst_266 = arith.constant -0.130389303 : f32
      %700 = vector.broadcast %cst_266 : f32 to vector<8x128xf32>
      %701 = arith.mulf %125, %700 : vector<8x128xf32>
      %702 = arith.addf %699, %701 : vector<8x128xf32>
      %cst_267 = arith.constant 0.109913662 : f32
      %703 = vector.broadcast %cst_267 : f32 to vector<8x128xf32>
      %704 = arith.mulf %134, %703 : vector<8x128xf32>
      %705 = arith.addf %702, %704 : vector<8x128xf32>
      %cst_268 = arith.constant 0.0425979048 : f32
      %706 = vector.broadcast %cst_268 : f32 to vector<8x128xf32>
      %707 = arith.mulf %143, %706 : vector<8x128xf32>
      %708 = arith.addf %705, %707 : vector<8x128xf32>
      %cst_269 = arith.constant -0.168003306 : f32
      %709 = vector.broadcast %cst_269 : f32 to vector<8x128xf32>
      %710 = arith.mulf %152, %709 : vector<8x128xf32>
      %711 = arith.addf %708, %710 : vector<8x128xf32>
      %cst_270 = arith.constant 0.0677134395 : f32
      %712 = vector.broadcast %cst_270 : f32 to vector<8x128xf32>
      %713 = arith.mulf %161, %712 : vector<8x128xf32>
      %714 = arith.addf %711, %713 : vector<8x128xf32>
      %cst_271 = arith.constant -0.162837222 : f32
      %715 = vector.broadcast %cst_271 : f32 to vector<8x128xf32>
      %716 = arith.mulf %170, %715 : vector<8x128xf32>
      %717 = arith.addf %714, %716 : vector<8x128xf32>
      %cst_272 = arith.constant 0.175918803 : f32
      %718 = vector.broadcast %cst_272 : f32 to vector<8x128xf32>
      %719 = arith.mulf %179, %718 : vector<8x128xf32>
      %720 = arith.addf %717, %719 : vector<8x128xf32>
      %cst_273 = arith.constant 0.139572859 : f32
      %721 = vector.broadcast %cst_273 : f32 to vector<8x128xf32>
      %722 = arith.mulf %188, %721 : vector<8x128xf32>
      %723 = arith.addf %720, %722 : vector<8x128xf32>
      %cst_274 = arith.constant 0.135114819 : f32
      %724 = vector.broadcast %cst_274 : f32 to vector<8x128xf32>
      %725 = arith.mulf %197, %724 : vector<8x128xf32>
      %726 = arith.addf %723, %725 : vector<8x128xf32>
      %cst_275 = arith.constant 0.116846099 : f32
      %727 = vector.broadcast %cst_275 : f32 to vector<8x128xf32>
      %728 = arith.mulf %206, %727 : vector<8x128xf32>
      %729 = arith.addf %726, %728 : vector<8x128xf32>
      %cst_276 = arith.constant 0.170578614 : f32
      %730 = vector.broadcast %cst_276 : f32 to vector<8x128xf32>
      %731 = arith.mulf %215, %730 : vector<8x128xf32>
      %732 = arith.addf %729, %731 : vector<8x128xf32>
      %cst_277 = arith.constant 0.178039536 : f32
      %733 = vector.broadcast %cst_277 : f32 to vector<8x128xf32>
      %734 = arith.mulf %224, %733 : vector<8x128xf32>
      %735 = arith.addf %732, %734 : vector<8x128xf32>
      %cst_278 = arith.constant 0.0739954263 : f32
      %736 = vector.broadcast %cst_278 : f32 to vector<8x128xf32>
      %737 = arith.mulf %233, %736 : vector<8x128xf32>
      %738 = arith.addf %735, %737 : vector<8x128xf32>
      %cst_279 = arith.constant 0.0280057378 : f32
      %739 = vector.broadcast %cst_279 : f32 to vector<8x128xf32>
      %740 = arith.mulf %242, %739 : vector<8x128xf32>
      %741 = arith.addf %738, %740 : vector<8x128xf32>
      %cst_280 = arith.constant -0.182358101 : f32
      %742 = vector.broadcast %cst_280 : f32 to vector<8x128xf32>
      %743 = arith.mulf %251, %742 : vector<8x128xf32>
      %744 = arith.addf %741, %743 : vector<8x128xf32>
      %cst_281 = arith.constant 0.119037926 : f32
      %745 = vector.broadcast %cst_281 : f32 to vector<8x128xf32>
      %746 = arith.mulf %260, %745 : vector<8x128xf32>
      %747 = arith.addf %744, %746 : vector<8x128xf32>
      %cst_282 = arith.constant 0.0490861312 : f32
      %748 = vector.broadcast %cst_282 : f32 to vector<8x128xf32>
      %749 = arith.mulf %269, %748 : vector<8x128xf32>
      %750 = arith.addf %747, %749 : vector<8x128xf32>
      %cst_283 = arith.constant 0.0255167447 : f32
      %751 = vector.broadcast %cst_283 : f32 to vector<8x128xf32>
      %752 = arith.mulf %278, %751 : vector<8x128xf32>
      %753 = arith.addf %750, %752 : vector<8x128xf32>
      %cst_284 = arith.constant 0.000000e+00 : f32
      %754 = vector.broadcast %cst_284 : f32 to vector<8x128xf32>
      %755 = arith.cmpf ogt, %753, %754 : vector<8x128xf32>
      %cst_285 = arith.constant 1.000000e-01 : f32
      %756 = vector.broadcast %cst_285 : f32 to vector<8x128xf32>
      %757 = arith.mulf %756, %753 : vector<8x128xf32>
      %758 = arith.select %755, %753, %757 : vector<8x128xi1>, vector<8x128xf32>
      %cst_286 = arith.constant 0.0445595831 : f32
      %759 = vector.broadcast %cst_286 : f32 to vector<8x128xf32>
      %cst_287 = arith.constant -0.087023288 : f32
      %760 = vector.broadcast %cst_287 : f32 to vector<8x128xf32>
      %761 = arith.mulf %17, %760 : vector<8x128xf32>
      %762 = arith.addf %759, %761 : vector<8x128xf32>
      %cst_288 = arith.constant 0.0187407471 : f32
      %763 = vector.broadcast %cst_288 : f32 to vector<8x128xf32>
      %764 = arith.mulf %26, %763 : vector<8x128xf32>
      %765 = arith.addf %762, %764 : vector<8x128xf32>
      %cst_289 = arith.constant 0.155384704 : f32
      %766 = vector.broadcast %cst_289 : f32 to vector<8x128xf32>
      %767 = arith.mulf %35, %766 : vector<8x128xf32>
      %768 = arith.addf %765, %767 : vector<8x128xf32>
      %cst_290 = arith.constant 0.118587486 : f32
      %769 = vector.broadcast %cst_290 : f32 to vector<8x128xf32>
      %770 = arith.mulf %44, %769 : vector<8x128xf32>
      %771 = arith.addf %768, %770 : vector<8x128xf32>
      %cst_291 = arith.constant -0.00771496305 : f32
      %772 = vector.broadcast %cst_291 : f32 to vector<8x128xf32>
      %773 = arith.mulf %53, %772 : vector<8x128xf32>
      %774 = arith.addf %771, %773 : vector<8x128xf32>
      %cst_292 = arith.constant -0.16485092 : f32
      %775 = vector.broadcast %cst_292 : f32 to vector<8x128xf32>
      %776 = arith.mulf %62, %775 : vector<8x128xf32>
      %777 = arith.addf %774, %776 : vector<8x128xf32>
      %cst_293 = arith.constant -0.154054329 : f32
      %778 = vector.broadcast %cst_293 : f32 to vector<8x128xf32>
      %779 = arith.mulf %71, %778 : vector<8x128xf32>
      %780 = arith.addf %777, %779 : vector<8x128xf32>
      %cst_294 = arith.constant 0.133629039 : f32
      %781 = vector.broadcast %cst_294 : f32 to vector<8x128xf32>
      %782 = arith.mulf %80, %781 : vector<8x128xf32>
      %783 = arith.addf %780, %782 : vector<8x128xf32>
      %cst_295 = arith.constant 0.0663665608 : f32
      %784 = vector.broadcast %cst_295 : f32 to vector<8x128xf32>
      %785 = arith.mulf %89, %784 : vector<8x128xf32>
      %786 = arith.addf %783, %785 : vector<8x128xf32>
      %cst_296 = arith.constant 0.173456281 : f32
      %787 = vector.broadcast %cst_296 : f32 to vector<8x128xf32>
      %788 = arith.mulf %98, %787 : vector<8x128xf32>
      %789 = arith.addf %786, %788 : vector<8x128xf32>
      %cst_297 = arith.constant 0.0680691153 : f32
      %790 = vector.broadcast %cst_297 : f32 to vector<8x128xf32>
      %791 = arith.mulf %107, %790 : vector<8x128xf32>
      %792 = arith.addf %789, %791 : vector<8x128xf32>
      %cst_298 = arith.constant 0.121197708 : f32
      %793 = vector.broadcast %cst_298 : f32 to vector<8x128xf32>
      %794 = arith.mulf %116, %793 : vector<8x128xf32>
      %795 = arith.addf %792, %794 : vector<8x128xf32>
      %cst_299 = arith.constant -0.00233259262 : f32
      %796 = vector.broadcast %cst_299 : f32 to vector<8x128xf32>
      %797 = arith.mulf %125, %796 : vector<8x128xf32>
      %798 = arith.addf %795, %797 : vector<8x128xf32>
      %cst_300 = arith.constant 0.143574879 : f32
      %799 = vector.broadcast %cst_300 : f32 to vector<8x128xf32>
      %800 = arith.mulf %134, %799 : vector<8x128xf32>
      %801 = arith.addf %798, %800 : vector<8x128xf32>
      %cst_301 = arith.constant 1.324470e-01 : f32
      %802 = vector.broadcast %cst_301 : f32 to vector<8x128xf32>
      %803 = arith.mulf %143, %802 : vector<8x128xf32>
      %804 = arith.addf %801, %803 : vector<8x128xf32>
      %cst_302 = arith.constant 0.0681337118 : f32
      %805 = vector.broadcast %cst_302 : f32 to vector<8x128xf32>
      %806 = arith.mulf %152, %805 : vector<8x128xf32>
      %807 = arith.addf %804, %806 : vector<8x128xf32>
      %cst_303 = arith.constant 0.14907895 : f32
      %808 = vector.broadcast %cst_303 : f32 to vector<8x128xf32>
      %809 = arith.mulf %161, %808 : vector<8x128xf32>
      %810 = arith.addf %807, %809 : vector<8x128xf32>
      %cst_304 = arith.constant -0.070026055 : f32
      %811 = vector.broadcast %cst_304 : f32 to vector<8x128xf32>
      %812 = arith.mulf %170, %811 : vector<8x128xf32>
      %813 = arith.addf %810, %812 : vector<8x128xf32>
      %cst_305 = arith.constant 0.163122088 : f32
      %814 = vector.broadcast %cst_305 : f32 to vector<8x128xf32>
      %815 = arith.mulf %179, %814 : vector<8x128xf32>
      %816 = arith.addf %813, %815 : vector<8x128xf32>
      %cst_306 = arith.constant -0.151664704 : f32
      %817 = vector.broadcast %cst_306 : f32 to vector<8x128xf32>
      %818 = arith.mulf %188, %817 : vector<8x128xf32>
      %819 = arith.addf %816, %818 : vector<8x128xf32>
      %cst_307 = arith.constant 0.0295199845 : f32
      %820 = vector.broadcast %cst_307 : f32 to vector<8x128xf32>
      %821 = arith.mulf %197, %820 : vector<8x128xf32>
      %822 = arith.addf %819, %821 : vector<8x128xf32>
      %cst_308 = arith.constant 0.181810036 : f32
      %823 = vector.broadcast %cst_308 : f32 to vector<8x128xf32>
      %824 = arith.mulf %206, %823 : vector<8x128xf32>
      %825 = arith.addf %822, %824 : vector<8x128xf32>
      %cst_309 = arith.constant 0.113993123 : f32
      %826 = vector.broadcast %cst_309 : f32 to vector<8x128xf32>
      %827 = arith.mulf %215, %826 : vector<8x128xf32>
      %828 = arith.addf %825, %827 : vector<8x128xf32>
      %cst_310 = arith.constant 0.119334921 : f32
      %829 = vector.broadcast %cst_310 : f32 to vector<8x128xf32>
      %830 = arith.mulf %224, %829 : vector<8x128xf32>
      %831 = arith.addf %828, %830 : vector<8x128xf32>
      %cst_311 = arith.constant 0.0557159148 : f32
      %832 = vector.broadcast %cst_311 : f32 to vector<8x128xf32>
      %833 = arith.mulf %233, %832 : vector<8x128xf32>
      %834 = arith.addf %831, %833 : vector<8x128xf32>
      %cst_312 = arith.constant -0.051804129 : f32
      %835 = vector.broadcast %cst_312 : f32 to vector<8x128xf32>
      %836 = arith.mulf %242, %835 : vector<8x128xf32>
      %837 = arith.addf %834, %836 : vector<8x128xf32>
      %cst_313 = arith.constant -0.1457434 : f32
      %838 = vector.broadcast %cst_313 : f32 to vector<8x128xf32>
      %839 = arith.mulf %251, %838 : vector<8x128xf32>
      %840 = arith.addf %837, %839 : vector<8x128xf32>
      %cst_314 = arith.constant 0.108615667 : f32
      %841 = vector.broadcast %cst_314 : f32 to vector<8x128xf32>
      %842 = arith.mulf %260, %841 : vector<8x128xf32>
      %843 = arith.addf %840, %842 : vector<8x128xf32>
      %cst_315 = arith.constant 0.146526977 : f32
      %844 = vector.broadcast %cst_315 : f32 to vector<8x128xf32>
      %845 = arith.mulf %269, %844 : vector<8x128xf32>
      %846 = arith.addf %843, %845 : vector<8x128xf32>
      %cst_316 = arith.constant -0.105920911 : f32
      %847 = vector.broadcast %cst_316 : f32 to vector<8x128xf32>
      %848 = arith.mulf %278, %847 : vector<8x128xf32>
      %849 = arith.addf %846, %848 : vector<8x128xf32>
      %cst_317 = arith.constant 0.000000e+00 : f32
      %850 = vector.broadcast %cst_317 : f32 to vector<8x128xf32>
      %851 = arith.cmpf ogt, %849, %850 : vector<8x128xf32>
      %cst_318 = arith.constant 1.000000e-01 : f32
      %852 = vector.broadcast %cst_318 : f32 to vector<8x128xf32>
      %853 = arith.mulf %852, %849 : vector<8x128xf32>
      %854 = arith.select %851, %849, %853 : vector<8x128xi1>, vector<8x128xf32>
      %cst_319 = arith.constant -0.00961927325 : f32
      %855 = vector.broadcast %cst_319 : f32 to vector<8x128xf32>
      %cst_320 = arith.constant 0.0803239047 : f32
      %856 = vector.broadcast %cst_320 : f32 to vector<8x128xf32>
      %857 = arith.mulf %17, %856 : vector<8x128xf32>
      %858 = arith.addf %855, %857 : vector<8x128xf32>
      %cst_321 = arith.constant 0.181576237 : f32
      %859 = vector.broadcast %cst_321 : f32 to vector<8x128xf32>
      %860 = arith.mulf %26, %859 : vector<8x128xf32>
      %861 = arith.addf %858, %860 : vector<8x128xf32>
      %cst_322 = arith.constant 0.0290659312 : f32
      %862 = vector.broadcast %cst_322 : f32 to vector<8x128xf32>
      %863 = arith.mulf %35, %862 : vector<8x128xf32>
      %864 = arith.addf %861, %863 : vector<8x128xf32>
      %cst_323 = arith.constant 0.139290482 : f32
      %865 = vector.broadcast %cst_323 : f32 to vector<8x128xf32>
      %866 = arith.mulf %44, %865 : vector<8x128xf32>
      %867 = arith.addf %864, %866 : vector<8x128xf32>
      %cst_324 = arith.constant 0.0946896299 : f32
      %868 = vector.broadcast %cst_324 : f32 to vector<8x128xf32>
      %869 = arith.mulf %53, %868 : vector<8x128xf32>
      %870 = arith.addf %867, %869 : vector<8x128xf32>
      %cst_325 = arith.constant 0.0111898892 : f32
      %871 = vector.broadcast %cst_325 : f32 to vector<8x128xf32>
      %872 = arith.mulf %62, %871 : vector<8x128xf32>
      %873 = arith.addf %870, %872 : vector<8x128xf32>
      %cst_326 = arith.constant 5.722450e-02 : f32
      %874 = vector.broadcast %cst_326 : f32 to vector<8x128xf32>
      %875 = arith.mulf %71, %874 : vector<8x128xf32>
      %876 = arith.addf %873, %875 : vector<8x128xf32>
      %cst_327 = arith.constant 0.174180478 : f32
      %877 = vector.broadcast %cst_327 : f32 to vector<8x128xf32>
      %878 = arith.mulf %80, %877 : vector<8x128xf32>
      %879 = arith.addf %876, %878 : vector<8x128xf32>
      %cst_328 = arith.constant -0.0985351204 : f32
      %880 = vector.broadcast %cst_328 : f32 to vector<8x128xf32>
      %881 = arith.mulf %89, %880 : vector<8x128xf32>
      %882 = arith.addf %879, %881 : vector<8x128xf32>
      %cst_329 = arith.constant 5.128030e-02 : f32
      %883 = vector.broadcast %cst_329 : f32 to vector<8x128xf32>
      %884 = arith.mulf %98, %883 : vector<8x128xf32>
      %885 = arith.addf %882, %884 : vector<8x128xf32>
      %cst_330 = arith.constant -0.0480223671 : f32
      %886 = vector.broadcast %cst_330 : f32 to vector<8x128xf32>
      %887 = arith.mulf %107, %886 : vector<8x128xf32>
      %888 = arith.addf %885, %887 : vector<8x128xf32>
      %cst_331 = arith.constant 0.134671092 : f32
      %889 = vector.broadcast %cst_331 : f32 to vector<8x128xf32>
      %890 = arith.mulf %116, %889 : vector<8x128xf32>
      %891 = arith.addf %888, %890 : vector<8x128xf32>
      %cst_332 = arith.constant -0.147089198 : f32
      %892 = vector.broadcast %cst_332 : f32 to vector<8x128xf32>
      %893 = arith.mulf %125, %892 : vector<8x128xf32>
      %894 = arith.addf %891, %893 : vector<8x128xf32>
      %cst_333 = arith.constant -0.0525164381 : f32
      %895 = vector.broadcast %cst_333 : f32 to vector<8x128xf32>
      %896 = arith.mulf %134, %895 : vector<8x128xf32>
      %897 = arith.addf %894, %896 : vector<8x128xf32>
      %cst_334 = arith.constant -0.0954565257 : f32
      %898 = vector.broadcast %cst_334 : f32 to vector<8x128xf32>
      %899 = arith.mulf %143, %898 : vector<8x128xf32>
      %900 = arith.addf %897, %899 : vector<8x128xf32>
      %cst_335 = arith.constant 0.113446832 : f32
      %901 = vector.broadcast %cst_335 : f32 to vector<8x128xf32>
      %902 = arith.mulf %152, %901 : vector<8x128xf32>
      %903 = arith.addf %900, %902 : vector<8x128xf32>
      %cst_336 = arith.constant 0.026626911 : f32
      %904 = vector.broadcast %cst_336 : f32 to vector<8x128xf32>
      %905 = arith.mulf %161, %904 : vector<8x128xf32>
      %906 = arith.addf %903, %905 : vector<8x128xf32>
      %cst_337 = arith.constant -0.148090273 : f32
      %907 = vector.broadcast %cst_337 : f32 to vector<8x128xf32>
      %908 = arith.mulf %170, %907 : vector<8x128xf32>
      %909 = arith.addf %906, %908 : vector<8x128xf32>
      %cst_338 = arith.constant 0.0892149731 : f32
      %910 = vector.broadcast %cst_338 : f32 to vector<8x128xf32>
      %911 = arith.mulf %179, %910 : vector<8x128xf32>
      %912 = arith.addf %909, %911 : vector<8x128xf32>
      %cst_339 = arith.constant -0.0225949865 : f32
      %913 = vector.broadcast %cst_339 : f32 to vector<8x128xf32>
      %914 = arith.mulf %188, %913 : vector<8x128xf32>
      %915 = arith.addf %912, %914 : vector<8x128xf32>
      %cst_340 = arith.constant 0.119942546 : f32
      %916 = vector.broadcast %cst_340 : f32 to vector<8x128xf32>
      %917 = arith.mulf %197, %916 : vector<8x128xf32>
      %918 = arith.addf %915, %917 : vector<8x128xf32>
      %cst_341 = arith.constant -0.0741711556 : f32
      %919 = vector.broadcast %cst_341 : f32 to vector<8x128xf32>
      %920 = arith.mulf %206, %919 : vector<8x128xf32>
      %921 = arith.addf %918, %920 : vector<8x128xf32>
      %cst_342 = arith.constant 0.15829666 : f32
      %922 = vector.broadcast %cst_342 : f32 to vector<8x128xf32>
      %923 = arith.mulf %215, %922 : vector<8x128xf32>
      %924 = arith.addf %921, %923 : vector<8x128xf32>
      %cst_343 = arith.constant 0.0774577707 : f32
      %925 = vector.broadcast %cst_343 : f32 to vector<8x128xf32>
      %926 = arith.mulf %224, %925 : vector<8x128xf32>
      %927 = arith.addf %924, %926 : vector<8x128xf32>
      %cst_344 = arith.constant 0.137501702 : f32
      %928 = vector.broadcast %cst_344 : f32 to vector<8x128xf32>
      %929 = arith.mulf %233, %928 : vector<8x128xf32>
      %930 = arith.addf %927, %929 : vector<8x128xf32>
      %cst_345 = arith.constant 0.00407101354 : f32
      %931 = vector.broadcast %cst_345 : f32 to vector<8x128xf32>
      %932 = arith.mulf %242, %931 : vector<8x128xf32>
      %933 = arith.addf %930, %932 : vector<8x128xf32>
      %cst_346 = arith.constant -0.0996542051 : f32
      %934 = vector.broadcast %cst_346 : f32 to vector<8x128xf32>
      %935 = arith.mulf %251, %934 : vector<8x128xf32>
      %936 = arith.addf %933, %935 : vector<8x128xf32>
      %cst_347 = arith.constant 0.0646459907 : f32
      %937 = vector.broadcast %cst_347 : f32 to vector<8x128xf32>
      %938 = arith.mulf %260, %937 : vector<8x128xf32>
      %939 = arith.addf %936, %938 : vector<8x128xf32>
      %cst_348 = arith.constant -0.1272237 : f32
      %940 = vector.broadcast %cst_348 : f32 to vector<8x128xf32>
      %941 = arith.mulf %269, %940 : vector<8x128xf32>
      %942 = arith.addf %939, %941 : vector<8x128xf32>
      %cst_349 = arith.constant -0.160588652 : f32
      %943 = vector.broadcast %cst_349 : f32 to vector<8x128xf32>
      %944 = arith.mulf %278, %943 : vector<8x128xf32>
      %945 = arith.addf %942, %944 : vector<8x128xf32>
      %cst_350 = arith.constant 0.000000e+00 : f32
      %946 = vector.broadcast %cst_350 : f32 to vector<8x128xf32>
      %947 = arith.cmpf ogt, %945, %946 : vector<8x128xf32>
      %cst_351 = arith.constant 1.000000e-01 : f32
      %948 = vector.broadcast %cst_351 : f32 to vector<8x128xf32>
      %949 = arith.mulf %948, %945 : vector<8x128xf32>
      %950 = arith.select %947, %945, %949 : vector<8x128xi1>, vector<8x128xf32>
      %cst_352 = arith.constant 0.125510439 : f32
      %951 = vector.broadcast %cst_352 : f32 to vector<8x128xf32>
      %cst_353 = arith.constant 0.152187139 : f32
      %952 = vector.broadcast %cst_353 : f32 to vector<8x128xf32>
      %953 = arith.mulf %17, %952 : vector<8x128xf32>
      %954 = arith.addf %951, %953 : vector<8x128xf32>
      %cst_354 = arith.constant 0.132574201 : f32
      %955 = vector.broadcast %cst_354 : f32 to vector<8x128xf32>
      %956 = arith.mulf %26, %955 : vector<8x128xf32>
      %957 = arith.addf %954, %956 : vector<8x128xf32>
      %cst_355 = arith.constant 0.16026175 : f32
      %958 = vector.broadcast %cst_355 : f32 to vector<8x128xf32>
      %959 = arith.mulf %35, %958 : vector<8x128xf32>
      %960 = arith.addf %957, %959 : vector<8x128xf32>
      %cst_356 = arith.constant -0.159239247 : f32
      %961 = vector.broadcast %cst_356 : f32 to vector<8x128xf32>
      %962 = arith.mulf %44, %961 : vector<8x128xf32>
      %963 = arith.addf %960, %962 : vector<8x128xf32>
      %cst_357 = arith.constant 0.0751727149 : f32
      %964 = vector.broadcast %cst_357 : f32 to vector<8x128xf32>
      %965 = arith.mulf %53, %964 : vector<8x128xf32>
      %966 = arith.addf %963, %965 : vector<8x128xf32>
      %cst_358 = arith.constant -0.0363176577 : f32
      %967 = vector.broadcast %cst_358 : f32 to vector<8x128xf32>
      %968 = arith.mulf %62, %967 : vector<8x128xf32>
      %969 = arith.addf %966, %968 : vector<8x128xf32>
      %cst_359 = arith.constant -0.0613182783 : f32
      %970 = vector.broadcast %cst_359 : f32 to vector<8x128xf32>
      %971 = arith.mulf %71, %970 : vector<8x128xf32>
      %972 = arith.addf %969, %971 : vector<8x128xf32>
      %cst_360 = arith.constant -0.0953910574 : f32
      %973 = vector.broadcast %cst_360 : f32 to vector<8x128xf32>
      %974 = arith.mulf %80, %973 : vector<8x128xf32>
      %975 = arith.addf %972, %974 : vector<8x128xf32>
      %cst_361 = arith.constant -0.0753829181 : f32
      %976 = vector.broadcast %cst_361 : f32 to vector<8x128xf32>
      %977 = arith.mulf %89, %976 : vector<8x128xf32>
      %978 = arith.addf %975, %977 : vector<8x128xf32>
      %cst_362 = arith.constant -0.0401407741 : f32
      %979 = vector.broadcast %cst_362 : f32 to vector<8x128xf32>
      %980 = arith.mulf %98, %979 : vector<8x128xf32>
      %981 = arith.addf %978, %980 : vector<8x128xf32>
      %cst_363 = arith.constant 9.882920e-02 : f32
      %982 = vector.broadcast %cst_363 : f32 to vector<8x128xf32>
      %983 = arith.mulf %107, %982 : vector<8x128xf32>
      %984 = arith.addf %981, %983 : vector<8x128xf32>
      %cst_364 = arith.constant 0.114973567 : f32
      %985 = vector.broadcast %cst_364 : f32 to vector<8x128xf32>
      %986 = arith.mulf %116, %985 : vector<8x128xf32>
      %987 = arith.addf %984, %986 : vector<8x128xf32>
      %cst_365 = arith.constant -0.173286304 : f32
      %988 = vector.broadcast %cst_365 : f32 to vector<8x128xf32>
      %989 = arith.mulf %125, %988 : vector<8x128xf32>
      %990 = arith.addf %987, %989 : vector<8x128xf32>
      %cst_366 = arith.constant 0.146019503 : f32
      %991 = vector.broadcast %cst_366 : f32 to vector<8x128xf32>
      %992 = arith.mulf %134, %991 : vector<8x128xf32>
      %993 = arith.addf %990, %992 : vector<8x128xf32>
      %cst_367 = arith.constant 0.00835144519 : f32
      %994 = vector.broadcast %cst_367 : f32 to vector<8x128xf32>
      %995 = arith.mulf %143, %994 : vector<8x128xf32>
      %996 = arith.addf %993, %995 : vector<8x128xf32>
      %cst_368 = arith.constant -0.116901949 : f32
      %997 = vector.broadcast %cst_368 : f32 to vector<8x128xf32>
      %998 = arith.mulf %152, %997 : vector<8x128xf32>
      %999 = arith.addf %996, %998 : vector<8x128xf32>
      %cst_369 = arith.constant 0.0389067233 : f32
      %1000 = vector.broadcast %cst_369 : f32 to vector<8x128xf32>
      %1001 = arith.mulf %161, %1000 : vector<8x128xf32>
      %1002 = arith.addf %999, %1001 : vector<8x128xf32>
      %cst_370 = arith.constant -0.102565736 : f32
      %1003 = vector.broadcast %cst_370 : f32 to vector<8x128xf32>
      %1004 = arith.mulf %170, %1003 : vector<8x128xf32>
      %1005 = arith.addf %1002, %1004 : vector<8x128xf32>
      %cst_371 = arith.constant -0.0240675323 : f32
      %1006 = vector.broadcast %cst_371 : f32 to vector<8x128xf32>
      %1007 = arith.mulf %179, %1006 : vector<8x128xf32>
      %1008 = arith.addf %1005, %1007 : vector<8x128xf32>
      %cst_372 = arith.constant 0.0898400545 : f32
      %1009 = vector.broadcast %cst_372 : f32 to vector<8x128xf32>
      %1010 = arith.mulf %188, %1009 : vector<8x128xf32>
      %1011 = arith.addf %1008, %1010 : vector<8x128xf32>
      %cst_373 = arith.constant -0.0190426223 : f32
      %1012 = vector.broadcast %cst_373 : f32 to vector<8x128xf32>
      %1013 = arith.mulf %197, %1012 : vector<8x128xf32>
      %1014 = arith.addf %1011, %1013 : vector<8x128xf32>
      %cst_374 = arith.constant 0.0457892381 : f32
      %1015 = vector.broadcast %cst_374 : f32 to vector<8x128xf32>
      %1016 = arith.mulf %206, %1015 : vector<8x128xf32>
      %1017 = arith.addf %1014, %1016 : vector<8x128xf32>
      %cst_375 = arith.constant -0.182498664 : f32
      %1018 = vector.broadcast %cst_375 : f32 to vector<8x128xf32>
      %1019 = arith.mulf %215, %1018 : vector<8x128xf32>
      %1020 = arith.addf %1017, %1019 : vector<8x128xf32>
      %cst_376 = arith.constant 0.0517728329 : f32
      %1021 = vector.broadcast %cst_376 : f32 to vector<8x128xf32>
      %1022 = arith.mulf %224, %1021 : vector<8x128xf32>
      %1023 = arith.addf %1020, %1022 : vector<8x128xf32>
      %cst_377 = arith.constant -0.105815664 : f32
      %1024 = vector.broadcast %cst_377 : f32 to vector<8x128xf32>
      %1025 = arith.mulf %233, %1024 : vector<8x128xf32>
      %1026 = arith.addf %1023, %1025 : vector<8x128xf32>
      %cst_378 = arith.constant -0.152588084 : f32
      %1027 = vector.broadcast %cst_378 : f32 to vector<8x128xf32>
      %1028 = arith.mulf %242, %1027 : vector<8x128xf32>
      %1029 = arith.addf %1026, %1028 : vector<8x128xf32>
      %cst_379 = arith.constant 7.332660e-02 : f32
      %1030 = vector.broadcast %cst_379 : f32 to vector<8x128xf32>
      %1031 = arith.mulf %251, %1030 : vector<8x128xf32>
      %1032 = arith.addf %1029, %1031 : vector<8x128xf32>
      %cst_380 = arith.constant -0.0676901937 : f32
      %1033 = vector.broadcast %cst_380 : f32 to vector<8x128xf32>
      %1034 = arith.mulf %260, %1033 : vector<8x128xf32>
      %1035 = arith.addf %1032, %1034 : vector<8x128xf32>
      %cst_381 = arith.constant -0.0875005424 : f32
      %1036 = vector.broadcast %cst_381 : f32 to vector<8x128xf32>
      %1037 = arith.mulf %269, %1036 : vector<8x128xf32>
      %1038 = arith.addf %1035, %1037 : vector<8x128xf32>
      %cst_382 = arith.constant -0.0690710694 : f32
      %1039 = vector.broadcast %cst_382 : f32 to vector<8x128xf32>
      %1040 = arith.mulf %278, %1039 : vector<8x128xf32>
      %1041 = arith.addf %1038, %1040 : vector<8x128xf32>
      %cst_383 = arith.constant 0.000000e+00 : f32
      %1042 = vector.broadcast %cst_383 : f32 to vector<8x128xf32>
      %1043 = arith.cmpf ogt, %1041, %1042 : vector<8x128xf32>
      %cst_384 = arith.constant 1.000000e-01 : f32
      %1044 = vector.broadcast %cst_384 : f32 to vector<8x128xf32>
      %1045 = arith.mulf %1044, %1041 : vector<8x128xf32>
      %1046 = arith.select %1043, %1041, %1045 : vector<8x128xi1>, vector<8x128xf32>
      %cst_385 = arith.constant -0.0615322255 : f32
      %1047 = vector.broadcast %cst_385 : f32 to vector<8x128xf32>
      %cst_386 = arith.constant -0.147444829 : f32
      %1048 = vector.broadcast %cst_386 : f32 to vector<8x128xf32>
      %1049 = arith.mulf %17, %1048 : vector<8x128xf32>
      %1050 = arith.addf %1047, %1049 : vector<8x128xf32>
      %cst_387 = arith.constant 0.143733189 : f32
      %1051 = vector.broadcast %cst_387 : f32 to vector<8x128xf32>
      %1052 = arith.mulf %26, %1051 : vector<8x128xf32>
      %1053 = arith.addf %1050, %1052 : vector<8x128xf32>
      %cst_388 = arith.constant 0.00757436408 : f32
      %1054 = vector.broadcast %cst_388 : f32 to vector<8x128xf32>
      %1055 = arith.mulf %35, %1054 : vector<8x128xf32>
      %1056 = arith.addf %1053, %1055 : vector<8x128xf32>
      %cst_389 = arith.constant 0.0865341499 : f32
      %1057 = vector.broadcast %cst_389 : f32 to vector<8x128xf32>
      %1058 = arith.mulf %44, %1057 : vector<8x128xf32>
      %1059 = arith.addf %1056, %1058 : vector<8x128xf32>
      %cst_390 = arith.constant 0.0723063647 : f32
      %1060 = vector.broadcast %cst_390 : f32 to vector<8x128xf32>
      %1061 = arith.mulf %53, %1060 : vector<8x128xf32>
      %1062 = arith.addf %1059, %1061 : vector<8x128xf32>
      %cst_391 = arith.constant -0.134681404 : f32
      %1063 = vector.broadcast %cst_391 : f32 to vector<8x128xf32>
      %1064 = arith.mulf %62, %1063 : vector<8x128xf32>
      %1065 = arith.addf %1062, %1064 : vector<8x128xf32>
      %cst_392 = arith.constant 0.0829866155 : f32
      %1066 = vector.broadcast %cst_392 : f32 to vector<8x128xf32>
      %1067 = arith.mulf %71, %1066 : vector<8x128xf32>
      %1068 = arith.addf %1065, %1067 : vector<8x128xf32>
      %cst_393 = arith.constant -0.0465817712 : f32
      %1069 = vector.broadcast %cst_393 : f32 to vector<8x128xf32>
      %1070 = arith.mulf %80, %1069 : vector<8x128xf32>
      %1071 = arith.addf %1068, %1070 : vector<8x128xf32>
      %cst_394 = arith.constant 0.0841266885 : f32
      %1072 = vector.broadcast %cst_394 : f32 to vector<8x128xf32>
      %1073 = arith.mulf %89, %1072 : vector<8x128xf32>
      %1074 = arith.addf %1071, %1073 : vector<8x128xf32>
      %cst_395 = arith.constant 0.14702943 : f32
      %1075 = vector.broadcast %cst_395 : f32 to vector<8x128xf32>
      %1076 = arith.mulf %98, %1075 : vector<8x128xf32>
      %1077 = arith.addf %1074, %1076 : vector<8x128xf32>
      %cst_396 = arith.constant 0.144856885 : f32
      %1078 = vector.broadcast %cst_396 : f32 to vector<8x128xf32>
      %1079 = arith.mulf %107, %1078 : vector<8x128xf32>
      %1080 = arith.addf %1077, %1079 : vector<8x128xf32>
      %cst_397 = arith.constant 0.0981854498 : f32
      %1081 = vector.broadcast %cst_397 : f32 to vector<8x128xf32>
      %1082 = arith.mulf %116, %1081 : vector<8x128xf32>
      %1083 = arith.addf %1080, %1082 : vector<8x128xf32>
      %cst_398 = arith.constant -0.103651702 : f32
      %1084 = vector.broadcast %cst_398 : f32 to vector<8x128xf32>
      %1085 = arith.mulf %125, %1084 : vector<8x128xf32>
      %1086 = arith.addf %1083, %1085 : vector<8x128xf32>
      %cst_399 = arith.constant -1.204810e-01 : f32
      %1087 = vector.broadcast %cst_399 : f32 to vector<8x128xf32>
      %1088 = arith.mulf %134, %1087 : vector<8x128xf32>
      %1089 = arith.addf %1086, %1088 : vector<8x128xf32>
      %cst_400 = arith.constant 0.0255904831 : f32
      %1090 = vector.broadcast %cst_400 : f32 to vector<8x128xf32>
      %1091 = arith.mulf %143, %1090 : vector<8x128xf32>
      %1092 = arith.addf %1089, %1091 : vector<8x128xf32>
      %cst_401 = arith.constant -0.053948544 : f32
      %1093 = vector.broadcast %cst_401 : f32 to vector<8x128xf32>
      %1094 = arith.mulf %152, %1093 : vector<8x128xf32>
      %1095 = arith.addf %1092, %1094 : vector<8x128xf32>
      %cst_402 = arith.constant -0.160924301 : f32
      %1096 = vector.broadcast %cst_402 : f32 to vector<8x128xf32>
      %1097 = arith.mulf %161, %1096 : vector<8x128xf32>
      %1098 = arith.addf %1095, %1097 : vector<8x128xf32>
      %cst_403 = arith.constant -0.146547422 : f32
      %1099 = vector.broadcast %cst_403 : f32 to vector<8x128xf32>
      %1100 = arith.mulf %170, %1099 : vector<8x128xf32>
      %1101 = arith.addf %1098, %1100 : vector<8x128xf32>
      %cst_404 = arith.constant 0.170034975 : f32
      %1102 = vector.broadcast %cst_404 : f32 to vector<8x128xf32>
      %1103 = arith.mulf %179, %1102 : vector<8x128xf32>
      %1104 = arith.addf %1101, %1103 : vector<8x128xf32>
      %cst_405 = arith.constant -0.154624373 : f32
      %1105 = vector.broadcast %cst_405 : f32 to vector<8x128xf32>
      %1106 = arith.mulf %188, %1105 : vector<8x128xf32>
      %1107 = arith.addf %1104, %1106 : vector<8x128xf32>
      %cst_406 = arith.constant 0.0860703065 : f32
      %1108 = vector.broadcast %cst_406 : f32 to vector<8x128xf32>
      %1109 = arith.mulf %197, %1108 : vector<8x128xf32>
      %1110 = arith.addf %1107, %1109 : vector<8x128xf32>
      %cst_407 = arith.constant -0.0138220051 : f32
      %1111 = vector.broadcast %cst_407 : f32 to vector<8x128xf32>
      %1112 = arith.mulf %206, %1111 : vector<8x128xf32>
      %1113 = arith.addf %1110, %1112 : vector<8x128xf32>
      %cst_408 = arith.constant -0.0599565171 : f32
      %1114 = vector.broadcast %cst_408 : f32 to vector<8x128xf32>
      %1115 = arith.mulf %215, %1114 : vector<8x128xf32>
      %1116 = arith.addf %1113, %1115 : vector<8x128xf32>
      %cst_409 = arith.constant 0.0175339468 : f32
      %1117 = vector.broadcast %cst_409 : f32 to vector<8x128xf32>
      %1118 = arith.mulf %224, %1117 : vector<8x128xf32>
      %1119 = arith.addf %1116, %1118 : vector<8x128xf32>
      %cst_410 = arith.constant 0.0928244516 : f32
      %1120 = vector.broadcast %cst_410 : f32 to vector<8x128xf32>
      %1121 = arith.mulf %233, %1120 : vector<8x128xf32>
      %1122 = arith.addf %1119, %1121 : vector<8x128xf32>
      %cst_411 = arith.constant 0.0829634144 : f32
      %1123 = vector.broadcast %cst_411 : f32 to vector<8x128xf32>
      %1124 = arith.mulf %242, %1123 : vector<8x128xf32>
      %1125 = arith.addf %1122, %1124 : vector<8x128xf32>
      %cst_412 = arith.constant 0.139530331 : f32
      %1126 = vector.broadcast %cst_412 : f32 to vector<8x128xf32>
      %1127 = arith.mulf %251, %1126 : vector<8x128xf32>
      %1128 = arith.addf %1125, %1127 : vector<8x128xf32>
      %cst_413 = arith.constant -0.0268408563 : f32
      %1129 = vector.broadcast %cst_413 : f32 to vector<8x128xf32>
      %1130 = arith.mulf %260, %1129 : vector<8x128xf32>
      %1131 = arith.addf %1128, %1130 : vector<8x128xf32>
      %cst_414 = arith.constant -0.0921471416 : f32
      %1132 = vector.broadcast %cst_414 : f32 to vector<8x128xf32>
      %1133 = arith.mulf %269, %1132 : vector<8x128xf32>
      %1134 = arith.addf %1131, %1133 : vector<8x128xf32>
      %cst_415 = arith.constant -0.0435145386 : f32
      %1135 = vector.broadcast %cst_415 : f32 to vector<8x128xf32>
      %1136 = arith.mulf %278, %1135 : vector<8x128xf32>
      %1137 = arith.addf %1134, %1136 : vector<8x128xf32>
      %cst_416 = arith.constant 0.000000e+00 : f32
      %1138 = vector.broadcast %cst_416 : f32 to vector<8x128xf32>
      %1139 = arith.cmpf ogt, %1137, %1138 : vector<8x128xf32>
      %cst_417 = arith.constant 1.000000e-01 : f32
      %1140 = vector.broadcast %cst_417 : f32 to vector<8x128xf32>
      %1141 = arith.mulf %1140, %1137 : vector<8x128xf32>
      %1142 = arith.select %1139, %1137, %1141 : vector<8x128xi1>, vector<8x128xf32>
      %cst_418 = arith.constant -0.0986446365 : f32
      %1143 = vector.broadcast %cst_418 : f32 to vector<8x128xf32>
      %cst_419 = arith.constant 0.128443733 : f32
      %1144 = vector.broadcast %cst_419 : f32 to vector<8x128xf32>
      %1145 = arith.mulf %17, %1144 : vector<8x128xf32>
      %1146 = arith.addf %1143, %1145 : vector<8x128xf32>
      %cst_420 = arith.constant 0.169529215 : f32
      %1147 = vector.broadcast %cst_420 : f32 to vector<8x128xf32>
      %1148 = arith.mulf %26, %1147 : vector<8x128xf32>
      %1149 = arith.addf %1146, %1148 : vector<8x128xf32>
      %cst_421 = arith.constant 0.160014108 : f32
      %1150 = vector.broadcast %cst_421 : f32 to vector<8x128xf32>
      %1151 = arith.mulf %35, %1150 : vector<8x128xf32>
      %1152 = arith.addf %1149, %1151 : vector<8x128xf32>
      %cst_422 = arith.constant -0.149893641 : f32
      %1153 = vector.broadcast %cst_422 : f32 to vector<8x128xf32>
      %1154 = arith.mulf %44, %1153 : vector<8x128xf32>
      %1155 = arith.addf %1152, %1154 : vector<8x128xf32>
      %cst_423 = arith.constant 0.0252697617 : f32
      %1156 = vector.broadcast %cst_423 : f32 to vector<8x128xf32>
      %1157 = arith.mulf %53, %1156 : vector<8x128xf32>
      %1158 = arith.addf %1155, %1157 : vector<8x128xf32>
      %cst_424 = arith.constant 0.0972184091 : f32
      %1159 = vector.broadcast %cst_424 : f32 to vector<8x128xf32>
      %1160 = arith.mulf %62, %1159 : vector<8x128xf32>
      %1161 = arith.addf %1158, %1160 : vector<8x128xf32>
      %cst_425 = arith.constant -0.00736007048 : f32
      %1162 = vector.broadcast %cst_425 : f32 to vector<8x128xf32>
      %1163 = arith.mulf %71, %1162 : vector<8x128xf32>
      %1164 = arith.addf %1161, %1163 : vector<8x128xf32>
      %cst_426 = arith.constant 0.115464404 : f32
      %1165 = vector.broadcast %cst_426 : f32 to vector<8x128xf32>
      %1166 = arith.mulf %80, %1165 : vector<8x128xf32>
      %1167 = arith.addf %1164, %1166 : vector<8x128xf32>
      %cst_427 = arith.constant 0.0453532934 : f32
      %1168 = vector.broadcast %cst_427 : f32 to vector<8x128xf32>
      %1169 = arith.mulf %89, %1168 : vector<8x128xf32>
      %1170 = arith.addf %1167, %1169 : vector<8x128xf32>
      %cst_428 = arith.constant -0.0581013076 : f32
      %1171 = vector.broadcast %cst_428 : f32 to vector<8x128xf32>
      %1172 = arith.mulf %98, %1171 : vector<8x128xf32>
      %1173 = arith.addf %1170, %1172 : vector<8x128xf32>
      %cst_429 = arith.constant 0.11629986 : f32
      %1174 = vector.broadcast %cst_429 : f32 to vector<8x128xf32>
      %1175 = arith.mulf %107, %1174 : vector<8x128xf32>
      %1176 = arith.addf %1173, %1175 : vector<8x128xf32>
      %cst_430 = arith.constant -0.144697919 : f32
      %1177 = vector.broadcast %cst_430 : f32 to vector<8x128xf32>
      %1178 = arith.mulf %116, %1177 : vector<8x128xf32>
      %1179 = arith.addf %1176, %1178 : vector<8x128xf32>
      %cst_431 = arith.constant 0.0408291444 : f32
      %1180 = vector.broadcast %cst_431 : f32 to vector<8x128xf32>
      %1181 = arith.mulf %125, %1180 : vector<8x128xf32>
      %1182 = arith.addf %1179, %1181 : vector<8x128xf32>
      %cst_432 = arith.constant -0.0253024083 : f32
      %1183 = vector.broadcast %cst_432 : f32 to vector<8x128xf32>
      %1184 = arith.mulf %134, %1183 : vector<8x128xf32>
      %1185 = arith.addf %1182, %1184 : vector<8x128xf32>
      %cst_433 = arith.constant -0.139432162 : f32
      %1186 = vector.broadcast %cst_433 : f32 to vector<8x128xf32>
      %1187 = arith.mulf %143, %1186 : vector<8x128xf32>
      %1188 = arith.addf %1185, %1187 : vector<8x128xf32>
      %cst_434 = arith.constant -0.0776097327 : f32
      %1189 = vector.broadcast %cst_434 : f32 to vector<8x128xf32>
      %1190 = arith.mulf %152, %1189 : vector<8x128xf32>
      %1191 = arith.addf %1188, %1190 : vector<8x128xf32>
      %cst_435 = arith.constant -0.0357861258 : f32
      %1192 = vector.broadcast %cst_435 : f32 to vector<8x128xf32>
      %1193 = arith.mulf %161, %1192 : vector<8x128xf32>
      %1194 = arith.addf %1191, %1193 : vector<8x128xf32>
      %cst_436 = arith.constant -0.0941638424 : f32
      %1195 = vector.broadcast %cst_436 : f32 to vector<8x128xf32>
      %1196 = arith.mulf %170, %1195 : vector<8x128xf32>
      %1197 = arith.addf %1194, %1196 : vector<8x128xf32>
      %cst_437 = arith.constant 0.0195926111 : f32
      %1198 = vector.broadcast %cst_437 : f32 to vector<8x128xf32>
      %1199 = arith.mulf %179, %1198 : vector<8x128xf32>
      %1200 = arith.addf %1197, %1199 : vector<8x128xf32>
      %cst_438 = arith.constant -0.0659721494 : f32
      %1201 = vector.broadcast %cst_438 : f32 to vector<8x128xf32>
      %1202 = arith.mulf %188, %1201 : vector<8x128xf32>
      %1203 = arith.addf %1200, %1202 : vector<8x128xf32>
      %cst_439 = arith.constant -0.157343909 : f32
      %1204 = vector.broadcast %cst_439 : f32 to vector<8x128xf32>
      %1205 = arith.mulf %197, %1204 : vector<8x128xf32>
      %1206 = arith.addf %1203, %1205 : vector<8x128xf32>
      %cst_440 = arith.constant 0.169690669 : f32
      %1207 = vector.broadcast %cst_440 : f32 to vector<8x128xf32>
      %1208 = arith.mulf %206, %1207 : vector<8x128xf32>
      %1209 = arith.addf %1206, %1208 : vector<8x128xf32>
      %cst_441 = arith.constant 1.382810e-01 : f32
      %1210 = vector.broadcast %cst_441 : f32 to vector<8x128xf32>
      %1211 = arith.mulf %215, %1210 : vector<8x128xf32>
      %1212 = arith.addf %1209, %1211 : vector<8x128xf32>
      %cst_442 = arith.constant 0.132819623 : f32
      %1213 = vector.broadcast %cst_442 : f32 to vector<8x128xf32>
      %1214 = arith.mulf %224, %1213 : vector<8x128xf32>
      %1215 = arith.addf %1212, %1214 : vector<8x128xf32>
      %cst_443 = arith.constant 0.158515483 : f32
      %1216 = vector.broadcast %cst_443 : f32 to vector<8x128xf32>
      %1217 = arith.mulf %233, %1216 : vector<8x128xf32>
      %1218 = arith.addf %1215, %1217 : vector<8x128xf32>
      %cst_444 = arith.constant 0.0427560024 : f32
      %1219 = vector.broadcast %cst_444 : f32 to vector<8x128xf32>
      %1220 = arith.mulf %242, %1219 : vector<8x128xf32>
      %1221 = arith.addf %1218, %1220 : vector<8x128xf32>
      %cst_445 = arith.constant -0.0542966053 : f32
      %1222 = vector.broadcast %cst_445 : f32 to vector<8x128xf32>
      %1223 = arith.mulf %251, %1222 : vector<8x128xf32>
      %1224 = arith.addf %1221, %1223 : vector<8x128xf32>
      %cst_446 = arith.constant -0.112497941 : f32
      %1225 = vector.broadcast %cst_446 : f32 to vector<8x128xf32>
      %1226 = arith.mulf %260, %1225 : vector<8x128xf32>
      %1227 = arith.addf %1224, %1226 : vector<8x128xf32>
      %cst_447 = arith.constant 0.0982102602 : f32
      %1228 = vector.broadcast %cst_447 : f32 to vector<8x128xf32>
      %1229 = arith.mulf %269, %1228 : vector<8x128xf32>
      %1230 = arith.addf %1227, %1229 : vector<8x128xf32>
      %cst_448 = arith.constant 7.668300e-03 : f32
      %1231 = vector.broadcast %cst_448 : f32 to vector<8x128xf32>
      %1232 = arith.mulf %278, %1231 : vector<8x128xf32>
      %1233 = arith.addf %1230, %1232 : vector<8x128xf32>
      %cst_449 = arith.constant 0.000000e+00 : f32
      %1234 = vector.broadcast %cst_449 : f32 to vector<8x128xf32>
      %1235 = arith.cmpf ogt, %1233, %1234 : vector<8x128xf32>
      %cst_450 = arith.constant 1.000000e-01 : f32
      %1236 = vector.broadcast %cst_450 : f32 to vector<8x128xf32>
      %1237 = arith.mulf %1236, %1233 : vector<8x128xf32>
      %1238 = arith.select %1235, %1233, %1237 : vector<8x128xi1>, vector<8x128xf32>
      %cst_451 = arith.constant 0.166124627 : f32
      %1239 = vector.broadcast %cst_451 : f32 to vector<8x128xf32>
      %cst_452 = arith.constant -0.0731613189 : f32
      %1240 = vector.broadcast %cst_452 : f32 to vector<8x128xf32>
      %1241 = arith.mulf %17, %1240 : vector<8x128xf32>
      %1242 = arith.addf %1239, %1241 : vector<8x128xf32>
      %cst_453 = arith.constant 0.178545877 : f32
      %1243 = vector.broadcast %cst_453 : f32 to vector<8x128xf32>
      %1244 = arith.mulf %26, %1243 : vector<8x128xf32>
      %1245 = arith.addf %1242, %1244 : vector<8x128xf32>
      %cst_454 = arith.constant 0.0745655298 : f32
      %1246 = vector.broadcast %cst_454 : f32 to vector<8x128xf32>
      %1247 = arith.mulf %35, %1246 : vector<8x128xf32>
      %1248 = arith.addf %1245, %1247 : vector<8x128xf32>
      %cst_455 = arith.constant -0.120874673 : f32
      %1249 = vector.broadcast %cst_455 : f32 to vector<8x128xf32>
      %1250 = arith.mulf %44, %1249 : vector<8x128xf32>
      %1251 = arith.addf %1248, %1250 : vector<8x128xf32>
      %cst_456 = arith.constant -0.117454812 : f32
      %1252 = vector.broadcast %cst_456 : f32 to vector<8x128xf32>
      %1253 = arith.mulf %53, %1252 : vector<8x128xf32>
      %1254 = arith.addf %1251, %1253 : vector<8x128xf32>
      %cst_457 = arith.constant -0.109784514 : f32
      %1255 = vector.broadcast %cst_457 : f32 to vector<8x128xf32>
      %1256 = arith.mulf %62, %1255 : vector<8x128xf32>
      %1257 = arith.addf %1254, %1256 : vector<8x128xf32>
      %cst_458 = arith.constant -0.0527494065 : f32
      %1258 = vector.broadcast %cst_458 : f32 to vector<8x128xf32>
      %1259 = arith.mulf %71, %1258 : vector<8x128xf32>
      %1260 = arith.addf %1257, %1259 : vector<8x128xf32>
      %cst_459 = arith.constant 0.156487167 : f32
      %1261 = vector.broadcast %cst_459 : f32 to vector<8x128xf32>
      %1262 = arith.mulf %80, %1261 : vector<8x128xf32>
      %1263 = arith.addf %1260, %1262 : vector<8x128xf32>
      %cst_460 = arith.constant -0.11610689 : f32
      %1264 = vector.broadcast %cst_460 : f32 to vector<8x128xf32>
      %1265 = arith.mulf %89, %1264 : vector<8x128xf32>
      %1266 = arith.addf %1263, %1265 : vector<8x128xf32>
      %cst_461 = arith.constant -0.0700157359 : f32
      %1267 = vector.broadcast %cst_461 : f32 to vector<8x128xf32>
      %1268 = arith.mulf %98, %1267 : vector<8x128xf32>
      %1269 = arith.addf %1266, %1268 : vector<8x128xf32>
      %cst_462 = arith.constant -0.0495095365 : f32
      %1270 = vector.broadcast %cst_462 : f32 to vector<8x128xf32>
      %1271 = arith.mulf %107, %1270 : vector<8x128xf32>
      %1272 = arith.addf %1269, %1271 : vector<8x128xf32>
      %cst_463 = arith.constant 0.175953329 : f32
      %1273 = vector.broadcast %cst_463 : f32 to vector<8x128xf32>
      %1274 = arith.mulf %116, %1273 : vector<8x128xf32>
      %1275 = arith.addf %1272, %1274 : vector<8x128xf32>
      %cst_464 = arith.constant -0.123299465 : f32
      %1276 = vector.broadcast %cst_464 : f32 to vector<8x128xf32>
      %1277 = arith.mulf %125, %1276 : vector<8x128xf32>
      %1278 = arith.addf %1275, %1277 : vector<8x128xf32>
      %cst_465 = arith.constant 0.095299296 : f32
      %1279 = vector.broadcast %cst_465 : f32 to vector<8x128xf32>
      %1280 = arith.mulf %134, %1279 : vector<8x128xf32>
      %1281 = arith.addf %1278, %1280 : vector<8x128xf32>
      %cst_466 = arith.constant -0.146471128 : f32
      %1282 = vector.broadcast %cst_466 : f32 to vector<8x128xf32>
      %1283 = arith.mulf %143, %1282 : vector<8x128xf32>
      %1284 = arith.addf %1281, %1283 : vector<8x128xf32>
      %cst_467 = arith.constant 0.147992894 : f32
      %1285 = vector.broadcast %cst_467 : f32 to vector<8x128xf32>
      %1286 = arith.mulf %152, %1285 : vector<8x128xf32>
      %1287 = arith.addf %1284, %1286 : vector<8x128xf32>
      %cst_468 = arith.constant -0.130347297 : f32
      %1288 = vector.broadcast %cst_468 : f32 to vector<8x128xf32>
      %1289 = arith.mulf %161, %1288 : vector<8x128xf32>
      %1290 = arith.addf %1287, %1289 : vector<8x128xf32>
      %cst_469 = arith.constant -0.0879638195 : f32
      %1291 = vector.broadcast %cst_469 : f32 to vector<8x128xf32>
      %1292 = arith.mulf %170, %1291 : vector<8x128xf32>
      %1293 = arith.addf %1290, %1292 : vector<8x128xf32>
      %cst_470 = arith.constant 0.0970628783 : f32
      %1294 = vector.broadcast %cst_470 : f32 to vector<8x128xf32>
      %1295 = arith.mulf %179, %1294 : vector<8x128xf32>
      %1296 = arith.addf %1293, %1295 : vector<8x128xf32>
      %cst_471 = arith.constant 0.154494271 : f32
      %1297 = vector.broadcast %cst_471 : f32 to vector<8x128xf32>
      %1298 = arith.mulf %188, %1297 : vector<8x128xf32>
      %1299 = arith.addf %1296, %1298 : vector<8x128xf32>
      %cst_472 = arith.constant 0.146341443 : f32
      %1300 = vector.broadcast %cst_472 : f32 to vector<8x128xf32>
      %1301 = arith.mulf %197, %1300 : vector<8x128xf32>
      %1302 = arith.addf %1299, %1301 : vector<8x128xf32>
      %cst_473 = arith.constant -0.020990286 : f32
      %1303 = vector.broadcast %cst_473 : f32 to vector<8x128xf32>
      %1304 = arith.mulf %206, %1303 : vector<8x128xf32>
      %1305 = arith.addf %1302, %1304 : vector<8x128xf32>
      %cst_474 = arith.constant -0.163186938 : f32
      %1306 = vector.broadcast %cst_474 : f32 to vector<8x128xf32>
      %1307 = arith.mulf %215, %1306 : vector<8x128xf32>
      %1308 = arith.addf %1305, %1307 : vector<8x128xf32>
      %cst_475 = arith.constant 0.0793366655 : f32
      %1309 = vector.broadcast %cst_475 : f32 to vector<8x128xf32>
      %1310 = arith.mulf %224, %1309 : vector<8x128xf32>
      %1311 = arith.addf %1308, %1310 : vector<8x128xf32>
      %cst_476 = arith.constant -0.0421487279 : f32
      %1312 = vector.broadcast %cst_476 : f32 to vector<8x128xf32>
      %1313 = arith.mulf %233, %1312 : vector<8x128xf32>
      %1314 = arith.addf %1311, %1313 : vector<8x128xf32>
      %cst_477 = arith.constant 0.0068971822 : f32
      %1315 = vector.broadcast %cst_477 : f32 to vector<8x128xf32>
      %1316 = arith.mulf %242, %1315 : vector<8x128xf32>
      %1317 = arith.addf %1314, %1316 : vector<8x128xf32>
      %cst_478 = arith.constant 6.479160e-02 : f32
      %1318 = vector.broadcast %cst_478 : f32 to vector<8x128xf32>
      %1319 = arith.mulf %251, %1318 : vector<8x128xf32>
      %1320 = arith.addf %1317, %1319 : vector<8x128xf32>
      %cst_479 = arith.constant -0.0667170137 : f32
      %1321 = vector.broadcast %cst_479 : f32 to vector<8x128xf32>
      %1322 = arith.mulf %260, %1321 : vector<8x128xf32>
      %1323 = arith.addf %1320, %1322 : vector<8x128xf32>
      %cst_480 = arith.constant 0.0527320392 : f32
      %1324 = vector.broadcast %cst_480 : f32 to vector<8x128xf32>
      %1325 = arith.mulf %269, %1324 : vector<8x128xf32>
      %1326 = arith.addf %1323, %1325 : vector<8x128xf32>
      %cst_481 = arith.constant 0.166725203 : f32
      %1327 = vector.broadcast %cst_481 : f32 to vector<8x128xf32>
      %1328 = arith.mulf %278, %1327 : vector<8x128xf32>
      %1329 = arith.addf %1326, %1328 : vector<8x128xf32>
      %cst_482 = arith.constant 0.000000e+00 : f32
      %1330 = vector.broadcast %cst_482 : f32 to vector<8x128xf32>
      %1331 = arith.cmpf ogt, %1329, %1330 : vector<8x128xf32>
      %cst_483 = arith.constant 1.000000e-01 : f32
      %1332 = vector.broadcast %cst_483 : f32 to vector<8x128xf32>
      %1333 = arith.mulf %1332, %1329 : vector<8x128xf32>
      %1334 = arith.select %1331, %1329, %1333 : vector<8x128xi1>, vector<8x128xf32>
      %cst_484 = arith.constant -0.0035741725 : f32
      %1335 = vector.broadcast %cst_484 : f32 to vector<8x128xf32>
      %cst_485 = arith.constant -0.121226303 : f32
      %1336 = vector.broadcast %cst_485 : f32 to vector<8x128xf32>
      %1337 = arith.mulf %17, %1336 : vector<8x128xf32>
      %1338 = arith.addf %1335, %1337 : vector<8x128xf32>
      %cst_486 = arith.constant 0.180457577 : f32
      %1339 = vector.broadcast %cst_486 : f32 to vector<8x128xf32>
      %1340 = arith.mulf %26, %1339 : vector<8x128xf32>
      %1341 = arith.addf %1338, %1340 : vector<8x128xf32>
      %cst_487 = arith.constant -0.115040429 : f32
      %1342 = vector.broadcast %cst_487 : f32 to vector<8x128xf32>
      %1343 = arith.mulf %35, %1342 : vector<8x128xf32>
      %1344 = arith.addf %1341, %1343 : vector<8x128xf32>
      %cst_488 = arith.constant 0.059774477 : f32
      %1345 = vector.broadcast %cst_488 : f32 to vector<8x128xf32>
      %1346 = arith.mulf %44, %1345 : vector<8x128xf32>
      %1347 = arith.addf %1344, %1346 : vector<8x128xf32>
      %cst_489 = arith.constant -0.117041856 : f32
      %1348 = vector.broadcast %cst_489 : f32 to vector<8x128xf32>
      %1349 = arith.mulf %53, %1348 : vector<8x128xf32>
      %1350 = arith.addf %1347, %1349 : vector<8x128xf32>
      %cst_490 = arith.constant 0.0484666675 : f32
      %1351 = vector.broadcast %cst_490 : f32 to vector<8x128xf32>
      %1352 = arith.mulf %62, %1351 : vector<8x128xf32>
      %1353 = arith.addf %1350, %1352 : vector<8x128xf32>
      %cst_491 = arith.constant 0.0430255756 : f32
      %1354 = vector.broadcast %cst_491 : f32 to vector<8x128xf32>
      %1355 = arith.mulf %71, %1354 : vector<8x128xf32>
      %1356 = arith.addf %1353, %1355 : vector<8x128xf32>
      %cst_492 = arith.constant -0.0827677547 : f32
      %1357 = vector.broadcast %cst_492 : f32 to vector<8x128xf32>
      %1358 = arith.mulf %80, %1357 : vector<8x128xf32>
      %1359 = arith.addf %1356, %1358 : vector<8x128xf32>
      %cst_493 = arith.constant -0.0508206338 : f32
      %1360 = vector.broadcast %cst_493 : f32 to vector<8x128xf32>
      %1361 = arith.mulf %89, %1360 : vector<8x128xf32>
      %1362 = arith.addf %1359, %1361 : vector<8x128xf32>
      %cst_494 = arith.constant 0.154541373 : f32
      %1363 = vector.broadcast %cst_494 : f32 to vector<8x128xf32>
      %1364 = arith.mulf %98, %1363 : vector<8x128xf32>
      %1365 = arith.addf %1362, %1364 : vector<8x128xf32>
      %cst_495 = arith.constant 0.0203565042 : f32
      %1366 = vector.broadcast %cst_495 : f32 to vector<8x128xf32>
      %1367 = arith.mulf %107, %1366 : vector<8x128xf32>
      %1368 = arith.addf %1365, %1367 : vector<8x128xf32>
      %cst_496 = arith.constant 0.129679039 : f32
      %1369 = vector.broadcast %cst_496 : f32 to vector<8x128xf32>
      %1370 = arith.mulf %116, %1369 : vector<8x128xf32>
      %1371 = arith.addf %1368, %1370 : vector<8x128xf32>
      %cst_497 = arith.constant -0.0601543561 : f32
      %1372 = vector.broadcast %cst_497 : f32 to vector<8x128xf32>
      %1373 = arith.mulf %125, %1372 : vector<8x128xf32>
      %1374 = arith.addf %1371, %1373 : vector<8x128xf32>
      %cst_498 = arith.constant -0.0964770615 : f32
      %1375 = vector.broadcast %cst_498 : f32 to vector<8x128xf32>
      %1376 = arith.mulf %134, %1375 : vector<8x128xf32>
      %1377 = arith.addf %1374, %1376 : vector<8x128xf32>
      %cst_499 = arith.constant -8.807630e-02 : f32
      %1378 = vector.broadcast %cst_499 : f32 to vector<8x128xf32>
      %1379 = arith.mulf %143, %1378 : vector<8x128xf32>
      %1380 = arith.addf %1377, %1379 : vector<8x128xf32>
      %cst_500 = arith.constant 0.0329073295 : f32
      %1381 = vector.broadcast %cst_500 : f32 to vector<8x128xf32>
      %1382 = arith.mulf %152, %1381 : vector<8x128xf32>
      %1383 = arith.addf %1380, %1382 : vector<8x128xf32>
      %cst_501 = arith.constant 0.017690042 : f32
      %1384 = vector.broadcast %cst_501 : f32 to vector<8x128xf32>
      %1385 = arith.mulf %161, %1384 : vector<8x128xf32>
      %1386 = arith.addf %1383, %1385 : vector<8x128xf32>
      %cst_502 = arith.constant 0.170115337 : f32
      %1387 = vector.broadcast %cst_502 : f32 to vector<8x128xf32>
      %1388 = arith.mulf %170, %1387 : vector<8x128xf32>
      %1389 = arith.addf %1386, %1388 : vector<8x128xf32>
      %cst_503 = arith.constant -0.16009137 : f32
      %1390 = vector.broadcast %cst_503 : f32 to vector<8x128xf32>
      %1391 = arith.mulf %179, %1390 : vector<8x128xf32>
      %1392 = arith.addf %1389, %1391 : vector<8x128xf32>
      %cst_504 = arith.constant 0.0757592246 : f32
      %1393 = vector.broadcast %cst_504 : f32 to vector<8x128xf32>
      %1394 = arith.mulf %188, %1393 : vector<8x128xf32>
      %1395 = arith.addf %1392, %1394 : vector<8x128xf32>
      %cst_505 = arith.constant 0.0178435706 : f32
      %1396 = vector.broadcast %cst_505 : f32 to vector<8x128xf32>
      %1397 = arith.mulf %197, %1396 : vector<8x128xf32>
      %1398 = arith.addf %1395, %1397 : vector<8x128xf32>
      %cst_506 = arith.constant -0.179930791 : f32
      %1399 = vector.broadcast %cst_506 : f32 to vector<8x128xf32>
      %1400 = arith.mulf %206, %1399 : vector<8x128xf32>
      %1401 = arith.addf %1398, %1400 : vector<8x128xf32>
      %cst_507 = arith.constant -0.0534621961 : f32
      %1402 = vector.broadcast %cst_507 : f32 to vector<8x128xf32>
      %1403 = arith.mulf %215, %1402 : vector<8x128xf32>
      %1404 = arith.addf %1401, %1403 : vector<8x128xf32>
      %cst_508 = arith.constant 0.111717902 : f32
      %1405 = vector.broadcast %cst_508 : f32 to vector<8x128xf32>
      %1406 = arith.mulf %224, %1405 : vector<8x128xf32>
      %1407 = arith.addf %1404, %1406 : vector<8x128xf32>
      %cst_509 = arith.constant 0.0702976733 : f32
      %1408 = vector.broadcast %cst_509 : f32 to vector<8x128xf32>
      %1409 = arith.mulf %233, %1408 : vector<8x128xf32>
      %1410 = arith.addf %1407, %1409 : vector<8x128xf32>
      %cst_510 = arith.constant -0.159976766 : f32
      %1411 = vector.broadcast %cst_510 : f32 to vector<8x128xf32>
      %1412 = arith.mulf %242, %1411 : vector<8x128xf32>
      %1413 = arith.addf %1410, %1412 : vector<8x128xf32>
      %cst_511 = arith.constant 0.0976720228 : f32
      %1414 = vector.broadcast %cst_511 : f32 to vector<8x128xf32>
      %1415 = arith.mulf %251, %1414 : vector<8x128xf32>
      %1416 = arith.addf %1413, %1415 : vector<8x128xf32>
      %cst_512 = arith.constant -0.0576341078 : f32
      %1417 = vector.broadcast %cst_512 : f32 to vector<8x128xf32>
      %1418 = arith.mulf %260, %1417 : vector<8x128xf32>
      %1419 = arith.addf %1416, %1418 : vector<8x128xf32>
      %cst_513 = arith.constant -0.161566436 : f32
      %1420 = vector.broadcast %cst_513 : f32 to vector<8x128xf32>
      %1421 = arith.mulf %269, %1420 : vector<8x128xf32>
      %1422 = arith.addf %1419, %1421 : vector<8x128xf32>
      %cst_514 = arith.constant 0.0142211672 : f32
      %1423 = vector.broadcast %cst_514 : f32 to vector<8x128xf32>
      %1424 = arith.mulf %278, %1423 : vector<8x128xf32>
      %1425 = arith.addf %1422, %1424 : vector<8x128xf32>
      %cst_515 = arith.constant 0.000000e+00 : f32
      %1426 = vector.broadcast %cst_515 : f32 to vector<8x128xf32>
      %1427 = arith.cmpf ogt, %1425, %1426 : vector<8x128xf32>
      %cst_516 = arith.constant 1.000000e-01 : f32
      %1428 = vector.broadcast %cst_516 : f32 to vector<8x128xf32>
      %1429 = arith.mulf %1428, %1425 : vector<8x128xf32>
      %1430 = arith.select %1427, %1425, %1429 : vector<8x128xi1>, vector<8x128xf32>
      %cst_517 = arith.constant 0.173047632 : f32
      %1431 = vector.broadcast %cst_517 : f32 to vector<8x128xf32>
      %cst_518 = arith.constant 0.156257063 : f32
      %1432 = vector.broadcast %cst_518 : f32 to vector<8x128xf32>
      %1433 = arith.mulf %17, %1432 : vector<8x128xf32>
      %1434 = arith.addf %1431, %1433 : vector<8x128xf32>
      %cst_519 = arith.constant 0.136467233 : f32
      %1435 = vector.broadcast %cst_519 : f32 to vector<8x128xf32>
      %1436 = arith.mulf %26, %1435 : vector<8x128xf32>
      %1437 = arith.addf %1434, %1436 : vector<8x128xf32>
      %cst_520 = arith.constant -0.174295783 : f32
      %1438 = vector.broadcast %cst_520 : f32 to vector<8x128xf32>
      %1439 = arith.mulf %35, %1438 : vector<8x128xf32>
      %1440 = arith.addf %1437, %1439 : vector<8x128xf32>
      %cst_521 = arith.constant 0.0492931977 : f32
      %1441 = vector.broadcast %cst_521 : f32 to vector<8x128xf32>
      %1442 = arith.mulf %44, %1441 : vector<8x128xf32>
      %1443 = arith.addf %1440, %1442 : vector<8x128xf32>
      %cst_522 = arith.constant 0.0450109392 : f32
      %1444 = vector.broadcast %cst_522 : f32 to vector<8x128xf32>
      %1445 = arith.mulf %53, %1444 : vector<8x128xf32>
      %1446 = arith.addf %1443, %1445 : vector<8x128xf32>
      %cst_523 = arith.constant 0.0876409187 : f32
      %1447 = vector.broadcast %cst_523 : f32 to vector<8x128xf32>
      %1448 = arith.mulf %62, %1447 : vector<8x128xf32>
      %1449 = arith.addf %1446, %1448 : vector<8x128xf32>
      %cst_524 = arith.constant 0.0385564901 : f32
      %1450 = vector.broadcast %cst_524 : f32 to vector<8x128xf32>
      %1451 = arith.mulf %71, %1450 : vector<8x128xf32>
      %1452 = arith.addf %1449, %1451 : vector<8x128xf32>
      %cst_525 = arith.constant -0.112080455 : f32
      %1453 = vector.broadcast %cst_525 : f32 to vector<8x128xf32>
      %1454 = arith.mulf %80, %1453 : vector<8x128xf32>
      %1455 = arith.addf %1452, %1454 : vector<8x128xf32>
      %cst_526 = arith.constant 0.170231119 : f32
      %1456 = vector.broadcast %cst_526 : f32 to vector<8x128xf32>
      %1457 = arith.mulf %89, %1456 : vector<8x128xf32>
      %1458 = arith.addf %1455, %1457 : vector<8x128xf32>
      %cst_527 = arith.constant 0.062146157 : f32
      %1459 = vector.broadcast %cst_527 : f32 to vector<8x128xf32>
      %1460 = arith.mulf %98, %1459 : vector<8x128xf32>
      %1461 = arith.addf %1458, %1460 : vector<8x128xf32>
      %cst_528 = arith.constant -0.141885638 : f32
      %1462 = vector.broadcast %cst_528 : f32 to vector<8x128xf32>
      %1463 = arith.mulf %107, %1462 : vector<8x128xf32>
      %1464 = arith.addf %1461, %1463 : vector<8x128xf32>
      %cst_529 = arith.constant -0.160601273 : f32
      %1465 = vector.broadcast %cst_529 : f32 to vector<8x128xf32>
      %1466 = arith.mulf %116, %1465 : vector<8x128xf32>
      %1467 = arith.addf %1464, %1466 : vector<8x128xf32>
      %cst_530 = arith.constant -0.164713204 : f32
      %1468 = vector.broadcast %cst_530 : f32 to vector<8x128xf32>
      %1469 = arith.mulf %125, %1468 : vector<8x128xf32>
      %1470 = arith.addf %1467, %1469 : vector<8x128xf32>
      %cst_531 = arith.constant 0.178253487 : f32
      %1471 = vector.broadcast %cst_531 : f32 to vector<8x128xf32>
      %1472 = arith.mulf %134, %1471 : vector<8x128xf32>
      %1473 = arith.addf %1470, %1472 : vector<8x128xf32>
      %cst_532 = arith.constant -9.915950e-02 : f32
      %1474 = vector.broadcast %cst_532 : f32 to vector<8x128xf32>
      %1475 = arith.mulf %143, %1474 : vector<8x128xf32>
      %1476 = arith.addf %1473, %1475 : vector<8x128xf32>
      %cst_533 = arith.constant 0.119376756 : f32
      %1477 = vector.broadcast %cst_533 : f32 to vector<8x128xf32>
      %1478 = arith.mulf %152, %1477 : vector<8x128xf32>
      %1479 = arith.addf %1476, %1478 : vector<8x128xf32>
      %cst_534 = arith.constant 0.0719235763 : f32
      %1480 = vector.broadcast %cst_534 : f32 to vector<8x128xf32>
      %1481 = arith.mulf %161, %1480 : vector<8x128xf32>
      %1482 = arith.addf %1479, %1481 : vector<8x128xf32>
      %cst_535 = arith.constant -0.148084089 : f32
      %1483 = vector.broadcast %cst_535 : f32 to vector<8x128xf32>
      %1484 = arith.mulf %170, %1483 : vector<8x128xf32>
      %1485 = arith.addf %1482, %1484 : vector<8x128xf32>
      %cst_536 = arith.constant -0.13440834 : f32
      %1486 = vector.broadcast %cst_536 : f32 to vector<8x128xf32>
      %1487 = arith.mulf %179, %1486 : vector<8x128xf32>
      %1488 = arith.addf %1485, %1487 : vector<8x128xf32>
      %cst_537 = arith.constant -0.116525248 : f32
      %1489 = vector.broadcast %cst_537 : f32 to vector<8x128xf32>
      %1490 = arith.mulf %188, %1489 : vector<8x128xf32>
      %1491 = arith.addf %1488, %1490 : vector<8x128xf32>
      %cst_538 = arith.constant 0.175337642 : f32
      %1492 = vector.broadcast %cst_538 : f32 to vector<8x128xf32>
      %1493 = arith.mulf %197, %1492 : vector<8x128xf32>
      %1494 = arith.addf %1491, %1493 : vector<8x128xf32>
      %cst_539 = arith.constant -0.11551442 : f32
      %1495 = vector.broadcast %cst_539 : f32 to vector<8x128xf32>
      %1496 = arith.mulf %206, %1495 : vector<8x128xf32>
      %1497 = arith.addf %1494, %1496 : vector<8x128xf32>
      %cst_540 = arith.constant -0.0781535878 : f32
      %1498 = vector.broadcast %cst_540 : f32 to vector<8x128xf32>
      %1499 = arith.mulf %215, %1498 : vector<8x128xf32>
      %1500 = arith.addf %1497, %1499 : vector<8x128xf32>
      %cst_541 = arith.constant 0.0433167405 : f32
      %1501 = vector.broadcast %cst_541 : f32 to vector<8x128xf32>
      %1502 = arith.mulf %224, %1501 : vector<8x128xf32>
      %1503 = arith.addf %1500, %1502 : vector<8x128xf32>
      %cst_542 = arith.constant -0.0747839138 : f32
      %1504 = vector.broadcast %cst_542 : f32 to vector<8x128xf32>
      %1505 = arith.mulf %233, %1504 : vector<8x128xf32>
      %1506 = arith.addf %1503, %1505 : vector<8x128xf32>
      %cst_543 = arith.constant -4.224140e-02 : f32
      %1507 = vector.broadcast %cst_543 : f32 to vector<8x128xf32>
      %1508 = arith.mulf %242, %1507 : vector<8x128xf32>
      %1509 = arith.addf %1506, %1508 : vector<8x128xf32>
      %cst_544 = arith.constant 0.0295768771 : f32
      %1510 = vector.broadcast %cst_544 : f32 to vector<8x128xf32>
      %1511 = arith.mulf %251, %1510 : vector<8x128xf32>
      %1512 = arith.addf %1509, %1511 : vector<8x128xf32>
      %cst_545 = arith.constant -0.178217962 : f32
      %1513 = vector.broadcast %cst_545 : f32 to vector<8x128xf32>
      %1514 = arith.mulf %260, %1513 : vector<8x128xf32>
      %1515 = arith.addf %1512, %1514 : vector<8x128xf32>
      %cst_546 = arith.constant -0.18236202 : f32
      %1516 = vector.broadcast %cst_546 : f32 to vector<8x128xf32>
      %1517 = arith.mulf %269, %1516 : vector<8x128xf32>
      %1518 = arith.addf %1515, %1517 : vector<8x128xf32>
      %cst_547 = arith.constant -0.163609132 : f32
      %1519 = vector.broadcast %cst_547 : f32 to vector<8x128xf32>
      %1520 = arith.mulf %278, %1519 : vector<8x128xf32>
      %1521 = arith.addf %1518, %1520 : vector<8x128xf32>
      %cst_548 = arith.constant 0.000000e+00 : f32
      %1522 = vector.broadcast %cst_548 : f32 to vector<8x128xf32>
      %1523 = arith.cmpf ogt, %1521, %1522 : vector<8x128xf32>
      %cst_549 = arith.constant 1.000000e-01 : f32
      %1524 = vector.broadcast %cst_549 : f32 to vector<8x128xf32>
      %1525 = arith.mulf %1524, %1521 : vector<8x128xf32>
      %1526 = arith.select %1523, %1521, %1525 : vector<8x128xi1>, vector<8x128xf32>
      %cst_550 = arith.constant 0.139437646 : f32
      %1527 = vector.broadcast %cst_550 : f32 to vector<8x128xf32>
      %cst_551 = arith.constant -0.062766321 : f32
      %1528 = vector.broadcast %cst_551 : f32 to vector<8x128xf32>
      %1529 = arith.mulf %17, %1528 : vector<8x128xf32>
      %1530 = arith.addf %1527, %1529 : vector<8x128xf32>
      %cst_552 = arith.constant -0.0725000277 : f32
      %1531 = vector.broadcast %cst_552 : f32 to vector<8x128xf32>
      %1532 = arith.mulf %26, %1531 : vector<8x128xf32>
      %1533 = arith.addf %1530, %1532 : vector<8x128xf32>
      %cst_553 = arith.constant 0.119101346 : f32
      %1534 = vector.broadcast %cst_553 : f32 to vector<8x128xf32>
      %1535 = arith.mulf %35, %1534 : vector<8x128xf32>
      %1536 = arith.addf %1533, %1535 : vector<8x128xf32>
      %cst_554 = arith.constant -0.179176912 : f32
      %1537 = vector.broadcast %cst_554 : f32 to vector<8x128xf32>
      %1538 = arith.mulf %44, %1537 : vector<8x128xf32>
      %1539 = arith.addf %1536, %1538 : vector<8x128xf32>
      %cst_555 = arith.constant -0.177731052 : f32
      %1540 = vector.broadcast %cst_555 : f32 to vector<8x128xf32>
      %1541 = arith.mulf %53, %1540 : vector<8x128xf32>
      %1542 = arith.addf %1539, %1541 : vector<8x128xf32>
      %cst_556 = arith.constant -0.13528049 : f32
      %1543 = vector.broadcast %cst_556 : f32 to vector<8x128xf32>
      %1544 = arith.mulf %62, %1543 : vector<8x128xf32>
      %1545 = arith.addf %1542, %1544 : vector<8x128xf32>
      %cst_557 = arith.constant 0.111702181 : f32
      %1546 = vector.broadcast %cst_557 : f32 to vector<8x128xf32>
      %1547 = arith.mulf %71, %1546 : vector<8x128xf32>
      %1548 = arith.addf %1545, %1547 : vector<8x128xf32>
      %cst_558 = arith.constant -0.139816046 : f32
      %1549 = vector.broadcast %cst_558 : f32 to vector<8x128xf32>
      %1550 = arith.mulf %80, %1549 : vector<8x128xf32>
      %1551 = arith.addf %1548, %1550 : vector<8x128xf32>
      %cst_559 = arith.constant -0.0394684672 : f32
      %1552 = vector.broadcast %cst_559 : f32 to vector<8x128xf32>
      %1553 = arith.mulf %89, %1552 : vector<8x128xf32>
      %1554 = arith.addf %1551, %1553 : vector<8x128xf32>
      %cst_560 = arith.constant 0.0946581587 : f32
      %1555 = vector.broadcast %cst_560 : f32 to vector<8x128xf32>
      %1556 = arith.mulf %98, %1555 : vector<8x128xf32>
      %1557 = arith.addf %1554, %1556 : vector<8x128xf32>
      %cst_561 = arith.constant 0.00276292115 : f32
      %1558 = vector.broadcast %cst_561 : f32 to vector<8x128xf32>
      %1559 = arith.mulf %107, %1558 : vector<8x128xf32>
      %1560 = arith.addf %1557, %1559 : vector<8x128xf32>
      %cst_562 = arith.constant -0.0412399694 : f32
      %1561 = vector.broadcast %cst_562 : f32 to vector<8x128xf32>
      %1562 = arith.mulf %116, %1561 : vector<8x128xf32>
      %1563 = arith.addf %1560, %1562 : vector<8x128xf32>
      %cst_563 = arith.constant -0.140145868 : f32
      %1564 = vector.broadcast %cst_563 : f32 to vector<8x128xf32>
      %1565 = arith.mulf %125, %1564 : vector<8x128xf32>
      %1566 = arith.addf %1563, %1565 : vector<8x128xf32>
      %cst_564 = arith.constant 0.0566095226 : f32
      %1567 = vector.broadcast %cst_564 : f32 to vector<8x128xf32>
      %1568 = arith.mulf %134, %1567 : vector<8x128xf32>
      %1569 = arith.addf %1566, %1568 : vector<8x128xf32>
      %cst_565 = arith.constant -0.178374708 : f32
      %1570 = vector.broadcast %cst_565 : f32 to vector<8x128xf32>
      %1571 = arith.mulf %143, %1570 : vector<8x128xf32>
      %1572 = arith.addf %1569, %1571 : vector<8x128xf32>
      %cst_566 = arith.constant -0.0724167153 : f32
      %1573 = vector.broadcast %cst_566 : f32 to vector<8x128xf32>
      %1574 = arith.mulf %152, %1573 : vector<8x128xf32>
      %1575 = arith.addf %1572, %1574 : vector<8x128xf32>
      %cst_567 = arith.constant -0.0833359808 : f32
      %1576 = vector.broadcast %cst_567 : f32 to vector<8x128xf32>
      %1577 = arith.mulf %161, %1576 : vector<8x128xf32>
      %1578 = arith.addf %1575, %1577 : vector<8x128xf32>
      %cst_568 = arith.constant -0.0821827203 : f32
      %1579 = vector.broadcast %cst_568 : f32 to vector<8x128xf32>
      %1580 = arith.mulf %170, %1579 : vector<8x128xf32>
      %1581 = arith.addf %1578, %1580 : vector<8x128xf32>
      %cst_569 = arith.constant -0.0461036898 : f32
      %1582 = vector.broadcast %cst_569 : f32 to vector<8x128xf32>
      %1583 = arith.mulf %179, %1582 : vector<8x128xf32>
      %1584 = arith.addf %1581, %1583 : vector<8x128xf32>
      %cst_570 = arith.constant -0.177742198 : f32
      %1585 = vector.broadcast %cst_570 : f32 to vector<8x128xf32>
      %1586 = arith.mulf %188, %1585 : vector<8x128xf32>
      %1587 = arith.addf %1584, %1586 : vector<8x128xf32>
      %cst_571 = arith.constant -3.897080e-02 : f32
      %1588 = vector.broadcast %cst_571 : f32 to vector<8x128xf32>
      %1589 = arith.mulf %197, %1588 : vector<8x128xf32>
      %1590 = arith.addf %1587, %1589 : vector<8x128xf32>
      %cst_572 = arith.constant 0.0618042797 : f32
      %1591 = vector.broadcast %cst_572 : f32 to vector<8x128xf32>
      %1592 = arith.mulf %206, %1591 : vector<8x128xf32>
      %1593 = arith.addf %1590, %1592 : vector<8x128xf32>
      %cst_573 = arith.constant 0.162268043 : f32
      %1594 = vector.broadcast %cst_573 : f32 to vector<8x128xf32>
      %1595 = arith.mulf %215, %1594 : vector<8x128xf32>
      %1596 = arith.addf %1593, %1595 : vector<8x128xf32>
      %cst_574 = arith.constant -0.0863210335 : f32
      %1597 = vector.broadcast %cst_574 : f32 to vector<8x128xf32>
      %1598 = arith.mulf %224, %1597 : vector<8x128xf32>
      %1599 = arith.addf %1596, %1598 : vector<8x128xf32>
      %cst_575 = arith.constant 0.15383628 : f32
      %1600 = vector.broadcast %cst_575 : f32 to vector<8x128xf32>
      %1601 = arith.mulf %233, %1600 : vector<8x128xf32>
      %1602 = arith.addf %1599, %1601 : vector<8x128xf32>
      %cst_576 = arith.constant 0.100682497 : f32
      %1603 = vector.broadcast %cst_576 : f32 to vector<8x128xf32>
      %1604 = arith.mulf %242, %1603 : vector<8x128xf32>
      %1605 = arith.addf %1602, %1604 : vector<8x128xf32>
      %cst_577 = arith.constant 0.0646511242 : f32
      %1606 = vector.broadcast %cst_577 : f32 to vector<8x128xf32>
      %1607 = arith.mulf %251, %1606 : vector<8x128xf32>
      %1608 = arith.addf %1605, %1607 : vector<8x128xf32>
      %cst_578 = arith.constant -0.0704395771 : f32
      %1609 = vector.broadcast %cst_578 : f32 to vector<8x128xf32>
      %1610 = arith.mulf %260, %1609 : vector<8x128xf32>
      %1611 = arith.addf %1608, %1610 : vector<8x128xf32>
      %cst_579 = arith.constant -0.0753974095 : f32
      %1612 = vector.broadcast %cst_579 : f32 to vector<8x128xf32>
      %1613 = arith.mulf %269, %1612 : vector<8x128xf32>
      %1614 = arith.addf %1611, %1613 : vector<8x128xf32>
      %cst_580 = arith.constant 0.104815714 : f32
      %1615 = vector.broadcast %cst_580 : f32 to vector<8x128xf32>
      %1616 = arith.mulf %278, %1615 : vector<8x128xf32>
      %1617 = arith.addf %1614, %1616 : vector<8x128xf32>
      %cst_581 = arith.constant 0.000000e+00 : f32
      %1618 = vector.broadcast %cst_581 : f32 to vector<8x128xf32>
      %1619 = arith.cmpf ogt, %1617, %1618 : vector<8x128xf32>
      %cst_582 = arith.constant 1.000000e-01 : f32
      %1620 = vector.broadcast %cst_582 : f32 to vector<8x128xf32>
      %1621 = arith.mulf %1620, %1617 : vector<8x128xf32>
      %1622 = arith.select %1619, %1617, %1621 : vector<8x128xi1>, vector<8x128xf32>
      %cst_583 = arith.constant -0.00645679841 : f32
      %1623 = vector.broadcast %cst_583 : f32 to vector<8x128xf32>
      %cst_584 = arith.constant -0.075789474 : f32
      %1624 = vector.broadcast %cst_584 : f32 to vector<8x128xf32>
      %1625 = arith.mulf %17, %1624 : vector<8x128xf32>
      %1626 = arith.addf %1623, %1625 : vector<8x128xf32>
      %cst_585 = arith.constant -0.148959637 : f32
      %1627 = vector.broadcast %cst_585 : f32 to vector<8x128xf32>
      %1628 = arith.mulf %26, %1627 : vector<8x128xf32>
      %1629 = arith.addf %1626, %1628 : vector<8x128xf32>
      %cst_586 = arith.constant 0.1654962 : f32
      %1630 = vector.broadcast %cst_586 : f32 to vector<8x128xf32>
      %1631 = arith.mulf %35, %1630 : vector<8x128xf32>
      %1632 = arith.addf %1629, %1631 : vector<8x128xf32>
      %cst_587 = arith.constant -0.0159548428 : f32
      %1633 = vector.broadcast %cst_587 : f32 to vector<8x128xf32>
      %1634 = arith.mulf %44, %1633 : vector<8x128xf32>
      %1635 = arith.addf %1632, %1634 : vector<8x128xf32>
      %cst_588 = arith.constant 0.018282691 : f32
      %1636 = vector.broadcast %cst_588 : f32 to vector<8x128xf32>
      %1637 = arith.mulf %53, %1636 : vector<8x128xf32>
      %1638 = arith.addf %1635, %1637 : vector<8x128xf32>
      %cst_589 = arith.constant -0.0507102422 : f32
      %1639 = vector.broadcast %cst_589 : f32 to vector<8x128xf32>
      %1640 = arith.mulf %62, %1639 : vector<8x128xf32>
      %1641 = arith.addf %1638, %1640 : vector<8x128xf32>
      %cst_590 = arith.constant 0.159178957 : f32
      %1642 = vector.broadcast %cst_590 : f32 to vector<8x128xf32>
      %1643 = arith.mulf %71, %1642 : vector<8x128xf32>
      %1644 = arith.addf %1641, %1643 : vector<8x128xf32>
      %cst_591 = arith.constant -0.172065347 : f32
      %1645 = vector.broadcast %cst_591 : f32 to vector<8x128xf32>
      %1646 = arith.mulf %80, %1645 : vector<8x128xf32>
      %1647 = arith.addf %1644, %1646 : vector<8x128xf32>
      %cst_592 = arith.constant -0.0155854551 : f32
      %1648 = vector.broadcast %cst_592 : f32 to vector<8x128xf32>
      %1649 = arith.mulf %89, %1648 : vector<8x128xf32>
      %1650 = arith.addf %1647, %1649 : vector<8x128xf32>
      %cst_593 = arith.constant 0.158008501 : f32
      %1651 = vector.broadcast %cst_593 : f32 to vector<8x128xf32>
      %1652 = arith.mulf %98, %1651 : vector<8x128xf32>
      %1653 = arith.addf %1650, %1652 : vector<8x128xf32>
      %cst_594 = arith.constant 0.0899700298 : f32
      %1654 = vector.broadcast %cst_594 : f32 to vector<8x128xf32>
      %1655 = arith.mulf %107, %1654 : vector<8x128xf32>
      %1656 = arith.addf %1653, %1655 : vector<8x128xf32>
      %cst_595 = arith.constant 0.0149903698 : f32
      %1657 = vector.broadcast %cst_595 : f32 to vector<8x128xf32>
      %1658 = arith.mulf %116, %1657 : vector<8x128xf32>
      %1659 = arith.addf %1656, %1658 : vector<8x128xf32>
      %cst_596 = arith.constant 0.00960199162 : f32
      %1660 = vector.broadcast %cst_596 : f32 to vector<8x128xf32>
      %1661 = arith.mulf %125, %1660 : vector<8x128xf32>
      %1662 = arith.addf %1659, %1661 : vector<8x128xf32>
      %cst_597 = arith.constant -0.00390355708 : f32
      %1663 = vector.broadcast %cst_597 : f32 to vector<8x128xf32>
      %1664 = arith.mulf %134, %1663 : vector<8x128xf32>
      %1665 = arith.addf %1662, %1664 : vector<8x128xf32>
      %cst_598 = arith.constant 0.0273789186 : f32
      %1666 = vector.broadcast %cst_598 : f32 to vector<8x128xf32>
      %1667 = arith.mulf %143, %1666 : vector<8x128xf32>
      %1668 = arith.addf %1665, %1667 : vector<8x128xf32>
      %cst_599 = arith.constant -0.145425811 : f32
      %1669 = vector.broadcast %cst_599 : f32 to vector<8x128xf32>
      %1670 = arith.mulf %152, %1669 : vector<8x128xf32>
      %1671 = arith.addf %1668, %1670 : vector<8x128xf32>
      %cst_600 = arith.constant 0.159805954 : f32
      %1672 = vector.broadcast %cst_600 : f32 to vector<8x128xf32>
      %1673 = arith.mulf %161, %1672 : vector<8x128xf32>
      %1674 = arith.addf %1671, %1673 : vector<8x128xf32>
      %cst_601 = arith.constant -0.116043732 : f32
      %1675 = vector.broadcast %cst_601 : f32 to vector<8x128xf32>
      %1676 = arith.mulf %170, %1675 : vector<8x128xf32>
      %1677 = arith.addf %1674, %1676 : vector<8x128xf32>
      %cst_602 = arith.constant -0.028480161 : f32
      %1678 = vector.broadcast %cst_602 : f32 to vector<8x128xf32>
      %1679 = arith.mulf %179, %1678 : vector<8x128xf32>
      %1680 = arith.addf %1677, %1679 : vector<8x128xf32>
      %cst_603 = arith.constant -0.0380907729 : f32
      %1681 = vector.broadcast %cst_603 : f32 to vector<8x128xf32>
      %1682 = arith.mulf %188, %1681 : vector<8x128xf32>
      %1683 = arith.addf %1680, %1682 : vector<8x128xf32>
      %cst_604 = arith.constant -0.0844336524 : f32
      %1684 = vector.broadcast %cst_604 : f32 to vector<8x128xf32>
      %1685 = arith.mulf %197, %1684 : vector<8x128xf32>
      %1686 = arith.addf %1683, %1685 : vector<8x128xf32>
      %cst_605 = arith.constant -0.0964723601 : f32
      %1687 = vector.broadcast %cst_605 : f32 to vector<8x128xf32>
      %1688 = arith.mulf %206, %1687 : vector<8x128xf32>
      %1689 = arith.addf %1686, %1688 : vector<8x128xf32>
      %cst_606 = arith.constant 0.180053681 : f32
      %1690 = vector.broadcast %cst_606 : f32 to vector<8x128xf32>
      %1691 = arith.mulf %215, %1690 : vector<8x128xf32>
      %1692 = arith.addf %1689, %1691 : vector<8x128xf32>
      %cst_607 = arith.constant -0.155350059 : f32
      %1693 = vector.broadcast %cst_607 : f32 to vector<8x128xf32>
      %1694 = arith.mulf %224, %1693 : vector<8x128xf32>
      %1695 = arith.addf %1692, %1694 : vector<8x128xf32>
      %cst_608 = arith.constant 0.141576588 : f32
      %1696 = vector.broadcast %cst_608 : f32 to vector<8x128xf32>
      %1697 = arith.mulf %233, %1696 : vector<8x128xf32>
      %1698 = arith.addf %1695, %1697 : vector<8x128xf32>
      %cst_609 = arith.constant -0.167911932 : f32
      %1699 = vector.broadcast %cst_609 : f32 to vector<8x128xf32>
      %1700 = arith.mulf %242, %1699 : vector<8x128xf32>
      %1701 = arith.addf %1698, %1700 : vector<8x128xf32>
      %cst_610 = arith.constant 0.170256361 : f32
      %1702 = vector.broadcast %cst_610 : f32 to vector<8x128xf32>
      %1703 = arith.mulf %251, %1702 : vector<8x128xf32>
      %1704 = arith.addf %1701, %1703 : vector<8x128xf32>
      %cst_611 = arith.constant 0.169757605 : f32
      %1705 = vector.broadcast %cst_611 : f32 to vector<8x128xf32>
      %1706 = arith.mulf %260, %1705 : vector<8x128xf32>
      %1707 = arith.addf %1704, %1706 : vector<8x128xf32>
      %cst_612 = arith.constant -0.0036431225 : f32
      %1708 = vector.broadcast %cst_612 : f32 to vector<8x128xf32>
      %1709 = arith.mulf %269, %1708 : vector<8x128xf32>
      %1710 = arith.addf %1707, %1709 : vector<8x128xf32>
      %cst_613 = arith.constant -0.128652796 : f32
      %1711 = vector.broadcast %cst_613 : f32 to vector<8x128xf32>
      %1712 = arith.mulf %278, %1711 : vector<8x128xf32>
      %1713 = arith.addf %1710, %1712 : vector<8x128xf32>
      %cst_614 = arith.constant 0.000000e+00 : f32
      %1714 = vector.broadcast %cst_614 : f32 to vector<8x128xf32>
      %1715 = arith.cmpf ogt, %1713, %1714 : vector<8x128xf32>
      %cst_615 = arith.constant 1.000000e-01 : f32
      %1716 = vector.broadcast %cst_615 : f32 to vector<8x128xf32>
      %1717 = arith.mulf %1716, %1713 : vector<8x128xf32>
      %1718 = arith.select %1715, %1713, %1717 : vector<8x128xi1>, vector<8x128xf32>
      %cst_616 = arith.constant -0.064207606 : f32
      %1719 = vector.broadcast %cst_616 : f32 to vector<8x128xf32>
      %cst_617 = arith.constant -0.15130429 : f32
      %1720 = vector.broadcast %cst_617 : f32 to vector<8x128xf32>
      %1721 = arith.mulf %17, %1720 : vector<8x128xf32>
      %1722 = arith.addf %1719, %1721 : vector<8x128xf32>
      %cst_618 = arith.constant -0.178049028 : f32
      %1723 = vector.broadcast %cst_618 : f32 to vector<8x128xf32>
      %1724 = arith.mulf %26, %1723 : vector<8x128xf32>
      %1725 = arith.addf %1722, %1724 : vector<8x128xf32>
      %cst_619 = arith.constant 0.131201476 : f32
      %1726 = vector.broadcast %cst_619 : f32 to vector<8x128xf32>
      %1727 = arith.mulf %35, %1726 : vector<8x128xf32>
      %1728 = arith.addf %1725, %1727 : vector<8x128xf32>
      %cst_620 = arith.constant 0.121684052 : f32
      %1729 = vector.broadcast %cst_620 : f32 to vector<8x128xf32>
      %1730 = arith.mulf %44, %1729 : vector<8x128xf32>
      %1731 = arith.addf %1728, %1730 : vector<8x128xf32>
      %cst_621 = arith.constant -0.0526122898 : f32
      %1732 = vector.broadcast %cst_621 : f32 to vector<8x128xf32>
      %1733 = arith.mulf %53, %1732 : vector<8x128xf32>
      %1734 = arith.addf %1731, %1733 : vector<8x128xf32>
      %cst_622 = arith.constant 0.057952743 : f32
      %1735 = vector.broadcast %cst_622 : f32 to vector<8x128xf32>
      %1736 = arith.mulf %62, %1735 : vector<8x128xf32>
      %1737 = arith.addf %1734, %1736 : vector<8x128xf32>
      %cst_623 = arith.constant 0.174066901 : f32
      %1738 = vector.broadcast %cst_623 : f32 to vector<8x128xf32>
      %1739 = arith.mulf %71, %1738 : vector<8x128xf32>
      %1740 = arith.addf %1737, %1739 : vector<8x128xf32>
      %cst_624 = arith.constant -0.0206884127 : f32
      %1741 = vector.broadcast %cst_624 : f32 to vector<8x128xf32>
      %1742 = arith.mulf %80, %1741 : vector<8x128xf32>
      %1743 = arith.addf %1740, %1742 : vector<8x128xf32>
      %cst_625 = arith.constant 0.0890487805 : f32
      %1744 = vector.broadcast %cst_625 : f32 to vector<8x128xf32>
      %1745 = arith.mulf %89, %1744 : vector<8x128xf32>
      %1746 = arith.addf %1743, %1745 : vector<8x128xf32>
      %cst_626 = arith.constant 0.158166558 : f32
      %1747 = vector.broadcast %cst_626 : f32 to vector<8x128xf32>
      %1748 = arith.mulf %98, %1747 : vector<8x128xf32>
      %1749 = arith.addf %1746, %1748 : vector<8x128xf32>
      %cst_627 = arith.constant -0.104999363 : f32
      %1750 = vector.broadcast %cst_627 : f32 to vector<8x128xf32>
      %1751 = arith.mulf %107, %1750 : vector<8x128xf32>
      %1752 = arith.addf %1749, %1751 : vector<8x128xf32>
      %cst_628 = arith.constant 0.064284876 : f32
      %1753 = vector.broadcast %cst_628 : f32 to vector<8x128xf32>
      %1754 = arith.mulf %116, %1753 : vector<8x128xf32>
      %1755 = arith.addf %1752, %1754 : vector<8x128xf32>
      %cst_629 = arith.constant 0.00855172239 : f32
      %1756 = vector.broadcast %cst_629 : f32 to vector<8x128xf32>
      %1757 = arith.mulf %125, %1756 : vector<8x128xf32>
      %1758 = arith.addf %1755, %1757 : vector<8x128xf32>
      %cst_630 = arith.constant -0.00288206013 : f32
      %1759 = vector.broadcast %cst_630 : f32 to vector<8x128xf32>
      %1760 = arith.mulf %134, %1759 : vector<8x128xf32>
      %1761 = arith.addf %1758, %1760 : vector<8x128xf32>
      %cst_631 = arith.constant -0.102512889 : f32
      %1762 = vector.broadcast %cst_631 : f32 to vector<8x128xf32>
      %1763 = arith.mulf %143, %1762 : vector<8x128xf32>
      %1764 = arith.addf %1761, %1763 : vector<8x128xf32>
      %cst_632 = arith.constant 0.0598440804 : f32
      %1765 = vector.broadcast %cst_632 : f32 to vector<8x128xf32>
      %1766 = arith.mulf %152, %1765 : vector<8x128xf32>
      %1767 = arith.addf %1764, %1766 : vector<8x128xf32>
      %cst_633 = arith.constant 0.00713898614 : f32
      %1768 = vector.broadcast %cst_633 : f32 to vector<8x128xf32>
      %1769 = arith.mulf %161, %1768 : vector<8x128xf32>
      %1770 = arith.addf %1767, %1769 : vector<8x128xf32>
      %cst_634 = arith.constant 0.0503809899 : f32
      %1771 = vector.broadcast %cst_634 : f32 to vector<8x128xf32>
      %1772 = arith.mulf %170, %1771 : vector<8x128xf32>
      %1773 = arith.addf %1770, %1772 : vector<8x128xf32>
      %cst_635 = arith.constant 0.112398565 : f32
      %1774 = vector.broadcast %cst_635 : f32 to vector<8x128xf32>
      %1775 = arith.mulf %179, %1774 : vector<8x128xf32>
      %1776 = arith.addf %1773, %1775 : vector<8x128xf32>
      %cst_636 = arith.constant 0.0828724876 : f32
      %1777 = vector.broadcast %cst_636 : f32 to vector<8x128xf32>
      %1778 = arith.mulf %188, %1777 : vector<8x128xf32>
      %1779 = arith.addf %1776, %1778 : vector<8x128xf32>
      %cst_637 = arith.constant -0.0525293685 : f32
      %1780 = vector.broadcast %cst_637 : f32 to vector<8x128xf32>
      %1781 = arith.mulf %197, %1780 : vector<8x128xf32>
      %1782 = arith.addf %1779, %1781 : vector<8x128xf32>
      %cst_638 = arith.constant 6.058760e-02 : f32
      %1783 = vector.broadcast %cst_638 : f32 to vector<8x128xf32>
      %1784 = arith.mulf %206, %1783 : vector<8x128xf32>
      %1785 = arith.addf %1782, %1784 : vector<8x128xf32>
      %cst_639 = arith.constant 0.0219636839 : f32
      %1786 = vector.broadcast %cst_639 : f32 to vector<8x128xf32>
      %1787 = arith.mulf %215, %1786 : vector<8x128xf32>
      %1788 = arith.addf %1785, %1787 : vector<8x128xf32>
      %cst_640 = arith.constant 0.110179409 : f32
      %1789 = vector.broadcast %cst_640 : f32 to vector<8x128xf32>
      %1790 = arith.mulf %224, %1789 : vector<8x128xf32>
      %1791 = arith.addf %1788, %1790 : vector<8x128xf32>
      %cst_641 = arith.constant -0.119223267 : f32
      %1792 = vector.broadcast %cst_641 : f32 to vector<8x128xf32>
      %1793 = arith.mulf %233, %1792 : vector<8x128xf32>
      %1794 = arith.addf %1791, %1793 : vector<8x128xf32>
      %cst_642 = arith.constant 0.133258477 : f32
      %1795 = vector.broadcast %cst_642 : f32 to vector<8x128xf32>
      %1796 = arith.mulf %242, %1795 : vector<8x128xf32>
      %1797 = arith.addf %1794, %1796 : vector<8x128xf32>
      %cst_643 = arith.constant 0.0573824681 : f32
      %1798 = vector.broadcast %cst_643 : f32 to vector<8x128xf32>
      %1799 = arith.mulf %251, %1798 : vector<8x128xf32>
      %1800 = arith.addf %1797, %1799 : vector<8x128xf32>
      %cst_644 = arith.constant 0.0963928326 : f32
      %1801 = vector.broadcast %cst_644 : f32 to vector<8x128xf32>
      %1802 = arith.mulf %260, %1801 : vector<8x128xf32>
      %1803 = arith.addf %1800, %1802 : vector<8x128xf32>
      %cst_645 = arith.constant -0.0415864177 : f32
      %1804 = vector.broadcast %cst_645 : f32 to vector<8x128xf32>
      %1805 = arith.mulf %269, %1804 : vector<8x128xf32>
      %1806 = arith.addf %1803, %1805 : vector<8x128xf32>
      %cst_646 = arith.constant -0.144108057 : f32
      %1807 = vector.broadcast %cst_646 : f32 to vector<8x128xf32>
      %1808 = arith.mulf %278, %1807 : vector<8x128xf32>
      %1809 = arith.addf %1806, %1808 : vector<8x128xf32>
      %cst_647 = arith.constant 0.000000e+00 : f32
      %1810 = vector.broadcast %cst_647 : f32 to vector<8x128xf32>
      %1811 = arith.cmpf ogt, %1809, %1810 : vector<8x128xf32>
      %cst_648 = arith.constant 1.000000e-01 : f32
      %1812 = vector.broadcast %cst_648 : f32 to vector<8x128xf32>
      %1813 = arith.mulf %1812, %1809 : vector<8x128xf32>
      %1814 = arith.select %1811, %1809, %1813 : vector<8x128xi1>, vector<8x128xf32>
      %cst_649 = arith.constant -0.0677302405 : f32
      %1815 = vector.broadcast %cst_649 : f32 to vector<8x128xf32>
      %cst_650 = arith.constant -0.0394564532 : f32
      %1816 = vector.broadcast %cst_650 : f32 to vector<8x128xf32>
      %1817 = arith.mulf %17, %1816 : vector<8x128xf32>
      %1818 = arith.addf %1815, %1817 : vector<8x128xf32>
      %cst_651 = arith.constant 0.140778735 : f32
      %1819 = vector.broadcast %cst_651 : f32 to vector<8x128xf32>
      %1820 = arith.mulf %26, %1819 : vector<8x128xf32>
      %1821 = arith.addf %1818, %1820 : vector<8x128xf32>
      %cst_652 = arith.constant -0.0106626218 : f32
      %1822 = vector.broadcast %cst_652 : f32 to vector<8x128xf32>
      %1823 = arith.mulf %35, %1822 : vector<8x128xf32>
      %1824 = arith.addf %1821, %1823 : vector<8x128xf32>
      %cst_653 = arith.constant 0.0203947648 : f32
      %1825 = vector.broadcast %cst_653 : f32 to vector<8x128xf32>
      %1826 = arith.mulf %44, %1825 : vector<8x128xf32>
      %1827 = arith.addf %1824, %1826 : vector<8x128xf32>
      %cst_654 = arith.constant 0.0418596491 : f32
      %1828 = vector.broadcast %cst_654 : f32 to vector<8x128xf32>
      %1829 = arith.mulf %53, %1828 : vector<8x128xf32>
      %1830 = arith.addf %1827, %1829 : vector<8x128xf32>
      %cst_655 = arith.constant 0.0319141708 : f32
      %1831 = vector.broadcast %cst_655 : f32 to vector<8x128xf32>
      %1832 = arith.mulf %62, %1831 : vector<8x128xf32>
      %1833 = arith.addf %1830, %1832 : vector<8x128xf32>
      %cst_656 = arith.constant 0.0642399937 : f32
      %1834 = vector.broadcast %cst_656 : f32 to vector<8x128xf32>
      %1835 = arith.mulf %71, %1834 : vector<8x128xf32>
      %1836 = arith.addf %1833, %1835 : vector<8x128xf32>
      %cst_657 = arith.constant 0.0824424624 : f32
      %1837 = vector.broadcast %cst_657 : f32 to vector<8x128xf32>
      %1838 = arith.mulf %80, %1837 : vector<8x128xf32>
      %1839 = arith.addf %1836, %1838 : vector<8x128xf32>
      %cst_658 = arith.constant 0.145207435 : f32
      %1840 = vector.broadcast %cst_658 : f32 to vector<8x128xf32>
      %1841 = arith.mulf %89, %1840 : vector<8x128xf32>
      %1842 = arith.addf %1839, %1841 : vector<8x128xf32>
      %cst_659 = arith.constant -0.0937840044 : f32
      %1843 = vector.broadcast %cst_659 : f32 to vector<8x128xf32>
      %1844 = arith.mulf %98, %1843 : vector<8x128xf32>
      %1845 = arith.addf %1842, %1844 : vector<8x128xf32>
      %cst_660 = arith.constant -0.169648185 : f32
      %1846 = vector.broadcast %cst_660 : f32 to vector<8x128xf32>
      %1847 = arith.mulf %107, %1846 : vector<8x128xf32>
      %1848 = arith.addf %1845, %1847 : vector<8x128xf32>
      %cst_661 = arith.constant -0.0546905436 : f32
      %1849 = vector.broadcast %cst_661 : f32 to vector<8x128xf32>
      %1850 = arith.mulf %116, %1849 : vector<8x128xf32>
      %1851 = arith.addf %1848, %1850 : vector<8x128xf32>
      %cst_662 = arith.constant 0.122794524 : f32
      %1852 = vector.broadcast %cst_662 : f32 to vector<8x128xf32>
      %1853 = arith.mulf %125, %1852 : vector<8x128xf32>
      %1854 = arith.addf %1851, %1853 : vector<8x128xf32>
      %cst_663 = arith.constant -0.00963498745 : f32
      %1855 = vector.broadcast %cst_663 : f32 to vector<8x128xf32>
      %1856 = arith.mulf %134, %1855 : vector<8x128xf32>
      %1857 = arith.addf %1854, %1856 : vector<8x128xf32>
      %cst_664 = arith.constant 0.115259334 : f32
      %1858 = vector.broadcast %cst_664 : f32 to vector<8x128xf32>
      %1859 = arith.mulf %143, %1858 : vector<8x128xf32>
      %1860 = arith.addf %1857, %1859 : vector<8x128xf32>
      %cst_665 = arith.constant 0.0173882563 : f32
      %1861 = vector.broadcast %cst_665 : f32 to vector<8x128xf32>
      %1862 = arith.mulf %152, %1861 : vector<8x128xf32>
      %1863 = arith.addf %1860, %1862 : vector<8x128xf32>
      %cst_666 = arith.constant 0.0837035402 : f32
      %1864 = vector.broadcast %cst_666 : f32 to vector<8x128xf32>
      %1865 = arith.mulf %161, %1864 : vector<8x128xf32>
      %1866 = arith.addf %1863, %1865 : vector<8x128xf32>
      %cst_667 = arith.constant -0.0788264126 : f32
      %1867 = vector.broadcast %cst_667 : f32 to vector<8x128xf32>
      %1868 = arith.mulf %170, %1867 : vector<8x128xf32>
      %1869 = arith.addf %1866, %1868 : vector<8x128xf32>
      %cst_668 = arith.constant 0.156218201 : f32
      %1870 = vector.broadcast %cst_668 : f32 to vector<8x128xf32>
      %1871 = arith.mulf %179, %1870 : vector<8x128xf32>
      %1872 = arith.addf %1869, %1871 : vector<8x128xf32>
      %cst_669 = arith.constant 0.139919475 : f32
      %1873 = vector.broadcast %cst_669 : f32 to vector<8x128xf32>
      %1874 = arith.mulf %188, %1873 : vector<8x128xf32>
      %1875 = arith.addf %1872, %1874 : vector<8x128xf32>
      %cst_670 = arith.constant 0.00449254923 : f32
      %1876 = vector.broadcast %cst_670 : f32 to vector<8x128xf32>
      %1877 = arith.mulf %197, %1876 : vector<8x128xf32>
      %1878 = arith.addf %1875, %1877 : vector<8x128xf32>
      %cst_671 = arith.constant 0.0355578586 : f32
      %1879 = vector.broadcast %cst_671 : f32 to vector<8x128xf32>
      %1880 = arith.mulf %206, %1879 : vector<8x128xf32>
      %1881 = arith.addf %1878, %1880 : vector<8x128xf32>
      %cst_672 = arith.constant 0.0787762701 : f32
      %1882 = vector.broadcast %cst_672 : f32 to vector<8x128xf32>
      %1883 = arith.mulf %215, %1882 : vector<8x128xf32>
      %1884 = arith.addf %1881, %1883 : vector<8x128xf32>
      %cst_673 = arith.constant 0.0388608463 : f32
      %1885 = vector.broadcast %cst_673 : f32 to vector<8x128xf32>
      %1886 = arith.mulf %224, %1885 : vector<8x128xf32>
      %1887 = arith.addf %1884, %1886 : vector<8x128xf32>
      %cst_674 = arith.constant -0.180310979 : f32
      %1888 = vector.broadcast %cst_674 : f32 to vector<8x128xf32>
      %1889 = arith.mulf %233, %1888 : vector<8x128xf32>
      %1890 = arith.addf %1887, %1889 : vector<8x128xf32>
      %cst_675 = arith.constant 0.0397792645 : f32
      %1891 = vector.broadcast %cst_675 : f32 to vector<8x128xf32>
      %1892 = arith.mulf %242, %1891 : vector<8x128xf32>
      %1893 = arith.addf %1890, %1892 : vector<8x128xf32>
      %cst_676 = arith.constant 0.0294458102 : f32
      %1894 = vector.broadcast %cst_676 : f32 to vector<8x128xf32>
      %1895 = arith.mulf %251, %1894 : vector<8x128xf32>
      %1896 = arith.addf %1893, %1895 : vector<8x128xf32>
      %cst_677 = arith.constant -0.115467057 : f32
      %1897 = vector.broadcast %cst_677 : f32 to vector<8x128xf32>
      %1898 = arith.mulf %260, %1897 : vector<8x128xf32>
      %1899 = arith.addf %1896, %1898 : vector<8x128xf32>
      %cst_678 = arith.constant -0.0796479806 : f32
      %1900 = vector.broadcast %cst_678 : f32 to vector<8x128xf32>
      %1901 = arith.mulf %269, %1900 : vector<8x128xf32>
      %1902 = arith.addf %1899, %1901 : vector<8x128xf32>
      %cst_679 = arith.constant -0.159853622 : f32
      %1903 = vector.broadcast %cst_679 : f32 to vector<8x128xf32>
      %1904 = arith.mulf %278, %1903 : vector<8x128xf32>
      %1905 = arith.addf %1902, %1904 : vector<8x128xf32>
      %cst_680 = arith.constant 0.000000e+00 : f32
      %1906 = vector.broadcast %cst_680 : f32 to vector<8x128xf32>
      %1907 = arith.cmpf ogt, %1905, %1906 : vector<8x128xf32>
      %cst_681 = arith.constant 1.000000e-01 : f32
      %1908 = vector.broadcast %cst_681 : f32 to vector<8x128xf32>
      %1909 = arith.mulf %1908, %1905 : vector<8x128xf32>
      %1910 = arith.select %1907, %1905, %1909 : vector<8x128xi1>, vector<8x128xf32>
      %cst_682 = arith.constant -0.097904466 : f32
      %1911 = vector.broadcast %cst_682 : f32 to vector<8x128xf32>
      %cst_683 = arith.constant -0.063547574 : f32
      %1912 = vector.broadcast %cst_683 : f32 to vector<8x128xf32>
      %1913 = arith.mulf %17, %1912 : vector<8x128xf32>
      %1914 = arith.addf %1911, %1913 : vector<8x128xf32>
      %cst_684 = arith.constant -0.0306005497 : f32
      %1915 = vector.broadcast %cst_684 : f32 to vector<8x128xf32>
      %1916 = arith.mulf %26, %1915 : vector<8x128xf32>
      %1917 = arith.addf %1914, %1916 : vector<8x128xf32>
      %cst_685 = arith.constant -0.109766491 : f32
      %1918 = vector.broadcast %cst_685 : f32 to vector<8x128xf32>
      %1919 = arith.mulf %35, %1918 : vector<8x128xf32>
      %1920 = arith.addf %1917, %1919 : vector<8x128xf32>
      %cst_686 = arith.constant 0.055686228 : f32
      %1921 = vector.broadcast %cst_686 : f32 to vector<8x128xf32>
      %1922 = arith.mulf %44, %1921 : vector<8x128xf32>
      %1923 = arith.addf %1920, %1922 : vector<8x128xf32>
      %cst_687 = arith.constant 0.0378339514 : f32
      %1924 = vector.broadcast %cst_687 : f32 to vector<8x128xf32>
      %1925 = arith.mulf %53, %1924 : vector<8x128xf32>
      %1926 = arith.addf %1923, %1925 : vector<8x128xf32>
      %cst_688 = arith.constant -1.377300e-01 : f32
      %1927 = vector.broadcast %cst_688 : f32 to vector<8x128xf32>
      %1928 = arith.mulf %62, %1927 : vector<8x128xf32>
      %1929 = arith.addf %1926, %1928 : vector<8x128xf32>
      %cst_689 = arith.constant 0.0779152662 : f32
      %1930 = vector.broadcast %cst_689 : f32 to vector<8x128xf32>
      %1931 = arith.mulf %71, %1930 : vector<8x128xf32>
      %1932 = arith.addf %1929, %1931 : vector<8x128xf32>
      %cst_690 = arith.constant 0.117454506 : f32
      %1933 = vector.broadcast %cst_690 : f32 to vector<8x128xf32>
      %1934 = arith.mulf %80, %1933 : vector<8x128xf32>
      %1935 = arith.addf %1932, %1934 : vector<8x128xf32>
      %cst_691 = arith.constant -0.0817658454 : f32
      %1936 = vector.broadcast %cst_691 : f32 to vector<8x128xf32>
      %1937 = arith.mulf %89, %1936 : vector<8x128xf32>
      %1938 = arith.addf %1935, %1937 : vector<8x128xf32>
      %cst_692 = arith.constant -0.0902930647 : f32
      %1939 = vector.broadcast %cst_692 : f32 to vector<8x128xf32>
      %1940 = arith.mulf %98, %1939 : vector<8x128xf32>
      %1941 = arith.addf %1938, %1940 : vector<8x128xf32>
      %cst_693 = arith.constant 0.025743749 : f32
      %1942 = vector.broadcast %cst_693 : f32 to vector<8x128xf32>
      %1943 = arith.mulf %107, %1942 : vector<8x128xf32>
      %1944 = arith.addf %1941, %1943 : vector<8x128xf32>
      %cst_694 = arith.constant 0.0280026905 : f32
      %1945 = vector.broadcast %cst_694 : f32 to vector<8x128xf32>
      %1946 = arith.mulf %116, %1945 : vector<8x128xf32>
      %1947 = arith.addf %1944, %1946 : vector<8x128xf32>
      %cst_695 = arith.constant 0.0677393824 : f32
      %1948 = vector.broadcast %cst_695 : f32 to vector<8x128xf32>
      %1949 = arith.mulf %125, %1948 : vector<8x128xf32>
      %1950 = arith.addf %1947, %1949 : vector<8x128xf32>
      %cst_696 = arith.constant -0.12321724 : f32
      %1951 = vector.broadcast %cst_696 : f32 to vector<8x128xf32>
      %1952 = arith.mulf %134, %1951 : vector<8x128xf32>
      %1953 = arith.addf %1950, %1952 : vector<8x128xf32>
      %cst_697 = arith.constant 0.056607563 : f32
      %1954 = vector.broadcast %cst_697 : f32 to vector<8x128xf32>
      %1955 = arith.mulf %143, %1954 : vector<8x128xf32>
      %1956 = arith.addf %1953, %1955 : vector<8x128xf32>
      %cst_698 = arith.constant -0.00834008399 : f32
      %1957 = vector.broadcast %cst_698 : f32 to vector<8x128xf32>
      %1958 = arith.mulf %152, %1957 : vector<8x128xf32>
      %1959 = arith.addf %1956, %1958 : vector<8x128xf32>
      %cst_699 = arith.constant -0.00633883476 : f32
      %1960 = vector.broadcast %cst_699 : f32 to vector<8x128xf32>
      %1961 = arith.mulf %161, %1960 : vector<8x128xf32>
      %1962 = arith.addf %1959, %1961 : vector<8x128xf32>
      %cst_700 = arith.constant 0.148770377 : f32
      %1963 = vector.broadcast %cst_700 : f32 to vector<8x128xf32>
      %1964 = arith.mulf %170, %1963 : vector<8x128xf32>
      %1965 = arith.addf %1962, %1964 : vector<8x128xf32>
      %cst_701 = arith.constant -0.0366160944 : f32
      %1966 = vector.broadcast %cst_701 : f32 to vector<8x128xf32>
      %1967 = arith.mulf %179, %1966 : vector<8x128xf32>
      %1968 = arith.addf %1965, %1967 : vector<8x128xf32>
      %cst_702 = arith.constant 1.988800e-03 : f32
      %1969 = vector.broadcast %cst_702 : f32 to vector<8x128xf32>
      %1970 = arith.mulf %188, %1969 : vector<8x128xf32>
      %1971 = arith.addf %1968, %1970 : vector<8x128xf32>
      %cst_703 = arith.constant -0.0968338251 : f32
      %1972 = vector.broadcast %cst_703 : f32 to vector<8x128xf32>
      %1973 = arith.mulf %197, %1972 : vector<8x128xf32>
      %1974 = arith.addf %1971, %1973 : vector<8x128xf32>
      %cst_704 = arith.constant 0.070147194 : f32
      %1975 = vector.broadcast %cst_704 : f32 to vector<8x128xf32>
      %1976 = arith.mulf %206, %1975 : vector<8x128xf32>
      %1977 = arith.addf %1974, %1976 : vector<8x128xf32>
      %cst_705 = arith.constant -7.417320e-02 : f32
      %1978 = vector.broadcast %cst_705 : f32 to vector<8x128xf32>
      %1979 = arith.mulf %215, %1978 : vector<8x128xf32>
      %1980 = arith.addf %1977, %1979 : vector<8x128xf32>
      %cst_706 = arith.constant 0.0650647804 : f32
      %1981 = vector.broadcast %cst_706 : f32 to vector<8x128xf32>
      %1982 = arith.mulf %224, %1981 : vector<8x128xf32>
      %1983 = arith.addf %1980, %1982 : vector<8x128xf32>
      %cst_707 = arith.constant -0.0382357687 : f32
      %1984 = vector.broadcast %cst_707 : f32 to vector<8x128xf32>
      %1985 = arith.mulf %233, %1984 : vector<8x128xf32>
      %1986 = arith.addf %1983, %1985 : vector<8x128xf32>
      %cst_708 = arith.constant -0.175684661 : f32
      %1987 = vector.broadcast %cst_708 : f32 to vector<8x128xf32>
      %1988 = arith.mulf %242, %1987 : vector<8x128xf32>
      %1989 = arith.addf %1986, %1988 : vector<8x128xf32>
      %cst_709 = arith.constant 0.14436923 : f32
      %1990 = vector.broadcast %cst_709 : f32 to vector<8x128xf32>
      %1991 = arith.mulf %251, %1990 : vector<8x128xf32>
      %1992 = arith.addf %1989, %1991 : vector<8x128xf32>
      %cst_710 = arith.constant 0.0352523699 : f32
      %1993 = vector.broadcast %cst_710 : f32 to vector<8x128xf32>
      %1994 = arith.mulf %260, %1993 : vector<8x128xf32>
      %1995 = arith.addf %1992, %1994 : vector<8x128xf32>
      %cst_711 = arith.constant -0.135410205 : f32
      %1996 = vector.broadcast %cst_711 : f32 to vector<8x128xf32>
      %1997 = arith.mulf %269, %1996 : vector<8x128xf32>
      %1998 = arith.addf %1995, %1997 : vector<8x128xf32>
      %cst_712 = arith.constant 0.175526872 : f32
      %1999 = vector.broadcast %cst_712 : f32 to vector<8x128xf32>
      %2000 = arith.mulf %278, %1999 : vector<8x128xf32>
      %2001 = arith.addf %1998, %2000 : vector<8x128xf32>
      %cst_713 = arith.constant 0.000000e+00 : f32
      %2002 = vector.broadcast %cst_713 : f32 to vector<8x128xf32>
      %2003 = arith.cmpf ogt, %2001, %2002 : vector<8x128xf32>
      %cst_714 = arith.constant 1.000000e-01 : f32
      %2004 = vector.broadcast %cst_714 : f32 to vector<8x128xf32>
      %2005 = arith.mulf %2004, %2001 : vector<8x128xf32>
      %2006 = arith.select %2003, %2001, %2005 : vector<8x128xi1>, vector<8x128xf32>
      %cst_715 = arith.constant -0.144844651 : f32
      %2007 = vector.broadcast %cst_715 : f32 to vector<8x128xf32>
      %cst_716 = arith.constant 0.159014717 : f32
      %2008 = vector.broadcast %cst_716 : f32 to vector<8x128xf32>
      %2009 = arith.mulf %17, %2008 : vector<8x128xf32>
      %2010 = arith.addf %2007, %2009 : vector<8x128xf32>
      %cst_717 = arith.constant 0.136806369 : f32
      %2011 = vector.broadcast %cst_717 : f32 to vector<8x128xf32>
      %2012 = arith.mulf %26, %2011 : vector<8x128xf32>
      %2013 = arith.addf %2010, %2012 : vector<8x128xf32>
      %cst_718 = arith.constant 0.169849589 : f32
      %2014 = vector.broadcast %cst_718 : f32 to vector<8x128xf32>
      %2015 = arith.mulf %35, %2014 : vector<8x128xf32>
      %2016 = arith.addf %2013, %2015 : vector<8x128xf32>
      %cst_719 = arith.constant -0.061714828 : f32
      %2017 = vector.broadcast %cst_719 : f32 to vector<8x128xf32>
      %2018 = arith.mulf %44, %2017 : vector<8x128xf32>
      %2019 = arith.addf %2016, %2018 : vector<8x128xf32>
      %cst_720 = arith.constant 0.0210872702 : f32
      %2020 = vector.broadcast %cst_720 : f32 to vector<8x128xf32>
      %2021 = arith.mulf %53, %2020 : vector<8x128xf32>
      %2022 = arith.addf %2019, %2021 : vector<8x128xf32>
      %cst_721 = arith.constant -0.126541764 : f32
      %2023 = vector.broadcast %cst_721 : f32 to vector<8x128xf32>
      %2024 = arith.mulf %62, %2023 : vector<8x128xf32>
      %2025 = arith.addf %2022, %2024 : vector<8x128xf32>
      %cst_722 = arith.constant 0.0165953301 : f32
      %2026 = vector.broadcast %cst_722 : f32 to vector<8x128xf32>
      %2027 = arith.mulf %71, %2026 : vector<8x128xf32>
      %2028 = arith.addf %2025, %2027 : vector<8x128xf32>
      %cst_723 = arith.constant -0.0497409366 : f32
      %2029 = vector.broadcast %cst_723 : f32 to vector<8x128xf32>
      %2030 = arith.mulf %80, %2029 : vector<8x128xf32>
      %2031 = arith.addf %2028, %2030 : vector<8x128xf32>
      %cst_724 = arith.constant 0.0380378403 : f32
      %2032 = vector.broadcast %cst_724 : f32 to vector<8x128xf32>
      %2033 = arith.mulf %89, %2032 : vector<8x128xf32>
      %2034 = arith.addf %2031, %2033 : vector<8x128xf32>
      %cst_725 = arith.constant 0.019398341 : f32
      %2035 = vector.broadcast %cst_725 : f32 to vector<8x128xf32>
      %2036 = arith.mulf %98, %2035 : vector<8x128xf32>
      %2037 = arith.addf %2034, %2036 : vector<8x128xf32>
      %cst_726 = arith.constant -0.0702118799 : f32
      %2038 = vector.broadcast %cst_726 : f32 to vector<8x128xf32>
      %2039 = arith.mulf %107, %2038 : vector<8x128xf32>
      %2040 = arith.addf %2037, %2039 : vector<8x128xf32>
      %cst_727 = arith.constant 0.123155601 : f32
      %2041 = vector.broadcast %cst_727 : f32 to vector<8x128xf32>
      %2042 = arith.mulf %116, %2041 : vector<8x128xf32>
      %2043 = arith.addf %2040, %2042 : vector<8x128xf32>
      %cst_728 = arith.constant 0.0490977094 : f32
      %2044 = vector.broadcast %cst_728 : f32 to vector<8x128xf32>
      %2045 = arith.mulf %125, %2044 : vector<8x128xf32>
      %2046 = arith.addf %2043, %2045 : vector<8x128xf32>
      %cst_729 = arith.constant 0.0762545839 : f32
      %2047 = vector.broadcast %cst_729 : f32 to vector<8x128xf32>
      %2048 = arith.mulf %134, %2047 : vector<8x128xf32>
      %2049 = arith.addf %2046, %2048 : vector<8x128xf32>
      %cst_730 = arith.constant -0.17935355 : f32
      %2050 = vector.broadcast %cst_730 : f32 to vector<8x128xf32>
      %2051 = arith.mulf %143, %2050 : vector<8x128xf32>
      %2052 = arith.addf %2049, %2051 : vector<8x128xf32>
      %cst_731 = arith.constant -0.112140261 : f32
      %2053 = vector.broadcast %cst_731 : f32 to vector<8x128xf32>
      %2054 = arith.mulf %152, %2053 : vector<8x128xf32>
      %2055 = arith.addf %2052, %2054 : vector<8x128xf32>
      %cst_732 = arith.constant 0.0237074587 : f32
      %2056 = vector.broadcast %cst_732 : f32 to vector<8x128xf32>
      %2057 = arith.mulf %161, %2056 : vector<8x128xf32>
      %2058 = arith.addf %2055, %2057 : vector<8x128xf32>
      %cst_733 = arith.constant -0.173084229 : f32
      %2059 = vector.broadcast %cst_733 : f32 to vector<8x128xf32>
      %2060 = arith.mulf %170, %2059 : vector<8x128xf32>
      %2061 = arith.addf %2058, %2060 : vector<8x128xf32>
      %cst_734 = arith.constant -0.0155949015 : f32
      %2062 = vector.broadcast %cst_734 : f32 to vector<8x128xf32>
      %2063 = arith.mulf %179, %2062 : vector<8x128xf32>
      %2064 = arith.addf %2061, %2063 : vector<8x128xf32>
      %cst_735 = arith.constant -0.0854127556 : f32
      %2065 = vector.broadcast %cst_735 : f32 to vector<8x128xf32>
      %2066 = arith.mulf %188, %2065 : vector<8x128xf32>
      %2067 = arith.addf %2064, %2066 : vector<8x128xf32>
      %cst_736 = arith.constant 0.101274058 : f32
      %2068 = vector.broadcast %cst_736 : f32 to vector<8x128xf32>
      %2069 = arith.mulf %197, %2068 : vector<8x128xf32>
      %2070 = arith.addf %2067, %2069 : vector<8x128xf32>
      %cst_737 = arith.constant -0.153479084 : f32
      %2071 = vector.broadcast %cst_737 : f32 to vector<8x128xf32>
      %2072 = arith.mulf %206, %2071 : vector<8x128xf32>
      %2073 = arith.addf %2070, %2072 : vector<8x128xf32>
      %cst_738 = arith.constant -0.121928386 : f32
      %2074 = vector.broadcast %cst_738 : f32 to vector<8x128xf32>
      %2075 = arith.mulf %215, %2074 : vector<8x128xf32>
      %2076 = arith.addf %2073, %2075 : vector<8x128xf32>
      %cst_739 = arith.constant 0.173497364 : f32
      %2077 = vector.broadcast %cst_739 : f32 to vector<8x128xf32>
      %2078 = arith.mulf %224, %2077 : vector<8x128xf32>
      %2079 = arith.addf %2076, %2078 : vector<8x128xf32>
      %cst_740 = arith.constant 0.0510242172 : f32
      %2080 = vector.broadcast %cst_740 : f32 to vector<8x128xf32>
      %2081 = arith.mulf %233, %2080 : vector<8x128xf32>
      %2082 = arith.addf %2079, %2081 : vector<8x128xf32>
      %cst_741 = arith.constant 0.162985221 : f32
      %2083 = vector.broadcast %cst_741 : f32 to vector<8x128xf32>
      %2084 = arith.mulf %242, %2083 : vector<8x128xf32>
      %2085 = arith.addf %2082, %2084 : vector<8x128xf32>
      %cst_742 = arith.constant 0.0725747272 : f32
      %2086 = vector.broadcast %cst_742 : f32 to vector<8x128xf32>
      %2087 = arith.mulf %251, %2086 : vector<8x128xf32>
      %2088 = arith.addf %2085, %2087 : vector<8x128xf32>
      %cst_743 = arith.constant 0.0926866829 : f32
      %2089 = vector.broadcast %cst_743 : f32 to vector<8x128xf32>
      %2090 = arith.mulf %260, %2089 : vector<8x128xf32>
      %2091 = arith.addf %2088, %2090 : vector<8x128xf32>
      %cst_744 = arith.constant 0.0659185648 : f32
      %2092 = vector.broadcast %cst_744 : f32 to vector<8x128xf32>
      %2093 = arith.mulf %269, %2092 : vector<8x128xf32>
      %2094 = arith.addf %2091, %2093 : vector<8x128xf32>
      %cst_745 = arith.constant 0.177099884 : f32
      %2095 = vector.broadcast %cst_745 : f32 to vector<8x128xf32>
      %2096 = arith.mulf %278, %2095 : vector<8x128xf32>
      %2097 = arith.addf %2094, %2096 : vector<8x128xf32>
      %cst_746 = arith.constant 0.000000e+00 : f32
      %2098 = vector.broadcast %cst_746 : f32 to vector<8x128xf32>
      %2099 = arith.cmpf ogt, %2097, %2098 : vector<8x128xf32>
      %cst_747 = arith.constant 1.000000e-01 : f32
      %2100 = vector.broadcast %cst_747 : f32 to vector<8x128xf32>
      %2101 = arith.mulf %2100, %2097 : vector<8x128xf32>
      %2102 = arith.select %2099, %2097, %2101 : vector<8x128xi1>, vector<8x128xf32>
      %cst_748 = arith.constant -0.143075854 : f32
      %2103 = vector.broadcast %cst_748 : f32 to vector<8x128xf32>
      %cst_749 = arith.constant -0.111029923 : f32
      %2104 = vector.broadcast %cst_749 : f32 to vector<8x128xf32>
      %2105 = arith.mulf %17, %2104 : vector<8x128xf32>
      %2106 = arith.addf %2103, %2105 : vector<8x128xf32>
      %cst_750 = arith.constant 0.120145828 : f32
      %2107 = vector.broadcast %cst_750 : f32 to vector<8x128xf32>
      %2108 = arith.mulf %26, %2107 : vector<8x128xf32>
      %2109 = arith.addf %2106, %2108 : vector<8x128xf32>
      %cst_751 = arith.constant -0.151176661 : f32
      %2110 = vector.broadcast %cst_751 : f32 to vector<8x128xf32>
      %2111 = arith.mulf %35, %2110 : vector<8x128xf32>
      %2112 = arith.addf %2109, %2111 : vector<8x128xf32>
      %cst_752 = arith.constant -0.0524144061 : f32
      %2113 = vector.broadcast %cst_752 : f32 to vector<8x128xf32>
      %2114 = arith.mulf %44, %2113 : vector<8x128xf32>
      %2115 = arith.addf %2112, %2114 : vector<8x128xf32>
      %cst_753 = arith.constant 0.163077548 : f32
      %2116 = vector.broadcast %cst_753 : f32 to vector<8x128xf32>
      %2117 = arith.mulf %53, %2116 : vector<8x128xf32>
      %2118 = arith.addf %2115, %2117 : vector<8x128xf32>
      %cst_754 = arith.constant 0.00306993164 : f32
      %2119 = vector.broadcast %cst_754 : f32 to vector<8x128xf32>
      %2120 = arith.mulf %62, %2119 : vector<8x128xf32>
      %2121 = arith.addf %2118, %2120 : vector<8x128xf32>
      %cst_755 = arith.constant 0.0850072801 : f32
      %2122 = vector.broadcast %cst_755 : f32 to vector<8x128xf32>
      %2123 = arith.mulf %71, %2122 : vector<8x128xf32>
      %2124 = arith.addf %2121, %2123 : vector<8x128xf32>
      %cst_756 = arith.constant 0.127137244 : f32
      %2125 = vector.broadcast %cst_756 : f32 to vector<8x128xf32>
      %2126 = arith.mulf %80, %2125 : vector<8x128xf32>
      %2127 = arith.addf %2124, %2126 : vector<8x128xf32>
      %cst_757 = arith.constant 0.0679961592 : f32
      %2128 = vector.broadcast %cst_757 : f32 to vector<8x128xf32>
      %2129 = arith.mulf %89, %2128 : vector<8x128xf32>
      %2130 = arith.addf %2127, %2129 : vector<8x128xf32>
      %cst_758 = arith.constant -0.00149988139 : f32
      %2131 = vector.broadcast %cst_758 : f32 to vector<8x128xf32>
      %2132 = arith.mulf %98, %2131 : vector<8x128xf32>
      %2133 = arith.addf %2130, %2132 : vector<8x128xf32>
      %cst_759 = arith.constant -0.12684229 : f32
      %2134 = vector.broadcast %cst_759 : f32 to vector<8x128xf32>
      %2135 = arith.mulf %107, %2134 : vector<8x128xf32>
      %2136 = arith.addf %2133, %2135 : vector<8x128xf32>
      %cst_760 = arith.constant -0.110649258 : f32
      %2137 = vector.broadcast %cst_760 : f32 to vector<8x128xf32>
      %2138 = arith.mulf %116, %2137 : vector<8x128xf32>
      %2139 = arith.addf %2136, %2138 : vector<8x128xf32>
      %cst_761 = arith.constant -0.0438882783 : f32
      %2140 = vector.broadcast %cst_761 : f32 to vector<8x128xf32>
      %2141 = arith.mulf %125, %2140 : vector<8x128xf32>
      %2142 = arith.addf %2139, %2141 : vector<8x128xf32>
      %cst_762 = arith.constant 0.0010354697 : f32
      %2143 = vector.broadcast %cst_762 : f32 to vector<8x128xf32>
      %2144 = arith.mulf %134, %2143 : vector<8x128xf32>
      %2145 = arith.addf %2142, %2144 : vector<8x128xf32>
      %cst_763 = arith.constant -0.0109523078 : f32
      %2146 = vector.broadcast %cst_763 : f32 to vector<8x128xf32>
      %2147 = arith.mulf %143, %2146 : vector<8x128xf32>
      %2148 = arith.addf %2145, %2147 : vector<8x128xf32>
      %cst_764 = arith.constant 0.0594178438 : f32
      %2149 = vector.broadcast %cst_764 : f32 to vector<8x128xf32>
      %2150 = arith.mulf %152, %2149 : vector<8x128xf32>
      %2151 = arith.addf %2148, %2150 : vector<8x128xf32>
      %cst_765 = arith.constant 0.0590749197 : f32
      %2152 = vector.broadcast %cst_765 : f32 to vector<8x128xf32>
      %2153 = arith.mulf %161, %2152 : vector<8x128xf32>
      %2154 = arith.addf %2151, %2153 : vector<8x128xf32>
      %cst_766 = arith.constant 0.167162314 : f32
      %2155 = vector.broadcast %cst_766 : f32 to vector<8x128xf32>
      %2156 = arith.mulf %170, %2155 : vector<8x128xf32>
      %2157 = arith.addf %2154, %2156 : vector<8x128xf32>
      %cst_767 = arith.constant -0.165053681 : f32
      %2158 = vector.broadcast %cst_767 : f32 to vector<8x128xf32>
      %2159 = arith.mulf %179, %2158 : vector<8x128xf32>
      %2160 = arith.addf %2157, %2159 : vector<8x128xf32>
      %cst_768 = arith.constant -0.0811495184 : f32
      %2161 = vector.broadcast %cst_768 : f32 to vector<8x128xf32>
      %2162 = arith.mulf %188, %2161 : vector<8x128xf32>
      %2163 = arith.addf %2160, %2162 : vector<8x128xf32>
      %cst_769 = arith.constant 0.0418002754 : f32
      %2164 = vector.broadcast %cst_769 : f32 to vector<8x128xf32>
      %2165 = arith.mulf %197, %2164 : vector<8x128xf32>
      %2166 = arith.addf %2163, %2165 : vector<8x128xf32>
      %cst_770 = arith.constant 0.0704698339 : f32
      %2167 = vector.broadcast %cst_770 : f32 to vector<8x128xf32>
      %2168 = arith.mulf %206, %2167 : vector<8x128xf32>
      %2169 = arith.addf %2166, %2168 : vector<8x128xf32>
      %cst_771 = arith.constant 0.0787958577 : f32
      %2170 = vector.broadcast %cst_771 : f32 to vector<8x128xf32>
      %2171 = arith.mulf %215, %2170 : vector<8x128xf32>
      %2172 = arith.addf %2169, %2171 : vector<8x128xf32>
      %cst_772 = arith.constant -0.00297016301 : f32
      %2173 = vector.broadcast %cst_772 : f32 to vector<8x128xf32>
      %2174 = arith.mulf %224, %2173 : vector<8x128xf32>
      %2175 = arith.addf %2172, %2174 : vector<8x128xf32>
      %cst_773 = arith.constant -0.0493145287 : f32
      %2176 = vector.broadcast %cst_773 : f32 to vector<8x128xf32>
      %2177 = arith.mulf %233, %2176 : vector<8x128xf32>
      %2178 = arith.addf %2175, %2177 : vector<8x128xf32>
      %cst_774 = arith.constant 0.125763953 : f32
      %2179 = vector.broadcast %cst_774 : f32 to vector<8x128xf32>
      %2180 = arith.mulf %242, %2179 : vector<8x128xf32>
      %2181 = arith.addf %2178, %2180 : vector<8x128xf32>
      %cst_775 = arith.constant -0.00698924623 : f32
      %2182 = vector.broadcast %cst_775 : f32 to vector<8x128xf32>
      %2183 = arith.mulf %251, %2182 : vector<8x128xf32>
      %2184 = arith.addf %2181, %2183 : vector<8x128xf32>
      %cst_776 = arith.constant -0.130228683 : f32
      %2185 = vector.broadcast %cst_776 : f32 to vector<8x128xf32>
      %2186 = arith.mulf %260, %2185 : vector<8x128xf32>
      %2187 = arith.addf %2184, %2186 : vector<8x128xf32>
      %cst_777 = arith.constant 0.132297352 : f32
      %2188 = vector.broadcast %cst_777 : f32 to vector<8x128xf32>
      %2189 = arith.mulf %269, %2188 : vector<8x128xf32>
      %2190 = arith.addf %2187, %2189 : vector<8x128xf32>
      %cst_778 = arith.constant 3.120900e-02 : f32
      %2191 = vector.broadcast %cst_778 : f32 to vector<8x128xf32>
      %2192 = arith.mulf %278, %2191 : vector<8x128xf32>
      %2193 = arith.addf %2190, %2192 : vector<8x128xf32>
      %cst_779 = arith.constant 0.000000e+00 : f32
      %2194 = vector.broadcast %cst_779 : f32 to vector<8x128xf32>
      %2195 = arith.cmpf ogt, %2193, %2194 : vector<8x128xf32>
      %cst_780 = arith.constant 1.000000e-01 : f32
      %2196 = vector.broadcast %cst_780 : f32 to vector<8x128xf32>
      %2197 = arith.mulf %2196, %2193 : vector<8x128xf32>
      %2198 = arith.select %2195, %2193, %2197 : vector<8x128xi1>, vector<8x128xf32>
      %cst_781 = arith.constant -0.0505595021 : f32
      %2199 = vector.broadcast %cst_781 : f32 to vector<8x128xf32>
      %cst_782 = arith.constant -0.100213468 : f32
      %2200 = vector.broadcast %cst_782 : f32 to vector<8x128xf32>
      %2201 = arith.mulf %17, %2200 : vector<8x128xf32>
      %2202 = arith.addf %2199, %2201 : vector<8x128xf32>
      %cst_783 = arith.constant 0.110639945 : f32
      %2203 = vector.broadcast %cst_783 : f32 to vector<8x128xf32>
      %2204 = arith.mulf %26, %2203 : vector<8x128xf32>
      %2205 = arith.addf %2202, %2204 : vector<8x128xf32>
      %cst_784 = arith.constant 0.0511331297 : f32
      %2206 = vector.broadcast %cst_784 : f32 to vector<8x128xf32>
      %2207 = arith.mulf %35, %2206 : vector<8x128xf32>
      %2208 = arith.addf %2205, %2207 : vector<8x128xf32>
      %cst_785 = arith.constant -0.0121507505 : f32
      %2209 = vector.broadcast %cst_785 : f32 to vector<8x128xf32>
      %2210 = arith.mulf %44, %2209 : vector<8x128xf32>
      %2211 = arith.addf %2208, %2210 : vector<8x128xf32>
      %cst_786 = arith.constant 0.0182529166 : f32
      %2212 = vector.broadcast %cst_786 : f32 to vector<8x128xf32>
      %2213 = arith.mulf %53, %2212 : vector<8x128xf32>
      %2214 = arith.addf %2211, %2213 : vector<8x128xf32>
      %cst_787 = arith.constant -0.00710860314 : f32
      %2215 = vector.broadcast %cst_787 : f32 to vector<8x128xf32>
      %2216 = arith.mulf %62, %2215 : vector<8x128xf32>
      %2217 = arith.addf %2214, %2216 : vector<8x128xf32>
      %cst_788 = arith.constant -0.0973567888 : f32
      %2218 = vector.broadcast %cst_788 : f32 to vector<8x128xf32>
      %2219 = arith.mulf %71, %2218 : vector<8x128xf32>
      %2220 = arith.addf %2217, %2219 : vector<8x128xf32>
      %cst_789 = arith.constant 0.161452964 : f32
      %2221 = vector.broadcast %cst_789 : f32 to vector<8x128xf32>
      %2222 = arith.mulf %80, %2221 : vector<8x128xf32>
      %2223 = arith.addf %2220, %2222 : vector<8x128xf32>
      %cst_790 = arith.constant -0.0189238302 : f32
      %2224 = vector.broadcast %cst_790 : f32 to vector<8x128xf32>
      %2225 = arith.mulf %89, %2224 : vector<8x128xf32>
      %2226 = arith.addf %2223, %2225 : vector<8x128xf32>
      %cst_791 = arith.constant -0.0616791807 : f32
      %2227 = vector.broadcast %cst_791 : f32 to vector<8x128xf32>
      %2228 = arith.mulf %98, %2227 : vector<8x128xf32>
      %2229 = arith.addf %2226, %2228 : vector<8x128xf32>
      %cst_792 = arith.constant -0.180148438 : f32
      %2230 = vector.broadcast %cst_792 : f32 to vector<8x128xf32>
      %2231 = arith.mulf %107, %2230 : vector<8x128xf32>
      %2232 = arith.addf %2229, %2231 : vector<8x128xf32>
      %cst_793 = arith.constant -0.158656865 : f32
      %2233 = vector.broadcast %cst_793 : f32 to vector<8x128xf32>
      %2234 = arith.mulf %116, %2233 : vector<8x128xf32>
      %2235 = arith.addf %2232, %2234 : vector<8x128xf32>
      %cst_794 = arith.constant 0.128414601 : f32
      %2236 = vector.broadcast %cst_794 : f32 to vector<8x128xf32>
      %2237 = arith.mulf %125, %2236 : vector<8x128xf32>
      %2238 = arith.addf %2235, %2237 : vector<8x128xf32>
      %cst_795 = arith.constant -0.086582385 : f32
      %2239 = vector.broadcast %cst_795 : f32 to vector<8x128xf32>
      %2240 = arith.mulf %134, %2239 : vector<8x128xf32>
      %2241 = arith.addf %2238, %2240 : vector<8x128xf32>
      %cst_796 = arith.constant 0.103626803 : f32
      %2242 = vector.broadcast %cst_796 : f32 to vector<8x128xf32>
      %2243 = arith.mulf %143, %2242 : vector<8x128xf32>
      %2244 = arith.addf %2241, %2243 : vector<8x128xf32>
      %cst_797 = arith.constant 0.11288996 : f32
      %2245 = vector.broadcast %cst_797 : f32 to vector<8x128xf32>
      %2246 = arith.mulf %152, %2245 : vector<8x128xf32>
      %2247 = arith.addf %2244, %2246 : vector<8x128xf32>
      %cst_798 = arith.constant -0.011865722 : f32
      %2248 = vector.broadcast %cst_798 : f32 to vector<8x128xf32>
      %2249 = arith.mulf %161, %2248 : vector<8x128xf32>
      %2250 = arith.addf %2247, %2249 : vector<8x128xf32>
      %cst_799 = arith.constant 0.0378463119 : f32
      %2251 = vector.broadcast %cst_799 : f32 to vector<8x128xf32>
      %2252 = arith.mulf %170, %2251 : vector<8x128xf32>
      %2253 = arith.addf %2250, %2252 : vector<8x128xf32>
      %cst_800 = arith.constant 0.0886813551 : f32
      %2254 = vector.broadcast %cst_800 : f32 to vector<8x128xf32>
      %2255 = arith.mulf %179, %2254 : vector<8x128xf32>
      %2256 = arith.addf %2253, %2255 : vector<8x128xf32>
      %cst_801 = arith.constant -0.0218043234 : f32
      %2257 = vector.broadcast %cst_801 : f32 to vector<8x128xf32>
      %2258 = arith.mulf %188, %2257 : vector<8x128xf32>
      %2259 = arith.addf %2256, %2258 : vector<8x128xf32>
      %cst_802 = arith.constant 0.0214915685 : f32
      %2260 = vector.broadcast %cst_802 : f32 to vector<8x128xf32>
      %2261 = arith.mulf %197, %2260 : vector<8x128xf32>
      %2262 = arith.addf %2259, %2261 : vector<8x128xf32>
      %cst_803 = arith.constant 0.0868001133 : f32
      %2263 = vector.broadcast %cst_803 : f32 to vector<8x128xf32>
      %2264 = arith.mulf %206, %2263 : vector<8x128xf32>
      %2265 = arith.addf %2262, %2264 : vector<8x128xf32>
      %cst_804 = arith.constant 0.0800551548 : f32
      %2266 = vector.broadcast %cst_804 : f32 to vector<8x128xf32>
      %2267 = arith.mulf %215, %2266 : vector<8x128xf32>
      %2268 = arith.addf %2265, %2267 : vector<8x128xf32>
      %cst_805 = arith.constant 0.138923794 : f32
      %2269 = vector.broadcast %cst_805 : f32 to vector<8x128xf32>
      %2270 = arith.mulf %224, %2269 : vector<8x128xf32>
      %2271 = arith.addf %2268, %2270 : vector<8x128xf32>
      %cst_806 = arith.constant 0.168630734 : f32
      %2272 = vector.broadcast %cst_806 : f32 to vector<8x128xf32>
      %2273 = arith.mulf %233, %2272 : vector<8x128xf32>
      %2274 = arith.addf %2271, %2273 : vector<8x128xf32>
      %cst_807 = arith.constant 0.0955181643 : f32
      %2275 = vector.broadcast %cst_807 : f32 to vector<8x128xf32>
      %2276 = arith.mulf %242, %2275 : vector<8x128xf32>
      %2277 = arith.addf %2274, %2276 : vector<8x128xf32>
      %cst_808 = arith.constant -0.00680611935 : f32
      %2278 = vector.broadcast %cst_808 : f32 to vector<8x128xf32>
      %2279 = arith.mulf %251, %2278 : vector<8x128xf32>
      %2280 = arith.addf %2277, %2279 : vector<8x128xf32>
      %cst_809 = arith.constant -0.0956436545 : f32
      %2281 = vector.broadcast %cst_809 : f32 to vector<8x128xf32>
      %2282 = arith.mulf %260, %2281 : vector<8x128xf32>
      %2283 = arith.addf %2280, %2282 : vector<8x128xf32>
      %cst_810 = arith.constant 0.113906108 : f32
      %2284 = vector.broadcast %cst_810 : f32 to vector<8x128xf32>
      %2285 = arith.mulf %269, %2284 : vector<8x128xf32>
      %2286 = arith.addf %2283, %2285 : vector<8x128xf32>
      %cst_811 = arith.constant 0.150688574 : f32
      %2287 = vector.broadcast %cst_811 : f32 to vector<8x128xf32>
      %2288 = arith.mulf %278, %2287 : vector<8x128xf32>
      %2289 = arith.addf %2286, %2288 : vector<8x128xf32>
      %cst_812 = arith.constant 0.000000e+00 : f32
      %2290 = vector.broadcast %cst_812 : f32 to vector<8x128xf32>
      %2291 = arith.cmpf ogt, %2289, %2290 : vector<8x128xf32>
      %cst_813 = arith.constant 1.000000e-01 : f32
      %2292 = vector.broadcast %cst_813 : f32 to vector<8x128xf32>
      %2293 = arith.mulf %2292, %2289 : vector<8x128xf32>
      %2294 = arith.select %2291, %2289, %2293 : vector<8x128xi1>, vector<8x128xf32>
      %cst_814 = arith.constant 0.118023649 : f32
      %2295 = vector.broadcast %cst_814 : f32 to vector<8x128xf32>
      %cst_815 = arith.constant 0.140688762 : f32
      %2296 = vector.broadcast %cst_815 : f32 to vector<8x128xf32>
      %2297 = arith.mulf %17, %2296 : vector<8x128xf32>
      %2298 = arith.addf %2295, %2297 : vector<8x128xf32>
      %cst_816 = arith.constant -0.1060488 : f32
      %2299 = vector.broadcast %cst_816 : f32 to vector<8x128xf32>
      %2300 = arith.mulf %26, %2299 : vector<8x128xf32>
      %2301 = arith.addf %2298, %2300 : vector<8x128xf32>
      %cst_817 = arith.constant -0.151820287 : f32
      %2302 = vector.broadcast %cst_817 : f32 to vector<8x128xf32>
      %2303 = arith.mulf %35, %2302 : vector<8x128xf32>
      %2304 = arith.addf %2301, %2303 : vector<8x128xf32>
      %cst_818 = arith.constant -0.173655987 : f32
      %2305 = vector.broadcast %cst_818 : f32 to vector<8x128xf32>
      %2306 = arith.mulf %44, %2305 : vector<8x128xf32>
      %2307 = arith.addf %2304, %2306 : vector<8x128xf32>
      %cst_819 = arith.constant 0.032660652 : f32
      %2308 = vector.broadcast %cst_819 : f32 to vector<8x128xf32>
      %2309 = arith.mulf %53, %2308 : vector<8x128xf32>
      %2310 = arith.addf %2307, %2309 : vector<8x128xf32>
      %cst_820 = arith.constant 0.125029653 : f32
      %2311 = vector.broadcast %cst_820 : f32 to vector<8x128xf32>
      %2312 = arith.mulf %62, %2311 : vector<8x128xf32>
      %2313 = arith.addf %2310, %2312 : vector<8x128xf32>
      %cst_821 = arith.constant 0.00441445783 : f32
      %2314 = vector.broadcast %cst_821 : f32 to vector<8x128xf32>
      %2315 = arith.mulf %71, %2314 : vector<8x128xf32>
      %2316 = arith.addf %2313, %2315 : vector<8x128xf32>
      %cst_822 = arith.constant 0.0796896815 : f32
      %2317 = vector.broadcast %cst_822 : f32 to vector<8x128xf32>
      %2318 = arith.mulf %80, %2317 : vector<8x128xf32>
      %2319 = arith.addf %2316, %2318 : vector<8x128xf32>
      %cst_823 = arith.constant 0.0220587943 : f32
      %2320 = vector.broadcast %cst_823 : f32 to vector<8x128xf32>
      %2321 = arith.mulf %89, %2320 : vector<8x128xf32>
      %2322 = arith.addf %2319, %2321 : vector<8x128xf32>
      %cst_824 = arith.constant 0.0628201663 : f32
      %2323 = vector.broadcast %cst_824 : f32 to vector<8x128xf32>
      %2324 = arith.mulf %98, %2323 : vector<8x128xf32>
      %2325 = arith.addf %2322, %2324 : vector<8x128xf32>
      %cst_825 = arith.constant 0.0974902436 : f32
      %2326 = vector.broadcast %cst_825 : f32 to vector<8x128xf32>
      %2327 = arith.mulf %107, %2326 : vector<8x128xf32>
      %2328 = arith.addf %2325, %2327 : vector<8x128xf32>
      %cst_826 = arith.constant 0.111243956 : f32
      %2329 = vector.broadcast %cst_826 : f32 to vector<8x128xf32>
      %2330 = arith.mulf %116, %2329 : vector<8x128xf32>
      %2331 = arith.addf %2328, %2330 : vector<8x128xf32>
      %cst_827 = arith.constant 0.00444688695 : f32
      %2332 = vector.broadcast %cst_827 : f32 to vector<8x128xf32>
      %2333 = arith.mulf %125, %2332 : vector<8x128xf32>
      %2334 = arith.addf %2331, %2333 : vector<8x128xf32>
      %cst_828 = arith.constant -0.106663346 : f32
      %2335 = vector.broadcast %cst_828 : f32 to vector<8x128xf32>
      %2336 = arith.mulf %134, %2335 : vector<8x128xf32>
      %2337 = arith.addf %2334, %2336 : vector<8x128xf32>
      %cst_829 = arith.constant -0.124258451 : f32
      %2338 = vector.broadcast %cst_829 : f32 to vector<8x128xf32>
      %2339 = arith.mulf %143, %2338 : vector<8x128xf32>
      %2340 = arith.addf %2337, %2339 : vector<8x128xf32>
      %cst_830 = arith.constant 0.113536499 : f32
      %2341 = vector.broadcast %cst_830 : f32 to vector<8x128xf32>
      %2342 = arith.mulf %152, %2341 : vector<8x128xf32>
      %2343 = arith.addf %2340, %2342 : vector<8x128xf32>
      %cst_831 = arith.constant -0.152081236 : f32
      %2344 = vector.broadcast %cst_831 : f32 to vector<8x128xf32>
      %2345 = arith.mulf %161, %2344 : vector<8x128xf32>
      %2346 = arith.addf %2343, %2345 : vector<8x128xf32>
      %cst_832 = arith.constant -0.0447183773 : f32
      %2347 = vector.broadcast %cst_832 : f32 to vector<8x128xf32>
      %2348 = arith.mulf %170, %2347 : vector<8x128xf32>
      %2349 = arith.addf %2346, %2348 : vector<8x128xf32>
      %cst_833 = arith.constant 0.0407739915 : f32
      %2350 = vector.broadcast %cst_833 : f32 to vector<8x128xf32>
      %2351 = arith.mulf %179, %2350 : vector<8x128xf32>
      %2352 = arith.addf %2349, %2351 : vector<8x128xf32>
      %cst_834 = arith.constant -0.138665661 : f32
      %2353 = vector.broadcast %cst_834 : f32 to vector<8x128xf32>
      %2354 = arith.mulf %188, %2353 : vector<8x128xf32>
      %2355 = arith.addf %2352, %2354 : vector<8x128xf32>
      %cst_835 = arith.constant -0.138833776 : f32
      %2356 = vector.broadcast %cst_835 : f32 to vector<8x128xf32>
      %2357 = arith.mulf %197, %2356 : vector<8x128xf32>
      %2358 = arith.addf %2355, %2357 : vector<8x128xf32>
      %cst_836 = arith.constant 0.00461225398 : f32
      %2359 = vector.broadcast %cst_836 : f32 to vector<8x128xf32>
      %2360 = arith.mulf %206, %2359 : vector<8x128xf32>
      %2361 = arith.addf %2358, %2360 : vector<8x128xf32>
      %cst_837 = arith.constant -0.0190176796 : f32
      %2362 = vector.broadcast %cst_837 : f32 to vector<8x128xf32>
      %2363 = arith.mulf %215, %2362 : vector<8x128xf32>
      %2364 = arith.addf %2361, %2363 : vector<8x128xf32>
      %cst_838 = arith.constant 0.0596734472 : f32
      %2365 = vector.broadcast %cst_838 : f32 to vector<8x128xf32>
      %2366 = arith.mulf %224, %2365 : vector<8x128xf32>
      %2367 = arith.addf %2364, %2366 : vector<8x128xf32>
      %cst_839 = arith.constant 0.117703713 : f32
      %2368 = vector.broadcast %cst_839 : f32 to vector<8x128xf32>
      %2369 = arith.mulf %233, %2368 : vector<8x128xf32>
      %2370 = arith.addf %2367, %2369 : vector<8x128xf32>
      %cst_840 = arith.constant 0.134595037 : f32
      %2371 = vector.broadcast %cst_840 : f32 to vector<8x128xf32>
      %2372 = arith.mulf %242, %2371 : vector<8x128xf32>
      %2373 = arith.addf %2370, %2372 : vector<8x128xf32>
      %cst_841 = arith.constant 0.168936267 : f32
      %2374 = vector.broadcast %cst_841 : f32 to vector<8x128xf32>
      %2375 = arith.mulf %251, %2374 : vector<8x128xf32>
      %2376 = arith.addf %2373, %2375 : vector<8x128xf32>
      %cst_842 = arith.constant 0.0287345443 : f32
      %2377 = vector.broadcast %cst_842 : f32 to vector<8x128xf32>
      %2378 = arith.mulf %260, %2377 : vector<8x128xf32>
      %2379 = arith.addf %2376, %2378 : vector<8x128xf32>
      %cst_843 = arith.constant 0.0171571169 : f32
      %2380 = vector.broadcast %cst_843 : f32 to vector<8x128xf32>
      %2381 = arith.mulf %269, %2380 : vector<8x128xf32>
      %2382 = arith.addf %2379, %2381 : vector<8x128xf32>
      %cst_844 = arith.constant -0.129762262 : f32
      %2383 = vector.broadcast %cst_844 : f32 to vector<8x128xf32>
      %2384 = arith.mulf %278, %2383 : vector<8x128xf32>
      %2385 = arith.addf %2382, %2384 : vector<8x128xf32>
      %cst_845 = arith.constant 0.000000e+00 : f32
      %2386 = vector.broadcast %cst_845 : f32 to vector<8x128xf32>
      %2387 = arith.cmpf ogt, %2385, %2386 : vector<8x128xf32>
      %cst_846 = arith.constant 1.000000e-01 : f32
      %2388 = vector.broadcast %cst_846 : f32 to vector<8x128xf32>
      %2389 = arith.mulf %2388, %2385 : vector<8x128xf32>
      %2390 = arith.select %2387, %2385, %2389 : vector<8x128xi1>, vector<8x128xf32>
      %cst_847 = arith.constant -0.0737612396 : f32
      %2391 = vector.broadcast %cst_847 : f32 to vector<8x128xf32>
      %cst_848 = arith.constant -0.0261326376 : f32
      %2392 = vector.broadcast %cst_848 : f32 to vector<8x128xf32>
      %2393 = arith.mulf %17, %2392 : vector<8x128xf32>
      %2394 = arith.addf %2391, %2393 : vector<8x128xf32>
      %cst_849 = arith.constant 0.0808415487 : f32
      %2395 = vector.broadcast %cst_849 : f32 to vector<8x128xf32>
      %2396 = arith.mulf %26, %2395 : vector<8x128xf32>
      %2397 = arith.addf %2394, %2396 : vector<8x128xf32>
      %cst_850 = arith.constant -0.082009606 : f32
      %2398 = vector.broadcast %cst_850 : f32 to vector<8x128xf32>
      %2399 = arith.mulf %35, %2398 : vector<8x128xf32>
      %2400 = arith.addf %2397, %2399 : vector<8x128xf32>
      %cst_851 = arith.constant -0.0716788098 : f32
      %2401 = vector.broadcast %cst_851 : f32 to vector<8x128xf32>
      %2402 = arith.mulf %44, %2401 : vector<8x128xf32>
      %2403 = arith.addf %2400, %2402 : vector<8x128xf32>
      %cst_852 = arith.constant -0.0487430766 : f32
      %2404 = vector.broadcast %cst_852 : f32 to vector<8x128xf32>
      %2405 = arith.mulf %53, %2404 : vector<8x128xf32>
      %2406 = arith.addf %2403, %2405 : vector<8x128xf32>
      %cst_853 = arith.constant -0.0249464698 : f32
      %2407 = vector.broadcast %cst_853 : f32 to vector<8x128xf32>
      %2408 = arith.mulf %62, %2407 : vector<8x128xf32>
      %2409 = arith.addf %2406, %2408 : vector<8x128xf32>
      %cst_854 = arith.constant -0.114601485 : f32
      %2410 = vector.broadcast %cst_854 : f32 to vector<8x128xf32>
      %2411 = arith.mulf %71, %2410 : vector<8x128xf32>
      %2412 = arith.addf %2409, %2411 : vector<8x128xf32>
      %cst_855 = arith.constant 0.0159073528 : f32
      %2413 = vector.broadcast %cst_855 : f32 to vector<8x128xf32>
      %2414 = arith.mulf %80, %2413 : vector<8x128xf32>
      %2415 = arith.addf %2412, %2414 : vector<8x128xf32>
      %cst_856 = arith.constant 0.0912083908 : f32
      %2416 = vector.broadcast %cst_856 : f32 to vector<8x128xf32>
      %2417 = arith.mulf %89, %2416 : vector<8x128xf32>
      %2418 = arith.addf %2415, %2417 : vector<8x128xf32>
      %cst_857 = arith.constant 0.0895831882 : f32
      %2419 = vector.broadcast %cst_857 : f32 to vector<8x128xf32>
      %2420 = arith.mulf %98, %2419 : vector<8x128xf32>
      %2421 = arith.addf %2418, %2420 : vector<8x128xf32>
      %cst_858 = arith.constant -0.0398646705 : f32
      %2422 = vector.broadcast %cst_858 : f32 to vector<8x128xf32>
      %2423 = arith.mulf %107, %2422 : vector<8x128xf32>
      %2424 = arith.addf %2421, %2423 : vector<8x128xf32>
      %cst_859 = arith.constant -0.111860111 : f32
      %2425 = vector.broadcast %cst_859 : f32 to vector<8x128xf32>
      %2426 = arith.mulf %116, %2425 : vector<8x128xf32>
      %2427 = arith.addf %2424, %2426 : vector<8x128xf32>
      %cst_860 = arith.constant -0.0842645466 : f32
      %2428 = vector.broadcast %cst_860 : f32 to vector<8x128xf32>
      %2429 = arith.mulf %125, %2428 : vector<8x128xf32>
      %2430 = arith.addf %2427, %2429 : vector<8x128xf32>
      %cst_861 = arith.constant 0.0295304302 : f32
      %2431 = vector.broadcast %cst_861 : f32 to vector<8x128xf32>
      %2432 = arith.mulf %134, %2431 : vector<8x128xf32>
      %2433 = arith.addf %2430, %2432 : vector<8x128xf32>
      %cst_862 = arith.constant 0.0573160425 : f32
      %2434 = vector.broadcast %cst_862 : f32 to vector<8x128xf32>
      %2435 = arith.mulf %143, %2434 : vector<8x128xf32>
      %2436 = arith.addf %2433, %2435 : vector<8x128xf32>
      %cst_863 = arith.constant -0.00363467797 : f32
      %2437 = vector.broadcast %cst_863 : f32 to vector<8x128xf32>
      %2438 = arith.mulf %152, %2437 : vector<8x128xf32>
      %2439 = arith.addf %2436, %2438 : vector<8x128xf32>
      %cst_864 = arith.constant 0.0930113643 : f32
      %2440 = vector.broadcast %cst_864 : f32 to vector<8x128xf32>
      %2441 = arith.mulf %161, %2440 : vector<8x128xf32>
      %2442 = arith.addf %2439, %2441 : vector<8x128xf32>
      %cst_865 = arith.constant -0.0135310134 : f32
      %2443 = vector.broadcast %cst_865 : f32 to vector<8x128xf32>
      %2444 = arith.mulf %170, %2443 : vector<8x128xf32>
      %2445 = arith.addf %2442, %2444 : vector<8x128xf32>
      %cst_866 = arith.constant -0.109294116 : f32
      %2446 = vector.broadcast %cst_866 : f32 to vector<8x128xf32>
      %2447 = arith.mulf %179, %2446 : vector<8x128xf32>
      %2448 = arith.addf %2445, %2447 : vector<8x128xf32>
      %cst_867 = arith.constant 0.053225223 : f32
      %2449 = vector.broadcast %cst_867 : f32 to vector<8x128xf32>
      %2450 = arith.mulf %188, %2449 : vector<8x128xf32>
      %2451 = arith.addf %2448, %2450 : vector<8x128xf32>
      %cst_868 = arith.constant -0.138897195 : f32
      %2452 = vector.broadcast %cst_868 : f32 to vector<8x128xf32>
      %2453 = arith.mulf %197, %2452 : vector<8x128xf32>
      %2454 = arith.addf %2451, %2453 : vector<8x128xf32>
      %cst_869 = arith.constant 0.0380975641 : f32
      %2455 = vector.broadcast %cst_869 : f32 to vector<8x128xf32>
      %2456 = arith.mulf %206, %2455 : vector<8x128xf32>
      %2457 = arith.addf %2454, %2456 : vector<8x128xf32>
      %cst_870 = arith.constant -0.11658258 : f32
      %2458 = vector.broadcast %cst_870 : f32 to vector<8x128xf32>
      %2459 = arith.mulf %215, %2458 : vector<8x128xf32>
      %2460 = arith.addf %2457, %2459 : vector<8x128xf32>
      %cst_871 = arith.constant -0.101236098 : f32
      %2461 = vector.broadcast %cst_871 : f32 to vector<8x128xf32>
      %2462 = arith.mulf %224, %2461 : vector<8x128xf32>
      %2463 = arith.addf %2460, %2462 : vector<8x128xf32>
      %cst_872 = arith.constant -9.35526913E-4 : f32
      %2464 = vector.broadcast %cst_872 : f32 to vector<8x128xf32>
      %2465 = arith.mulf %233, %2464 : vector<8x128xf32>
      %2466 = arith.addf %2463, %2465 : vector<8x128xf32>
      %cst_873 = arith.constant -0.0803722217 : f32
      %2467 = vector.broadcast %cst_873 : f32 to vector<8x128xf32>
      %2468 = arith.mulf %242, %2467 : vector<8x128xf32>
      %2469 = arith.addf %2466, %2468 : vector<8x128xf32>
      %cst_874 = arith.constant -0.0918881371 : f32
      %2470 = vector.broadcast %cst_874 : f32 to vector<8x128xf32>
      %2471 = arith.mulf %251, %2470 : vector<8x128xf32>
      %2472 = arith.addf %2469, %2471 : vector<8x128xf32>
      %cst_875 = arith.constant 0.0986143872 : f32
      %2473 = vector.broadcast %cst_875 : f32 to vector<8x128xf32>
      %2474 = arith.mulf %260, %2473 : vector<8x128xf32>
      %2475 = arith.addf %2472, %2474 : vector<8x128xf32>
      %cst_876 = arith.constant 0.0163197033 : f32
      %2476 = vector.broadcast %cst_876 : f32 to vector<8x128xf32>
      %2477 = arith.mulf %269, %2476 : vector<8x128xf32>
      %2478 = arith.addf %2475, %2477 : vector<8x128xf32>
      %cst_877 = arith.constant 0.0874500498 : f32
      %2479 = vector.broadcast %cst_877 : f32 to vector<8x128xf32>
      %2480 = arith.mulf %278, %2479 : vector<8x128xf32>
      %2481 = arith.addf %2478, %2480 : vector<8x128xf32>
      %cst_878 = arith.constant 0.000000e+00 : f32
      %2482 = vector.broadcast %cst_878 : f32 to vector<8x128xf32>
      %2483 = arith.cmpf ogt, %2481, %2482 : vector<8x128xf32>
      %cst_879 = arith.constant 1.000000e-01 : f32
      %2484 = vector.broadcast %cst_879 : f32 to vector<8x128xf32>
      %2485 = arith.mulf %2484, %2481 : vector<8x128xf32>
      %2486 = arith.select %2483, %2481, %2485 : vector<8x128xi1>, vector<8x128xf32>
      %cst_880 = arith.constant 0.148542538 : f32
      %2487 = vector.broadcast %cst_880 : f32 to vector<8x128xf32>
      %cst_881 = arith.constant -0.0477401689 : f32
      %2488 = vector.broadcast %cst_881 : f32 to vector<8x128xf32>
      %2489 = arith.mulf %17, %2488 : vector<8x128xf32>
      %2490 = arith.addf %2487, %2489 : vector<8x128xf32>
      %cst_882 = arith.constant -0.0910755843 : f32
      %2491 = vector.broadcast %cst_882 : f32 to vector<8x128xf32>
      %2492 = arith.mulf %26, %2491 : vector<8x128xf32>
      %2493 = arith.addf %2490, %2492 : vector<8x128xf32>
      %cst_883 = arith.constant -0.0848613306 : f32
      %2494 = vector.broadcast %cst_883 : f32 to vector<8x128xf32>
      %2495 = arith.mulf %35, %2494 : vector<8x128xf32>
      %2496 = arith.addf %2493, %2495 : vector<8x128xf32>
      %cst_884 = arith.constant 1.584330e-01 : f32
      %2497 = vector.broadcast %cst_884 : f32 to vector<8x128xf32>
      %2498 = arith.mulf %44, %2497 : vector<8x128xf32>
      %2499 = arith.addf %2496, %2498 : vector<8x128xf32>
      %cst_885 = arith.constant -0.0656424165 : f32
      %2500 = vector.broadcast %cst_885 : f32 to vector<8x128xf32>
      %2501 = arith.mulf %53, %2500 : vector<8x128xf32>
      %2502 = arith.addf %2499, %2501 : vector<8x128xf32>
      %cst_886 = arith.constant 0.167030692 : f32
      %2503 = vector.broadcast %cst_886 : f32 to vector<8x128xf32>
      %2504 = arith.mulf %62, %2503 : vector<8x128xf32>
      %2505 = arith.addf %2502, %2504 : vector<8x128xf32>
      %cst_887 = arith.constant 0.0630399436 : f32
      %2506 = vector.broadcast %cst_887 : f32 to vector<8x128xf32>
      %2507 = arith.mulf %71, %2506 : vector<8x128xf32>
      %2508 = arith.addf %2505, %2507 : vector<8x128xf32>
      %cst_888 = arith.constant -0.00149026152 : f32
      %2509 = vector.broadcast %cst_888 : f32 to vector<8x128xf32>
      %2510 = arith.mulf %80, %2509 : vector<8x128xf32>
      %2511 = arith.addf %2508, %2510 : vector<8x128xf32>
      %cst_889 = arith.constant 0.0497689284 : f32
      %2512 = vector.broadcast %cst_889 : f32 to vector<8x128xf32>
      %2513 = arith.mulf %89, %2512 : vector<8x128xf32>
      %2514 = arith.addf %2511, %2513 : vector<8x128xf32>
      %cst_890 = arith.constant 0.0861350298 : f32
      %2515 = vector.broadcast %cst_890 : f32 to vector<8x128xf32>
      %2516 = arith.mulf %98, %2515 : vector<8x128xf32>
      %2517 = arith.addf %2514, %2516 : vector<8x128xf32>
      %cst_891 = arith.constant -0.0315555334 : f32
      %2518 = vector.broadcast %cst_891 : f32 to vector<8x128xf32>
      %2519 = arith.mulf %107, %2518 : vector<8x128xf32>
      %2520 = arith.addf %2517, %2519 : vector<8x128xf32>
      %cst_892 = arith.constant 0.0318581499 : f32
      %2521 = vector.broadcast %cst_892 : f32 to vector<8x128xf32>
      %2522 = arith.mulf %116, %2521 : vector<8x128xf32>
      %2523 = arith.addf %2520, %2522 : vector<8x128xf32>
      %cst_893 = arith.constant 0.123851977 : f32
      %2524 = vector.broadcast %cst_893 : f32 to vector<8x128xf32>
      %2525 = arith.mulf %125, %2524 : vector<8x128xf32>
      %2526 = arith.addf %2523, %2525 : vector<8x128xf32>
      %cst_894 = arith.constant -0.0937882736 : f32
      %2527 = vector.broadcast %cst_894 : f32 to vector<8x128xf32>
      %2528 = arith.mulf %134, %2527 : vector<8x128xf32>
      %2529 = arith.addf %2526, %2528 : vector<8x128xf32>
      %cst_895 = arith.constant -0.037654262 : f32
      %2530 = vector.broadcast %cst_895 : f32 to vector<8x128xf32>
      %2531 = arith.mulf %143, %2530 : vector<8x128xf32>
      %2532 = arith.addf %2529, %2531 : vector<8x128xf32>
      %cst_896 = arith.constant -0.165499941 : f32
      %2533 = vector.broadcast %cst_896 : f32 to vector<8x128xf32>
      %2534 = arith.mulf %152, %2533 : vector<8x128xf32>
      %2535 = arith.addf %2532, %2534 : vector<8x128xf32>
      %cst_897 = arith.constant 0.109254025 : f32
      %2536 = vector.broadcast %cst_897 : f32 to vector<8x128xf32>
      %2537 = arith.mulf %161, %2536 : vector<8x128xf32>
      %2538 = arith.addf %2535, %2537 : vector<8x128xf32>
      %cst_898 = arith.constant 0.0620554871 : f32
      %2539 = vector.broadcast %cst_898 : f32 to vector<8x128xf32>
      %2540 = arith.mulf %170, %2539 : vector<8x128xf32>
      %2541 = arith.addf %2538, %2540 : vector<8x128xf32>
      %cst_899 = arith.constant 0.153697208 : f32
      %2542 = vector.broadcast %cst_899 : f32 to vector<8x128xf32>
      %2543 = arith.mulf %179, %2542 : vector<8x128xf32>
      %2544 = arith.addf %2541, %2543 : vector<8x128xf32>
      %cst_900 = arith.constant -0.0522521287 : f32
      %2545 = vector.broadcast %cst_900 : f32 to vector<8x128xf32>
      %2546 = arith.mulf %188, %2545 : vector<8x128xf32>
      %2547 = arith.addf %2544, %2546 : vector<8x128xf32>
      %cst_901 = arith.constant -0.17600973 : f32
      %2548 = vector.broadcast %cst_901 : f32 to vector<8x128xf32>
      %2549 = arith.mulf %197, %2548 : vector<8x128xf32>
      %2550 = arith.addf %2547, %2549 : vector<8x128xf32>
      %cst_902 = arith.constant 0.13530086 : f32
      %2551 = vector.broadcast %cst_902 : f32 to vector<8x128xf32>
      %2552 = arith.mulf %206, %2551 : vector<8x128xf32>
      %2553 = arith.addf %2550, %2552 : vector<8x128xf32>
      %cst_903 = arith.constant 0.0939409286 : f32
      %2554 = vector.broadcast %cst_903 : f32 to vector<8x128xf32>
      %2555 = arith.mulf %215, %2554 : vector<8x128xf32>
      %2556 = arith.addf %2553, %2555 : vector<8x128xf32>
      %cst_904 = arith.constant 0.148648664 : f32
      %2557 = vector.broadcast %cst_904 : f32 to vector<8x128xf32>
      %2558 = arith.mulf %224, %2557 : vector<8x128xf32>
      %2559 = arith.addf %2556, %2558 : vector<8x128xf32>
      %cst_905 = arith.constant -0.117351472 : f32
      %2560 = vector.broadcast %cst_905 : f32 to vector<8x128xf32>
      %2561 = arith.mulf %233, %2560 : vector<8x128xf32>
      %2562 = arith.addf %2559, %2561 : vector<8x128xf32>
      %cst_906 = arith.constant 0.135052532 : f32
      %2563 = vector.broadcast %cst_906 : f32 to vector<8x128xf32>
      %2564 = arith.mulf %242, %2563 : vector<8x128xf32>
      %2565 = arith.addf %2562, %2564 : vector<8x128xf32>
      %cst_907 = arith.constant -0.00216940208 : f32
      %2566 = vector.broadcast %cst_907 : f32 to vector<8x128xf32>
      %2567 = arith.mulf %251, %2566 : vector<8x128xf32>
      %2568 = arith.addf %2565, %2567 : vector<8x128xf32>
      %cst_908 = arith.constant -0.120661862 : f32
      %2569 = vector.broadcast %cst_908 : f32 to vector<8x128xf32>
      %2570 = arith.mulf %260, %2569 : vector<8x128xf32>
      %2571 = arith.addf %2568, %2570 : vector<8x128xf32>
      %cst_909 = arith.constant 0.00802380219 : f32
      %2572 = vector.broadcast %cst_909 : f32 to vector<8x128xf32>
      %2573 = arith.mulf %269, %2572 : vector<8x128xf32>
      %2574 = arith.addf %2571, %2573 : vector<8x128xf32>
      %cst_910 = arith.constant 0.174025282 : f32
      %2575 = vector.broadcast %cst_910 : f32 to vector<8x128xf32>
      %2576 = arith.mulf %278, %2575 : vector<8x128xf32>
      %2577 = arith.addf %2574, %2576 : vector<8x128xf32>
      %cst_911 = arith.constant 0.000000e+00 : f32
      %2578 = vector.broadcast %cst_911 : f32 to vector<8x128xf32>
      %2579 = arith.cmpf ogt, %2577, %2578 : vector<8x128xf32>
      %cst_912 = arith.constant 1.000000e-01 : f32
      %2580 = vector.broadcast %cst_912 : f32 to vector<8x128xf32>
      %2581 = arith.mulf %2580, %2577 : vector<8x128xf32>
      %2582 = arith.select %2579, %2577, %2581 : vector<8x128xi1>, vector<8x128xf32>
      %cst_913 = arith.constant 0.0772383884 : f32
      %2583 = vector.broadcast %cst_913 : f32 to vector<8x128xf32>
      %cst_914 = arith.constant -0.0449344143 : f32
      %2584 = vector.broadcast %cst_914 : f32 to vector<8x128xf32>
      %2585 = arith.mulf %17, %2584 : vector<8x128xf32>
      %2586 = arith.addf %2583, %2585 : vector<8x128xf32>
      %cst_915 = arith.constant 0.175864354 : f32
      %2587 = vector.broadcast %cst_915 : f32 to vector<8x128xf32>
      %2588 = arith.mulf %26, %2587 : vector<8x128xf32>
      %2589 = arith.addf %2586, %2588 : vector<8x128xf32>
      %cst_916 = arith.constant 0.142663464 : f32
      %2590 = vector.broadcast %cst_916 : f32 to vector<8x128xf32>
      %2591 = arith.mulf %35, %2590 : vector<8x128xf32>
      %2592 = arith.addf %2589, %2591 : vector<8x128xf32>
      %cst_917 = arith.constant 0.1480719 : f32
      %2593 = vector.broadcast %cst_917 : f32 to vector<8x128xf32>
      %2594 = arith.mulf %44, %2593 : vector<8x128xf32>
      %2595 = arith.addf %2592, %2594 : vector<8x128xf32>
      %cst_918 = arith.constant -0.172828197 : f32
      %2596 = vector.broadcast %cst_918 : f32 to vector<8x128xf32>
      %2597 = arith.mulf %53, %2596 : vector<8x128xf32>
      %2598 = arith.addf %2595, %2597 : vector<8x128xf32>
      %cst_919 = arith.constant 0.0116564343 : f32
      %2599 = vector.broadcast %cst_919 : f32 to vector<8x128xf32>
      %2600 = arith.mulf %62, %2599 : vector<8x128xf32>
      %2601 = arith.addf %2598, %2600 : vector<8x128xf32>
      %cst_920 = arith.constant -0.129722357 : f32
      %2602 = vector.broadcast %cst_920 : f32 to vector<8x128xf32>
      %2603 = arith.mulf %71, %2602 : vector<8x128xf32>
      %2604 = arith.addf %2601, %2603 : vector<8x128xf32>
      %cst_921 = arith.constant 0.0886629373 : f32
      %2605 = vector.broadcast %cst_921 : f32 to vector<8x128xf32>
      %2606 = arith.mulf %80, %2605 : vector<8x128xf32>
      %2607 = arith.addf %2604, %2606 : vector<8x128xf32>
      %cst_922 = arith.constant 0.023090478 : f32
      %2608 = vector.broadcast %cst_922 : f32 to vector<8x128xf32>
      %2609 = arith.mulf %89, %2608 : vector<8x128xf32>
      %2610 = arith.addf %2607, %2609 : vector<8x128xf32>
      %cst_923 = arith.constant -0.133352369 : f32
      %2611 = vector.broadcast %cst_923 : f32 to vector<8x128xf32>
      %2612 = arith.mulf %98, %2611 : vector<8x128xf32>
      %2613 = arith.addf %2610, %2612 : vector<8x128xf32>
      %cst_924 = arith.constant 0.142643824 : f32
      %2614 = vector.broadcast %cst_924 : f32 to vector<8x128xf32>
      %2615 = arith.mulf %107, %2614 : vector<8x128xf32>
      %2616 = arith.addf %2613, %2615 : vector<8x128xf32>
      %cst_925 = arith.constant -0.0141849071 : f32
      %2617 = vector.broadcast %cst_925 : f32 to vector<8x128xf32>
      %2618 = arith.mulf %116, %2617 : vector<8x128xf32>
      %2619 = arith.addf %2616, %2618 : vector<8x128xf32>
      %cst_926 = arith.constant 0.020598961 : f32
      %2620 = vector.broadcast %cst_926 : f32 to vector<8x128xf32>
      %2621 = arith.mulf %125, %2620 : vector<8x128xf32>
      %2622 = arith.addf %2619, %2621 : vector<8x128xf32>
      %cst_927 = arith.constant 0.00828680489 : f32
      %2623 = vector.broadcast %cst_927 : f32 to vector<8x128xf32>
      %2624 = arith.mulf %134, %2623 : vector<8x128xf32>
      %2625 = arith.addf %2622, %2624 : vector<8x128xf32>
      %cst_928 = arith.constant 0.0660084039 : f32
      %2626 = vector.broadcast %cst_928 : f32 to vector<8x128xf32>
      %2627 = arith.mulf %143, %2626 : vector<8x128xf32>
      %2628 = arith.addf %2625, %2627 : vector<8x128xf32>
      %cst_929 = arith.constant -0.121332951 : f32
      %2629 = vector.broadcast %cst_929 : f32 to vector<8x128xf32>
      %2630 = arith.mulf %152, %2629 : vector<8x128xf32>
      %2631 = arith.addf %2628, %2630 : vector<8x128xf32>
      %cst_930 = arith.constant -0.0239578821 : f32
      %2632 = vector.broadcast %cst_930 : f32 to vector<8x128xf32>
      %2633 = arith.mulf %161, %2632 : vector<8x128xf32>
      %2634 = arith.addf %2631, %2633 : vector<8x128xf32>
      %cst_931 = arith.constant 0.0555840619 : f32
      %2635 = vector.broadcast %cst_931 : f32 to vector<8x128xf32>
      %2636 = arith.mulf %170, %2635 : vector<8x128xf32>
      %2637 = arith.addf %2634, %2636 : vector<8x128xf32>
      %cst_932 = arith.constant 0.00985454767 : f32
      %2638 = vector.broadcast %cst_932 : f32 to vector<8x128xf32>
      %2639 = arith.mulf %179, %2638 : vector<8x128xf32>
      %2640 = arith.addf %2637, %2639 : vector<8x128xf32>
      %cst_933 = arith.constant -0.146544605 : f32
      %2641 = vector.broadcast %cst_933 : f32 to vector<8x128xf32>
      %2642 = arith.mulf %188, %2641 : vector<8x128xf32>
      %2643 = arith.addf %2640, %2642 : vector<8x128xf32>
      %cst_934 = arith.constant -0.153383583 : f32
      %2644 = vector.broadcast %cst_934 : f32 to vector<8x128xf32>
      %2645 = arith.mulf %197, %2644 : vector<8x128xf32>
      %2646 = arith.addf %2643, %2645 : vector<8x128xf32>
      %cst_935 = arith.constant 0.139820099 : f32
      %2647 = vector.broadcast %cst_935 : f32 to vector<8x128xf32>
      %2648 = arith.mulf %206, %2647 : vector<8x128xf32>
      %2649 = arith.addf %2646, %2648 : vector<8x128xf32>
      %cst_936 = arith.constant 0.143303037 : f32
      %2650 = vector.broadcast %cst_936 : f32 to vector<8x128xf32>
      %2651 = arith.mulf %215, %2650 : vector<8x128xf32>
      %2652 = arith.addf %2649, %2651 : vector<8x128xf32>
      %cst_937 = arith.constant 0.101640612 : f32
      %2653 = vector.broadcast %cst_937 : f32 to vector<8x128xf32>
      %2654 = arith.mulf %224, %2653 : vector<8x128xf32>
      %2655 = arith.addf %2652, %2654 : vector<8x128xf32>
      %cst_938 = arith.constant 0.0481017195 : f32
      %2656 = vector.broadcast %cst_938 : f32 to vector<8x128xf32>
      %2657 = arith.mulf %233, %2656 : vector<8x128xf32>
      %2658 = arith.addf %2655, %2657 : vector<8x128xf32>
      %cst_939 = arith.constant 0.156552151 : f32
      %2659 = vector.broadcast %cst_939 : f32 to vector<8x128xf32>
      %2660 = arith.mulf %242, %2659 : vector<8x128xf32>
      %2661 = arith.addf %2658, %2660 : vector<8x128xf32>
      %cst_940 = arith.constant 0.151862726 : f32
      %2662 = vector.broadcast %cst_940 : f32 to vector<8x128xf32>
      %2663 = arith.mulf %251, %2662 : vector<8x128xf32>
      %2664 = arith.addf %2661, %2663 : vector<8x128xf32>
      %cst_941 = arith.constant -0.154719532 : f32
      %2665 = vector.broadcast %cst_941 : f32 to vector<8x128xf32>
      %2666 = arith.mulf %260, %2665 : vector<8x128xf32>
      %2667 = arith.addf %2664, %2666 : vector<8x128xf32>
      %cst_942 = arith.constant 0.0126268277 : f32
      %2668 = vector.broadcast %cst_942 : f32 to vector<8x128xf32>
      %2669 = arith.mulf %269, %2668 : vector<8x128xf32>
      %2670 = arith.addf %2667, %2669 : vector<8x128xf32>
      %cst_943 = arith.constant 0.123343728 : f32
      %2671 = vector.broadcast %cst_943 : f32 to vector<8x128xf32>
      %2672 = arith.mulf %278, %2671 : vector<8x128xf32>
      %2673 = arith.addf %2670, %2672 : vector<8x128xf32>
      %cst_944 = arith.constant 0.000000e+00 : f32
      %2674 = vector.broadcast %cst_944 : f32 to vector<8x128xf32>
      %2675 = arith.cmpf ogt, %2673, %2674 : vector<8x128xf32>
      %cst_945 = arith.constant 1.000000e-01 : f32
      %2676 = vector.broadcast %cst_945 : f32 to vector<8x128xf32>
      %2677 = arith.mulf %2676, %2673 : vector<8x128xf32>
      %2678 = arith.select %2675, %2673, %2677 : vector<8x128xi1>, vector<8x128xf32>
      %cst_946 = arith.constant 0.11528872 : f32
      %2679 = vector.broadcast %cst_946 : f32 to vector<8x128xf32>
      %cst_947 = arith.constant -0.0154994419 : f32
      %2680 = vector.broadcast %cst_947 : f32 to vector<8x128xf32>
      %2681 = arith.mulf %17, %2680 : vector<8x128xf32>
      %2682 = arith.addf %2679, %2681 : vector<8x128xf32>
      %cst_948 = arith.constant 0.00371363969 : f32
      %2683 = vector.broadcast %cst_948 : f32 to vector<8x128xf32>
      %2684 = arith.mulf %26, %2683 : vector<8x128xf32>
      %2685 = arith.addf %2682, %2684 : vector<8x128xf32>
      %cst_949 = arith.constant -0.177775413 : f32
      %2686 = vector.broadcast %cst_949 : f32 to vector<8x128xf32>
      %2687 = arith.mulf %35, %2686 : vector<8x128xf32>
      %2688 = arith.addf %2685, %2687 : vector<8x128xf32>
      %cst_950 = arith.constant -0.0484778099 : f32
      %2689 = vector.broadcast %cst_950 : f32 to vector<8x128xf32>
      %2690 = arith.mulf %44, %2689 : vector<8x128xf32>
      %2691 = arith.addf %2688, %2690 : vector<8x128xf32>
      %cst_951 = arith.constant -0.121607356 : f32
      %2692 = vector.broadcast %cst_951 : f32 to vector<8x128xf32>
      %2693 = arith.mulf %53, %2692 : vector<8x128xf32>
      %2694 = arith.addf %2691, %2693 : vector<8x128xf32>
      %cst_952 = arith.constant -0.114138201 : f32
      %2695 = vector.broadcast %cst_952 : f32 to vector<8x128xf32>
      %2696 = arith.mulf %62, %2695 : vector<8x128xf32>
      %2697 = arith.addf %2694, %2696 : vector<8x128xf32>
      %cst_953 = arith.constant 0.155010656 : f32
      %2698 = vector.broadcast %cst_953 : f32 to vector<8x128xf32>
      %2699 = arith.mulf %71, %2698 : vector<8x128xf32>
      %2700 = arith.addf %2697, %2699 : vector<8x128xf32>
      %cst_954 = arith.constant 0.172385767 : f32
      %2701 = vector.broadcast %cst_954 : f32 to vector<8x128xf32>
      %2702 = arith.mulf %80, %2701 : vector<8x128xf32>
      %2703 = arith.addf %2700, %2702 : vector<8x128xf32>
      %cst_955 = arith.constant 0.123004898 : f32
      %2704 = vector.broadcast %cst_955 : f32 to vector<8x128xf32>
      %2705 = arith.mulf %89, %2704 : vector<8x128xf32>
      %2706 = arith.addf %2703, %2705 : vector<8x128xf32>
      %cst_956 = arith.constant -0.166212216 : f32
      %2707 = vector.broadcast %cst_956 : f32 to vector<8x128xf32>
      %2708 = arith.mulf %98, %2707 : vector<8x128xf32>
      %2709 = arith.addf %2706, %2708 : vector<8x128xf32>
      %cst_957 = arith.constant 0.051602371 : f32
      %2710 = vector.broadcast %cst_957 : f32 to vector<8x128xf32>
      %2711 = arith.mulf %107, %2710 : vector<8x128xf32>
      %2712 = arith.addf %2709, %2711 : vector<8x128xf32>
      %cst_958 = arith.constant -0.103772841 : f32
      %2713 = vector.broadcast %cst_958 : f32 to vector<8x128xf32>
      %2714 = arith.mulf %116, %2713 : vector<8x128xf32>
      %2715 = arith.addf %2712, %2714 : vector<8x128xf32>
      %cst_959 = arith.constant -0.105925485 : f32
      %2716 = vector.broadcast %cst_959 : f32 to vector<8x128xf32>
      %2717 = arith.mulf %125, %2716 : vector<8x128xf32>
      %2718 = arith.addf %2715, %2717 : vector<8x128xf32>
      %cst_960 = arith.constant -0.0939608663 : f32
      %2719 = vector.broadcast %cst_960 : f32 to vector<8x128xf32>
      %2720 = arith.mulf %134, %2719 : vector<8x128xf32>
      %2721 = arith.addf %2718, %2720 : vector<8x128xf32>
      %cst_961 = arith.constant -0.00318724266 : f32
      %2722 = vector.broadcast %cst_961 : f32 to vector<8x128xf32>
      %2723 = arith.mulf %143, %2722 : vector<8x128xf32>
      %2724 = arith.addf %2721, %2723 : vector<8x128xf32>
      %cst_962 = arith.constant -0.0154869929 : f32
      %2725 = vector.broadcast %cst_962 : f32 to vector<8x128xf32>
      %2726 = arith.mulf %152, %2725 : vector<8x128xf32>
      %2727 = arith.addf %2724, %2726 : vector<8x128xf32>
      %cst_963 = arith.constant -0.049777329 : f32
      %2728 = vector.broadcast %cst_963 : f32 to vector<8x128xf32>
      %2729 = arith.mulf %161, %2728 : vector<8x128xf32>
      %2730 = arith.addf %2727, %2729 : vector<8x128xf32>
      %cst_964 = arith.constant 0.0743088797 : f32
      %2731 = vector.broadcast %cst_964 : f32 to vector<8x128xf32>
      %2732 = arith.mulf %170, %2731 : vector<8x128xf32>
      %2733 = arith.addf %2730, %2732 : vector<8x128xf32>
      %cst_965 = arith.constant -0.0267896652 : f32
      %2734 = vector.broadcast %cst_965 : f32 to vector<8x128xf32>
      %2735 = arith.mulf %179, %2734 : vector<8x128xf32>
      %2736 = arith.addf %2733, %2735 : vector<8x128xf32>
      %cst_966 = arith.constant -0.146232277 : f32
      %2737 = vector.broadcast %cst_966 : f32 to vector<8x128xf32>
      %2738 = arith.mulf %188, %2737 : vector<8x128xf32>
      %2739 = arith.addf %2736, %2738 : vector<8x128xf32>
      %cst_967 = arith.constant 7.246490e-02 : f32
      %2740 = vector.broadcast %cst_967 : f32 to vector<8x128xf32>
      %2741 = arith.mulf %197, %2740 : vector<8x128xf32>
      %2742 = arith.addf %2739, %2741 : vector<8x128xf32>
      %cst_968 = arith.constant 0.0246519968 : f32
      %2743 = vector.broadcast %cst_968 : f32 to vector<8x128xf32>
      %2744 = arith.mulf %206, %2743 : vector<8x128xf32>
      %2745 = arith.addf %2742, %2744 : vector<8x128xf32>
      %cst_969 = arith.constant 0.023266945 : f32
      %2746 = vector.broadcast %cst_969 : f32 to vector<8x128xf32>
      %2747 = arith.mulf %215, %2746 : vector<8x128xf32>
      %2748 = arith.addf %2745, %2747 : vector<8x128xf32>
      %cst_970 = arith.constant -0.180018499 : f32
      %2749 = vector.broadcast %cst_970 : f32 to vector<8x128xf32>
      %2750 = arith.mulf %224, %2749 : vector<8x128xf32>
      %2751 = arith.addf %2748, %2750 : vector<8x128xf32>
      %cst_971 = arith.constant -0.176553324 : f32
      %2752 = vector.broadcast %cst_971 : f32 to vector<8x128xf32>
      %2753 = arith.mulf %233, %2752 : vector<8x128xf32>
      %2754 = arith.addf %2751, %2753 : vector<8x128xf32>
      %cst_972 = arith.constant 0.139452934 : f32
      %2755 = vector.broadcast %cst_972 : f32 to vector<8x128xf32>
      %2756 = arith.mulf %242, %2755 : vector<8x128xf32>
      %2757 = arith.addf %2754, %2756 : vector<8x128xf32>
      %cst_973 = arith.constant -0.135313526 : f32
      %2758 = vector.broadcast %cst_973 : f32 to vector<8x128xf32>
      %2759 = arith.mulf %251, %2758 : vector<8x128xf32>
      %2760 = arith.addf %2757, %2759 : vector<8x128xf32>
      %cst_974 = arith.constant -0.154830232 : f32
      %2761 = vector.broadcast %cst_974 : f32 to vector<8x128xf32>
      %2762 = arith.mulf %260, %2761 : vector<8x128xf32>
      %2763 = arith.addf %2760, %2762 : vector<8x128xf32>
      %cst_975 = arith.constant -0.139313817 : f32
      %2764 = vector.broadcast %cst_975 : f32 to vector<8x128xf32>
      %2765 = arith.mulf %269, %2764 : vector<8x128xf32>
      %2766 = arith.addf %2763, %2765 : vector<8x128xf32>
      %cst_976 = arith.constant 0.0807857885 : f32
      %2767 = vector.broadcast %cst_976 : f32 to vector<8x128xf32>
      %2768 = arith.mulf %278, %2767 : vector<8x128xf32>
      %2769 = arith.addf %2766, %2768 : vector<8x128xf32>
      %cst_977 = arith.constant 0.000000e+00 : f32
      %2770 = vector.broadcast %cst_977 : f32 to vector<8x128xf32>
      %2771 = arith.cmpf ogt, %2769, %2770 : vector<8x128xf32>
      %cst_978 = arith.constant 1.000000e-01 : f32
      %2772 = vector.broadcast %cst_978 : f32 to vector<8x128xf32>
      %2773 = arith.mulf %2772, %2769 : vector<8x128xf32>
      %2774 = arith.select %2771, %2769, %2773 : vector<8x128xi1>, vector<8x128xf32>
      %cst_979 = arith.constant 0.171870247 : f32
      %2775 = vector.broadcast %cst_979 : f32 to vector<8x128xf32>
      %cst_980 = arith.constant -0.0276032686 : f32
      %2776 = vector.broadcast %cst_980 : f32 to vector<8x128xf32>
      %2777 = arith.mulf %17, %2776 : vector<8x128xf32>
      %2778 = arith.addf %2775, %2777 : vector<8x128xf32>
      %cst_981 = arith.constant -0.014020063 : f32
      %2779 = vector.broadcast %cst_981 : f32 to vector<8x128xf32>
      %2780 = arith.mulf %26, %2779 : vector<8x128xf32>
      %2781 = arith.addf %2778, %2780 : vector<8x128xf32>
      %cst_982 = arith.constant 0.0278561283 : f32
      %2782 = vector.broadcast %cst_982 : f32 to vector<8x128xf32>
      %2783 = arith.mulf %35, %2782 : vector<8x128xf32>
      %2784 = arith.addf %2781, %2783 : vector<8x128xf32>
      %cst_983 = arith.constant 0.138320655 : f32
      %2785 = vector.broadcast %cst_983 : f32 to vector<8x128xf32>
      %2786 = arith.mulf %44, %2785 : vector<8x128xf32>
      %2787 = arith.addf %2784, %2786 : vector<8x128xf32>
      %cst_984 = arith.constant 0.144845188 : f32
      %2788 = vector.broadcast %cst_984 : f32 to vector<8x128xf32>
      %2789 = arith.mulf %53, %2788 : vector<8x128xf32>
      %2790 = arith.addf %2787, %2789 : vector<8x128xf32>
      %cst_985 = arith.constant 0.0252881311 : f32
      %2791 = vector.broadcast %cst_985 : f32 to vector<8x128xf32>
      %2792 = arith.mulf %62, %2791 : vector<8x128xf32>
      %2793 = arith.addf %2790, %2792 : vector<8x128xf32>
      %cst_986 = arith.constant 0.136666417 : f32
      %2794 = vector.broadcast %cst_986 : f32 to vector<8x128xf32>
      %2795 = arith.mulf %71, %2794 : vector<8x128xf32>
      %2796 = arith.addf %2793, %2795 : vector<8x128xf32>
      %cst_987 = arith.constant -0.15511103 : f32
      %2797 = vector.broadcast %cst_987 : f32 to vector<8x128xf32>
      %2798 = arith.mulf %80, %2797 : vector<8x128xf32>
      %2799 = arith.addf %2796, %2798 : vector<8x128xf32>
      %cst_988 = arith.constant -0.14351967 : f32
      %2800 = vector.broadcast %cst_988 : f32 to vector<8x128xf32>
      %2801 = arith.mulf %89, %2800 : vector<8x128xf32>
      %2802 = arith.addf %2799, %2801 : vector<8x128xf32>
      %cst_989 = arith.constant -0.0135178678 : f32
      %2803 = vector.broadcast %cst_989 : f32 to vector<8x128xf32>
      %2804 = arith.mulf %98, %2803 : vector<8x128xf32>
      %2805 = arith.addf %2802, %2804 : vector<8x128xf32>
      %cst_990 = arith.constant -0.134758055 : f32
      %2806 = vector.broadcast %cst_990 : f32 to vector<8x128xf32>
      %2807 = arith.mulf %107, %2806 : vector<8x128xf32>
      %2808 = arith.addf %2805, %2807 : vector<8x128xf32>
      %cst_991 = arith.constant 0.0148965642 : f32
      %2809 = vector.broadcast %cst_991 : f32 to vector<8x128xf32>
      %2810 = arith.mulf %116, %2809 : vector<8x128xf32>
      %2811 = arith.addf %2808, %2810 : vector<8x128xf32>
      %cst_992 = arith.constant 0.100866184 : f32
      %2812 = vector.broadcast %cst_992 : f32 to vector<8x128xf32>
      %2813 = arith.mulf %125, %2812 : vector<8x128xf32>
      %2814 = arith.addf %2811, %2813 : vector<8x128xf32>
      %cst_993 = arith.constant 0.106154971 : f32
      %2815 = vector.broadcast %cst_993 : f32 to vector<8x128xf32>
      %2816 = arith.mulf %134, %2815 : vector<8x128xf32>
      %2817 = arith.addf %2814, %2816 : vector<8x128xf32>
      %cst_994 = arith.constant -0.0365861468 : f32
      %2818 = vector.broadcast %cst_994 : f32 to vector<8x128xf32>
      %2819 = arith.mulf %143, %2818 : vector<8x128xf32>
      %2820 = arith.addf %2817, %2819 : vector<8x128xf32>
      %cst_995 = arith.constant 0.0934762135 : f32
      %2821 = vector.broadcast %cst_995 : f32 to vector<8x128xf32>
      %2822 = arith.mulf %152, %2821 : vector<8x128xf32>
      %2823 = arith.addf %2820, %2822 : vector<8x128xf32>
      %cst_996 = arith.constant 0.0207291991 : f32
      %2824 = vector.broadcast %cst_996 : f32 to vector<8x128xf32>
      %2825 = arith.mulf %161, %2824 : vector<8x128xf32>
      %2826 = arith.addf %2823, %2825 : vector<8x128xf32>
      %cst_997 = arith.constant 4.302710e-02 : f32
      %2827 = vector.broadcast %cst_997 : f32 to vector<8x128xf32>
      %2828 = arith.mulf %170, %2827 : vector<8x128xf32>
      %2829 = arith.addf %2826, %2828 : vector<8x128xf32>
      %cst_998 = arith.constant -7.708220e-02 : f32
      %2830 = vector.broadcast %cst_998 : f32 to vector<8x128xf32>
      %2831 = arith.mulf %179, %2830 : vector<8x128xf32>
      %2832 = arith.addf %2829, %2831 : vector<8x128xf32>
      %cst_999 = arith.constant 0.154184654 : f32
      %2833 = vector.broadcast %cst_999 : f32 to vector<8x128xf32>
      %2834 = arith.mulf %188, %2833 : vector<8x128xf32>
      %2835 = arith.addf %2832, %2834 : vector<8x128xf32>
      %cst_1000 = arith.constant -0.088499099 : f32
      %2836 = vector.broadcast %cst_1000 : f32 to vector<8x128xf32>
      %2837 = arith.mulf %197, %2836 : vector<8x128xf32>
      %2838 = arith.addf %2835, %2837 : vector<8x128xf32>
      %cst_1001 = arith.constant 0.171229586 : f32
      %2839 = vector.broadcast %cst_1001 : f32 to vector<8x128xf32>
      %2840 = arith.mulf %206, %2839 : vector<8x128xf32>
      %2841 = arith.addf %2838, %2840 : vector<8x128xf32>
      %cst_1002 = arith.constant 0.0757701918 : f32
      %2842 = vector.broadcast %cst_1002 : f32 to vector<8x128xf32>
      %2843 = arith.mulf %215, %2842 : vector<8x128xf32>
      %2844 = arith.addf %2841, %2843 : vector<8x128xf32>
      %cst_1003 = arith.constant -0.0808269679 : f32
      %2845 = vector.broadcast %cst_1003 : f32 to vector<8x128xf32>
      %2846 = arith.mulf %224, %2845 : vector<8x128xf32>
      %2847 = arith.addf %2844, %2846 : vector<8x128xf32>
      %cst_1004 = arith.constant 0.050400272 : f32
      %2848 = vector.broadcast %cst_1004 : f32 to vector<8x128xf32>
      %2849 = arith.mulf %233, %2848 : vector<8x128xf32>
      %2850 = arith.addf %2847, %2849 : vector<8x128xf32>
      %cst_1005 = arith.constant 1.195140e-01 : f32
      %2851 = vector.broadcast %cst_1005 : f32 to vector<8x128xf32>
      %2852 = arith.mulf %242, %2851 : vector<8x128xf32>
      %2853 = arith.addf %2850, %2852 : vector<8x128xf32>
      %cst_1006 = arith.constant 0.0888105482 : f32
      %2854 = vector.broadcast %cst_1006 : f32 to vector<8x128xf32>
      %2855 = arith.mulf %251, %2854 : vector<8x128xf32>
      %2856 = arith.addf %2853, %2855 : vector<8x128xf32>
      %cst_1007 = arith.constant -0.0236333292 : f32
      %2857 = vector.broadcast %cst_1007 : f32 to vector<8x128xf32>
      %2858 = arith.mulf %260, %2857 : vector<8x128xf32>
      %2859 = arith.addf %2856, %2858 : vector<8x128xf32>
      %cst_1008 = arith.constant 0.0770334527 : f32
      %2860 = vector.broadcast %cst_1008 : f32 to vector<8x128xf32>
      %2861 = arith.mulf %269, %2860 : vector<8x128xf32>
      %2862 = arith.addf %2859, %2861 : vector<8x128xf32>
      %cst_1009 = arith.constant -1.795030e-01 : f32
      %2863 = vector.broadcast %cst_1009 : f32 to vector<8x128xf32>
      %2864 = arith.mulf %278, %2863 : vector<8x128xf32>
      %2865 = arith.addf %2862, %2864 : vector<8x128xf32>
      %cst_1010 = arith.constant 0.000000e+00 : f32
      %2866 = vector.broadcast %cst_1010 : f32 to vector<8x128xf32>
      %2867 = arith.cmpf ogt, %2865, %2866 : vector<8x128xf32>
      %cst_1011 = arith.constant 1.000000e-01 : f32
      %2868 = vector.broadcast %cst_1011 : f32 to vector<8x128xf32>
      %2869 = arith.mulf %2868, %2865 : vector<8x128xf32>
      %2870 = arith.select %2867, %2865, %2869 : vector<8x128xi1>, vector<8x128xf32>
      %cst_1012 = arith.constant 0.119641885 : f32
      %2871 = vector.broadcast %cst_1012 : f32 to vector<8x128xf32>
      %cst_1013 = arith.constant 0.0941752493 : f32
      %2872 = vector.broadcast %cst_1013 : f32 to vector<8x128xf32>
      %2873 = arith.mulf %17, %2872 : vector<8x128xf32>
      %2874 = arith.addf %2871, %2873 : vector<8x128xf32>
      %cst_1014 = arith.constant -0.16551666 : f32
      %2875 = vector.broadcast %cst_1014 : f32 to vector<8x128xf32>
      %2876 = arith.mulf %26, %2875 : vector<8x128xf32>
      %2877 = arith.addf %2874, %2876 : vector<8x128xf32>
      %cst_1015 = arith.constant -0.0982269346 : f32
      %2878 = vector.broadcast %cst_1015 : f32 to vector<8x128xf32>
      %2879 = arith.mulf %35, %2878 : vector<8x128xf32>
      %2880 = arith.addf %2877, %2879 : vector<8x128xf32>
      %cst_1016 = arith.constant -0.143684521 : f32
      %2881 = vector.broadcast %cst_1016 : f32 to vector<8x128xf32>
      %2882 = arith.mulf %44, %2881 : vector<8x128xf32>
      %2883 = arith.addf %2880, %2882 : vector<8x128xf32>
      %cst_1017 = arith.constant 0.109616101 : f32
      %2884 = vector.broadcast %cst_1017 : f32 to vector<8x128xf32>
      %2885 = arith.mulf %53, %2884 : vector<8x128xf32>
      %2886 = arith.addf %2883, %2885 : vector<8x128xf32>
      %cst_1018 = arith.constant -0.00385606685 : f32
      %2887 = vector.broadcast %cst_1018 : f32 to vector<8x128xf32>
      %2888 = arith.mulf %62, %2887 : vector<8x128xf32>
      %2889 = arith.addf %2886, %2888 : vector<8x128xf32>
      %cst_1019 = arith.constant -0.161428109 : f32
      %2890 = vector.broadcast %cst_1019 : f32 to vector<8x128xf32>
      %2891 = arith.mulf %71, %2890 : vector<8x128xf32>
      %2892 = arith.addf %2889, %2891 : vector<8x128xf32>
      %cst_1020 = arith.constant 0.0457244217 : f32
      %2893 = vector.broadcast %cst_1020 : f32 to vector<8x128xf32>
      %2894 = arith.mulf %80, %2893 : vector<8x128xf32>
      %2895 = arith.addf %2892, %2894 : vector<8x128xf32>
      %cst_1021 = arith.constant 0.0698644742 : f32
      %2896 = vector.broadcast %cst_1021 : f32 to vector<8x128xf32>
      %2897 = arith.mulf %89, %2896 : vector<8x128xf32>
      %2898 = arith.addf %2895, %2897 : vector<8x128xf32>
      %cst_1022 = arith.constant 0.0319893882 : f32
      %2899 = vector.broadcast %cst_1022 : f32 to vector<8x128xf32>
      %2900 = arith.mulf %98, %2899 : vector<8x128xf32>
      %2901 = arith.addf %2898, %2900 : vector<8x128xf32>
      %cst_1023 = arith.constant 0.12775518 : f32
      %2902 = vector.broadcast %cst_1023 : f32 to vector<8x128xf32>
      %2903 = arith.mulf %107, %2902 : vector<8x128xf32>
      %2904 = arith.addf %2901, %2903 : vector<8x128xf32>
      %cst_1024 = arith.constant 0.10496071 : f32
      %2905 = vector.broadcast %cst_1024 : f32 to vector<8x128xf32>
      %2906 = arith.mulf %116, %2905 : vector<8x128xf32>
      %2907 = arith.addf %2904, %2906 : vector<8x128xf32>
      %cst_1025 = arith.constant 5.420280e-02 : f32
      %2908 = vector.broadcast %cst_1025 : f32 to vector<8x128xf32>
      %2909 = arith.mulf %125, %2908 : vector<8x128xf32>
      %2910 = arith.addf %2907, %2909 : vector<8x128xf32>
      %cst_1026 = arith.constant 0.119277768 : f32
      %2911 = vector.broadcast %cst_1026 : f32 to vector<8x128xf32>
      %2912 = arith.mulf %134, %2911 : vector<8x128xf32>
      %2913 = arith.addf %2910, %2912 : vector<8x128xf32>
      %cst_1027 = arith.constant -0.0675893426 : f32
      %2914 = vector.broadcast %cst_1027 : f32 to vector<8x128xf32>
      %2915 = arith.mulf %143, %2914 : vector<8x128xf32>
      %2916 = arith.addf %2913, %2915 : vector<8x128xf32>
      %cst_1028 = arith.constant 0.131070316 : f32
      %2917 = vector.broadcast %cst_1028 : f32 to vector<8x128xf32>
      %2918 = arith.mulf %152, %2917 : vector<8x128xf32>
      %2919 = arith.addf %2916, %2918 : vector<8x128xf32>
      %cst_1029 = arith.constant 0.0430506058 : f32
      %2920 = vector.broadcast %cst_1029 : f32 to vector<8x128xf32>
      %2921 = arith.mulf %161, %2920 : vector<8x128xf32>
      %2922 = arith.addf %2919, %2921 : vector<8x128xf32>
      %cst_1030 = arith.constant 0.00291392347 : f32
      %2923 = vector.broadcast %cst_1030 : f32 to vector<8x128xf32>
      %2924 = arith.mulf %170, %2923 : vector<8x128xf32>
      %2925 = arith.addf %2922, %2924 : vector<8x128xf32>
      %cst_1031 = arith.constant 0.0238689519 : f32
      %2926 = vector.broadcast %cst_1031 : f32 to vector<8x128xf32>
      %2927 = arith.mulf %179, %2926 : vector<8x128xf32>
      %2928 = arith.addf %2925, %2927 : vector<8x128xf32>
      %cst_1032 = arith.constant 0.126987115 : f32
      %2929 = vector.broadcast %cst_1032 : f32 to vector<8x128xf32>
      %2930 = arith.mulf %188, %2929 : vector<8x128xf32>
      %2931 = arith.addf %2928, %2930 : vector<8x128xf32>
      %cst_1033 = arith.constant 6.81621837E-4 : f32
      %2932 = vector.broadcast %cst_1033 : f32 to vector<8x128xf32>
      %2933 = arith.mulf %197, %2932 : vector<8x128xf32>
      %2934 = arith.addf %2931, %2933 : vector<8x128xf32>
      %cst_1034 = arith.constant -0.0214865617 : f32
      %2935 = vector.broadcast %cst_1034 : f32 to vector<8x128xf32>
      %2936 = arith.mulf %206, %2935 : vector<8x128xf32>
      %2937 = arith.addf %2934, %2936 : vector<8x128xf32>
      %cst_1035 = arith.constant -0.139238894 : f32
      %2938 = vector.broadcast %cst_1035 : f32 to vector<8x128xf32>
      %2939 = arith.mulf %215, %2938 : vector<8x128xf32>
      %2940 = arith.addf %2937, %2939 : vector<8x128xf32>
      %cst_1036 = arith.constant 0.066294916 : f32
      %2941 = vector.broadcast %cst_1036 : f32 to vector<8x128xf32>
      %2942 = arith.mulf %224, %2941 : vector<8x128xf32>
      %2943 = arith.addf %2940, %2942 : vector<8x128xf32>
      %cst_1037 = arith.constant 0.149682567 : f32
      %2944 = vector.broadcast %cst_1037 : f32 to vector<8x128xf32>
      %2945 = arith.mulf %233, %2944 : vector<8x128xf32>
      %2946 = arith.addf %2943, %2945 : vector<8x128xf32>
      %cst_1038 = arith.constant -0.177335814 : f32
      %2947 = vector.broadcast %cst_1038 : f32 to vector<8x128xf32>
      %2948 = arith.mulf %242, %2947 : vector<8x128xf32>
      %2949 = arith.addf %2946, %2948 : vector<8x128xf32>
      %cst_1039 = arith.constant -0.0274214912 : f32
      %2950 = vector.broadcast %cst_1039 : f32 to vector<8x128xf32>
      %2951 = arith.mulf %251, %2950 : vector<8x128xf32>
      %2952 = arith.addf %2949, %2951 : vector<8x128xf32>
      %cst_1040 = arith.constant 0.0839668512 : f32
      %2953 = vector.broadcast %cst_1040 : f32 to vector<8x128xf32>
      %2954 = arith.mulf %260, %2953 : vector<8x128xf32>
      %2955 = arith.addf %2952, %2954 : vector<8x128xf32>
      %cst_1041 = arith.constant -0.123733886 : f32
      %2956 = vector.broadcast %cst_1041 : f32 to vector<8x128xf32>
      %2957 = arith.mulf %269, %2956 : vector<8x128xf32>
      %2958 = arith.addf %2955, %2957 : vector<8x128xf32>
      %cst_1042 = arith.constant 0.15241693 : f32
      %2959 = vector.broadcast %cst_1042 : f32 to vector<8x128xf32>
      %2960 = arith.mulf %278, %2959 : vector<8x128xf32>
      %2961 = arith.addf %2958, %2960 : vector<8x128xf32>
      %cst_1043 = arith.constant 0.000000e+00 : f32
      %2962 = vector.broadcast %cst_1043 : f32 to vector<8x128xf32>
      %2963 = arith.cmpf ogt, %2961, %2962 : vector<8x128xf32>
      %cst_1044 = arith.constant 1.000000e-01 : f32
      %2964 = vector.broadcast %cst_1044 : f32 to vector<8x128xf32>
      %2965 = arith.mulf %2964, %2961 : vector<8x128xf32>
      %2966 = arith.select %2963, %2961, %2965 : vector<8x128xi1>, vector<8x128xf32>
      %cst_1045 = arith.constant -0.0358426273 : f32
      %2967 = vector.broadcast %cst_1045 : f32 to vector<8x128xf32>
      %cst_1046 = arith.constant -0.0914963335 : f32
      %2968 = vector.broadcast %cst_1046 : f32 to vector<8x128xf32>
      %2969 = arith.mulf %17, %2968 : vector<8x128xf32>
      %2970 = arith.addf %2967, %2969 : vector<8x128xf32>
      %cst_1047 = arith.constant 0.0897655338 : f32
      %2971 = vector.broadcast %cst_1047 : f32 to vector<8x128xf32>
      %2972 = arith.mulf %26, %2971 : vector<8x128xf32>
      %2973 = arith.addf %2970, %2972 : vector<8x128xf32>
      %cst_1048 = arith.constant -0.111225806 : f32
      %2974 = vector.broadcast %cst_1048 : f32 to vector<8x128xf32>
      %2975 = arith.mulf %35, %2974 : vector<8x128xf32>
      %2976 = arith.addf %2973, %2975 : vector<8x128xf32>
      %cst_1049 = arith.constant -1.92746753E-4 : f32
      %2977 = vector.broadcast %cst_1049 : f32 to vector<8x128xf32>
      %2978 = arith.mulf %44, %2977 : vector<8x128xf32>
      %2979 = arith.addf %2976, %2978 : vector<8x128xf32>
      %cst_1050 = arith.constant 0.16131793 : f32
      %2980 = vector.broadcast %cst_1050 : f32 to vector<8x128xf32>
      %2981 = arith.mulf %53, %2980 : vector<8x128xf32>
      %2982 = arith.addf %2979, %2981 : vector<8x128xf32>
      %cst_1051 = arith.constant 0.121054538 : f32
      %2983 = vector.broadcast %cst_1051 : f32 to vector<8x128xf32>
      %2984 = arith.mulf %62, %2983 : vector<8x128xf32>
      %2985 = arith.addf %2982, %2984 : vector<8x128xf32>
      %cst_1052 = arith.constant -0.16413404 : f32
      %2986 = vector.broadcast %cst_1052 : f32 to vector<8x128xf32>
      %2987 = arith.mulf %71, %2986 : vector<8x128xf32>
      %2988 = arith.addf %2985, %2987 : vector<8x128xf32>
      %cst_1053 = arith.constant -0.0449621417 : f32
      %2989 = vector.broadcast %cst_1053 : f32 to vector<8x128xf32>
      %2990 = arith.mulf %80, %2989 : vector<8x128xf32>
      %2991 = arith.addf %2988, %2990 : vector<8x128xf32>
      %cst_1054 = arith.constant 0.0115494393 : f32
      %2992 = vector.broadcast %cst_1054 : f32 to vector<8x128xf32>
      %2993 = arith.mulf %89, %2992 : vector<8x128xf32>
      %2994 = arith.addf %2991, %2993 : vector<8x128xf32>
      %cst_1055 = arith.constant 0.0239229277 : f32
      %2995 = vector.broadcast %cst_1055 : f32 to vector<8x128xf32>
      %2996 = arith.mulf %98, %2995 : vector<8x128xf32>
      %2997 = arith.addf %2994, %2996 : vector<8x128xf32>
      %cst_1056 = arith.constant 0.0698438808 : f32
      %2998 = vector.broadcast %cst_1056 : f32 to vector<8x128xf32>
      %2999 = arith.mulf %107, %2998 : vector<8x128xf32>
      %3000 = arith.addf %2997, %2999 : vector<8x128xf32>
      %cst_1057 = arith.constant 0.0244278647 : f32
      %3001 = vector.broadcast %cst_1057 : f32 to vector<8x128xf32>
      %3002 = arith.mulf %116, %3001 : vector<8x128xf32>
      %3003 = arith.addf %3000, %3002 : vector<8x128xf32>
      %cst_1058 = arith.constant 0.11210335 : f32
      %3004 = vector.broadcast %cst_1058 : f32 to vector<8x128xf32>
      %3005 = arith.mulf %125, %3004 : vector<8x128xf32>
      %3006 = arith.addf %3003, %3005 : vector<8x128xf32>
      %cst_1059 = arith.constant -0.159894049 : f32
      %3007 = vector.broadcast %cst_1059 : f32 to vector<8x128xf32>
      %3008 = arith.mulf %134, %3007 : vector<8x128xf32>
      %3009 = arith.addf %3006, %3008 : vector<8x128xf32>
      %cst_1060 = arith.constant -0.0314891525 : f32
      %3010 = vector.broadcast %cst_1060 : f32 to vector<8x128xf32>
      %3011 = arith.mulf %143, %3010 : vector<8x128xf32>
      %3012 = arith.addf %3009, %3011 : vector<8x128xf32>
      %cst_1061 = arith.constant -0.14676486 : f32
      %3013 = vector.broadcast %cst_1061 : f32 to vector<8x128xf32>
      %3014 = arith.mulf %152, %3013 : vector<8x128xf32>
      %3015 = arith.addf %3012, %3014 : vector<8x128xf32>
      %cst_1062 = arith.constant 0.076965332 : f32
      %3016 = vector.broadcast %cst_1062 : f32 to vector<8x128xf32>
      %3017 = arith.mulf %161, %3016 : vector<8x128xf32>
      %3018 = arith.addf %3015, %3017 : vector<8x128xf32>
      %cst_1063 = arith.constant -0.0740278959 : f32
      %3019 = vector.broadcast %cst_1063 : f32 to vector<8x128xf32>
      %3020 = arith.mulf %170, %3019 : vector<8x128xf32>
      %3021 = arith.addf %3018, %3020 : vector<8x128xf32>
      %cst_1064 = arith.constant -0.0433577895 : f32
      %3022 = vector.broadcast %cst_1064 : f32 to vector<8x128xf32>
      %3023 = arith.mulf %179, %3022 : vector<8x128xf32>
      %3024 = arith.addf %3021, %3023 : vector<8x128xf32>
      %cst_1065 = arith.constant -0.0398813412 : f32
      %3025 = vector.broadcast %cst_1065 : f32 to vector<8x128xf32>
      %3026 = arith.mulf %188, %3025 : vector<8x128xf32>
      %3027 = arith.addf %3024, %3026 : vector<8x128xf32>
      %cst_1066 = arith.constant -0.0560650155 : f32
      %3028 = vector.broadcast %cst_1066 : f32 to vector<8x128xf32>
      %3029 = arith.mulf %197, %3028 : vector<8x128xf32>
      %3030 = arith.addf %3027, %3029 : vector<8x128xf32>
      %cst_1067 = arith.constant -0.135194525 : f32
      %3031 = vector.broadcast %cst_1067 : f32 to vector<8x128xf32>
      %3032 = arith.mulf %206, %3031 : vector<8x128xf32>
      %3033 = arith.addf %3030, %3032 : vector<8x128xf32>
      %cst_1068 = arith.constant 0.106197454 : f32
      %3034 = vector.broadcast %cst_1068 : f32 to vector<8x128xf32>
      %3035 = arith.mulf %215, %3034 : vector<8x128xf32>
      %3036 = arith.addf %3033, %3035 : vector<8x128xf32>
      %cst_1069 = arith.constant -0.0737506226 : f32
      %3037 = vector.broadcast %cst_1069 : f32 to vector<8x128xf32>
      %3038 = arith.mulf %224, %3037 : vector<8x128xf32>
      %3039 = arith.addf %3036, %3038 : vector<8x128xf32>
      %cst_1070 = arith.constant -0.0930720419 : f32
      %3040 = vector.broadcast %cst_1070 : f32 to vector<8x128xf32>
      %3041 = arith.mulf %233, %3040 : vector<8x128xf32>
      %3042 = arith.addf %3039, %3041 : vector<8x128xf32>
      %cst_1071 = arith.constant 0.0321999379 : f32
      %3043 = vector.broadcast %cst_1071 : f32 to vector<8x128xf32>
      %3044 = arith.mulf %242, %3043 : vector<8x128xf32>
      %3045 = arith.addf %3042, %3044 : vector<8x128xf32>
      %cst_1072 = arith.constant -0.00937894918 : f32
      %3046 = vector.broadcast %cst_1072 : f32 to vector<8x128xf32>
      %3047 = arith.mulf %251, %3046 : vector<8x128xf32>
      %3048 = arith.addf %3045, %3047 : vector<8x128xf32>
      %cst_1073 = arith.constant -0.105477482 : f32
      %3049 = vector.broadcast %cst_1073 : f32 to vector<8x128xf32>
      %3050 = arith.mulf %260, %3049 : vector<8x128xf32>
      %3051 = arith.addf %3048, %3050 : vector<8x128xf32>
      %cst_1074 = arith.constant 0.18008244 : f32
      %3052 = vector.broadcast %cst_1074 : f32 to vector<8x128xf32>
      %3053 = arith.mulf %269, %3052 : vector<8x128xf32>
      %3054 = arith.addf %3051, %3053 : vector<8x128xf32>
      %cst_1075 = arith.constant -0.0233323257 : f32
      %3055 = vector.broadcast %cst_1075 : f32 to vector<8x128xf32>
      %3056 = arith.mulf %278, %3055 : vector<8x128xf32>
      %3057 = arith.addf %3054, %3056 : vector<8x128xf32>
      %cst_1076 = arith.constant 0.000000e+00 : f32
      %3058 = vector.broadcast %cst_1076 : f32 to vector<8x128xf32>
      %3059 = arith.cmpf ogt, %3057, %3058 : vector<8x128xf32>
      %cst_1077 = arith.constant 1.000000e-01 : f32
      %3060 = vector.broadcast %cst_1077 : f32 to vector<8x128xf32>
      %3061 = arith.mulf %3060, %3057 : vector<8x128xf32>
      %3062 = arith.select %3059, %3057, %3061 : vector<8x128xi1>, vector<8x128xf32>
      %cst_1078 = arith.constant -0.0762639418 : f32
      %3063 = vector.broadcast %cst_1078 : f32 to vector<8x128xf32>
      %cst_1079 = arith.constant -0.0722552239 : f32
      %3064 = vector.broadcast %cst_1079 : f32 to vector<8x128xf32>
      %3065 = arith.mulf %17, %3064 : vector<8x128xf32>
      %3066 = arith.addf %3063, %3065 : vector<8x128xf32>
      %cst_1080 = arith.constant -0.168562919 : f32
      %3067 = vector.broadcast %cst_1080 : f32 to vector<8x128xf32>
      %3068 = arith.mulf %26, %3067 : vector<8x128xf32>
      %3069 = arith.addf %3066, %3068 : vector<8x128xf32>
      %cst_1081 = arith.constant 0.153882295 : f32
      %3070 = vector.broadcast %cst_1081 : f32 to vector<8x128xf32>
      %3071 = arith.mulf %35, %3070 : vector<8x128xf32>
      %3072 = arith.addf %3069, %3071 : vector<8x128xf32>
      %cst_1082 = arith.constant -0.0728220567 : f32
      %3073 = vector.broadcast %cst_1082 : f32 to vector<8x128xf32>
      %3074 = arith.mulf %44, %3073 : vector<8x128xf32>
      %3075 = arith.addf %3072, %3074 : vector<8x128xf32>
      %cst_1083 = arith.constant -0.159678847 : f32
      %3076 = vector.broadcast %cst_1083 : f32 to vector<8x128xf32>
      %3077 = arith.mulf %53, %3076 : vector<8x128xf32>
      %3078 = arith.addf %3075, %3077 : vector<8x128xf32>
      %cst_1084 = arith.constant 0.142931208 : f32
      %3079 = vector.broadcast %cst_1084 : f32 to vector<8x128xf32>
      %3080 = arith.mulf %62, %3079 : vector<8x128xf32>
      %3081 = arith.addf %3078, %3080 : vector<8x128xf32>
      %cst_1085 = arith.constant -0.0713669658 : f32
      %3082 = vector.broadcast %cst_1085 : f32 to vector<8x128xf32>
      %3083 = arith.mulf %71, %3082 : vector<8x128xf32>
      %3084 = arith.addf %3081, %3083 : vector<8x128xf32>
      %cst_1086 = arith.constant 0.154201314 : f32
      %3085 = vector.broadcast %cst_1086 : f32 to vector<8x128xf32>
      %3086 = arith.mulf %80, %3085 : vector<8x128xf32>
      %3087 = arith.addf %3084, %3086 : vector<8x128xf32>
      %cst_1087 = arith.constant 0.0124735618 : f32
      %3088 = vector.broadcast %cst_1087 : f32 to vector<8x128xf32>
      %3089 = arith.mulf %89, %3088 : vector<8x128xf32>
      %3090 = arith.addf %3087, %3089 : vector<8x128xf32>
      %cst_1088 = arith.constant -0.138341933 : f32
      %3091 = vector.broadcast %cst_1088 : f32 to vector<8x128xf32>
      %3092 = arith.mulf %98, %3091 : vector<8x128xf32>
      %3093 = arith.addf %3090, %3092 : vector<8x128xf32>
      %cst_1089 = arith.constant -0.0956603288 : f32
      %3094 = vector.broadcast %cst_1089 : f32 to vector<8x128xf32>
      %3095 = arith.mulf %107, %3094 : vector<8x128xf32>
      %3096 = arith.addf %3093, %3095 : vector<8x128xf32>
      %cst_1090 = arith.constant -0.172224402 : f32
      %3097 = vector.broadcast %cst_1090 : f32 to vector<8x128xf32>
      %3098 = arith.mulf %116, %3097 : vector<8x128xf32>
      %3099 = arith.addf %3096, %3098 : vector<8x128xf32>
      %cst_1091 = arith.constant 0.0412822366 : f32
      %3100 = vector.broadcast %cst_1091 : f32 to vector<8x128xf32>
      %3101 = arith.mulf %125, %3100 : vector<8x128xf32>
      %3102 = arith.addf %3099, %3101 : vector<8x128xf32>
      %cst_1092 = arith.constant -0.156226113 : f32
      %3103 = vector.broadcast %cst_1092 : f32 to vector<8x128xf32>
      %3104 = arith.mulf %134, %3103 : vector<8x128xf32>
      %3105 = arith.addf %3102, %3104 : vector<8x128xf32>
      %cst_1093 = arith.constant 0.0399179049 : f32
      %3106 = vector.broadcast %cst_1093 : f32 to vector<8x128xf32>
      %3107 = arith.mulf %143, %3106 : vector<8x128xf32>
      %3108 = arith.addf %3105, %3107 : vector<8x128xf32>
      %cst_1094 = arith.constant 0.106942147 : f32
      %3109 = vector.broadcast %cst_1094 : f32 to vector<8x128xf32>
      %3110 = arith.mulf %152, %3109 : vector<8x128xf32>
      %3111 = arith.addf %3108, %3110 : vector<8x128xf32>
      %cst_1095 = arith.constant -0.126542941 : f32
      %3112 = vector.broadcast %cst_1095 : f32 to vector<8x128xf32>
      %3113 = arith.mulf %161, %3112 : vector<8x128xf32>
      %3114 = arith.addf %3111, %3113 : vector<8x128xf32>
      %cst_1096 = arith.constant 0.10089875 : f32
      %3115 = vector.broadcast %cst_1096 : f32 to vector<8x128xf32>
      %3116 = arith.mulf %170, %3115 : vector<8x128xf32>
      %3117 = arith.addf %3114, %3116 : vector<8x128xf32>
      %cst_1097 = arith.constant -0.180860698 : f32
      %3118 = vector.broadcast %cst_1097 : f32 to vector<8x128xf32>
      %3119 = arith.mulf %179, %3118 : vector<8x128xf32>
      %3120 = arith.addf %3117, %3119 : vector<8x128xf32>
      %cst_1098 = arith.constant -0.0474398173 : f32
      %3121 = vector.broadcast %cst_1098 : f32 to vector<8x128xf32>
      %3122 = arith.mulf %188, %3121 : vector<8x128xf32>
      %3123 = arith.addf %3120, %3122 : vector<8x128xf32>
      %cst_1099 = arith.constant 0.0576587468 : f32
      %3124 = vector.broadcast %cst_1099 : f32 to vector<8x128xf32>
      %3125 = arith.mulf %197, %3124 : vector<8x128xf32>
      %3126 = arith.addf %3123, %3125 : vector<8x128xf32>
      %cst_1100 = arith.constant 0.154580936 : f32
      %3127 = vector.broadcast %cst_1100 : f32 to vector<8x128xf32>
      %3128 = arith.mulf %206, %3127 : vector<8x128xf32>
      %3129 = arith.addf %3126, %3128 : vector<8x128xf32>
      %cst_1101 = arith.constant -0.026939841 : f32
      %3130 = vector.broadcast %cst_1101 : f32 to vector<8x128xf32>
      %3131 = arith.mulf %215, %3130 : vector<8x128xf32>
      %3132 = arith.addf %3129, %3131 : vector<8x128xf32>
      %cst_1102 = arith.constant -0.0279605538 : f32
      %3133 = vector.broadcast %cst_1102 : f32 to vector<8x128xf32>
      %3134 = arith.mulf %224, %3133 : vector<8x128xf32>
      %3135 = arith.addf %3132, %3134 : vector<8x128xf32>
      %cst_1103 = arith.constant -0.120526224 : f32
      %3136 = vector.broadcast %cst_1103 : f32 to vector<8x128xf32>
      %3137 = arith.mulf %233, %3136 : vector<8x128xf32>
      %3138 = arith.addf %3135, %3137 : vector<8x128xf32>
      %cst_1104 = arith.constant 0.0527895838 : f32
      %3139 = vector.broadcast %cst_1104 : f32 to vector<8x128xf32>
      %3140 = arith.mulf %242, %3139 : vector<8x128xf32>
      %3141 = arith.addf %3138, %3140 : vector<8x128xf32>
      %cst_1105 = arith.constant 0.0476190709 : f32
      %3142 = vector.broadcast %cst_1105 : f32 to vector<8x128xf32>
      %3143 = arith.mulf %251, %3142 : vector<8x128xf32>
      %3144 = arith.addf %3141, %3143 : vector<8x128xf32>
      %cst_1106 = arith.constant 0.153249085 : f32
      %3145 = vector.broadcast %cst_1106 : f32 to vector<8x128xf32>
      %3146 = arith.mulf %260, %3145 : vector<8x128xf32>
      %3147 = arith.addf %3144, %3146 : vector<8x128xf32>
      %cst_1107 = arith.constant 0.109983958 : f32
      %3148 = vector.broadcast %cst_1107 : f32 to vector<8x128xf32>
      %3149 = arith.mulf %269, %3148 : vector<8x128xf32>
      %3150 = arith.addf %3147, %3149 : vector<8x128xf32>
      %cst_1108 = arith.constant -0.0321039148 : f32
      %3151 = vector.broadcast %cst_1108 : f32 to vector<8x128xf32>
      %3152 = arith.mulf %278, %3151 : vector<8x128xf32>
      %3153 = arith.addf %3150, %3152 : vector<8x128xf32>
      %cst_1109 = arith.constant 0.000000e+00 : f32
      %3154 = vector.broadcast %cst_1109 : f32 to vector<8x128xf32>
      %3155 = arith.cmpf ogt, %3153, %3154 : vector<8x128xf32>
      %cst_1110 = arith.constant 1.000000e-01 : f32
      %3156 = vector.broadcast %cst_1110 : f32 to vector<8x128xf32>
      %3157 = arith.mulf %3156, %3153 : vector<8x128xf32>
      %3158 = arith.select %3155, %3153, %3157 : vector<8x128xi1>, vector<8x128xf32>
      %cst_1111 = arith.constant 0.0237505957 : f32
      %3159 = vector.broadcast %cst_1111 : f32 to vector<8x128xf32>
      %cst_1112 = arith.constant 0.0288523789 : f32
      %3160 = vector.broadcast %cst_1112 : f32 to vector<8x128xf32>
      %3161 = arith.mulf %374, %3160 : vector<8x128xf32>
      %3162 = arith.addf %3159, %3161 : vector<8x128xf32>
      %cst_1113 = arith.constant 0.166049153 : f32
      %3163 = vector.broadcast %cst_1113 : f32 to vector<8x128xf32>
      %3164 = arith.mulf %470, %3163 : vector<8x128xf32>
      %3165 = arith.addf %3162, %3164 : vector<8x128xf32>
      %cst_1114 = arith.constant 0.0815587789 : f32
      %3166 = vector.broadcast %cst_1114 : f32 to vector<8x128xf32>
      %3167 = arith.mulf %566, %3166 : vector<8x128xf32>
      %3168 = arith.addf %3165, %3167 : vector<8x128xf32>
      %cst_1115 = arith.constant -0.17618455 : f32
      %3169 = vector.broadcast %cst_1115 : f32 to vector<8x128xf32>
      %3170 = arith.mulf %662, %3169 : vector<8x128xf32>
      %3171 = arith.addf %3168, %3170 : vector<8x128xf32>
      %cst_1116 = arith.constant 0.159294441 : f32
      %3172 = vector.broadcast %cst_1116 : f32 to vector<8x128xf32>
      %3173 = arith.mulf %758, %3172 : vector<8x128xf32>
      %3174 = arith.addf %3171, %3173 : vector<8x128xf32>
      %cst_1117 = arith.constant 0.0320250839 : f32
      %3175 = vector.broadcast %cst_1117 : f32 to vector<8x128xf32>
      %3176 = arith.mulf %854, %3175 : vector<8x128xf32>
      %3177 = arith.addf %3174, %3176 : vector<8x128xf32>
      %cst_1118 = arith.constant -2.850850e-02 : f32
      %3178 = vector.broadcast %cst_1118 : f32 to vector<8x128xf32>
      %3179 = arith.mulf %950, %3178 : vector<8x128xf32>
      %3180 = arith.addf %3177, %3179 : vector<8x128xf32>
      %cst_1119 = arith.constant -0.128020972 : f32
      %3181 = vector.broadcast %cst_1119 : f32 to vector<8x128xf32>
      %3182 = arith.mulf %1046, %3181 : vector<8x128xf32>
      %3183 = arith.addf %3180, %3182 : vector<8x128xf32>
      %cst_1120 = arith.constant -0.0186579563 : f32
      %3184 = vector.broadcast %cst_1120 : f32 to vector<8x128xf32>
      %3185 = arith.mulf %1142, %3184 : vector<8x128xf32>
      %3186 = arith.addf %3183, %3185 : vector<8x128xf32>
      %cst_1121 = arith.constant -0.0869527235 : f32
      %3187 = vector.broadcast %cst_1121 : f32 to vector<8x128xf32>
      %3188 = arith.mulf %1238, %3187 : vector<8x128xf32>
      %3189 = arith.addf %3186, %3188 : vector<8x128xf32>
      %cst_1122 = arith.constant 0.0878682732 : f32
      %3190 = vector.broadcast %cst_1122 : f32 to vector<8x128xf32>
      %3191 = arith.mulf %1334, %3190 : vector<8x128xf32>
      %3192 = arith.addf %3189, %3191 : vector<8x128xf32>
      %cst_1123 = arith.constant -0.0635557622 : f32
      %3193 = vector.broadcast %cst_1123 : f32 to vector<8x128xf32>
      %3194 = arith.mulf %1430, %3193 : vector<8x128xf32>
      %3195 = arith.addf %3192, %3194 : vector<8x128xf32>
      %cst_1124 = arith.constant 0.130226642 : f32
      %3196 = vector.broadcast %cst_1124 : f32 to vector<8x128xf32>
      %3197 = arith.mulf %1526, %3196 : vector<8x128xf32>
      %3198 = arith.addf %3195, %3197 : vector<8x128xf32>
      %cst_1125 = arith.constant -0.122015618 : f32
      %3199 = vector.broadcast %cst_1125 : f32 to vector<8x128xf32>
      %3200 = arith.mulf %1622, %3199 : vector<8x128xf32>
      %3201 = arith.addf %3198, %3200 : vector<8x128xf32>
      %cst_1126 = arith.constant -0.163877621 : f32
      %3202 = vector.broadcast %cst_1126 : f32 to vector<8x128xf32>
      %3203 = arith.mulf %1718, %3202 : vector<8x128xf32>
      %3204 = arith.addf %3201, %3203 : vector<8x128xf32>
      %cst_1127 = arith.constant -0.035073597 : f32
      %3205 = vector.broadcast %cst_1127 : f32 to vector<8x128xf32>
      %3206 = arith.mulf %1814, %3205 : vector<8x128xf32>
      %3207 = arith.addf %3204, %3206 : vector<8x128xf32>
      %cst_1128 = arith.constant 0.0698100626 : f32
      %3208 = vector.broadcast %cst_1128 : f32 to vector<8x128xf32>
      %3209 = arith.mulf %1910, %3208 : vector<8x128xf32>
      %3210 = arith.addf %3207, %3209 : vector<8x128xf32>
      %cst_1129 = arith.constant -0.108824216 : f32
      %3211 = vector.broadcast %cst_1129 : f32 to vector<8x128xf32>
      %3212 = arith.mulf %2006, %3211 : vector<8x128xf32>
      %3213 = arith.addf %3210, %3212 : vector<8x128xf32>
      %cst_1130 = arith.constant 0.162649184 : f32
      %3214 = vector.broadcast %cst_1130 : f32 to vector<8x128xf32>
      %3215 = arith.mulf %2102, %3214 : vector<8x128xf32>
      %3216 = arith.addf %3213, %3215 : vector<8x128xf32>
      %cst_1131 = arith.constant -0.0191517491 : f32
      %3217 = vector.broadcast %cst_1131 : f32 to vector<8x128xf32>
      %3218 = arith.mulf %2198, %3217 : vector<8x128xf32>
      %3219 = arith.addf %3216, %3218 : vector<8x128xf32>
      %cst_1132 = arith.constant -8.661320e-02 : f32
      %3220 = vector.broadcast %cst_1132 : f32 to vector<8x128xf32>
      %3221 = arith.mulf %2294, %3220 : vector<8x128xf32>
      %3222 = arith.addf %3219, %3221 : vector<8x128xf32>
      %cst_1133 = arith.constant 8.308830e-02 : f32
      %3223 = vector.broadcast %cst_1133 : f32 to vector<8x128xf32>
      %3224 = arith.mulf %2390, %3223 : vector<8x128xf32>
      %3225 = arith.addf %3222, %3224 : vector<8x128xf32>
      %cst_1134 = arith.constant 0.134469584 : f32
      %3226 = vector.broadcast %cst_1134 : f32 to vector<8x128xf32>
      %3227 = arith.mulf %2486, %3226 : vector<8x128xf32>
      %3228 = arith.addf %3225, %3227 : vector<8x128xf32>
      %cst_1135 = arith.constant -0.161289856 : f32
      %3229 = vector.broadcast %cst_1135 : f32 to vector<8x128xf32>
      %3230 = arith.mulf %2582, %3229 : vector<8x128xf32>
      %3231 = arith.addf %3228, %3230 : vector<8x128xf32>
      %cst_1136 = arith.constant 0.085923396 : f32
      %3232 = vector.broadcast %cst_1136 : f32 to vector<8x128xf32>
      %3233 = arith.mulf %2678, %3232 : vector<8x128xf32>
      %3234 = arith.addf %3231, %3233 : vector<8x128xf32>
      %cst_1137 = arith.constant -0.0822791829 : f32
      %3235 = vector.broadcast %cst_1137 : f32 to vector<8x128xf32>
      %3236 = arith.mulf %2774, %3235 : vector<8x128xf32>
      %3237 = arith.addf %3234, %3236 : vector<8x128xf32>
      %cst_1138 = arith.constant -0.150267944 : f32
      %3238 = vector.broadcast %cst_1138 : f32 to vector<8x128xf32>
      %3239 = arith.mulf %2870, %3238 : vector<8x128xf32>
      %3240 = arith.addf %3237, %3239 : vector<8x128xf32>
      %cst_1139 = arith.constant 0.110917531 : f32
      %3241 = vector.broadcast %cst_1139 : f32 to vector<8x128xf32>
      %3242 = arith.mulf %2966, %3241 : vector<8x128xf32>
      %3243 = arith.addf %3240, %3242 : vector<8x128xf32>
      %cst_1140 = arith.constant -0.081269443 : f32
      %3244 = vector.broadcast %cst_1140 : f32 to vector<8x128xf32>
      %3245 = arith.mulf %3062, %3244 : vector<8x128xf32>
      %3246 = arith.addf %3243, %3245 : vector<8x128xf32>
      %cst_1141 = arith.constant 0.166069865 : f32
      %3247 = vector.broadcast %cst_1141 : f32 to vector<8x128xf32>
      %3248 = arith.mulf %3158, %3247 : vector<8x128xf32>
      %3249 = arith.addf %3246, %3248 : vector<8x128xf32>
      %3250 = arith.mulf %3249, %6 : vector<8x128xf32>
      %3251 = arith.index_cast %4 : i32 to index
      %c0_1142 = arith.constant 0 : index
      %3252 = vector.load %arg3[%3251, %c0_1142] : memref<256x128xf32, #tpu.memory_space<vmem>>, vector<8x128xf32>
      tpu.vector_store %arg3[%3251, %c0_1142], %3250 {strides = array<i32>} : memref<256x128xf32, #tpu.memory_space<vmem>>, vector<8x128xf32>,
    }
    %c32_i32_0 = arith.constant 32 : i32
    return
  }
  func.func @transform_0(%arg0: i32, %arg1: i32) -> (i32, i32) {
    %c0_i32 = arith.constant 0 : i32
    %c0_i32_0 = arith.constant 0 : i32
    return %arg0, %c0_i32 : i32, i32
  }
  func.func @transform_1(%arg0: i32, %arg1: i32) -> (i32, i32) {
    %c1_i32 = arith.constant 1 : i32
    %0 = arith.muli %arg1, %c1_i32 : i32
    %1 = arith.addi %0, %arg0 : i32
    %c0_i32 = arith.constant 0 : i32
    %c0_i32_0 = arith.constant 0 : i32
    return %1, %c0_i32 : i32, i32
  }
}

</mosaic_0001>

<llo_original>
// kernel: tpu_custom_call.1
$region0: #{tpu_custom_call.1}
  #allocation0 [shape = 'u32[]', space=smem, size = 0x4, offset = 0x4, fixed_abs, tag = 'smem constant byte address 0x4 - core index']
  #allocation1 [shape = 'u32[144,128]{1,0:T(1,128)}', space=vmem, size = 0x12000, scoped, tag = 'internal scratch']
  %s0 = inlined_call_operand.hbm [shape: f32[256,128], index: 0, kind: input, shape index: {}]
  %s1 = inlined_call_operand.hbm [shape: f32[1024,128], index: 1, kind: output, shape index: {}]
  %s2 = sld [smem:[#allocation0]]
  $region48: #{tpu_custom_call.1} parent=0
    _
  %s4 = ssub.s32 1, %s2
  %s5 = scalar_select 0, %s4, %s2
  $region1: #{tpu_custom_call.1} parent=0
    #allocation2 [shape = 'u8[131072]{0}', space=vmem, size = 0x20000, scoped, tag = 'input window, operand 0, single buffered']
    #allocation3 [shape = 's32[2]{0}', space=sflag, size = 0x8, scoped, tag = 'scoped memory for tpu_custom_call.1']
    #allocation4 [shape = 's32[2]{0}', space=sflag, size = 0x8, scoped, tag = 'scoped memory for tpu_custom_call.1']
    #allocation5 [shape = 'u8[262144]{0}', space=vmem, size = 0x40000, scoped, tag = 'output window, operand 0']
    %6 = vsyncpa [#allocation3], 0
    %7 = vsyncpa [#allocation4], 0
    %s8 = scalar_lea.sflag [#allocation4], 1
    %9 = vsyncpa %s8, 0
    loop: start=0, step=1, limit=6
    $region2: #{tpu_custom_call.1} parent=1 // loop_pre_header
      _
    $region3: #{tpu_custom_call.1} parent=1 // loop_header
      %s11 = sphi 0, %s15
      %p12 = scmp.ge.s32.totalorder %s11, 6
      %s18 = sphi 0, %s30
      %s19 = sphi 0, %s26
      %s20 = sphi 0, %s18
      %s21 = sphi 0, %s19
      %s22 = sphi 0, %s20
      %s23 = sphi 0, %s21
      %s33 = sphi 0, %s35
      %s36 = sphi 0, %s33
      %s37 = sphi 0, %s36
      %s53 = sphi 0, %s37
      %s61 = sphi 0, %s63
      %s64 = sphi 0, %s61
      %s65 = sphi 0, %s64
      %s81 = sphi 0, %s65
    $region4: #{tpu_custom_call.1} parent=1 // loop_header_branch
      %14 = sbr.rel (%p12) target = $region8
    $region5: #{tpu_custom_call.1} parent=1 // loop_body
      %s16 = ssub.s32 %s11, 1
      %s17 = ssub.s32 %s11, 2
      %s24 = sadd.s32 1, %s19
      %p25 = scmp.ge.s32.totalorder %s24, 4
      %s26 = scalar_select %p25, 0, %s24
      %s27 = sadd.s32 1, %s18
      %s28 = scalar_select %p25, %s27, %s18
      %p29 = scmp.ge.s32.totalorder %s28, 1
      %s30 = scalar_select %p29, 0, %s28
      %s31 = ssub.s32 %s18, %s30
      %p32 = scmp.eq.s32.totalorder %s31, 0
      %s34 = sadd.s32 %s33, 1
      %s35 = scalar_select %p32, %s33, %s34
      %p38 = pneg %p32
      %p39 = scmp.eq.s32.totalorder %s11, 3
      %p40 = por %p38, %p39
      %p41 = scmp.ne.s32.totalorder %s33, %s36
      %p42 = scmp.eq.s32.totalorder %s11, 0
      %p43 = por %p41, %p42
      %p44 = scmp.ne.s32.totalorder %s33, %s36
      %p45 = scmp.eq.s32.totalorder %s16, 3
      %p46 = por %p44, %p45
      %p47 = scmp.ne.s32.totalorder %s36, %s37
      %p48 = scmp.eq.s32.totalorder %s16, 0
      %p49 = por %p47, %p48
      %p50 = scmp.ne.s32.totalorder %s36, %s37
      %p51 = scmp.eq.s32.totalorder %s17, 3
      %p52 = por %p50, %p51
      %p54 = scmp.ne.s32.totalorder %s37, %s53
      %p55 = scmp.eq.s32.totalorder %s17, 0
      %p56 = por %p54, %p55
      %s57 = sadd.s32 %s19, %s18
      %s58 = sadd.s32 %s26, %s30
      %s59 = ssub.s32 %s57, %s58
      %p60 = scmp.eq.s32.totalorder %s59, 0
      %s62 = sadd.s32 %s61, 1
      %s63 = scalar_select %p60, %s61, %s62
      %p66 = pneg %p60
      %p67 = scmp.eq.s32.totalorder %s11, 3
      %p68 = por %p66, %p67
      %p69 = scmp.ne.s32.totalorder %s61, %s64
      %p70 = scmp.eq.s32.totalorder %s11, 0
      %p71 = por %p69, %p70
      %p72 = scmp.ne.s32.totalorder %s61, %s64
      %p73 = scmp.eq.s32.totalorder %s16, 3
      %p74 = por %p72, %p73
      %p75 = scmp.ne.s32.totalorder %s64, %s65
      %p76 = scmp.eq.s32.totalorder %s16, 0
      %p77 = por %p75, %p76
      %p78 = scmp.ne.s32.totalorder %s64, %s65
      %p79 = scmp.eq.s32.totalorder %s17, 3
      %p80 = por %p78, %p79
      %p82 = scmp.ne.s32.totalorder %s65, %s81
      %p83 = scmp.eq.s32.totalorder %s17, 0
      %p84 = por %p82, %p83
      %p85 = scmp.le.s32.totalorder 1, %s11
      %p86 = scmp.lt.s32.totalorder %s11, 5
      %p87 = pnand %p85, %p86
      %p88 = pneg %p87
      // Predicated region
      $region9: #{tpu_custom_call.1} parent=5 // pred_check
        _
      $region10: #{tpu_custom_call.1} parent=5 // pred_check_branch
        %90 = sbr.rel (%p87) target = $region12
      $region11: #{tpu_custom_call.1} parent=5 // pred_region
        %s91 = ssub.s32 %s11, 1
        // Predicated region
        $region13: #{tpu_custom_call.1} parent=11 // pred_check
          %p92 = pneg %p49
        $region14: #{tpu_custom_call.1} parent=11 // pred_check_branch
          %94 = sbr.rel (%p92) target = $region16
        $region15: #{tpu_custom_call.1} parent=11 // pred_region
          %s95 = smul.u32 32, %s20
          %s97 = ssub.s32 4096, 4096
          %98 = vsyncadd [#allocation3], %s97
          %s99 = smul.addr %s95, 128
          %s100 = scalar_lea.hbm %s0, %s99
          %s101 = sshll.u32 [#allocation2], 4
          %s102 = int_to_ptr.vmem [resolvable:$true] %s101
          %107 = dma.hbm_to_vmem [thread:$0]  %s100, 4096, %s102, [#allocation3], 128, 128, 8
        $region16: #{tpu_custom_call.1} parent=11 // pred_fallthru
          _
      $region12: #{tpu_custom_call.1} parent=5 // pred_fallthru
        _
      %p108 = scmp.lt.s32.totalorder %s11, 4
      // Predicated region
      $region17: #{tpu_custom_call.1} parent=5 // pred_check
        %p109 = pneg %p108
      $region18: #{tpu_custom_call.1} parent=5 // pred_check_branch
        %111 = sbr.rel (%p109) target = $region20
      $region19: #{tpu_custom_call.1} parent=5 // pred_region
        _
      $region20: #{tpu_custom_call.1} parent=5 // pred_fallthru
        _
      %p112 = scmp.le.s32.totalorder 1, %s11
      %p113 = scmp.lt.s32.totalorder %s11, 5
      %p114 = pnand %p112, %p113
      %p115 = pneg %p114
      // Predicated region
      $region21: #{tpu_custom_call.1} parent=5 // pred_check
        _
      $region22: #{tpu_custom_call.1} parent=5 // pred_check_branch
        %117 = sbr.rel (%p114) target = $region24
      $region23: #{tpu_custom_call.1} parent=5 // pred_region
        %s118 = ssub.s32 %s11, 1
        // Predicated region
        $region25: #{tpu_custom_call.1} parent=23 // pred_check
          %p119 = pneg %p49
        $region26: #{tpu_custom_call.1} parent=23 // pred_check_branch
          %121 = sbr.rel (%p119) target = $region28
        $region27: #{tpu_custom_call.1} parent=23 // pred_region
          %122 = dma.done [#allocation3], 4096
        $region28: #{tpu_custom_call.1} parent=23 // pred_fallthru
          _
        %p123 = pneg %p49
        %p124 = pneg %p46
        %p125 = pneg %p77
        %p126 = pneg %p74
        %s127 = sand.u32 %s64, 1
        %s128 = scalar_lea.sflag [#allocation4], %s127
        %s129 = sand.u32 %s64, 1
        %s130 = smul.addr %s129, 256
        %s131 = scalar_lea.vmem [#allocation5], %s130
        %s132 = smul.u32 32, %s20
        %s133 = sadd.s32 %s21, %s20
        %s134 = smul.u32 32, %s133
        %s135 = scvt.s32.f32 %s21
        %s136 = smul.f32 %s135, 0.33333334
        loop: start=0, step=1, limit=32
        $region29: #{tpu_custom_call.1} parent=23 // loop_pre_header
          _
        $region30: #{tpu_custom_call.1} parent=23 // loop_header
          %s138 = sphi 0, %s142
          %p139 = scmp.ge.s32.totalorder %s138, 32
        $region31: #{tpu_custom_call.1} parent=23 // loop_header_branch
          %141 = sbr.rel (%p139) target = $region35
        $region32: #{tpu_custom_call.1} parent=23 // loop_body
          %s143 = smul.u32 %s138, 8
          %s144 = scalar_lea.vmem [#allocation2], %s143
          %v145 = vld [vmem:[%s144] sm:$0xff]
          %v146 = vstv %s136
          %v147 = vsub.f32 %v145, %v146
          %v148 = vmul.f32 %v147, -0.5283501
          %v149 = vadd.f32 %v148, -0.16702724
          %vm150 = vcmp.gt.f32.partialorder %v149, 0.0
          %v151 = vmul.f32 %v149, 0.1
          %v152 = vsel %vm150, %v149, %v151
          %v153 = vmul.f32 %v147, 0.87938094
          %v154 = vadd.f32 %v153, -0.82705283
          %vm155 = vcmp.gt.f32.partialorder %v154, 0.0
          %v156 = vmul.f32 %v154, 0.1
          %v157 = vsel %vm155, %v154, %v156
          %v158 = vmul.f32 %v147, -0.60785604
          %v159 = vadd.f32 %v158, -0.035895824
          %vm160 = vcmp.gt.f32.partialorder %v159, 0.0
          %v161 = vmul.f32 %v159, 0.1
          %v162 = vsel %vm160, %v159, %v161
          %v163 = vmul.f32 %v147, 0.213382
          %v164 = vadd.f32 %v163, -0.7513521
          %vm165 = vcmp.gt.f32.partialorder %v164, 0.0
          %v166 = vmul.f32 %v164, 0.1
          %v167 = vsel %vm165, %v164, %v166
          %v168 = vmul.f32 %v147, 0.14656281
          %v169 = vadd.f32 %v168, 0.94439435
          %vm170 = vcmp.gt.f32.partialorder %v169, 0.0
          %v171 = vmul.f32 %v169, 0.1
          %v172 = vsel %vm170, %v169, %v171
          %v173 = vmul.f32 %v147, 0.6702893
          %v174 = vadd.f32 %v173, -0.36664724
          %vm175 = vcmp.gt.f32.partialorder %v174, 0.0
          %v176 = vmul.f32 %v174, 0.1
          %v177 = vsel %vm175, %v174, %v176
          %v178 = vmul.f32 %v147, -0.26763034
          %v179 = vadd.f32 %v178, 0.4829352
          %vm180 = vcmp.gt.f32.partialorder %v179, 0.0
          %v181 = vmul.f32 %v179, 0.1
          %v182 = vsel %vm180, %v179, %v181
          %v183 = vmul.f32 %v147, -0.7932067
          %v184 = vadd.f32 %v183, 0.500159
          %vm185 = vcmp.gt.f32.partialorder %v184, 0.0
          %v186 = vmul.f32 %v184, 0.1
          %v187 = vsel %vm185, %v184, %v186
          %v188 = vmul.f32 %v147, -0.17723846
          %v189 = vadd.f32 %v188, 0.9968312
          %vm190 = vcmp.gt.f32.partialorder %v189, 0.0
          %v191 = vmul.f32 %v189, 0.1
          %v192 = vsel %vm190, %v189, %v191
          %v193 = vmul.f32 %v147, -0.20573044
          %v194 = vadd.f32 %v193, -0.61814284
          %vm195 = vcmp.gt.f32.partialorder %v194, 0.0
          %v196 = vmul.f32 %v194, 0.1
          %v197 = vsel %vm195, %v194, %v196
          %v198 = vmul.f32 %v147, -0.29148602
          %v199 = vadd.f32 %v198, 0.80799174
          %vm200 = vcmp.gt.f32.partialorder %v199, 0.0
          %v201 = vmul.f32 %v199, 0.1
          %v202 = vsel %vm200, %v199, %v201
          %v203 = vmul.f32 %v147, 0.085948944
          %v204 = vadd.f32 %v203, -0.40095758
          %vm205 = vcmp.gt.f32.partialorder %v204, 0.0
          %v206 = vmul.f32 %v204, 0.1
          %v207 = vsel %vm205, %v204, %v206
          %v208 = vmul.f32 %v147, 0.29526114
          %v209 = vadd.f32 %v208, 0.38572454
          %vm210 = vcmp.gt.f32.partialorder %v209, 0.0
          %v211 = vmul.f32 %v209, 0.1
          %v212 = vsel %vm210, %v209, %v211
          %v213 = vmul.f32 %v147, -0.809078
          %v214 = vadd.f32 %v213, 0.7014034
          %vm215 = vcmp.gt.f32.partialorder %v214, 0.0
          %v216 = vmul.f32 %v214, 0.1
          %v217 = vsel %vm215, %v214, %v216
          %v218 = vmul.f32 %v147, -0.298285
          %v219 = vadd.f32 %v218, -0.1316061
          %vm220 = vcmp.gt.f32.partialorder %v219, 0.0
          %v221 = vmul.f32 %v219, 0.1
          %v222 = vsel %vm220, %v219, %v221
          %v223 = vmul.f32 %v147, 0.62167287
          %v224 = vadd.f32 %v223, -0.35688043
          %vm225 = vcmp.gt.f32.partialorder %v224, 0.0
          %v226 = vmul.f32 %v224, 0.1
          %v227 = vsel %vm225, %v224, %v226
          %v228 = vmul.f32 %v147, -0.5994234
          %v229 = vadd.f32 %v228, 0.42327905
          %vm230 = vcmp.gt.f32.partialorder %v229, 0.0
          %v231 = vmul.f32 %v229, 0.1
          %v232 = vsel %vm230, %v229, %v231
          %v233 = vmul.f32 %v147, 0.18254042
          %v234 = vadd.f32 %v233, -0.94452405
          %vm235 = vcmp.gt.f32.partialorder %v234, 0.0
          %v236 = vmul.f32 %v234, 0.1
          %v237 = vsel %vm235, %v234, %v236
          %v238 = vmul.f32 %v147, 0.3458073
          %v239 = vadd.f32 %v238, 0.30519772
          %vm240 = vcmp.gt.f32.partialorder %v239, 0.0
          %v241 = vmul.f32 %v239, 0.1
          %v242 = vsel %vm240, %v239, %v241
          %v243 = vmul.f32 %v147, -0.6762476
          %v244 = vadd.f32 %v243, -0.6372552
          %vm245 = vcmp.gt.f32.partialorder %v244, 0.0
          %v246 = vmul.f32 %v244, 0.1
          %v247 = vsel %vm245, %v244, %v246
          %v248 = vmul.f32 %v147, -0.69418955
          %v249 = vadd.f32 %v248, -0.22190166
          %vm250 = vcmp.gt.f32.partialorder %v249, 0.0
          %v251 = vmul.f32 %v249, 0.1
          %v252 = vsel %vm250, %v249, %v251
          %v253 = vmul.f32 %v147, -0.64003634
          %v254 = vadd.f32 %v253, 0.17201829
          %vm255 = vcmp.gt.f32.partialorder %v254, 0.0
          %v256 = vmul.f32 %v254, 0.1
          %v257 = vsel %vm255, %v254, %v256
          %v258 = vmul.f32 %v147, 0.44361544
          %v259 = vadd.f32 %v258, 0.28118253
          %vm260 = vcmp.gt.f32.partialorder %v259, 0.0
          %v261 = vmul.f32 %v259, 0.1
          %v262 = vsel %vm260, %v259, %v261
          %v263 = vmul.f32 %v147, -0.75723076
          %v264 = vadd.f32 %v263, 0.99381137
          %vm265 = vcmp.gt.f32.partialorder %v264, 0.0
          %v266 = vmul.f32 %v264, 0.1
          %v267 = vsel %vm265, %v264, %v266
          %v268 = vmul.f32 %v147, -0.532356
          %v269 = vadd.f32 %v268, 0.32517338
          %vm270 = vcmp.gt.f32.partialorder %v269, 0.0
          %v271 = vmul.f32 %v269, 0.1
          %v272 = vsel %vm270, %v269, %v271
          %v273 = vmul.f32 %v147, -0.26896524
          %v274 = vadd.f32 %v273, 0.911958
          %vm275 = vcmp.gt.f32.partialorder %v274, 0.0
          %v276 = vmul.f32 %v274, 0.1
          %v277 = vsel %vm275, %v274, %v276
          %v278 = vmul.f32 %v147, 0.35996747
          %v279 = vadd.f32 %v278, 0.334625
          %vm280 = vcmp.gt.f32.partialorder %v279, 0.0
          %v281 = vmul.f32 %v279, 0.1
          %v282 = vsel %vm280, %v279, %v281
          %v283 = vmul.f32 %v147, 0.068938255
          %v284 = vadd.f32 %v283, -0.9424715
          %vm285 = vcmp.gt.f32.partialorder %v284, 0.0
          %v286 = vmul.f32 %v284, 0.1
          %v287 = vsel %vm285, %v284, %v286
          %v288 = vmul.f32 %v147, 0.092463255
          %v289 = vadd.f32 %v288, -0.6787014
          %vm290 = vcmp.gt.f32.partialorder %v289, 0.0
          %v291 = vmul.f32 %v289, 0.1
          %v292 = vsel %vm290, %v289, %v291
          %v293 = vmul.f32 %v147, -0.15106559
          %v294 = vadd.f32 %v293, 0.8703308
          %vm295 = vcmp.gt.f32.partialorder %v294, 0.0
          %v296 = vmul.f32 %v294, 0.1
          %v297 = vsel %vm295, %v294, %v296
          %v298 = vmul.f32 %v152, -0.17018567
          %v299 = vadd.f32 %v298, -0.12722035
          %v300 = vmul.f32 %v157, -0.004293708
          %v301 = vadd.f32 %v299, %v300
          %v302 = vmul.f32 %v162, -0.106553786
          %v303 = vadd.f32 %v301, %v302
          %v304 = vmul.f32 %v167, 0.12088469
          %v305 = vadd.f32 %v303, %v304
          %v306 = vmul.f32 %v172, 0.10800052
          %v307 = vadd.f32 %v305, %v306
          %v308 = vmul.f32 %v177, -0.04115522
          %v309 = vadd.f32 %v307, %v308
          %v310 = vmul.f32 %v182, 0.052967574
          %v311 = vadd.f32 %v309, %v310
          %v312 = vmul.f32 %v187, 0.022501051
          %v313 = vadd.f32 %v311, %v312
          %v314 = vmul.f32 %v192, -0.061107032
          %v315 = vadd.f32 %v313, %v314
          %v316 = vmul.f32 %v197, -0.064413324
          %v317 = vadd.f32 %v315, %v316
          %v318 = vmul.f32 %v202, 0.09914888
          %v319 = vadd.f32 %v317, %v318
          %v320 = vmul.f32 %v207, -0.026144348
          %v321 = vadd.f32 %v319, %v320
          %v322 = vmul.f32 %v212, -0.04912818
          %v323 = vadd.f32 %v321, %v322
          %v324 = vmul.f32 %v217, 0.026101645
          %v325 = vadd.f32 %v323, %v324
          %v326 = vmul.f32 %v222, 0.045395516
          %v327 = vadd.f32 %v325, %v326
          %v328 = vmul.f32 %v227, 0.16602173
          %v329 = vadd.f32 %v327, %v328
          %v330 = vmul.f32 %v232, 0.18070287
          %v331 = vadd.f32 %v329, %v330
          %v332 = vmul.f32 %v237, -0.029763442
          %v333 = vadd.f32 %v331, %v332
          %v334 = vmul.f32 %v242, -0.03757739
          %v335 = vadd.f32 %v333, %v334
          %v336 = vmul.f32 %v247, 0.1263871
          %v337 = vadd.f32 %v335, %v336
          %v338 = vmul.f32 %v252, 0.12613626
          %v339 = vadd.f32 %v337, %v338
          %v340 = vmul.f32 %v257, -0.117235124
          %v341 = vadd.f32 %v339, %v340
          %v342 = vmul.f32 %v262, 0.015955191
          %v343 = vadd.f32 %v341, %v342
          %v344 = vmul.f32 %v267, -0.07761065
          %v345 = vadd.f32 %v343, %v344
          %v346 = vmul.f32 %v272, 0.020364644
          %v347 = vadd.f32 %v345, %v346
          %v348 = vmul.f32 %v277, -0.02001615
          %v349 = vadd.f32 %v347, %v348
          %v350 = vmul.f32 %v282, 0.10730261
          %v351 = vadd.f32 %v349, %v350
          %v352 = vmul.f32 %v287, -0.12644735
          %v353 = vadd.f32 %v351, %v352
          %v354 = vmul.f32 %v292, -0.0034036257
          %v355 = vadd.f32 %v353, %v354
          %v356 = vmul.f32 %v297, 0.1594095
          %v357 = vadd.f32 %v355, %v356
          %vm358 = vcmp.gt.f32.partialorder %v357, 0.0
          %v359 = vmul.f32 %v357, 0.1
          %v360 = vsel %vm358, %v357, %v359
          %v361 = vmul.f32 %v152, -0.057695962
          %v362 = vadd.f32 %v361, 0.053577546
          %v363 = vmul.f32 %v157, -0.016559724
          %v364 = vadd.f32 %v362, %v363
          %v365 = vmul.f32 %v162, -0.13715681
          %v366 = vadd.f32 %v364, %v365
          %v367 = vmul.f32 %v167, -0.0418731
          %v368 = vadd.f32 %v366, %v367
          %v369 = vmul.f32 %v172, 0.14206842
          %v370 = vadd.f32 %v368, %v369
          %v371 = vmul.f32 %v177, 0.17882629
          %v372 = vadd.f32 %v370, %v371
          %v373 = vmul.f32 %v182, -0.09872682
          %v374 = vadd.f32 %v372, %v373
          %v375 = vmul.f32 %v187, 0.14372861
          %v376 = vadd.f32 %v374, %v375
          %v377 = vmul.f32 %v192, 0.01769518
          %v378 = vadd.f32 %v376, %v377
          %v379 = vmul.f32 %v197, 0.08732255
          %v380 = vadd.f32 %v378, %v379
          %v381 = vmul.f32 %v202, -0.03233475
          %v382 = vadd.f32 %v380, %v381
          %v383 = vmul.f32 %v207, 0.15218061
          %v384 = vadd.f32 %v382, %v383
          %v385 = vmul.f32 %v212, -0.14536087
          %v386 = vadd.f32 %v384, %v385
          %v387 = vmul.f32 %v217, -0.054836888
          %v388 = vadd.f32 %v386, %v387
          %v389 = vmul.f32 %v222, -0.10713276
          %v390 = vadd.f32 %v388, %v389
          %v391 = vmul.f32 %v227, -0.061547242
          %v392 = vadd.f32 %v390, %v391
          %v393 = vmul.f32 %v232, -0.059294872
          %v394 = vadd.f32 %v392, %v393
          %v395 = vmul.f32 %v237, 0.09044998
          %v396 = vadd.f32 %v394, %v395
          %v397 = vmul.f32 %v242, -0.027247243
          %v398 = vadd.f32 %v396, %v397
          %v399 = vmul.f32 %v247, 0.14748195
          %v400 = vadd.f32 %v398, %v399
          %v401 = vmul.f32 %v252, 0.06872406
          %v402 = vadd.f32 %v400, %v401
          %v403 = vmul.f32 %v257, -0.057528637
          %v404 = vadd.f32 %v402, %v403
          %v405 = vmul.f32 %v262, -0.043177538
          %v406 = vadd.f32 %v404, %v405
          %v407 = vmul.f32 %v267, 0.032015506
          %v408 = vadd.f32 %v406, %v407
          %v409 = vmul.f32 %v272, -0.1109776
          %v410 = vadd.f32 %v408, %v409
          %v411 = vmul.f32 %v277, 0.0097614825
          %v412 = vadd.f32 %v410, %v411
          %v413 = vmul.f32 %v282, -0.17239422
          %v414 = vadd.f32 %v412, %v413
          %v415 = vmul.f32 %v287, -0.02747168
          %v416 = vadd.f32 %v414, %v415
          %v417 = vmul.f32 %v292, 0.05645199
          %v418 = vadd.f32 %v416, %v417
          %v419 = vmul.f32 %v297, -0.083968595
          %v420 = vadd.f32 %v418, %v419
          %vm421 = vcmp.gt.f32.partialorder %v420, 0.0
          %v422 = vmul.f32 %v420, 0.1
          %v423 = vsel %vm421, %v420, %v422
          %v424 = vmul.f32 %v152, 0.07673654
          %v425 = vadd.f32 %v424, -0.009445592
          %v426 = vmul.f32 %v157, -0.16080725
          %v427 = vadd.f32 %v425, %v426
          %v428 = vmul.f32 %v162, -0.08445037
          %v429 = vadd.f32 %v427, %v428
          %v430 = vmul.f32 %v167, 0.1779594
          %v431 = vadd.f32 %v429, %v430
          %v432 = vmul.f32 %v172, 0.021373734
          %v433 = vadd.f32 %v431, %v432
          %v434 = vmul.f32 %v177, 0.04758799
          %v435 = vadd.f32 %v433, %v434
          %v436 = vmul.f32 %v182, -0.11500426
          %v437 = vadd.f32 %v435, %v436
          %v438 = vmul.f32 %v187, 0.059518438
          %v439 = vadd.f32 %v437, %v438
          %v440 = vmul.f32 %v192, 0.0007112216
          %v441 = vadd.f32 %v439, %v440
          %v442 = vmul.f32 %v197, 0.032422546
          %v443 = vadd.f32 %v441, %v442
          %v444 = vmul.f32 %v202, -0.112012066
          %v445 = vadd.f32 %v443, %v444
          %v446 = vmul.f32 %v207, -0.031137524
          %v447 = vadd.f32 %v445, %v446
          %v448 = vmul.f32 %v212, 0.018165162
          %v449 = vadd.f32 %v447, %v448
          %v450 = vmul.f32 %v217, -0.10579172
          %v451 = vadd.f32 %v449, %v450
          %v452 = vmul.f32 %v222, 0.01486753
          %v453 = vadd.f32 %v451, %v452
          %v454 = vmul.f32 %v227, -0.12762918
          %v455 = vadd.f32 %v453, %v454
          %v456 = vmul.f32 %v232, 0.023081206
          %v457 = vadd.f32 %v455, %v456
          %v458 = vmul.f32 %v237, -0.041297473
          %v459 = vadd.f32 %v457, %v458
          %v460 = vmul.f32 %v242, 0.1063808
          %v461 = vadd.f32 %v459, %v460
          %v462 = vmul.f32 %v247, 0.14198837
          %v463 = vadd.f32 %v461, %v462
          %v464 = vmul.f32 %v252, 0.14433397
          %v465 = vadd.f32 %v463, %v464
          %v466 = vmul.f32 %v257, 0.05890137
          %v467 = vadd.f32 %v465, %v466
          %v468 = vmul.f32 %v262, 0.02865184
          %v469 = vadd.f32 %v467, %v468
          %v470 = vmul.f32 %v267, 0.029194865
          %v471 = vadd.f32 %v469, %v470
          %v472 = vmul.f32 %v272, -0.02674013
          %v473 = vadd.f32 %v471, %v472
          %v474 = vmul.f32 %v277, -0.17472623
          %v475 = vadd.f32 %v473, %v474
          %v476 = vmul.f32 %v282, 0.13698587
          %v477 = vadd.f32 %v475, %v476
          %v478 = vmul.f32 %v287, 0.022846758
          %v479 = vadd.f32 %v477, %v478
          %v480 = vmul.f32 %v292, -0.12990844
          %v481 = vadd.f32 %v479, %v480
          %v482 = vmul.f32 %v297, -0.17224298
          %v483 = vadd.f32 %v481, %v482
          %vm484 = vcmp.gt.f32.partialorder %v483, 0.0
          %v485 = vmul.f32 %v483, 0.1
          %v486 = vsel %vm484, %v483, %v485
          %v487 = vmul.f32 %v152, 0.17867725
          %v488 = vadd.f32 %v487, -0.15317282
          %v489 = vmul.f32 %v157, 0.061966863
          %v490 = vadd.f32 %v488, %v489
          %v491 = vmul.f32 %v162, -0.15638904
          %v492 = vadd.f32 %v490, %v491
          %v493 = vmul.f32 %v167, -0.050971895
          %v494 = vadd.f32 %v492, %v493
          %v495 = vmul.f32 %v172, 0.12868628
          %v496 = vadd.f32 %v494, %v495
          %v497 = vmul.f32 %v177, -0.1565209
          %v498 = vadd.f32 %v496, %v497
          %v499 = vmul.f32 %v182, 0.12542033
          %v500 = vadd.f32 %v498, %v499
          %v501 = vmul.f32 %v187, 0.0012327435
          %v502 = vadd.f32 %v500, %v501
          %v503 = vmul.f32 %v192, -0.00068675826
          %v504 = vadd.f32 %v502, %v503
          %v505 = vmul.f32 %v197, 0.087485306
          %v506 = vadd.f32 %v504, %v505
          %v507 = vmul.f32 %v202, -0.011008721
          %v508 = vadd.f32 %v506, %v507
          %v509 = vmul.f32 %v207, 0.12512504
          %v510 = vadd.f32 %v508, %v509
          %v511 = vmul.f32 %v212, 0.008618235
          %v512 = vadd.f32 %v510, %v511
          %v513 = vmul.f32 %v217, -0.07201202
          %v514 = vadd.f32 %v512, %v513
          %v515 = vmul.f32 %v222, 0.042976912
          %v516 = vadd.f32 %v514, %v515
          %v517 = vmul.f32 %v227, 0.12421697
          %v518 = vadd.f32 %v516, %v517
          %v519 = vmul.f32 %v232, 0.034544762
          %v520 = vadd.f32 %v518, %v519
          %v521 = vmul.f32 %v237, -0.050658356
          %v522 = vadd.f32 %v520, %v521
          %v523 = vmul.f32 %v242, 0.11915236
          %v524 = vadd.f32 %v522, %v523
          %v525 = vmul.f32 %v247, -0.011850443
          %v526 = vadd.f32 %v524, %v525
          %v527 = vmul.f32 %v252, 0.057599634
          %v528 = vadd.f32 %v526, %v527
          %v529 = vmul.f32 %v257, -0.17676318
          %v530 = vadd.f32 %v528, %v529
          %v531 = vmul.f32 %v262, 0.11555229
          %v532 = vadd.f32 %v530, %v531
          %v533 = vmul.f32 %v267, 0.03767411
          %v534 = vadd.f32 %v532, %v533
          %v535 = vmul.f32 %v272, 0.012110355
          %v536 = vadd.f32 %v534, %v535
          %v537 = vmul.f32 %v277, 0.14807978
          %v538 = vadd.f32 %v536, %v537
          %v539 = vmul.f32 %v282, -0.033684064
          %v540 = vadd.f32 %v538, %v539
          %v541 = vmul.f32 %v287, -0.008007522
          %v542 = vadd.f32 %v540, %v541
          %v543 = vmul.f32 %v292, 0.0073500588
          %v544 = vadd.f32 %v542, %v543
          %v545 = vmul.f32 %v297, -0.016243441
          %v546 = vadd.f32 %v544, %v545
          %vm547 = vcmp.gt.f32.partialorder %v546, 0.0
          %v548 = vmul.f32 %v546, 0.1
          %v549 = vsel %vm547, %v546, %v548
          %v550 = vmul.f32 %v152, 0.14031354
          %v551 = vadd.f32 %v550, -0.0018096344
          %v552 = vmul.f32 %v157, 0.16033104
          %v553 = vadd.f32 %v551, %v552
          %v554 = vmul.f32 %v162, -0.04244207
          %v555 = vadd.f32 %v553, %v554
          %v556 = vmul.f32 %v167, 0.15101725
          %v557 = vadd.f32 %v555, %v556
          %v558 = vmul.f32 %v172, -0.13640973
          %v559 = vadd.f32 %v557, %v558
          %v560 = vmul.f32 %v177, 0.17753917
          %v561 = vadd.f32 %v559, %v560
          %v562 = vmul.f32 %v182, -0.12200839
          %v563 = vadd.f32 %v561, %v562
          %v564 = vmul.f32 %v187, -0.14545062
          %v565 = vadd.f32 %v563, %v564
          %v566 = vmul.f32 %v192, 0.020871626
          %v567 = vadd.f32 %v565, %v566
          %v568 = vmul.f32 %v197, -0.085699044
          %v569 = vadd.f32 %v567, %v568
          %v570 = vmul.f32 %v202, 0.02553124
          %v571 = vadd.f32 %v569, %v570
          %v572 = vmul.f32 %v207, 0.14364304
          %v573 = vadd.f32 %v571, %v572
          %v574 = vmul.f32 %v212, -0.1303893
          %v575 = vadd.f32 %v573, %v574
          %v576 = vmul.f32 %v217, 0.10991366
          %v577 = vadd.f32 %v575, %v576
          %v578 = vmul.f32 %v222, 0.042597905
          %v579 = vadd.f32 %v577, %v578
          %v580 = vmul.f32 %v227, -0.1680033
          %v581 = vadd.f32 %v579, %v580
          %v582 = vmul.f32 %v232, 0.06771344
          %v583 = vadd.f32 %v581, %v582
          %v584 = vmul.f32 %v237, -0.16283722
          %v585 = vadd.f32 %v583, %v584
          %v586 = vmul.f32 %v242, 0.1759188
          %v587 = vadd.f32 %v585, %v586
          %v588 = vmul.f32 %v247, 0.13957286
          %v589 = vadd.f32 %v587, %v588
          %v590 = vmul.f32 %v252, 0.13511482
          %v591 = vadd.f32 %v589, %v590
          %v592 = vmul.f32 %v257, 0.1168461
          %v593 = vadd.f32 %v591, %v592
          %v594 = vmul.f32 %v262, 0.17057861
          %v595 = vadd.f32 %v593, %v594
          %v596 = vmul.f32 %v267, 0.17803954
          %v597 = vadd.f32 %v595, %v596
          %v598 = vmul.f32 %v272, 0.07399543
          %v599 = vadd.f32 %v597, %v598
          %v600 = vmul.f32 %v277, 0.028005738
          %v601 = vadd.f32 %v599, %v600
          %v602 = vmul.f32 %v282, -0.1823581
          %v603 = vadd.f32 %v601, %v602
          %v604 = vmul.f32 %v287, 0.119037926
          %v605 = vadd.f32 %v603, %v604
          %v606 = vmul.f32 %v292, 0.04908613
          %v607 = vadd.f32 %v605, %v606
          %v608 = vmul.f32 %v297, 0.025516745
          %v609 = vadd.f32 %v607, %v608
          %vm610 = vcmp.gt.f32.partialorder %v609, 0.0
          %v611 = vmul.f32 %v609, 0.1
          %v612 = vsel %vm610, %v609, %v611
          %v613 = vmul.f32 %v152, -0.08702329
          %v614 = vadd.f32 %v613, 0.044559583
          %v615 = vmul.f32 %v157, 0.018740747
          %v616 = vadd.f32 %v614, %v615
          %v617 = vmul.f32 %v162, 0.1553847
          %v618 = vadd.f32 %v616, %v617
          %v619 = vmul.f32 %v167, 0.11858749
          %v620 = vadd.f32 %v618, %v619
          %v621 = vmul.f32 %v172, -0.007714963
          %v622 = vadd.f32 %v620, %v621
          %v623 = vmul.f32 %v177, -0.16485092
          %v624 = vadd.f32 %v622, %v623
          %v625 = vmul.f32 %v182, -0.15405433
          %v626 = vadd.f32 %v624, %v625
          %v627 = vmul.f32 %v187, 0.13362904
          %v628 = vadd.f32 %v626, %v627
          %v629 = vmul.f32 %v192, 0.06636656
          %v630 = vadd.f32 %v628, %v629
          %v631 = vmul.f32 %v197, 0.17345628
          %v632 = vadd.f32 %v630, %v631
          %v633 = vmul.f32 %v202, 0.068069115
          %v634 = vadd.f32 %v632, %v633
          %v635 = vmul.f32 %v207, 0.12119771
          %v636 = vadd.f32 %v634, %v635
          %v637 = vmul.f32 %v212, -0.0023325926
          %v638 = vadd.f32 %v636, %v637
          %v639 = vmul.f32 %v217, 0.14357488
          %v640 = vadd.f32 %v638, %v639
          %v641 = vmul.f32 %v222, 0.132447
          %v642 = vadd.f32 %v640, %v641
          %v643 = vmul.f32 %v227, 0.06813371
          %v644 = vadd.f32 %v642, %v643
          %v645 = vmul.f32 %v232, 0.14907895
          %v646 = vadd.f32 %v644, %v645
          %v647 = vmul.f32 %v237, -0.070026055
          %v648 = vadd.f32 %v646, %v647
          %v649 = vmul.f32 %v242, 0.16312209
          %v650 = vadd.f32 %v648, %v649
          %v651 = vmul.f32 %v247, -0.1516647
          %v652 = vadd.f32 %v650, %v651
          %v653 = vmul.f32 %v252, 0.029519984
          %v654 = vadd.f32 %v652, %v653
          %v655 = vmul.f32 %v257, 0.18181004
          %v656 = vadd.f32 %v654, %v655
          %v657 = vmul.f32 %v262, 0.11399312
          %v658 = vadd.f32 %v656, %v657
          %v659 = vmul.f32 %v267, 0.11933492
          %v660 = vadd.f32 %v658, %v659
          %v661 = vmul.f32 %v272, 0.055715915
          %v662 = vadd.f32 %v660, %v661
          %v663 = vmul.f32 %v277, -0.05180413
          %v664 = vadd.f32 %v662, %v663
          %v665 = vmul.f32 %v282, -0.1457434
          %v666 = vadd.f32 %v664, %v665
          %v667 = vmul.f32 %v287, 0.10861567
          %v668 = vadd.f32 %v666, %v667
          %v669 = vmul.f32 %v292, 0.14652698
          %v670 = vadd.f32 %v668, %v669
          %v671 = vmul.f32 %v297, -0.10592091
          %v672 = vadd.f32 %v670, %v671
          %vm673 = vcmp.gt.f32.partialorder %v672, 0.0
          %v674 = vmul.f32 %v672, 0.1
          %v675 = vsel %vm673, %v672, %v674
          %v676 = vmul.f32 %v152, 0.080323905
          %v677 = vadd.f32 %v676, -0.009619273
          %v678 = vmul.f32 %v157, 0.18157624
          %v679 = vadd.f32 %v677, %v678
          %v680 = vmul.f32 %v162, 0.029065931
          %v681 = vadd.f32 %v679, %v680
          %v682 = vmul.f32 %v167, 0.13929048
          %v683 = vadd.f32 %v681, %v682
          %v684 = vmul.f32 %v172, 0.09468963
          %v685 = vadd.f32 %v683, %v684
          %v686 = vmul.f32 %v177, 0.011189889
          %v687 = vadd.f32 %v685, %v686
          %v688 = vmul.f32 %v182, 0.0572245
          %v689 = vadd.f32 %v687, %v688
          %v690 = vmul.f32 %v187, 0.17418048
          %v691 = vadd.f32 %v689, %v690
          %v692 = vmul.f32 %v192, -0.09853512
          %v693 = vadd.f32 %v691, %v692
          %v694 = vmul.f32 %v197, 0.0512803
          %v695 = vadd.f32 %v693, %v694
          %v696 = vmul.f32 %v202, -0.048022367
          %v697 = vadd.f32 %v695, %v696
          %v698 = vmul.f32 %v207, 0.13467109
          %v699 = vadd.f32 %v697, %v698
          %v700 = vmul.f32 %v212, -0.1470892
          %v701 = vadd.f32 %v699, %v700
          %v702 = vmul.f32 %v217, -0.052516438
          %v703 = vadd.f32 %v701, %v702
          %v704 = vmul.f32 %v222, -0.095456526
          %v705 = vadd.f32 %v703, %v704
          %v706 = vmul.f32 %v227, 0.11344683
          %v707 = vadd.f32 %v705, %v706
          %v708 = vmul.f32 %v232, 0.026626911
          %v709 = vadd.f32 %v707, %v708
          %v710 = vmul.f32 %v237, -0.14809027
          %v711 = vadd.f32 %v709, %v710
          %v712 = vmul.f32 %v242, 0.08921497
          %v713 = vadd.f32 %v711, %v712
          %v714 = vmul.f32 %v247, -0.022594986
          %v715 = vadd.f32 %v713, %v714
          %v716 = vmul.f32 %v252, 0.119942546
          %v717 = vadd.f32 %v715, %v716
          %v718 = vmul.f32 %v257, -0.074171156
          %v719 = vadd.f32 %v717, %v718
          %v720 = vmul.f32 %v262, 0.15829666
          %v721 = vadd.f32 %v719, %v720
          %v722 = vmul.f32 %v267, 0.07745777
          %v723 = vadd.f32 %v721, %v722
          %v724 = vmul.f32 %v272, 0.1375017
          %v725 = vadd.f32 %v723, %v724
          %v726 = vmul.f32 %v277, 0.0040710135
          %v727 = vadd.f32 %v725, %v726
          %v728 = vmul.f32 %v282, -0.099654205
          %v729 = vadd.f32 %v727, %v728
          %v730 = vmul.f32 %v287, 0.06464599
          %v731 = vadd.f32 %v729, %v730
          %v732 = vmul.f32 %v292, -0.1272237
          %v733 = vadd.f32 %v731, %v732
          %v734 = vmul.f32 %v297, -0.16058865
          %v735 = vadd.f32 %v733, %v734
          %vm736 = vcmp.gt.f32.partialorder %v735, 0.0
          %v737 = vmul.f32 %v735, 0.1
          %v738 = vsel %vm736, %v735, %v737
          %v739 = vmul.f32 %v152, 0.15218714
          %v740 = vadd.f32 %v739, 0.12551044
          %v741 = vmul.f32 %v157, 0.1325742
          %v742 = vadd.f32 %v740, %v741
          %v743 = vmul.f32 %v162, 0.16026175
          %v744 = vadd.f32 %v742, %v743
          %v745 = vmul.f32 %v167, -0.15923925
          %v746 = vadd.f32 %v744, %v745
          %v747 = vmul.f32 %v172, 0.075172715
          %v748 = vadd.f32 %v746, %v747
          %v749 = vmul.f32 %v177, -0.036317658
          %v750 = vadd.f32 %v748, %v749
          %v751 = vmul.f32 %v182, -0.06131828
          %v752 = vadd.f32 %v750, %v751
          %v753 = vmul.f32 %v187, -0.09539106
          %v754 = vadd.f32 %v752, %v753
          %v755 = vmul.f32 %v192, -0.07538292
          %v756 = vadd.f32 %v754, %v755
          %v757 = vmul.f32 %v197, -0.040140774
          %v758 = vadd.f32 %v756, %v757
          %v759 = vmul.f32 %v202, 0.0988292
          %v760 = vadd.f32 %v758, %v759
          %v761 = vmul.f32 %v207, 0.11497357
          %v762 = vadd.f32 %v760, %v761
          %v763 = vmul.f32 %v212, -0.1732863
          %v764 = vadd.f32 %v762, %v763
          %v765 = vmul.f32 %v217, 0.1460195
          %v766 = vadd.f32 %v764, %v765
          %v767 = vmul.f32 %v222, 0.008351445
          %v768 = vadd.f32 %v766, %v767
          %v769 = vmul.f32 %v227, -0.11690195
          %v770 = vadd.f32 %v768, %v769
          %v771 = vmul.f32 %v232, 0.038906723
          %v772 = vadd.f32 %v770, %v771
          %v773 = vmul.f32 %v237, -0.102565736
          %v774 = vadd.f32 %v772, %v773
          %v775 = vmul.f32 %v242, -0.024067532
          %v776 = vadd.f32 %v774, %v775
          %v777 = vmul.f32 %v247, 0.089840055
          %v778 = vadd.f32 %v776, %v777
          %v779 = vmul.f32 %v252, -0.019042622
          %v780 = vadd.f32 %v778, %v779
          %v781 = vmul.f32 %v257, 0.045789238
          %v782 = vadd.f32 %v780, %v781
          %v783 = vmul.f32 %v262, -0.18249866
          %v784 = vadd.f32 %v782, %v783
          %v785 = vmul.f32 %v267, 0.051772833
          %v786 = vadd.f32 %v784, %v785
          %v787 = vmul.f32 %v272, -0.105815664
          %v788 = vadd.f32 %v786, %v787
          %v789 = vmul.f32 %v277, -0.15258808
          %v790 = vadd.f32 %v788, %v789
          %v791 = vmul.f32 %v282, 0.0733266
          %v792 = vadd.f32 %v790, %v791
          %v793 = vmul.f32 %v287, -0.06769019
          %v794 = vadd.f32 %v792, %v793
          %v795 = vmul.f32 %v292, -0.08750054
          %v796 = vadd.f32 %v794, %v795
          %v797 = vmul.f32 %v297, -0.06907107
          %v798 = vadd.f32 %v796, %v797
          %vm799 = vcmp.gt.f32.partialorder %v798, 0.0
          %v800 = vmul.f32 %v798, 0.1
          %v801 = vsel %vm799, %v798, %v800
          %v802 = vmul.f32 %v152, -0.14744483
          %v803 = vadd.f32 %v802, -0.061532225
          %v804 = vmul.f32 %v157, 0.14373319
          %v805 = vadd.f32 %v803, %v804
          %v806 = vmul.f32 %v162, 0.007574364
          %v807 = vadd.f32 %v805, %v806
          %v808 = vmul.f32 %v167, 0.08653415
          %v809 = vadd.f32 %v807, %v808
          %v810 = vmul.f32 %v172, 0.072306365
          %v811 = vadd.f32 %v809, %v810
          %v812 = vmul.f32 %v177, -0.1346814
          %v813 = vadd.f32 %v811, %v812
          %v814 = vmul.f32 %v182, 0.082986616
          %v815 = vadd.f32 %v813, %v814
          %v816 = vmul.f32 %v187, -0.04658177
          %v817 = vadd.f32 %v815, %v816
          %v818 = vmul.f32 %v192, 0.08412669
          %v819 = vadd.f32 %v817, %v818
          %v820 = vmul.f32 %v197, 0.14702943
          %v821 = vadd.f32 %v819, %v820
          %v822 = vmul.f32 %v202, 0.14485689
          %v823 = vadd.f32 %v821, %v822
          %v824 = vmul.f32 %v207, 0.09818545
          %v825 = vadd.f32 %v823, %v824
          %v826 = vmul.f32 %v212, -0.1036517
          %v827 = vadd.f32 %v825, %v826
          %v828 = vmul.f32 %v217, -0.120481
          %v829 = vadd.f32 %v827, %v828
          %v830 = vmul.f32 %v222, 0.025590483
          %v831 = vadd.f32 %v829, %v830
          %v832 = vmul.f32 %v227, -0.053948544
          %v833 = vadd.f32 %v831, %v832
          %v834 = vmul.f32 %v232, -0.1609243
          %v835 = vadd.f32 %v833, %v834
          %v836 = vmul.f32 %v237, -0.14654742
          %v837 = vadd.f32 %v835, %v836
          %v838 = vmul.f32 %v242, 0.17003497
          %v839 = vadd.f32 %v837, %v838
          %v840 = vmul.f32 %v247, -0.15462437
          %v841 = vadd.f32 %v839, %v840
          %v842 = vmul.f32 %v252, 0.08607031
          %v843 = vadd.f32 %v841, %v842
          %v844 = vmul.f32 %v257, -0.013822005
          %v845 = vadd.f32 %v843, %v844
          %v846 = vmul.f32 %v262, -0.059956517
          %v847 = vadd.f32 %v845, %v846
          %v848 = vmul.f32 %v267, 0.017533947
          %v849 = vadd.f32 %v847, %v848
          %v850 = vmul.f32 %v272, 0.09282445
          %v851 = vadd.f32 %v849, %v850
          %v852 = vmul.f32 %v277, 0.082963414
          %v853 = vadd.f32 %v851, %v852
          %v854 = vmul.f32 %v282, 0.13953033
          %v855 = vadd.f32 %v853, %v854
          %v856 = vmul.f32 %v287, -0.026840856
          %v857 = vadd.f32 %v855, %v856
          %v858 = vmul.f32 %v292, -0.09214714
          %v859 = vadd.f32 %v857, %v858
          %v860 = vmul.f32 %v297, -0.04351454
          %v861 = vadd.f32 %v859, %v860
          %vm862 = vcmp.gt.f32.partialorder %v861, 0.0
          %v863 = vmul.f32 %v861, 0.1
          %v864 = vsel %vm862, %v861, %v863
          %v865 = vmul.f32 %v152, 0.12844373
          %v866 = vadd.f32 %v865, -0.09864464
          %v867 = vmul.f32 %v157, 0.16952921
          %v868 = vadd.f32 %v866, %v867
          %v869 = vmul.f32 %v162, 0.16001411
          %v870 = vadd.f32 %v868, %v869
          %v871 = vmul.f32 %v167, -0.14989364
          %v872 = vadd.f32 %v870, %v871
          %v873 = vmul.f32 %v172, 0.025269762
          %v874 = vadd.f32 %v872, %v873
          %v875 = vmul.f32 %v177, 0.09721841
          %v876 = vadd.f32 %v874, %v875
          %v877 = vmul.f32 %v182, -0.0073600705
          %v878 = vadd.f32 %v876, %v877
          %v879 = vmul.f32 %v187, 0.115464404
          %v880 = vadd.f32 %v878, %v879
          %v881 = vmul.f32 %v192, 0.045353293
          %v882 = vadd.f32 %v880, %v881
          %v883 = vmul.f32 %v197, -0.058101308
          %v884 = vadd.f32 %v882, %v883
          %v885 = vmul.f32 %v202, 0.11629986
          %v886 = vadd.f32 %v884, %v885
          %v887 = vmul.f32 %v207, -0.14469792
          %v888 = vadd.f32 %v886, %v887
          %v889 = vmul.f32 %v212, 0.040829144
          %v890 = vadd.f32 %v888, %v889
          %v891 = vmul.f32 %v217, -0.025302408
          %v892 = vadd.f32 %v890, %v891
          %v893 = vmul.f32 %v222, -0.13943216
          %v894 = vadd.f32 %v892, %v893
          %v895 = vmul.f32 %v227, -0.07760973
          %v896 = vadd.f32 %v894, %v895
          %v897 = vmul.f32 %v232, -0.035786126
          %v898 = vadd.f32 %v896, %v897
          %v899 = vmul.f32 %v237, -0.09416384
          %v900 = vadd.f32 %v898, %v899
          %v901 = vmul.f32 %v242, 0.019592611
          %v902 = vadd.f32 %v900, %v901
          %v903 = vmul.f32 %v247, -0.06597215
          %v904 = vadd.f32 %v902, %v903
          %v905 = vmul.f32 %v252, -0.15734391
          %v906 = vadd.f32 %v904, %v905
          %v907 = vmul.f32 %v257, 0.16969067
          %v908 = vadd.f32 %v906, %v907
          %v909 = vmul.f32 %v262, 0.138281
          %v910 = vadd.f32 %v908, %v909
          %v911 = vmul.f32 %v267, 0.13281962
          %v912 = vadd.f32 %v910, %v911
          %v913 = vmul.f32 %v272, 0.15851548
          %v914 = vadd.f32 %v912, %v913
          %v915 = vmul.f32 %v277, 0.042756002
          %v916 = vadd.f32 %v914, %v915
          %v917 = vmul.f32 %v282, -0.054296605
          %v918 = vadd.f32 %v916, %v917
          %v919 = vmul.f32 %v287, -0.11249794
          %v920 = vadd.f32 %v918, %v919
          %v921 = vmul.f32 %v292, 0.09821026
          %v922 = vadd.f32 %v920, %v921
          %v923 = vmul.f32 %v297, 0.0076683
          %v924 = vadd.f32 %v922, %v923
          %vm925 = vcmp.gt.f32.partialorder %v924, 0.0
          %v926 = vmul.f32 %v924, 0.1
          %v927 = vsel %vm925, %v924, %v926
          %v928 = vmul.f32 %v152, -0.07316132
          %v929 = vadd.f32 %v928, 0.16612463
          %v930 = vmul.f32 %v157, 0.17854588
          %v931 = vadd.f32 %v929, %v930
          %v932 = vmul.f32 %v162, 0.07456553
          %v933 = vadd.f32 %v931, %v932
          %v934 = vmul.f32 %v167, -0.12087467
          %v935 = vadd.f32 %v933, %v934
          %v936 = vmul.f32 %v172, -0.11745481
          %v937 = vadd.f32 %v935, %v936
          %v938 = vmul.f32 %v177, -0.10978451
          %v939 = vadd.f32 %v937, %v938
          %v940 = vmul.f32 %v182, -0.052749407
          %v941 = vadd.f32 %v939, %v940
          %v942 = vmul.f32 %v187, 0.15648717
          %v943 = vadd.f32 %v941, %v942
          %v944 = vmul.f32 %v192, -0.11610689
          %v945 = vadd.f32 %v943, %v944
          %v946 = vmul.f32 %v197, -0.070015736
          %v947 = vadd.f32 %v945, %v946
          %v948 = vmul.f32 %v202, -0.049509536
          %v949 = vadd.f32 %v947, %v948
          %v950 = vmul.f32 %v207, 0.17595333
          %v951 = vadd.f32 %v949, %v950
          %v952 = vmul.f32 %v212, -0.123299465
          %v953 = vadd.f32 %v951, %v952
          %v954 = vmul.f32 %v217, 0.095299296
          %v955 = vadd.f32 %v953, %v954
          %v956 = vmul.f32 %v222, -0.14647113
          %v957 = vadd.f32 %v955, %v956
          %v958 = vmul.f32 %v227, 0.1479929
          %v959 = vadd.f32 %v957, %v958
          %v960 = vmul.f32 %v232, -0.1303473
          %v961 = vadd.f32 %v959, %v960
          %v962 = vmul.f32 %v237, -0.08796382
          %v963 = vadd.f32 %v961, %v962
          %v964 = vmul.f32 %v242, 0.09706288
          %v965 = vadd.f32 %v963, %v964
          %v966 = vmul.f32 %v247, 0.15449427
          %v967 = vadd.f32 %v965, %v966
          %v968 = vmul.f32 %v252, 0.14634144
          %v969 = vadd.f32 %v967, %v968
          %v970 = vmul.f32 %v257, -0.020990286
          %v971 = vadd.f32 %v969, %v970
          %v972 = vmul.f32 %v262, -0.16318694
          %v973 = vadd.f32 %v971, %v972
          %v974 = vmul.f32 %v267, 0.079336666
          %v975 = vadd.f32 %v973, %v974
          %v976 = vmul.f32 %v272, -0.042148728
          %v977 = vadd.f32 %v975, %v976
          %v978 = vmul.f32 %v277, 0.006897182
          %v979 = vadd.f32 %v977, %v978
          %v980 = vmul.f32 %v282, 0.0647916
          %v981 = vadd.f32 %v979, %v980
          %v982 = vmul.f32 %v287, -0.06671701
          %v983 = vadd.f32 %v981, %v982
          %v984 = vmul.f32 %v292, 0.05273204
          %v985 = vadd.f32 %v983, %v984
          %v986 = vmul.f32 %v297, 0.1667252
          %v987 = vadd.f32 %v985, %v986
          %vm988 = vcmp.gt.f32.partialorder %v987, 0.0
          %v989 = vmul.f32 %v987, 0.1
          %v990 = vsel %vm988, %v987, %v989
          %v991 = vmul.f32 %v152, -0.1212263
          %v992 = vadd.f32 %v991, -0.0035741725
          %v993 = vmul.f32 %v157, 0.18045758
          %v994 = vadd.f32 %v992, %v993
          %v995 = vmul.f32 %v162, -0.11504043
          %v996 = vadd.f32 %v994, %v995
          %v997 = vmul.f32 %v167, 0.059774477
          %v998 = vadd.f32 %v996, %v997
          %v999 = vmul.f32 %v172, -0.117041856
          %v1000 = vadd.f32 %v998, %v999
          %v1001 = vmul.f32 %v177, 0.048466668
          %v1002 = vadd.f32 %v1000, %v1001
          %v1003 = vmul.f32 %v182, 0.043025576
          %v1004 = vadd.f32 %v1002, %v1003
          %v1005 = vmul.f32 %v187, -0.082767755
          %v1006 = vadd.f32 %v1004, %v1005
          %v1007 = vmul.f32 %v192, -0.050820634
          %v1008 = vadd.f32 %v1006, %v1007
          %v1009 = vmul.f32 %v197, 0.15454137
          %v1010 = vadd.f32 %v1008, %v1009
          %v1011 = vmul.f32 %v202, 0.020356504
          %v1012 = vadd.f32 %v1010, %v1011
          %v1013 = vmul.f32 %v207, 0.12967904
          %v1014 = vadd.f32 %v1012, %v1013
          %v1015 = vmul.f32 %v212, -0.060154356
          %v1016 = vadd.f32 %v1014, %v1015
          %v1017 = vmul.f32 %v217, -0.09647706
          %v1018 = vadd.f32 %v1016, %v1017
          %v1019 = vmul.f32 %v222, -0.0880763
          %v1020 = vadd.f32 %v1018, %v1019
          %v1021 = vmul.f32 %v227, 0.03290733
          %v1022 = vadd.f32 %v1020, %v1021
          %v1023 = vmul.f32 %v232, 0.017690042
          %v1024 = vadd.f32 %v1022, %v1023
          %v1025 = vmul.f32 %v237, 0.17011534
          %v1026 = vadd.f32 %v1024, %v1025
          %v1027 = vmul.f32 %v242, -0.16009137
          %v1028 = vadd.f32 %v1026, %v1027
          %v1029 = vmul.f32 %v247, 0.075759225
          %v1030 = vadd.f32 %v1028, %v1029
          %v1031 = vmul.f32 %v252, 0.01784357
          %v1032 = vadd.f32 %v1030, %v1031
          %v1033 = vmul.f32 %v257, -0.17993079
          %v1034 = vadd.f32 %v1032, %v1033
          %v1035 = vmul.f32 %v262, -0.053462196
          %v1036 = vadd.f32 %v1034, %v1035
          %v1037 = vmul.f32 %v267, 0.1117179
          %v1038 = vadd.f32 %v1036, %v1037
          %v1039 = vmul.f32 %v272, 0.07029767
          %v1040 = vadd.f32 %v1038, %v1039
          %v1041 = vmul.f32 %v277, -0.15997677
          %v1042 = vadd.f32 %v1040, %v1041
          %v1043 = vmul.f32 %v282, 0.09767202
          %v1044 = vadd.f32 %v1042, %v1043
          %v1045 = vmul.f32 %v287, -0.057634108
          %v1046 = vadd.f32 %v1044, %v1045
          %v1047 = vmul.f32 %v292, -0.16156644
          %v1048 = vadd.f32 %v1046, %v1047
          %v1049 = vmul.f32 %v297, 0.014221167
          %v1050 = vadd.f32 %v1048, %v1049
          %vm1051 = vcmp.gt.f32.partialorder %v1050, 0.0
          %v1052 = vmul.f32 %v1050, 0.1
          %v1053 = vsel %vm1051, %v1050, %v1052
          %v1054 = vmul.f32 %v152, 0.15625706
          %v1055 = vadd.f32 %v1054, 0.17304763
          %v1056 = vmul.f32 %v157, 0.13646723
          %v1057 = vadd.f32 %v1055, %v1056
          %v1058 = vmul.f32 %v162, -0.17429578
          %v1059 = vadd.f32 %v1057, %v1058
          %v1060 = vmul.f32 %v167, 0.049293198
          %v1061 = vadd.f32 %v1059, %v1060
          %v1062 = vmul.f32 %v172, 0.04501094
          %v1063 = vadd.f32 %v1061, %v1062
          %v1064 = vmul.f32 %v177, 0.08764092
          %v1065 = vadd.f32 %v1063, %v1064
          %v1066 = vmul.f32 %v182, 0.03855649
          %v1067 = vadd.f32 %v1065, %v1066
          %v1068 = vmul.f32 %v187, -0.112080455
          %v1069 = vadd.f32 %v1067, %v1068
          %v1070 = vmul.f32 %v192, 0.17023112
          %v1071 = vadd.f32 %v1069, %v1070
          %v1072 = vmul.f32 %v197, 0.062146157
          %v1073 = vadd.f32 %v1071, %v1072
          %v1074 = vmul.f32 %v202, -0.14188564
          %v1075 = vadd.f32 %v1073, %v1074
          %v1076 = vmul.f32 %v207, -0.16060127
          %v1077 = vadd.f32 %v1075, %v1076
          %v1078 = vmul.f32 %v212, -0.1647132
          %v1079 = vadd.f32 %v1077, %v1078
          %v1080 = vmul.f32 %v217, 0.17825349
          %v1081 = vadd.f32 %v1079, %v1080
          %v1082 = vmul.f32 %v222, -0.0991595
          %v1083 = vadd.f32 %v1081, %v1082
          %v1084 = vmul.f32 %v227, 0.119376756
          %v1085 = vadd.f32 %v1083, %v1084
          %v1086 = vmul.f32 %v232, 0.07192358
          %v1087 = vadd.f32 %v1085, %v1086
          %v1088 = vmul.f32 %v237, -0.14808409
          %v1089 = vadd.f32 %v1087, %v1088
          %v1090 = vmul.f32 %v242, -0.13440834
          %v1091 = vadd.f32 %v1089, %v1090
          %v1092 = vmul.f32 %v247, -0.11652525
          %v1093 = vadd.f32 %v1091, %v1092
          %v1094 = vmul.f32 %v252, 0.17533764
          %v1095 = vadd.f32 %v1093, %v1094
          %v1096 = vmul.f32 %v257, -0.11551442
          %v1097 = vadd.f32 %v1095, %v1096
          %v1098 = vmul.f32 %v262, -0.07815359
          %v1099 = vadd.f32 %v1097, %v1098
          %v1100 = vmul.f32 %v267, 0.04331674
          %v1101 = vadd.f32 %v1099, %v1100
          %v1102 = vmul.f32 %v272, -0.074783914
          %v1103 = vadd.f32 %v1101, %v1102
          %v1104 = vmul.f32 %v277, -0.0422414
          %v1105 = vadd.f32 %v1103, %v1104
          %v1106 = vmul.f32 %v282, 0.029576877
          %v1107 = vadd.f32 %v1105, %v1106
          %v1108 = vmul.f32 %v287, -0.17821796
          %v1109 = vadd.f32 %v1107, %v1108
          %v1110 = vmul.f32 %v292, -0.18236202
          %v1111 = vadd.f32 %v1109, %v1110
          %v1112 = vmul.f32 %v297, -0.16360913
          %v1113 = vadd.f32 %v1111, %v1112
          %vm1114 = vcmp.gt.f32.partialorder %v1113, 0.0
          %v1115 = vmul.f32 %v1113, 0.1
          %v1116 = vsel %vm1114, %v1113, %v1115
          %v1117 = vmul.f32 %v152, -0.06276632
          %v1118 = vadd.f32 %v1117, 0.13943765
          %v1119 = vmul.f32 %v157, -0.07250003
          %v1120 = vadd.f32 %v1118, %v1119
          %v1121 = vmul.f32 %v162, 0.119101346
          %v1122 = vadd.f32 %v1120, %v1121
          %v1123 = vmul.f32 %v167, -0.17917691
          %v1124 = vadd.f32 %v1122, %v1123
          %v1125 = vmul.f32 %v172, -0.17773105
          %v1126 = vadd.f32 %v1124, %v1125
          %v1127 = vmul.f32 %v177, -0.13528049
          %v1128 = vadd.f32 %v1126, %v1127
          %v1129 = vmul.f32 %v182, 0.11170218
          %v1130 = vadd.f32 %v1128, %v1129
          %v1131 = vmul.f32 %v187, -0.13981605
          %v1132 = vadd.f32 %v1130, %v1131
          %v1133 = vmul.f32 %v192, -0.039468467
          %v1134 = vadd.f32 %v1132, %v1133
          %v1135 = vmul.f32 %v197, 0.09465816
          %v1136 = vadd.f32 %v1134, %v1135
          %v1137 = vmul.f32 %v202, 0.0027629212
          %v1138 = vadd.f32 %v1136, %v1137
          %v1139 = vmul.f32 %v207, -0.04123997
          %v1140 = vadd.f32 %v1138, %v1139
          %v1141 = vmul.f32 %v212, -0.14014587
          %v1142 = vadd.f32 %v1140, %v1141
          %v1143 = vmul.f32 %v217, 0.056609523
          %v1144 = vadd.f32 %v1142, %v1143
          %v1145 = vmul.f32 %v222, -0.17837471
          %v1146 = vadd.f32 %v1144, %v1145
          %v1147 = vmul.f32 %v227, -0.072416715
          %v1148 = vadd.f32 %v1146, %v1147
          %v1149 = vmul.f32 %v232, -0.08333598
          %v1150 = vadd.f32 %v1148, %v1149
          %v1151 = vmul.f32 %v237, -0.08218272
          %v1152 = vadd.f32 %v1150, %v1151
          %v1153 = vmul.f32 %v242, -0.04610369
          %v1154 = vadd.f32 %v1152, %v1153
          %v1155 = vmul.f32 %v247, -0.1777422
          %v1156 = vadd.f32 %v1154, %v1155
          %v1157 = vmul.f32 %v252, -0.0389708
          %v1158 = vadd.f32 %v1156, %v1157
          %v1159 = vmul.f32 %v257, 0.06180428
          %v1160 = vadd.f32 %v1158, %v1159
          %v1161 = vmul.f32 %v262, 0.16226804
          %v1162 = vadd.f32 %v1160, %v1161
          %v1163 = vmul.f32 %v267, -0.08632103
          %v1164 = vadd.f32 %v1162, %v1163
          %v1165 = vmul.f32 %v272, 0.15383628
          %v1166 = vadd.f32 %v1164, %v1165
          %v1167 = vmul.f32 %v277, 0.1006825
          %v1168 = vadd.f32 %v1166, %v1167
          %v1169 = vmul.f32 %v282, 0.064651124
          %v1170 = vadd.f32 %v1168, %v1169
          %v1171 = vmul.f32 %v287, -0.07043958
          %v1172 = vadd.f32 %v1170, %v1171
          %v1173 = vmul.f32 %v292, -0.07539741
          %v1174 = vadd.f32 %v1172, %v1173
          %v1175 = vmul.f32 %v297, 0.104815714
          %v1176 = vadd.f32 %v1174, %v1175
          %vm1177 = vcmp.gt.f32.partialorder %v1176, 0.0
          %v1178 = vmul.f32 %v1176, 0.1
          %v1179 = vsel %vm1177, %v1176, %v1178
          %v1180 = vmul.f32 %v152, -0.075789474
          %v1181 = vadd.f32 %v1180, -0.0064567984
          %v1182 = vmul.f32 %v157, -0.14895964
          %v1183 = vadd.f32 %v1181, %v1182
          %v1184 = vmul.f32 %v162, 0.1654962
          %v1185 = vadd.f32 %v1183, %v1184
          %v1186 = vmul.f32 %v167, -0.015954843
          %v1187 = vadd.f32 %v1185, %v1186
          %v1188 = vmul.f32 %v172, 0.018282691
          %v1189 = vadd.f32 %v1187, %v1188
          %v1190 = vmul.f32 %v177, -0.050710242
          %v1191 = vadd.f32 %v1189, %v1190
          %v1192 = vmul.f32 %v182, 0.15917896
          %v1193 = vadd.f32 %v1191, %v1192
          %v1194 = vmul.f32 %v187, -0.17206535
          %v1195 = vadd.f32 %v1193, %v1194
          %v1196 = vmul.f32 %v192, -0.015585455
          %v1197 = vadd.f32 %v1195, %v1196
          %v1198 = vmul.f32 %v197, 0.1580085
          %v1199 = vadd.f32 %v1197, %v1198
          %v1200 = vmul.f32 %v202, 0.08997003
          %v1201 = vadd.f32 %v1199, %v1200
          %v1202 = vmul.f32 %v207, 0.01499037
          %v1203 = vadd.f32 %v1201, %v1202
          %v1204 = vmul.f32 %v212, 0.009601992
          %v1205 = vadd.f32 %v1203, %v1204
          %v1206 = vmul.f32 %v217, -0.003903557
          %v1207 = vadd.f32 %v1205, %v1206
          %v1208 = vmul.f32 %v222, 0.027378919
          %v1209 = vadd.f32 %v1207, %v1208
          %v1210 = vmul.f32 %v227, -0.14542581
          %v1211 = vadd.f32 %v1209, %v1210
          %v1212 = vmul.f32 %v232, 0.15980595
          %v1213 = vadd.f32 %v1211, %v1212
          %v1214 = vmul.f32 %v237, -0.11604373
          %v1215 = vadd.f32 %v1213, %v1214
          %v1216 = vmul.f32 %v242, -0.028480161
          %v1217 = vadd.f32 %v1215, %v1216
          %v1218 = vmul.f32 %v247, -0.038090773
          %v1219 = vadd.f32 %v1217, %v1218
          %v1220 = vmul.f32 %v252, -0.08443365
          %v1221 = vadd.f32 %v1219, %v1220
          %v1222 = vmul.f32 %v257, -0.09647236
          %v1223 = vadd.f32 %v1221, %v1222
          %v1224 = vmul.f32 %v262, 0.18005368
          %v1225 = vadd.f32 %v1223, %v1224
          %v1226 = vmul.f32 %v267, -0.15535006
          %v1227 = vadd.f32 %v1225, %v1226
          %v1228 = vmul.f32 %v272, 0.14157659
          %v1229 = vadd.f32 %v1227, %v1228
          %v1230 = vmul.f32 %v277, -0.16791193
          %v1231 = vadd.f32 %v1229, %v1230
          %v1232 = vmul.f32 %v282, 0.17025636
          %v1233 = vadd.f32 %v1231, %v1232
          %v1234 = vmul.f32 %v287, 0.1697576
          %v1235 = vadd.f32 %v1233, %v1234
          %v1236 = vmul.f32 %v292, -0.0036431225
          %v1237 = vadd.f32 %v1235, %v1236
          %v1238 = vmul.f32 %v297, -0.1286528
          %v1239 = vadd.f32 %v1237, %v1238
          %vm1240 = vcmp.gt.f32.partialorder %v1239, 0.0
          %v1241 = vmul.f32 %v1239, 0.1
          %v1242 = vsel %vm1240, %v1239, %v1241
          %v1243 = vmul.f32 %v152, -0.15130429
          %v1244 = vadd.f32 %v1243, -0.064207606
          %v1245 = vmul.f32 %v157, -0.17804903
          %v1246 = vadd.f32 %v1244, %v1245
          %v1247 = vmul.f32 %v162, 0.13120148
          %v1248 = vadd.f32 %v1246, %v1247
          %v1249 = vmul.f32 %v167, 0.12168405
          %v1250 = vadd.f32 %v1248, %v1249
          %v1251 = vmul.f32 %v172, -0.05261229
          %v1252 = vadd.f32 %v1250, %v1251
          %v1253 = vmul.f32 %v177, 0.057952743
          %v1254 = vadd.f32 %v1252, %v1253
          %v1255 = vmul.f32 %v182, 0.1740669
          %v1256 = vadd.f32 %v1254, %v1255
          %v1257 = vmul.f32 %v187, -0.020688413
          %v1258 = vadd.f32 %v1256, %v1257
          %v1259 = vmul.f32 %v192, 0.08904878
          %v1260 = vadd.f32 %v1258, %v1259
          %v1261 = vmul.f32 %v197, 0.15816656
          %v1262 = vadd.f32 %v1260, %v1261
          %v1263 = vmul.f32 %v202, -0.10499936
          %v1264 = vadd.f32 %v1262, %v1263
          %v1265 = vmul.f32 %v207, 0.064284876
          %v1266 = vadd.f32 %v1264, %v1265
          %v1267 = vmul.f32 %v212, 0.008551722
          %v1268 = vadd.f32 %v1266, %v1267
          %v1269 = vmul.f32 %v217, -0.0028820601
          %v1270 = vadd.f32 %v1268, %v1269
          %v1271 = vmul.f32 %v222, -0.10251289
          %v1272 = vadd.f32 %v1270, %v1271
          %v1273 = vmul.f32 %v227, 0.05984408
          %v1274 = vadd.f32 %v1272, %v1273
          %v1275 = vmul.f32 %v232, 0.007138986
          %v1276 = vadd.f32 %v1274, %v1275
          %v1277 = vmul.f32 %v237, 0.05038099
          %v1278 = vadd.f32 %v1276, %v1277
          %v1279 = vmul.f32 %v242, 0.112398565
          %v1280 = vadd.f32 %v1278, %v1279
          %v1281 = vmul.f32 %v247, 0.08287249
          %v1282 = vadd.f32 %v1280, %v1281
          %v1283 = vmul.f32 %v252, -0.05252937
          %v1284 = vadd.f32 %v1282, %v1283
          %v1285 = vmul.f32 %v257, 0.0605876
          %v1286 = vadd.f32 %v1284, %v1285
          %v1287 = vmul.f32 %v262, 0.021963684
          %v1288 = vadd.f32 %v1286, %v1287
          %v1289 = vmul.f32 %v267, 0.11017941
          %v1290 = vadd.f32 %v1288, %v1289
          %v1291 = vmul.f32 %v272, -0.11922327
          %v1292 = vadd.f32 %v1290, %v1291
          %v1293 = vmul.f32 %v277, 0.13325848
          %v1294 = vadd.f32 %v1292, %v1293
          %v1295 = vmul.f32 %v282, 0.057382468
          %v1296 = vadd.f32 %v1294, %v1295
          %v1297 = vmul.f32 %v287, 0.09639283
          %v1298 = vadd.f32 %v1296, %v1297
          %v1299 = vmul.f32 %v292, -0.041586418
          %v1300 = vadd.f32 %v1298, %v1299
          %v1301 = vmul.f32 %v297, -0.14410806
          %v1302 = vadd.f32 %v1300, %v1301
          %vm1303 = vcmp.gt.f32.partialorder %v1302, 0.0
          %v1304 = vmul.f32 %v1302, 0.1
          %v1305 = vsel %vm1303, %v1302, %v1304
          %v1306 = vmul.f32 %v152, -0.039456453
          %v1307 = vadd.f32 %v1306, -0.06773024
          %v1308 = vmul.f32 %v157, 0.14077874
          %v1309 = vadd.f32 %v1307, %v1308
          %v1310 = vmul.f32 %v162, -0.010662622
          %v1311 = vadd.f32 %v1309, %v1310
          %v1312 = vmul.f32 %v167, 0.020394765
          %v1313 = vadd.f32 %v1311, %v1312
          %v1314 = vmul.f32 %v172, 0.04185965
          %v1315 = vadd.f32 %v1313, %v1314
          %v1316 = vmul.f32 %v177, 0.03191417
          %v1317 = vadd.f32 %v1315, %v1316
          %v1318 = vmul.f32 %v182, 0.06423999
          %v1319 = vadd.f32 %v1317, %v1318
          %v1320 = vmul.f32 %v187, 0.08244246
          %v1321 = vadd.f32 %v1319, %v1320
          %v1322 = vmul.f32 %v192, 0.14520743
          %v1323 = vadd.f32 %v1321, %v1322
          %v1324 = vmul.f32 %v197, -0.093784004
          %v1325 = vadd.f32 %v1323, %v1324
          %v1326 = vmul.f32 %v202, -0.16964819
          %v1327 = vadd.f32 %v1325, %v1326
          %v1328 = vmul.f32 %v207, -0.054690544
          %v1329 = vadd.f32 %v1327, %v1328
          %v1330 = vmul.f32 %v212, 0.122794524
          %v1331 = vadd.f32 %v1329, %v1330
          %v1332 = vmul.f32 %v217, -0.009634987
          %v1333 = vadd.f32 %v1331, %v1332
          %v1334 = vmul.f32 %v222, 0.115259334
          %v1335 = vadd.f32 %v1333, %v1334
          %v1336 = vmul.f32 %v227, 0.017388256
          %v1337 = vadd.f32 %v1335, %v1336
          %v1338 = vmul.f32 %v232, 0.08370354
          %v1339 = vadd.f32 %v1337, %v1338
          %v1340 = vmul.f32 %v237, -0.07882641
          %v1341 = vadd.f32 %v1339, %v1340
          %v1342 = vmul.f32 %v242, 0.1562182
          %v1343 = vadd.f32 %v1341, %v1342
          %v1344 = vmul.f32 %v247, 0.13991947
          %v1345 = vadd.f32 %v1343, %v1344
          %v1346 = vmul.f32 %v252, 0.004492549
          %v1347 = vadd.f32 %v1345, %v1346
          %v1348 = vmul.f32 %v257, 0.03555786
          %v1349 = vadd.f32 %v1347, %v1348
          %v1350 = vmul.f32 %v262, 0.07877627
          %v1351 = vadd.f32 %v1349, %v1350
          %v1352 = vmul.f32 %v267, 0.038860846
          %v1353 = vadd.f32 %v1351, %v1352
          %v1354 = vmul.f32 %v272, -0.18031098
          %v1355 = vadd.f32 %v1353, %v1354
          %v1356 = vmul.f32 %v277, 0.039779264
          %v1357 = vadd.f32 %v1355, %v1356
          %v1358 = vmul.f32 %v282, 0.02944581
          %v1359 = vadd.f32 %v1357, %v1358
          %v1360 = vmul.f32 %v287, -0.11546706
          %v1361 = vadd.f32 %v1359, %v1360
          %v1362 = vmul.f32 %v292, -0.07964798
          %v1363 = vadd.f32 %v1361, %v1362
          %v1364 = vmul.f32 %v297, -0.15985362
          %v1365 = vadd.f32 %v1363, %v1364
          %vm1366 = vcmp.gt.f32.partialorder %v1365, 0.0
          %v1367 = vmul.f32 %v1365, 0.1
          %v1368 = vsel %vm1366, %v1365, %v1367
          %v1369 = vmul.f32 %v152, -0.063547574
          %v1370 = vadd.f32 %v1369, -0.097904466
          %v1371 = vmul.f32 %v157, -0.03060055
          %v1372 = vadd.f32 %v1370, %v1371
          %v1373 = vmul.f32 %v162, -0.10976649
          %v1374 = vadd.f32 %v1372, %v1373
          %v1375 = vmul.f32 %v167, 0.055686228
          %v1376 = vadd.f32 %v1374, %v1375
          %v1377 = vmul.f32 %v172, 0.03783395
          %v1378 = vadd.f32 %v1376, %v1377
          %v1379 = vmul.f32 %v177, -0.13773
          %v1380 = vadd.f32 %v1378, %v1379
          %v1381 = vmul.f32 %v182, 0.077915266
          %v1382 = vadd.f32 %v1380, %v1381
          %v1383 = vmul.f32 %v187, 0.11745451
          %v1384 = vadd.f32 %v1382, %v1383
          %v1385 = vmul.f32 %v192, -0.081765845
          %v1386 = vadd.f32 %v1384, %v1385
          %v1387 = vmul.f32 %v197, -0.090293065
          %v1388 = vadd.f32 %v1386, %v1387
          %v1389 = vmul.f32 %v202, 0.025743749
          %v1390 = vadd.f32 %v1388, %v1389
          %v1391 = vmul.f32 %v207, 0.02800269
          %v1392 = vadd.f32 %v1390, %v1391
          %v1393 = vmul.f32 %v212, 0.06773938
          %v1394 = vadd.f32 %v1392, %v1393
          %v1395 = vmul.f32 %v217, -0.12321724
          %v1396 = vadd.f32 %v1394, %v1395
          %v1397 = vmul.f32 %v222, 0.056607563
          %v1398 = vadd.f32 %v1396, %v1397
          %v1399 = vmul.f32 %v227, -0.008340084
          %v1400 = vadd.f32 %v1398, %v1399
          %v1401 = vmul.f32 %v232, -0.0063388348
          %v1402 = vadd.f32 %v1400, %v1401
          %v1403 = vmul.f32 %v237, 0.14877038
          %v1404 = vadd.f32 %v1402, %v1403
          %v1405 = vmul.f32 %v242, -0.036616094
          %v1406 = vadd.f32 %v1404, %v1405
          %v1407 = vmul.f32 %v247, 0.0019888
          %v1408 = vadd.f32 %v1406, %v1407
          %v1409 = vmul.f32 %v252, -0.096833825
          %v1410 = vadd.f32 %v1408, %v1409
          %v1411 = vmul.f32 %v257, 0.070147194
          %v1412 = vadd.f32 %v1410, %v1411
          %v1413 = vmul.f32 %v262, -0.0741732
          %v1414 = vadd.f32 %v1412, %v1413
          %v1415 = vmul.f32 %v267, 0.06506478
          %v1416 = vadd.f32 %v1414, %v1415
          %v1417 = vmul.f32 %v272, -0.03823577
          %v1418 = vadd.f32 %v1416, %v1417
          %v1419 = vmul.f32 %v277, -0.17568466
          %v1420 = vadd.f32 %v1418, %v1419
          %v1421 = vmul.f32 %v282, 0.14436923
          %v1422 = vadd.f32 %v1420, %v1421
          %v1423 = vmul.f32 %v287, 0.03525237
          %v1424 = vadd.f32 %v1422, %v1423
          %v1425 = vmul.f32 %v292, -0.1354102
          %v1426 = vadd.f32 %v1424, %v1425
          %v1427 = vmul.f32 %v297, 0.17552687
          %v1428 = vadd.f32 %v1426, %v1427
          %vm1429 = vcmp.gt.f32.partialorder %v1428, 0.0
          %v1430 = vmul.f32 %v1428, 0.1
          %v1431 = vsel %vm1429, %v1428, %v1430
          %v1432 = vmul.f32 %v152, 0.15901472
          %v1433 = vadd.f32 %v1432, -0.14484465
          %v1434 = vmul.f32 %v157, 0.13680637
          %v1435 = vadd.f32 %v1433, %v1434
          %v1436 = vmul.f32 %v162, 0.16984959
          %v1437 = vadd.f32 %v1435, %v1436
          %v1438 = vmul.f32 %v167, -0.061714828
          %v1439 = vadd.f32 %v1437, %v1438
          %v1440 = vmul.f32 %v172, 0.02108727
          %v1441 = vadd.f32 %v1439, %v1440
          %v1442 = vmul.f32 %v177, -0.12654176
          %v1443 = vadd.f32 %v1441, %v1442
          %v1444 = vmul.f32 %v182, 0.01659533
          %v1445 = vadd.f32 %v1443, %v1444
          %v1446 = vmul.f32 %v187, -0.049740937
          %v1447 = vadd.f32 %v1445, %v1446
          %v1448 = vmul.f32 %v192, 0.03803784
          %v1449 = vadd.f32 %v1447, %v1448
          %v1450 = vmul.f32 %v197, 0.019398341
          %v1451 = vadd.f32 %v1449, %v1450
          %v1452 = vmul.f32 %v202, -0.07021188
          %v1453 = vadd.f32 %v1451, %v1452
          %v1454 = vmul.f32 %v207, 0.1231556
          %v1455 = vadd.f32 %v1453, %v1454
          %v1456 = vmul.f32 %v212, 0.04909771
          %v1457 = vadd.f32 %v1455, %v1456
          %v1458 = vmul.f32 %v217, 0.076254584
          %v1459 = vadd.f32 %v1457, %v1458
          %v1460 = vmul.f32 %v222, -0.17935355
          %v1461 = vadd.f32 %v1459, %v1460
          %v1462 = vmul.f32 %v227, -0.11214026
          %v1463 = vadd.f32 %v1461, %v1462
          %v1464 = vmul.f32 %v232, 0.023707459
          %v1465 = vadd.f32 %v1463, %v1464
          %v1466 = vmul.f32 %v237, -0.17308423
          %v1467 = vadd.f32 %v1465, %v1466
          %v1468 = vmul.f32 %v242, -0.0155949015
          %v1469 = vadd.f32 %v1467, %v1468
          %v1470 = vmul.f32 %v247, -0.085412756
          %v1471 = vadd.f32 %v1469, %v1470
          %v1472 = vmul.f32 %v252, 0.10127406
          %v1473 = vadd.f32 %v1471, %v1472
          %v1474 = vmul.f32 %v257, -0.15347908
          %v1475 = vadd.f32 %v1473, %v1474
          %v1476 = vmul.f32 %v262, -0.12192839
          %v1477 = vadd.f32 %v1475, %v1476
          %v1478 = vmul.f32 %v267, 0.17349736
          %v1479 = vadd.f32 %v1477, %v1478
          %v1480 = vmul.f32 %v272, 0.051024217
          %v1481 = vadd.f32 %v1479, %v1480
          %v1482 = vmul.f32 %v277, 0.16298522
          %v1483 = vadd.f32 %v1481, %v1482
          %v1484 = vmul.f32 %v282, 0.07257473
          %v1485 = vadd.f32 %v1483, %v1484
          %v1486 = vmul.f32 %v287, 0.09268668
          %v1487 = vadd.f32 %v1485, %v1486
          %v1488 = vmul.f32 %v292, 0.065918565
          %v1489 = vadd.f32 %v1487, %v1488
          %v1490 = vmul.f32 %v297, 0.17709988
          %v1491 = vadd.f32 %v1489, %v1490
          %vm1492 = vcmp.gt.f32.partialorder %v1491, 0.0
          %v1493 = vmul.f32 %v1491, 0.1
          %v1494 = vsel %vm1492, %v1491, %v1493
          %v1495 = vmul.f32 %v152, -0.11102992
          %v1496 = vadd.f32 %v1495, -0.14307585
          %v1497 = vmul.f32 %v157, 0.12014583
          %v1498 = vadd.f32 %v1496, %v1497
          %v1499 = vmul.f32 %v162, -0.15117666
          %v1500 = vadd.f32 %v1498, %v1499
          %v1501 = vmul.f32 %v167, -0.052414406
          %v1502 = vadd.f32 %v1500, %v1501
          %v1503 = vmul.f32 %v172, 0.16307755
          %v1504 = vadd.f32 %v1502, %v1503
          %v1505 = vmul.f32 %v177, 0.0030699316
          %v1506 = vadd.f32 %v1504, %v1505
          %v1507 = vmul.f32 %v182, 0.08500728
          %v1508 = vadd.f32 %v1506, %v1507
          %v1509 = vmul.f32 %v187, 0.12713724
          %v1510 = vadd.f32 %v1508, %v1509
          %v1511 = vmul.f32 %v192, 0.06799616
          %v1512 = vadd.f32 %v1510, %v1511
          %v1513 = vmul.f32 %v197, -0.0014998814
          %v1514 = vadd.f32 %v1512, %v1513
          %v1515 = vmul.f32 %v202, -0.12684229
          %v1516 = vadd.f32 %v1514, %v1515
          %v1517 = vmul.f32 %v207, -0.11064926
          %v1518 = vadd.f32 %v1516, %v1517
          %v1519 = vmul.f32 %v212, -0.04388828
          %v1520 = vadd.f32 %v1518, %v1519
          %v1521 = vmul.f32 %v217, 0.0010354697
          %v1522 = vadd.f32 %v1520, %v1521
          %v1523 = vmul.f32 %v222, -0.010952308
          %v1524 = vadd.f32 %v1522, %v1523
          %v1525 = vmul.f32 %v227, 0.059417844
          %v1526 = vadd.f32 %v1524, %v1525
          %v1527 = vmul.f32 %v232, 0.05907492
          %v1528 = vadd.f32 %v1526, %v1527
          %v1529 = vmul.f32 %v237, 0.16716231
          %v1530 = vadd.f32 %v1528, %v1529
          %v1531 = vmul.f32 %v242, -0.16505368
          %v1532 = vadd.f32 %v1530, %v1531
          %v1533 = vmul.f32 %v247, -0.08114952
          %v1534 = vadd.f32 %v1532, %v1533
          %v1535 = vmul.f32 %v252, 0.041800275
          %v1536 = vadd.f32 %v1534, %v1535
          %v1537 = vmul.f32 %v257, 0.070469834
          %v1538 = vadd.f32 %v1536, %v1537
          %v1539 = vmul.f32 %v262, 0.07879586
          %v1540 = vadd.f32 %v1538, %v1539
          %v1541 = vmul.f32 %v267, -0.002970163
          %v1542 = vadd.f32 %v1540, %v1541
          %v1543 = vmul.f32 %v272, -0.04931453
          %v1544 = vadd.f32 %v1542, %v1543
          %v1545 = vmul.f32 %v277, 0.12576395
          %v1546 = vadd.f32 %v1544, %v1545
          %v1547 = vmul.f32 %v282, -0.0069892462
          %v1548 = vadd.f32 %v1546, %v1547
          %v1549 = vmul.f32 %v287, -0.13022868
          %v1550 = vadd.f32 %v1548, %v1549
          %v1551 = vmul.f32 %v292, 0.13229735
          %v1552 = vadd.f32 %v1550, %v1551
          %v1553 = vmul.f32 %v297, 0.031209
          %v1554 = vadd.f32 %v1552, %v1553
          %vm1555 = vcmp.gt.f32.partialorder %v1554, 0.0
          %v1556 = vmul.f32 %v1554, 0.1
          %v1557 = vsel %vm1555, %v1554, %v1556
          %v1558 = vmul.f32 %v152, -0.10021347
          %v1559 = vadd.f32 %v1558, -0.050559502
          %v1560 = vmul.f32 %v157, 0.110639945
          %v1561 = vadd.f32 %v1559, %v1560
          %v1562 = vmul.f32 %v162, 0.05113313
          %v1563 = vadd.f32 %v1561, %v1562
          %v1564 = vmul.f32 %v167, -0.0121507505
          %v1565 = vadd.f32 %v1563, %v1564
          %v1566 = vmul.f32 %v172, 0.018252917
          %v1567 = vadd.f32 %v1565, %v1566
          %v1568 = vmul.f32 %v177, -0.007108603
          %v1569 = vadd.f32 %v1567, %v1568
          %v1570 = vmul.f32 %v182, -0.09735679
          %v1571 = vadd.f32 %v1569, %v1570
          %v1572 = vmul.f32 %v187, 0.16145296
          %v1573 = vadd.f32 %v1571, %v1572
          %v1574 = vmul.f32 %v192, -0.01892383
          %v1575 = vadd.f32 %v1573, %v1574
          %v1576 = vmul.f32 %v197, -0.06167918
          %v1577 = vadd.f32 %v1575, %v1576
          %v1578 = vmul.f32 %v202, -0.18014844
          %v1579 = vadd.f32 %v1577, %v1578
          %v1580 = vmul.f32 %v207, -0.15865687
          %v1581 = vadd.f32 %v1579, %v1580
          %v1582 = vmul.f32 %v212, 0.1284146
          %v1583 = vadd.f32 %v1581, %v1582
          %v1584 = vmul.f32 %v217, -0.086582385
          %v1585 = vadd.f32 %v1583, %v1584
          %v1586 = vmul.f32 %v222, 0.1036268
          %v1587 = vadd.f32 %v1585, %v1586
          %v1588 = vmul.f32 %v227, 0.11288996
          %v1589 = vadd.f32 %v1587, %v1588
          %v1590 = vmul.f32 %v232, -0.011865722
          %v1591 = vadd.f32 %v1589, %v1590
          %v1592 = vmul.f32 %v237, 0.037846312
          %v1593 = vadd.f32 %v1591, %v1592
          %v1594 = vmul.f32 %v242, 0.088681355
          %v1595 = vadd.f32 %v1593, %v1594
          %v1596 = vmul.f32 %v247, -0.021804323
          %v1597 = vadd.f32 %v1595, %v1596
          %v1598 = vmul.f32 %v252, 0.021491569
          %v1599 = vadd.f32 %v1597, %v1598
          %v1600 = vmul.f32 %v257, 0.08680011
          %v1601 = vadd.f32 %v1599, %v1600
          %v1602 = vmul.f32 %v262, 0.080055155
          %v1603 = vadd.f32 %v1601, %v1602
          %v1604 = vmul.f32 %v267, 0.1389238
          %v1605 = vadd.f32 %v1603, %v1604
          %v1606 = vmul.f32 %v272, 0.16863073
          %v1607 = vadd.f32 %v1605, %v1606
          %v1608 = vmul.f32 %v277, 0.095518164
          %v1609 = vadd.f32 %v1607, %v1608
          %v1610 = vmul.f32 %v282, -0.0068061193
          %v1611 = vadd.f32 %v1609, %v1610
          %v1612 = vmul.f32 %v287, -0.095643654
          %v1613 = vadd.f32 %v1611, %v1612
          %v1614 = vmul.f32 %v292, 0.11390611
          %v1615 = vadd.f32 %v1613, %v1614
          %v1616 = vmul.f32 %v297, 0.15068857
          %v1617 = vadd.f32 %v1615, %v1616
          %vm1618 = vcmp.gt.f32.partialorder %v1617, 0.0
          %v1619 = vmul.f32 %v1617, 0.1
          %v1620 = vsel %vm1618, %v1617, %v1619
          %v1621 = vmul.f32 %v152, 0.14068876
          %v1622 = vadd.f32 %v1621, 0.11802365
          %v1623 = vmul.f32 %v157, -0.1060488
          %v1624 = vadd.f32 %v1622, %v1623
          %v1625 = vmul.f32 %v162, -0.15182029
          %v1626 = vadd.f32 %v1624, %v1625
          %v1627 = vmul.f32 %v167, -0.17365599
          %v1628 = vadd.f32 %v1626, %v1627
          %v1629 = vmul.f32 %v172, 0.032660652
          %v1630 = vadd.f32 %v1628, %v1629
          %v1631 = vmul.f32 %v177, 0.12502965
          %v1632 = vadd.f32 %v1630, %v1631
          %v1633 = vmul.f32 %v182, 0.004414458
          %v1634 = vadd.f32 %v1632, %v1633
          %v1635 = vmul.f32 %v187, 0.07968968
          %v1636 = vadd.f32 %v1634, %v1635
          %v1637 = vmul.f32 %v192, 0.022058794
          %v1638 = vadd.f32 %v1636, %v1637
          %v1639 = vmul.f32 %v197, 0.06282017
          %v1640 = vadd.f32 %v1638, %v1639
          %v1641 = vmul.f32 %v202, 0.09749024
          %v1642 = vadd.f32 %v1640, %v1641
          %v1643 = vmul.f32 %v207, 0.111243956
          %v1644 = vadd.f32 %v1642, %v1643
          %v1645 = vmul.f32 %v212, 0.004446887
          %v1646 = vadd.f32 %v1644, %v1645
          %v1647 = vmul.f32 %v217, -0.10666335
          %v1648 = vadd.f32 %v1646, %v1647
          %v1649 = vmul.f32 %v222, -0.12425845
          %v1650 = vadd.f32 %v1648, %v1649
          %v1651 = vmul.f32 %v227, 0.1135365
          %v1652 = vadd.f32 %v1650, %v1651
          %v1653 = vmul.f32 %v232, -0.15208124
          %v1654 = vadd.f32 %v1652, %v1653
          %v1655 = vmul.f32 %v237, -0.044718377
          %v1656 = vadd.f32 %v1654, %v1655
          %v1657 = vmul.f32 %v242, 0.04077399
          %v1658 = vadd.f32 %v1656, %v1657
          %v1659 = vmul.f32 %v247, -0.13866566
          %v1660 = vadd.f32 %v1658, %v1659
          %v1661 = vmul.f32 %v252, -0.13883378
          %v1662 = vadd.f32 %v1660, %v1661
          %v1663 = vmul.f32 %v257, 0.004612254
          %v1664 = vadd.f32 %v1662, %v1663
          %v1665 = vmul.f32 %v262, -0.01901768
          %v1666 = vadd.f32 %v1664, %v1665
          %v1667 = vmul.f32 %v267, 0.059673447
          %v1668 = vadd.f32 %v1666, %v1667
          %v1669 = vmul.f32 %v272, 0.11770371
          %v1670 = vadd.f32 %v1668, %v1669
          %v1671 = vmul.f32 %v277, 0.13459504
          %v1672 = vadd.f32 %v1670, %v1671
          %v1673 = vmul.f32 %v282, 0.16893627
          %v1674 = vadd.f32 %v1672, %v1673
          %v1675 = vmul.f32 %v287, 0.028734544
          %v1676 = vadd.f32 %v1674, %v1675
          %v1677 = vmul.f32 %v292, 0.017157117
          %v1678 = vadd.f32 %v1676, %v1677
          %v1679 = vmul.f32 %v297, -0.12976226
          %v1680 = vadd.f32 %v1678, %v1679
          %vm1681 = vcmp.gt.f32.partialorder %v1680, 0.0
          %v1682 = vmul.f32 %v1680, 0.1
          %v1683 = vsel %vm1681, %v1680, %v1682
          %v1684 = vmul.f32 %v152, -0.026132638
          %v1685 = vadd.f32 %v1684, -0.07376124
          %v1686 = vmul.f32 %v157, 0.08084155
          %v1687 = vadd.f32 %v1685, %v1686
          %v1688 = vmul.f32 %v162, -0.082009606
          %v1689 = vadd.f32 %v1687, %v1688
          %v1690 = vmul.f32 %v167, -0.07167881
          %v1691 = vadd.f32 %v1689, %v1690
          %v1692 = vmul.f32 %v172, -0.048743077
          %v1693 = vadd.f32 %v1691, %v1692
          %v1694 = vmul.f32 %v177, -0.02494647
          %v1695 = vadd.f32 %v1693, %v1694
          %v1696 = vmul.f32 %v182, -0.114601485
          %v1697 = vadd.f32 %v1695, %v1696
          %v1698 = vmul.f32 %v187, 0.015907353
          %v1699 = vadd.f32 %v1697, %v1698
          %v1700 = vmul.f32 %v192, 0.09120839
          %v1701 = vadd.f32 %v1699, %v1700
          %v1702 = vmul.f32 %v197, 0.08958319
          %v1703 = vadd.f32 %v1701, %v1702
          %v1704 = vmul.f32 %v202, -0.03986467
          %v1705 = vadd.f32 %v1703, %v1704
          %v1706 = vmul.f32 %v207, -0.11186011
          %v1707 = vadd.f32 %v1705, %v1706
          %v1708 = vmul.f32 %v212, -0.08426455
          %v1709 = vadd.f32 %v1707, %v1708
          %v1710 = vmul.f32 %v217, 0.02953043
          %v1711 = vadd.f32 %v1709, %v1710
          %v1712 = vmul.f32 %v222, 0.057316042
          %v1713 = vadd.f32 %v1711, %v1712
          %v1714 = vmul.f32 %v227, -0.003634678
          %v1715 = vadd.f32 %v1713, %v1714
          %v1716 = vmul.f32 %v232, 0.093011364
          %v1717 = vadd.f32 %v1715, %v1716
          %v1718 = vmul.f32 %v237, -0.013531013
          %v1719 = vadd.f32 %v1717, %v1718
          %v1720 = vmul.f32 %v242, -0.10929412
          %v1721 = vadd.f32 %v1719, %v1720
          %v1722 = vmul.f32 %v247, 0.053225223
          %v1723 = vadd.f32 %v1721, %v1722
          %v1724 = vmul.f32 %v252, -0.1388972
          %v1725 = vadd.f32 %v1723, %v1724
          %v1726 = vmul.f32 %v257, 0.038097564
          %v1727 = vadd.f32 %v1725, %v1726
          %v1728 = vmul.f32 %v262, -0.11658258
          %v1729 = vadd.f32 %v1727, %v1728
          %v1730 = vmul.f32 %v267, -0.1012361
          %v1731 = vadd.f32 %v1729, %v1730
          %v1732 = vmul.f32 %v272, -0.0009355269
          %v1733 = vadd.f32 %v1731, %v1732
          %v1734 = vmul.f32 %v277, -0.08037222
          %v1735 = vadd.f32 %v1733, %v1734
          %v1736 = vmul.f32 %v282, -0.09188814
          %v1737 = vadd.f32 %v1735, %v1736
          %v1738 = vmul.f32 %v287, 0.09861439
          %v1739 = vadd.f32 %v1737, %v1738
          %v1740 = vmul.f32 %v292, 0.016319703
          %v1741 = vadd.f32 %v1739, %v1740
          %v1742 = vmul.f32 %v297, 0.08745005
          %v1743 = vadd.f32 %v1741, %v1742
          %vm1744 = vcmp.gt.f32.partialorder %v1743, 0.0
          %v1745 = vmul.f32 %v1743, 0.1
          %v1746 = vsel %vm1744, %v1743, %v1745
          %v1747 = vmul.f32 %v152, -0.04774017
          %v1748 = vadd.f32 %v1747, 0.14854254
          %v1749 = vmul.f32 %v157, -0.091075584
          %v1750 = vadd.f32 %v1748, %v1749
          %v1751 = vmul.f32 %v162, -0.08486133
          %v1752 = vadd.f32 %v1750, %v1751
          %v1753 = vmul.f32 %v167, 0.158433
          %v1754 = vadd.f32 %v1752, %v1753
          %v1755 = vmul.f32 %v172, -0.06564242
          %v1756 = vadd.f32 %v1754, %v1755
          %v1757 = vmul.f32 %v177, 0.16703069
          %v1758 = vadd.f32 %v1756, %v1757
          %v1759 = vmul.f32 %v182, 0.06303994
          %v1760 = vadd.f32 %v1758, %v1759
          %v1761 = vmul.f32 %v187, -0.0014902615
          %v1762 = vadd.f32 %v1760, %v1761
          %v1763 = vmul.f32 %v192, 0.04976893
          %v1764 = vadd.f32 %v1762, %v1763
          %v1765 = vmul.f32 %v197, 0.08613503
          %v1766 = vadd.f32 %v1764, %v1765
          %v1767 = vmul.f32 %v202, -0.031555533
          %v1768 = vadd.f32 %v1766, %v1767
          %v1769 = vmul.f32 %v207, 0.03185815
          %v1770 = vadd.f32 %v1768, %v1769
          %v1771 = vmul.f32 %v212, 0.12385198
          %v1772 = vadd.f32 %v1770, %v1771
          %v1773 = vmul.f32 %v217, -0.09378827
          %v1774 = vadd.f32 %v1772, %v1773
          %v1775 = vmul.f32 %v222, -0.037654262
          %v1776 = vadd.f32 %v1774, %v1775
          %v1777 = vmul.f32 %v227, -0.16549994
          %v1778 = vadd.f32 %v1776, %v1777
          %v1779 = vmul.f32 %v232, 0.109254025
          %v1780 = vadd.f32 %v1778, %v1779
          %v1781 = vmul.f32 %v237, 0.062055487
          %v1782 = vadd.f32 %v1780, %v1781
          %v1783 = vmul.f32 %v242, 0.15369721
          %v1784 = vadd.f32 %v1782, %v1783
          %v1785 = vmul.f32 %v247, -0.05225213
          %v1786 = vadd.f32 %v1784, %v1785
          %v1787 = vmul.f32 %v252, -0.17600973
          %v1788 = vadd.f32 %v1786, %v1787
          %v1789 = vmul.f32 %v257, 0.13530086
          %v1790 = vadd.f32 %v1788, %v1789
          %v1791 = vmul.f32 %v262, 0.09394093
          %v1792 = vadd.f32 %v1790, %v1791
          %v1793 = vmul.f32 %v267, 0.14864866
          %v1794 = vadd.f32 %v1792, %v1793
          %v1795 = vmul.f32 %v272, -0.11735147
          %v1796 = vadd.f32 %v1794, %v1795
          %v1797 = vmul.f32 %v277, 0.13505253
          %v1798 = vadd.f32 %v1796, %v1797
          %v1799 = vmul.f32 %v282, -0.002169402
          %v1800 = vadd.f32 %v1798, %v1799
          %v1801 = vmul.f32 %v287, -0.12066186
          %v1802 = vadd.f32 %v1800, %v1801
          %v1803 = vmul.f32 %v292, 0.008023802
          %v1804 = vadd.f32 %v1802, %v1803
          %v1805 = vmul.f32 %v297, 0.17402528
          %v1806 = vadd.f32 %v1804, %v1805
          %vm1807 = vcmp.gt.f32.partialorder %v1806, 0.0
          %v1808 = vmul.f32 %v1806, 0.1
          %v1809 = vsel %vm1807, %v1806, %v1808
          %v1810 = vmul.f32 %v152, -0.044934414
          %v1811 = vadd.f32 %v1810, 0.07723839
          %v1812 = vmul.f32 %v157, 0.17586435
          %v1813 = vadd.f32 %v1811, %v1812
          %v1814 = vmul.f32 %v162, 0.14266346
          %v1815 = vadd.f32 %v1813, %v1814
          %v1816 = vmul.f32 %v167, 0.1480719
          %v1817 = vadd.f32 %v1815, %v1816
          %v1818 = vmul.f32 %v172, -0.1728282
          %v1819 = vadd.f32 %v1817, %v1818
          %v1820 = vmul.f32 %v177, 0.011656434
          %v1821 = vadd.f32 %v1819, %v1820
          %v1822 = vmul.f32 %v182, -0.12972236
          %v1823 = vadd.f32 %v1821, %v1822
          %v1824 = vmul.f32 %v187, 0.08866294
          %v1825 = vadd.f32 %v1823, %v1824
          %v1826 = vmul.f32 %v192, 0.023090478
          %v1827 = vadd.f32 %v1825, %v1826
          %v1828 = vmul.f32 %v197, -0.13335237
          %v1829 = vadd.f32 %v1827, %v1828
          %v1830 = vmul.f32 %v202, 0.14264382
          %v1831 = vadd.f32 %v1829, %v1830
          %v1832 = vmul.f32 %v207, -0.014184907
          %v1833 = vadd.f32 %v1831, %v1832
          %v1834 = vmul.f32 %v212, 0.020598961
          %v1835 = vadd.f32 %v1833, %v1834
          %v1836 = vmul.f32 %v217, 0.008286805
          %v1837 = vadd.f32 %v1835, %v1836
          %v1838 = vmul.f32 %v222, 0.066008404
          %v1839 = vadd.f32 %v1837, %v1838
          %v1840 = vmul.f32 %v227, -0.12133295
          %v1841 = vadd.f32 %v1839, %v1840
          %v1842 = vmul.f32 %v232, -0.023957882
          %v1843 = vadd.f32 %v1841, %v1842
          %v1844 = vmul.f32 %v237, 0.055584062
          %v1845 = vadd.f32 %v1843, %v1844
          %v1846 = vmul.f32 %v242, 0.009854548
          %v1847 = vadd.f32 %v1845, %v1846
          %v1848 = vmul.f32 %v247, -0.1465446
          %v1849 = vadd.f32 %v1847, %v1848
          %v1850 = vmul.f32 %v252, -0.15338358
          %v1851 = vadd.f32 %v1849, %v1850
          %v1852 = vmul.f32 %v257, 0.1398201
          %v1853 = vadd.f32 %v1851, %v1852
          %v1854 = vmul.f32 %v262, 0.14330304
          %v1855 = vadd.f32 %v1853, %v1854
          %v1856 = vmul.f32 %v267, 0.10164061
          %v1857 = vadd.f32 %v1855, %v1856
          %v1858 = vmul.f32 %v272, 0.04810172
          %v1859 = vadd.f32 %v1857, %v1858
          %v1860 = vmul.f32 %v277, 0.15655215
          %v1861 = vadd.f32 %v1859, %v1860
          %v1862 = vmul.f32 %v282, 0.15186273
          %v1863 = vadd.f32 %v1861, %v1862
          %v1864 = vmul.f32 %v287, -0.15471953
          %v1865 = vadd.f32 %v1863, %v1864
          %v1866 = vmul.f32 %v292, 0.012626828
          %v1867 = vadd.f32 %v1865, %v1866
          %v1868 = vmul.f32 %v297, 0.12334373
          %v1869 = vadd.f32 %v1867, %v1868
          %vm1870 = vcmp.gt.f32.partialorder %v1869, 0.0
          %v1871 = vmul.f32 %v1869, 0.1
          %v1872 = vsel %vm1870, %v1869, %v1871
          %v1873 = vmul.f32 %v152, -0.015499442
          %v1874 = vadd.f32 %v1873, 0.11528872
          %v1875 = vmul.f32 %v157, 0.0037136397
          %v1876 = vadd.f32 %v1874, %v1875
          %v1877 = vmul.f32 %v162, -0.17777541
          %v1878 = vadd.f32 %v1876, %v1877
          %v1879 = vmul.f32 %v167, -0.04847781
          %v1880 = vadd.f32 %v1878, %v1879
          %v1881 = vmul.f32 %v172, -0.121607356
          %v1882 = vadd.f32 %v1880, %v1881
          %v1883 = vmul.f32 %v177, -0.1141382
          %v1884 = vadd.f32 %v1882, %v1883
          %v1885 = vmul.f32 %v182, 0.15501066
          %v1886 = vadd.f32 %v1884, %v1885
          %v1887 = vmul.f32 %v187, 0.17238577
          %v1888 = vadd.f32 %v1886, %v1887
          %v1889 = vmul.f32 %v192, 0.1230049
          %v1890 = vadd.f32 %v1888, %v1889
          %v1891 = vmul.f32 %v197, -0.16621222
          %v1892 = vadd.f32 %v1890, %v1891
          %v1893 = vmul.f32 %v202, 0.05160237
          %v1894 = vadd.f32 %v1892, %v1893
          %v1895 = vmul.f32 %v207, -0.10377284
          %v1896 = vadd.f32 %v1894, %v1895
          %v1897 = vmul.f32 %v212, -0.105925485
          %v1898 = vadd.f32 %v1896, %v1897
          %v1899 = vmul.f32 %v217, -0.09396087
          %v1900 = vadd.f32 %v1898, %v1899
          %v1901 = vmul.f32 %v222, -0.0031872427
          %v1902 = vadd.f32 %v1900, %v1901
          %v1903 = vmul.f32 %v227, -0.015486993
          %v1904 = vadd.f32 %v1902, %v1903
          %v1905 = vmul.f32 %v232, -0.04977733
          %v1906 = vadd.f32 %v1904, %v1905
          %v1907 = vmul.f32 %v237, 0.07430888
          %v1908 = vadd.f32 %v1906, %v1907
          %v1909 = vmul.f32 %v242, -0.026789665
          %v1910 = vadd.f32 %v1908, %v1909
          %v1911 = vmul.f32 %v247, -0.14623228
          %v1912 = vadd.f32 %v1910, %v1911
          %v1913 = vmul.f32 %v252, 0.0724649
          %v1914 = vadd.f32 %v1912, %v1913
          %v1915 = vmul.f32 %v257, 0.024651997
          %v1916 = vadd.f32 %v1914, %v1915
          %v1917 = vmul.f32 %v262, 0.023266945
          %v1918 = vadd.f32 %v1916, %v1917
          %v1919 = vmul.f32 %v267, -0.1800185
          %v1920 = vadd.f32 %v1918, %v1919
          %v1921 = vmul.f32 %v272, -0.17655332
          %v1922 = vadd.f32 %v1920, %v1921
          %v1923 = vmul.f32 %v277, 0.13945293
          %v1924 = vadd.f32 %v1922, %v1923
          %v1925 = vmul.f32 %v282, -0.13531353
          %v1926 = vadd.f32 %v1924, %v1925
          %v1927 = vmul.f32 %v287, -0.15483023
          %v1928 = vadd.f32 %v1926, %v1927
          %v1929 = vmul.f32 %v292, -0.13931382
          %v1930 = vadd.f32 %v1928, %v1929
          %v1931 = vmul.f32 %v297, 0.08078579
          %v1932 = vadd.f32 %v1930, %v1931
          %vm1933 = vcmp.gt.f32.partialorder %v1932, 0.0
          %v1934 = vmul.f32 %v1932, 0.1
          %v1935 = vsel %vm1933, %v1932, %v1934
          %v1936 = vmul.f32 %v152, -0.027603269
          %v1937 = vadd.f32 %v1936, 0.17187025
          %v1938 = vmul.f32 %v157, -0.014020063
          %v1939 = vadd.f32 %v1937, %v1938
          %v1940 = vmul.f32 %v162, 0.027856128
          %v1941 = vadd.f32 %v1939, %v1940
          %v1942 = vmul.f32 %v167, 0.13832065
          %v1943 = vadd.f32 %v1941, %v1942
          %v1944 = vmul.f32 %v172, 0.14484519
          %v1945 = vadd.f32 %v1943, %v1944
          %v1946 = vmul.f32 %v177, 0.025288131
          %v1947 = vadd.f32 %v1945, %v1946
          %v1948 = vmul.f32 %v182, 0.13666642
          %v1949 = vadd.f32 %v1947, %v1948
          %v1950 = vmul.f32 %v187, -0.15511103
          %v1951 = vadd.f32 %v1949, %v1950
          %v1952 = vmul.f32 %v192, -0.14351967
          %v1953 = vadd.f32 %v1951, %v1952
          %v1954 = vmul.f32 %v197, -0.013517868
          %v1955 = vadd.f32 %v1953, %v1954
          %v1956 = vmul.f32 %v202, -0.13475806
          %v1957 = vadd.f32 %v1955, %v1956
          %v1958 = vmul.f32 %v207, 0.014896564
          %v1959 = vadd.f32 %v1957, %v1958
          %v1960 = vmul.f32 %v212, 0.10086618
          %v1961 = vadd.f32 %v1959, %v1960
          %v1962 = vmul.f32 %v217, 0.10615497
          %v1963 = vadd.f32 %v1961, %v1962
          %v1964 = vmul.f32 %v222, -0.036586147
          %v1965 = vadd.f32 %v1963, %v1964
          %v1966 = vmul.f32 %v227, 0.09347621
          %v1967 = vadd.f32 %v1965, %v1966
          %v1968 = vmul.f32 %v232, 0.020729199
          %v1969 = vadd.f32 %v1967, %v1968
          %v1970 = vmul.f32 %v237, 0.0430271
          %v1971 = vadd.f32 %v1969, %v1970
          %v1972 = vmul.f32 %v242, -0.0770822
          %v1973 = vadd.f32 %v1971, %v1972
          %v1974 = vmul.f32 %v247, 0.15418465
          %v1975 = vadd.f32 %v1973, %v1974
          %v1976 = vmul.f32 %v252, -0.0884991
          %v1977 = vadd.f32 %v1975, %v1976
          %v1978 = vmul.f32 %v257, 0.17122959
          %v1979 = vadd.f32 %v1977, %v1978
          %v1980 = vmul.f32 %v262, 0.07577019
          %v1981 = vadd.f32 %v1979, %v1980
          %v1982 = vmul.f32 %v267, -0.08082697
          %v1983 = vadd.f32 %v1981, %v1982
          %v1984 = vmul.f32 %v272, 0.050400272
          %v1985 = vadd.f32 %v1983, %v1984
          %v1986 = vmul.f32 %v277, 0.119514
          %v1987 = vadd.f32 %v1985, %v1986
          %v1988 = vmul.f32 %v282, 0.08881055
          %v1989 = vadd.f32 %v1987, %v1988
          %v1990 = vmul.f32 %v287, -0.02363333
          %v1991 = vadd.f32 %v1989, %v1990
          %v1992 = vmul.f32 %v292, 0.07703345
          %v1993 = vadd.f32 %v1991, %v1992
          %v1994 = vmul.f32 %v297, -0.179503
          %v1995 = vadd.f32 %v1993, %v1994
          %vm1996 = vcmp.gt.f32.partialorder %v1995, 0.0
          %v1997 = vmul.f32 %v1995, 0.1
          %v1998 = vsel %vm1996, %v1995, %v1997
          %v1999 = vmul.f32 %v152, 0.09417525
          %v2000 = vadd.f32 %v1999, 0.119641885
          %v2001 = vmul.f32 %v157, -0.16551666
          %v2002 = vadd.f32 %v2000, %v2001
          %v2003 = vmul.f32 %v162, -0.098226935
          %v2004 = vadd.f32 %v2002, %v2003
          %v2005 = vmul.f32 %v167, -0.14368452
          %v2006 = vadd.f32 %v2004, %v2005
          %v2007 = vmul.f32 %v172, 0.1096161
          %v2008 = vadd.f32 %v2006, %v2007
          %v2009 = vmul.f32 %v177, -0.0038560668
          %v2010 = vadd.f32 %v2008, %v2009
          %v2011 = vmul.f32 %v182, -0.16142811
          %v2012 = vadd.f32 %v2010, %v2011
          %v2013 = vmul.f32 %v187, 0.04572442
          %v2014 = vadd.f32 %v2012, %v2013
          %v2015 = vmul.f32 %v192, 0.069864474
          %v2016 = vadd.f32 %v2014, %v2015
          %v2017 = vmul.f32 %v197, 0.03198939
          %v2018 = vadd.f32 %v2016, %v2017
          %v2019 = vmul.f32 %v202, 0.12775518
          %v2020 = vadd.f32 %v2018, %v2019
          %v2021 = vmul.f32 %v207, 0.10496071
          %v2022 = vadd.f32 %v2020, %v2021
          %v2023 = vmul.f32 %v212, 0.0542028
          %v2024 = vadd.f32 %v2022, %v2023
          %v2025 = vmul.f32 %v217, 0.11927777
          %v2026 = vadd.f32 %v2024, %v2025
          %v2027 = vmul.f32 %v222, -0.06758934
          %v2028 = vadd.f32 %v2026, %v2027
          %v2029 = vmul.f32 %v227, 0.13107032
          %v2030 = vadd.f32 %v2028, %v2029
          %v2031 = vmul.f32 %v232, 0.043050606
          %v2032 = vadd.f32 %v2030, %v2031
          %v2033 = vmul.f32 %v237, 0.0029139235
          %v2034 = vadd.f32 %v2032, %v2033
          %v2035 = vmul.f32 %v242, 0.023868952
          %v2036 = vadd.f32 %v2034, %v2035
          %v2037 = vmul.f32 %v247, 0.12698711
          %v2038 = vadd.f32 %v2036, %v2037
          %v2039 = vmul.f32 %v252, 0.00068162184
          %v2040 = vadd.f32 %v2038, %v2039
          %v2041 = vmul.f32 %v257, -0.021486562
          %v2042 = vadd.f32 %v2040, %v2041
          %v2043 = vmul.f32 %v262, -0.1392389
          %v2044 = vadd.f32 %v2042, %v2043
          %v2045 = vmul.f32 %v267, 0.066294916
          %v2046 = vadd.f32 %v2044, %v2045
          %v2047 = vmul.f32 %v272, 0.14968257
          %v2048 = vadd.f32 %v2046, %v2047
          %v2049 = vmul.f32 %v277, -0.17733581
          %v2050 = vadd.f32 %v2048, %v2049
          %v2051 = vmul.f32 %v282, -0.027421491
          %v2052 = vadd.f32 %v2050, %v2051
          %v2053 = vmul.f32 %v287, 0.08396685
          %v2054 = vadd.f32 %v2052, %v2053
          %v2055 = vmul.f32 %v292, -0.123733886
          %v2056 = vadd.f32 %v2054, %v2055
          %v2057 = vmul.f32 %v297, 0.15241693
          %v2058 = vadd.f32 %v2056, %v2057
          %vm2059 = vcmp.gt.f32.partialorder %v2058, 0.0
          %v2060 = vmul.f32 %v2058, 0.1
          %v2061 = vsel %vm2059, %v2058, %v2060
          %v2062 = vmul.f32 %v152, -0.09149633
          %v2063 = vadd.f32 %v2062, -0.035842627
          %v2064 = vmul.f32 %v157, 0.089765534
          %v2065 = vadd.f32 %v2063, %v2064
          %v2066 = vmul.f32 %v162, -0.111225806
          %v2067 = vadd.f32 %v2065, %v2066
          %v2068 = vmul.f32 %v167, -0.00019274675
          %v2069 = vadd.f32 %v2067, %v2068
          %v2070 = vmul.f32 %v172, 0.16131793
          %v2071 = vadd.f32 %v2069, %v2070
          %v2072 = vmul.f32 %v177, 0.12105454
          %v2073 = vadd.f32 %v2071, %v2072
          %v2074 = vmul.f32 %v182, -0.16413404
          %v2075 = vadd.f32 %v2073, %v2074
          %v2076 = vmul.f32 %v187, -0.04496214
          %v2077 = vadd.f32 %v2075, %v2076
          %v2078 = vmul.f32 %v192, 0.011549439
          %v2079 = vadd.f32 %v2077, %v2078
          %v2080 = vmul.f32 %v197, 0.023922928
          %v2081 = vadd.f32 %v2079, %v2080
          %v2082 = vmul.f32 %v202, 0.06984388
          %v2083 = vadd.f32 %v2081, %v2082
          %v2084 = vmul.f32 %v207, 0.024427865
          %v2085 = vadd.f32 %v2083, %v2084
          %v2086 = vmul.f32 %v212, 0.11210335
          %v2087 = vadd.f32 %v2085, %v2086
          %v2088 = vmul.f32 %v217, -0.15989405
          %v2089 = vadd.f32 %v2087, %v2088
          %v2090 = vmul.f32 %v222, -0.031489152
          %v2091 = vadd.f32 %v2089, %v2090
          %v2092 = vmul.f32 %v227, -0.14676486
          %v2093 = vadd.f32 %v2091, %v2092
          %v2094 = vmul.f32 %v232, 0.07696533
          %v2095 = vadd.f32 %v2093, %v2094
          %v2096 = vmul.f32 %v237, -0.074027896
          %v2097 = vadd.f32 %v2095, %v2096
          %v2098 = vmul.f32 %v242, -0.04335779
          %v2099 = vadd.f32 %v2097, %v2098
          %v2100 = vmul.f32 %v247, -0.03988134
          %v2101 = vadd.f32 %v2099, %v2100
          %v2102 = vmul.f32 %v252, -0.056065015
          %v2103 = vadd.f32 %v2101, %v2102
          %v2104 = vmul.f32 %v257, -0.13519453
          %v2105 = vadd.f32 %v2103, %v2104
          %v2106 = vmul.f32 %v262, 0.106197454
          %v2107 = vadd.f32 %v2105, %v2106
          %v2108 = vmul.f32 %v267, -0.07375062
          %v2109 = vadd.f32 %v2107, %v2108
          %v2110 = vmul.f32 %v272, -0.09307204
          %v2111 = vadd.f32 %v2109, %v2110
          %v2112 = vmul.f32 %v277, 0.032199938
          %v2113 = vadd.f32 %v2111, %v2112
          %v2114 = vmul.f32 %v282, -0.009378949
          %v2115 = vadd.f32 %v2113, %v2114
          %v2116 = vmul.f32 %v287, -0.10547748
          %v2117 = vadd.f32 %v2115, %v2116
          %v2118 = vmul.f32 %v292, 0.18008244
          %v2119 = vadd.f32 %v2117, %v2118
          %v2120 = vmul.f32 %v297, -0.023332326
          %v2121 = vadd.f32 %v2119, %v2120
          %vm2122 = vcmp.gt.f32.partialorder %v2121, 0.0
          %v2123 = vmul.f32 %v2121, 0.1
          %v2124 = vsel %vm2122, %v2121, %v2123
          %v2125 = vmul.f32 %v152, -0.072255224
          %v2126 = vadd.f32 %v2125, -0.07626394
          %v2127 = vmul.f32 %v157, -0.16856292
          %v2128 = vadd.f32 %v2126, %v2127
          %v2129 = vmul.f32 %v162, 0.1538823
          %v2130 = vadd.f32 %v2128, %v2129
          %v2131 = vmul.f32 %v167, -0.07282206
          %v2132 = vadd.f32 %v2130, %v2131
          %v2133 = vmul.f32 %v172, -0.15967885
          %v2134 = vadd.f32 %v2132, %v2133
          %v2135 = vmul.f32 %v177, 0.14293121
          %v2136 = vadd.f32 %v2134, %v2135
          %v2137 = vmul.f32 %v182, -0.071366966
          %v2138 = vadd.f32 %v2136, %v2137
          %v2139 = vmul.f32 %v187, 0.15420131
          %v2140 = vadd.f32 %v2138, %v2139
          %v2141 = vmul.f32 %v192, 0.012473562
          %v2142 = vadd.f32 %v2140, %v2141
          %v2143 = vmul.f32 %v197, -0.13834193
          %v2144 = vadd.f32 %v2142, %v2143
          %v2145 = vmul.f32 %v202, -0.09566033
          %v2146 = vadd.f32 %v2144, %v2145
          %v2147 = vmul.f32 %v207, -0.1722244
          %v2148 = vadd.f32 %v2146, %v2147
          %v2149 = vmul.f32 %v212, 0.041282237
          %v2150 = vadd.f32 %v2148, %v2149
          %v2151 = vmul.f32 %v217, -0.15622611
          %v2152 = vadd.f32 %v2150, %v2151
          %v2153 = vmul.f32 %v222, 0.039917905
          %v2154 = vadd.f32 %v2152, %v2153
          %v2155 = vmul.f32 %v227, 0.10694215
          %v2156 = vadd.f32 %v2154, %v2155
          %v2157 = vmul.f32 %v232, -0.12654294
          %v2158 = vadd.f32 %v2156, %v2157
          %v2159 = vmul.f32 %v237, 0.10089875
          %v2160 = vadd.f32 %v2158, %v2159
          %v2161 = vmul.f32 %v242, -0.1808607
          %v2162 = vadd.f32 %v2160, %v2161
          %v2163 = vmul.f32 %v247, -0.047439817
          %v2164 = vadd.f32 %v2162, %v2163
          %v2165 = vmul.f32 %v252, 0.057658747
          %v2166 = vadd.f32 %v2164, %v2165
          %v2167 = vmul.f32 %v257, 0.15458094
          %v2168 = vadd.f32 %v2166, %v2167
          %v2169 = vmul.f32 %v262, -0.026939841
          %v2170 = vadd.f32 %v2168, %v2169
          %v2171 = vmul.f32 %v267, -0.027960554
          %v2172 = vadd.f32 %v2170, %v2171
          %v2173 = vmul.f32 %v272, -0.120526224
          %v2174 = vadd.f32 %v2172, %v2173
          %v2175 = vmul.f32 %v277, 0.052789584
          %v2176 = vadd.f32 %v2174, %v2175
          %v2177 = vmul.f32 %v282, 0.04761907
          %v2178 = vadd.f32 %v2176, %v2177
          %v2179 = vmul.f32 %v287, 0.15324908
          %v2180 = vadd.f32 %v2178, %v2179
          %v2181 = vmul.f32 %v292, 0.10998396
          %v2182 = vadd.f32 %v2180, %v2181
          %v2183 = vmul.f32 %v297, -0.032103915
          %v2184 = vadd.f32 %v2182, %v2183
          %vm2185 = vcmp.gt.f32.partialorder %v2184, 0.0
          %v2186 = vmul.f32 %v2184, 0.1
          %v2187 = vsel %vm2185, %v2184, %v2186
          %v2188 = vmul.f32 %v360, 0.028852379
          %v2189 = vadd.f32 %v2188, 0.023750596
          %v2190 = vmul.f32 %v423, 0.16604915
          %v2191 = vadd.f32 %v2189, %v2190
          %v2192 = vmul.f32 %v486, 0.08155878
          %v2193 = vadd.f32 %v2191, %v2192
          %v2194 = vmul.f32 %v549, -0.17618455
          %v2195 = vadd.f32 %v2193, %v2194
          %v2196 = vmul.f32 %v612, 0.15929444
          %v2197 = vadd.f32 %v2195, %v2196
          %v2198 = vmul.f32 %v675, 0.032025084
          %v2199 = vadd.f32 %v2197, %v2198
          %v2200 = vmul.f32 %v738, -0.0285085
          %v2201 = vadd.f32 %v2199, %v2200
          %v2202 = vmul.f32 %v801, -0.12802097
          %v2203 = vadd.f32 %v2201, %v2202
          %v2204 = vmul.f32 %v864, -0.018657956
          %v2205 = vadd.f32 %v2203, %v2204
          %v2206 = vmul.f32 %v927, -0.08695272
          %v2207 = vadd.f32 %v2205, %v2206
          %v2208 = vmul.f32 %v990, 0.08786827
          %v2209 = vadd.f32 %v2207, %v2208
          %v2210 = vmul.f32 %v1053, -0.06355576
          %v2211 = vadd.f32 %v2209, %v2210
          %v2212 = vmul.f32 %v1116, 0.13022664
          %v2213 = vadd.f32 %v2211, %v2212
          %v2214 = vmul.f32 %v1179, -0.12201562
          %v2215 = vadd.f32 %v2213, %v2214
          %v2216 = vmul.f32 %v1242, -0.16387762
          %v2217 = vadd.f32 %v2215, %v2216
          %v2218 = vmul.f32 %v1305, -0.035073597
          %v2219 = vadd.f32 %v2217, %v2218
          %v2220 = vmul.f32 %v1368, 0.06981006
          %v2221 = vadd.f32 %v2219, %v2220
          %v2222 = vmul.f32 %v1431, -0.108824216
          %v2223 = vadd.f32 %v2221, %v2222
          %v2224 = vmul.f32 %v1494, 0.16264918
          %v2225 = vadd.f32 %v2223, %v2224
          %v2226 = vmul.f32 %v1557, -0.01915175
          %v2227 = vadd.f32 %v2225, %v2226
          %v2228 = vmul.f32 %v1620, -0.0866132
          %v2229 = vadd.f32 %v2227, %v2228
          %v2230 = vmul.f32 %v1683, 0.0830883
          %v2231 = vadd.f32 %v2229, %v2230
          %v2232 = vmul.f32 %v1746, 0.13446958
          %v2233 = vadd.f32 %v2231, %v2232
          %v2234 = vmul.f32 %v1809, -0.16128986
          %v2235 = vadd.f32 %v2233, %v2234
          %v2236 = vmul.f32 %v1872, 0.085923396
          %v2237 = vadd.f32 %v2235, %v2236
          %v2238 = vmul.f32 %v1935, -0.08227918
          %v2239 = vadd.f32 %v2237, %v2238
          %v2240 = vmul.f32 %v1998, -0.15026794
          %v2241 = vadd.f32 %v2239, %v2240
          %v2242 = vmul.f32 %v2061, 0.11091753
          %v2243 = vadd.f32 %v2241, %v2242
          %v2244 = vmul.f32 %v2124, -0.08126944
          %v2245 = vadd.f32 %v2243, %v2244
          %v2246 = vmul.f32 %v2187, 0.16606987
          %v2247 = vadd.f32 %v2245, %v2246
          %v2248 = vmul.f32 %v2247, %v145
          %s2249 = scalar_lea.vmem %s131, %s143 [#allocation5]
          %2250 = vst [vmem:[%s2249] sm:$0xff] %v2248
        $region33: #{tpu_custom_call.1} parent=23 // loop_footer
          %s142 = sadd.s32 1, %s138
        $region34: #{tpu_custom_call.1} parent=23 // loop_footer_branch
          %137 = sbr.rel target = $region30
        $region35: #{tpu_custom_call.1} parent=23 // loop_exit
          _
        %s2251 = sand.u32 %s64, 1
        %s2252 = scalar_lea.sflag [#allocation4], %s2251
        %s2253 = sand.u32 %s64, 1
        %s2254 = smul.addr %s2253, 256
        %s2255 = scalar_lea.vmem [#allocation5], %s2254
        // Predicated region
        $region36: #{tpu_custom_call.1} parent=23 // pred_check
          %p2256 = pneg %p74
        $region37: #{tpu_custom_call.1} parent=23 // pred_check_branch
          %2258 = sbr.rel (%p2256) target = $region39
        $region38: #{tpu_custom_call.1} parent=23 // pred_region
          %s2259 = sadd.s32 %s21, %s20
          %s2260 = smul.u32 32, %s2259
          %s2262 = ssub.s32 4096, 4096
          %2263 = vsyncadd %s2252, %s2262
          %s2264 = smul.addr %s2260, 128
          %s2265 = scalar_lea.hbm %s1, %s2264
          %s2266 = sshll.u32 %s2255, 4
          %s2267 = int_to_ptr.vmem [resolvable:$true] %s2266
          %2272 = dma.vmem_to_hbm [thread:$0]  %s2267, 4096, %s2265, %s2252, 128, 128, 8
        $region39: #{tpu_custom_call.1} parent=23 // pred_fallthru
          _
      $region24: #{tpu_custom_call.1} parent=5 // pred_fallthru
        _
      %p2273 = scmp.le.s32.totalorder 2, %s11
      // Predicated region
      $region40: #{tpu_custom_call.1} parent=5 // pred_check
        %p2274 = pneg %p2273
      $region41: #{tpu_custom_call.1} parent=5 // pred_check_branch
        %2276 = sbr.rel (%p2274) target = $region43
      $region42: #{tpu_custom_call.1} parent=5 // pred_region
        %s2277 = ssub.s32 %s11, 2
        // Predicated region
        $region44: #{tpu_custom_call.1} parent=42 // pred_check
          %p2278 = pneg %p80
        $region45: #{tpu_custom_call.1} parent=42 // pred_check_branch
          %2280 = sbr.rel (%p2278) target = $region47
        $region46: #{tpu_custom_call.1} parent=42 // pred_region
          %s2281 = sand.u32 %s65, 1
          %s2282 = scalar_lea.sflag [#allocation4], %s2281
          %s2283 = sand.u32 %s65, 1
          %s2284 = smul.addr %s2283, 256
          %s2285 = scalar_lea.vmem [#allocation5], %s2284
          %2286 = dma.done %s2282, 4096
        $region47: #{tpu_custom_call.1} parent=42 // pred_fallthru
          _
      $region43: #{tpu_custom_call.1} parent=5 // pred_fallthru
        _
    $region6: #{tpu_custom_call.1} parent=1 // loop_footer
      %s15 = sadd.s32 1, %s11
    $region7: #{tpu_custom_call.1} parent=1 // loop_footer_branch
      %10 = sbr.rel target = $region3
    $region8: #{tpu_custom_call.1} parent=1 // loop_exit
      _
    %2287 = vsyncpa [#allocation3], 1
    %s2288 = scalar_lea.sflag [#allocation3], 1
    %2289 = vsyncpa %s2288, 1
    %2290 = vsyncpa [#allocation4], 1
    %s2291 = scalar_lea.sflag [#allocation4], 1
    %2292 = vsyncpa %s2291, 1

</llo_original>
